<compile_context>
chip_gen: v6e
topology: v6e:2x2x1
jax: 0.10.0
libtpu: 0.0.40
codegen_flags: <defaults>
</compile_context>

<pallas_src>
import functools
import math

import jax
import jax.numpy as jnp
from jax.experimental import pallas as pl
from jax.experimental.pallas import tpu as pltpu


def _round_up(v, m):
    return ((v + m - 1) // m) * m


@functools.lru_cache(maxsize=None)
def _hw_budget():
    """(vmem_limit_bytes, TM_cap, TN_cap) picked per TPU generation."""
    vmem = 64 * 1024 * 1024
    try:
        info = pltpu.get_tpu_info()
        v = getattr(info, "vmem_capacity_bytes", None)
        if v:
            vmem = int(v)
    except Exception:
        pass
    if vmem >= 96 * 1024 * 1024:
        # v5e / v6e: 128 MiB VMEM -> big tiles, fewer weight re-streams per layer.
        return 100 * 1024 * 1024, 1024, 1024
    # v7x: 64 MiB / TC -> bf16 activations keep TM=512 blocks well under budget.
    return 48 * 1024 * 1024, 512, 512


# ----------------------------------------------------------------------------
# Fused (LayerNorm ->) matmul (+bias, +GELU, +residual) kernel  == 1x1 Conv2d
# ----------------------------------------------------------------------------
def _fused_linear_kernel(*refs, has_ln, has_res, activation, eps, reuse_x):
    # ref order: x, w, b, [ln_g, ln_b], [res], out, [x_scratch]
    it = iter(refs)
    x_ref = next(it)
    w_ref = next(it)
    b_ref = next(it)
    g_ref = next(it) if has_ln else None
    bb_ref = next(it) if has_ln else None
    r_ref = next(it) if has_res else None
    o_ref = next(it)
    x_scr = next(it) if reuse_x else None

    def prep():
        x = x_ref[...]
        if has_ln:
            # LayerNorm statistics in f32 (v5e VPU/EUP have no bf16).
            xf = x.astype(jnp.float32)
            mu = jnp.mean(xf, axis=-1, keepdims=True)
            var = jnp.mean(jnp.square(xf - mu), axis=-1, keepdims=True)
            xf = (xf - mu) * jax.lax.rsqrt(var + eps)
            xf = xf * g_ref[...].astype(jnp.float32) + bb_ref[...].astype(jnp.float32)
            return xf.astype(w_ref.dtype)
        return x.astype(w_ref.dtype)

    if reuse_x:
        # Compute LN + bf16 cast once per M-tile (j == 0) and reuse across N-tiles.
        @pl.when(pl.program_id(1) == 0)
        def _():
            x_scr[...] = prep()
        xin = x_scr[...]
    else:
        xin = prep()

    # bf16 MXU operands, f32 accumulation.
    acc = jnp.dot(xin, w_ref[...], preferred_element_type=jnp.float32)
    acc = acc + b_ref[...].astype(jnp.float32)
    if activation == "gelu":
        # GPT-2 "gelu_new" (tanh approximation), f32 on the EUP.
        acc = jax.nn.gelu(acc, approximate=True)
    if has_res:
        acc = acc + r_ref[...].astype(jnp.float32)
    o_ref[...] = acc.astype(o_ref.dtype)


def fused_linear(x, w, b, *, ln_gamma=None, ln_beta=None, residual=None,
                 activation=None, eps=1e-5, out_dtype=jnp.bfloat16):
    """(optional LN(x)) @ w + b (+gelu) (+residual).  w is bf16; accumulation f32."""
    vmem_limit, tm_cap, tn_cap = _hw_budget()
    M, K = x.shape
    K2, N = w.shape
    assert K == K2
    has_ln = ln_gamma is not None
    has_res = residual is not None

    # K kept whole; (M, N) tiled.  Large TM minimizes weight re-streaming (the
    # dominant HBM term at real M = B*num_nodes); caps chosen per generation.
    TM = M if M <= tm_cap else tm_cap
    TN = N if N <= tn_cap else tn_cap
    grid_i, grid_j = pl.cdiv(M, TM), pl.cdiv(N, TN)
    # NOTE(v7x): the "parallel" axes are sharded across 2 TensorCores; at real
    # shapes grid_i*grid_j is large so any odd tail tile costs <1 step per core.
    reuse_x = has_ln and grid_j > 1

    in_specs = [
        pl.BlockSpec((TM, K), lambda i, j: (i, 0)),
        pl.BlockSpec((K, TN), lambda i, j: (0, j)),
        pl.BlockSpec((1, TN), lambda i, j: (0, j)),
    ]
    args = [x, w, b.reshape(1, N)]
    if has_ln:
        in_specs += [pl.BlockSpec((1, K), lambda i, j: (0, 0)),
                     pl.BlockSpec((1, K), lambda i, j: (0, 0))]
        args += [ln_gamma.reshape(1, K), ln_beta.reshape(1, K)]
    if has_res:
        in_specs += [pl.BlockSpec((TM, TN), lambda i, j: (i, j))]
        args += [residual]

    scratch = [pltpu.VMEM((TM, K), w.dtype)] if reuse_x else []
    semantics = ("parallel", "arbitrary") if reuse_x else ("parallel", "parallel")

    return pl.pallas_call(
        functools.partial(_fused_linear_kernel, has_ln=has_ln, has_res=has_res,
                          activation=activation, eps=eps, reuse_x=reuse_x),
        out_shape=jax.ShapeDtypeStruct((M, N), out_dtype),
        grid=(grid_i, grid_j),
        in_specs=in_specs,
        out_specs=pl.BlockSpec((TM, TN), lambda i, j: (i, j)),
        scratch_shapes=scratch,
        compiler_params=pltpu.CompilerParams(
            dimension_semantics=semantics,
            vmem_limit_bytes=vmem_limit),
    )(*args)


# ----------------------------------------------------------------------------
# feature_fusion 1x1 conv with the GPT-2 wpe positional add fused in
# (per-node residual broadcast over batch -> no standalone XLA add of (B*N, H))
# ----------------------------------------------------------------------------
def _fusion_kernel(x_ref, w_ref, b_ref, pos_ref, o_ref):
    x = x_ref[0].astype(w_ref.dtype)                      # (N, 3Cg)
    acc = jnp.dot(x, w_ref[...], preferred_element_type=jnp.float32)
    acc = acc + b_ref[...].astype(jnp.float32) + pos_ref[...].astype(jnp.float32)
    o_ref[0] = acc.astype(o_ref.dtype)


def feature_fusion_with_pos(x_bnk, w, b, pos, *, out_dtype=jnp.bfloat16):
    B, N, K = x_bnk.shape
    Nout = w.shape[1]
    vmem_limit, _, _ = _hw_budget()
    return pl.pallas_call(
        _fusion_kernel,
        out_shape=jax.ShapeDtypeStruct((B, N, Nout), out_dtype),
        grid=(B,),
        in_specs=[pl.BlockSpec((1, N, K), lambda bi: (bi, 0, 0)),
                  pl.BlockSpec((K, Nout), lambda bi: (0, 0)),
                  pl.BlockSpec((1, Nout), lambda bi: (0, 0)),
                  pl.BlockSpec((N, Nout), lambda bi: (0, 0))],
        out_specs=pl.BlockSpec((1, N, Nout), lambda bi: (bi, 0, 0)),
        compiler_params=pltpu.CompilerParams(
            dimension_semantics=("parallel",),
            vmem_limit_bytes=vmem_limit),
    )(x_bnk, w, b.reshape(1, Nout), pos)


# ----------------------------------------------------------------------------
# Causal (GPT-2) multi-head attention: one grid step per batch, head-batched MXU
# ----------------------------------------------------------------------------
def _causal_attn_kernel(qkv_ref, o_ref, *, n_heads, head_dim, hidden):
    qkv = qkv_ref[0]                                      # (N, 3H) bf16 — no upcast
    n = qkv.shape[0]

    def to_heads(off):                                    # (N, H) slab -> (nh, N, dh)
        x = qkv[:, off:off + hidden].reshape(n, n_heads, head_dim)
        return jnp.transpose(x, (1, 0, 2))

    q = to_heads(0)                  # softmax scale already folded into w_attn at init
    k = to_heads(hidden)
    v = to_heads(2 * hidden)

    # head-batched scores: (nh, N, dh) x (nh, N, dh) -> (nh, N, N), f32 accumulation
    s = jax.lax.dot_general(q, k, (((2,), (2,)), ((0,), (0,))),
                            preferred_element_type=jnp.float32)
    row = jax.lax.broadcasted_iota(jnp.int32, (n, n), 0)
    col = jax.lax.broadcasted_iota(jnp.int32, (n, n), 1)
    s = jnp.where((col <= row)[None], s, jnp.float32(-1e30))
    s = s - jnp.max(s, axis=-1, keepdims=True)
    p = jnp.exp(s)
    # normalization on the EUP (reciprocal) instead of a VPU divide
    p = p * pl.reciprocal(jnp.sum(p, axis=-1, keepdims=True), approx=True)
    o = jax.lax.dot_general(p.astype(qkv.dtype), v, (((2,), (1,)), ((0,), (0,))),
                            preferred_element_type=jnp.float32)     # (nh, N, dh)
    # single lane-dense (N, H) store
    o_ref[0] = jnp.transpose(o, (1, 0, 2)).reshape(n, hidden).astype(o_ref.dtype)


def causal_attention(qkv, *, n_heads, hidden, out_dtype=jnp.bfloat16):
    """qkv: (B, N, 3H) bf16 -> (B, N, H) bf16."""
    B, N, threeH = qkv.shape
    dh = hidden // n_heads
    vmem_limit, _, _ = _hw_budget()
    return pl.pallas_call(
        functools.partial(_causal_attn_kernel, n_heads=n_heads, head_dim=dh,
                          hidden=hidden),
        out_shape=jax.ShapeDtypeStruct((B, N, hidden), out_dtype),
        grid=(B,),
        in_specs=[pl.BlockSpec((1, N, threeH), lambda b: (b, 0, 0))],
        out_specs=pl.BlockSpec((1, N, hidden), lambda b: (b, 0, 0)),
        compiler_params=pltpu.CompilerParams(
            dimension_semantics=("parallel",),
            vmem_limit_bytes=vmem_limit),
    )(qkv)


# ----------------------------------------------------------------------------
# GCN layer: adj @ (x @ W) + b   (tiny; single block; aggregation kept in f32)
# ----------------------------------------------------------------------------
def _gcn_kernel(x_ref, w_ref, adj_ref, b_ref, o_ref):
    support = jnp.dot(x_ref[...].astype(w_ref.dtype), w_ref[...],
                      preferred_element_type=jnp.float32)            # (N, Co) f32
    out = jnp.dot(adj_ref[...], support, preferred_element_type=jnp.float32)
    o_ref[...] = (out + b_ref[...].astype(jnp.float32)).astype(o_ref.dtype)


def gcn(x, w, adj, b):
    N, C = x.shape
    Co = w.shape[1]
    vmem_limit, _, _ = _hw_budget()
    return pl.pallas_call(
        _gcn_kernel,
        out_shape=jax.ShapeDtypeStruct((N, Co), jnp.bfloat16),
        grid=(1,),
        in_specs=[
            pl.BlockSpec((N, C), lambda i: (0, 0)),
            pl.BlockSpec((C, Co), lambda i: (0, 0)),
            pl.BlockSpec((N, N), lambda i: (0, 0)),
            pl.BlockSpec((1, Co), lambda i: (0, 0)),
        ],
        out_specs=pl.BlockSpec((N, Co), lambda i: (0, 0)),
        compiler_params=pltpu.CompilerParams(vmem_limit_bytes=vmem_limit),
    )(x, w, adj, b.reshape(1, Co))


# ----------------------------------------------------------------------------
# Parameter init (deterministic, synthetic).  Matmul weights stored in bf16.
# ----------------------------------------------------------------------------
def init_params(key, cfg):
    Cg, H, L, D, N = (cfg["gpt_channel"], cfg["gpt_hidden"], cfg["input_len"],
                      cfg["input_dim"], cfg["num_nodes"])
    n_heads = cfg["n_heads"]
    out_pad = _round_up(cfg["output_len"], 128)
    keys = iter(jax.random.split(key, 16 + 4 * cfg["llm_layer"]))

    def xavier(shape):
        lim = math.sqrt(6.0 / (shape[0] + shape[1]))
        return jax.random.uniform(next(keys), shape, jnp.float32, -lim, lim)

    def normal(shape, std=0.02):
        return std * jax.random.normal(next(keys), shape, jnp.float32)

    def bf16(t):
        return t.astype(jnp.bfloat16)

    reg_w = normal((H, cfg["output_len"]))
    reg_w = jnp.pad(reg_w, ((0, 0), (0, out_pad - cfg["output_len"])))   # lane-dense head

    params = {
        "time_day": xavier((cfg["time_steps"], Cg)),
        "time_week": xavier((7, Cg)),
        "node_emb": xavier((N, Cg)),
        "gcn_w": bf16(xavier((Cg, Cg))),
        "gcn_b": jnp.zeros((Cg,), jnp.float32),
        "start_w": bf16(normal((D * L, Cg))),               # start_conv (1x1)
        "start_b": jnp.zeros((Cg,), jnp.float32),
        "fuse_w": bf16(normal((3 * Cg, H))),                 # feature_fusion (1x1)
        "fuse_b": jnp.zeros((H,), jnp.float32),
        "reg_w": bf16(reg_w),                                # regression_layer, padded
        "reg_b": jnp.zeros((out_pad,), jnp.float32),
    }

    scale = 1.0 / math.sqrt(H // n_heads)
    layers = []
    for _ in range(cfg["llm_layer"]):
        # Fold the softmax 1/sqrt(dh) scale into the q columns of w_attn / b_attn
        # (a pretrained checkpoint would get the same transform at load time).
        w_attn = normal((H, 3 * H))
        w_attn = w_attn.at[:, :H].multiply(scale)
        b_attn = jnp.zeros((3 * H,), jnp.float32)
        b_attn = b_attn.at[:H].multiply(scale)
        layers.append({
            "ln1_g": jnp.ones((H,), jnp.float32), "ln1_b": jnp.zeros((H,), jnp.float32),
            "ln2_g": jnp.ones((H,), jnp.float32), "ln2_b": jnp.zeros((H,), jnp.float32),
            "w_attn": bf16(w_attn), "b_attn": b_attn,
            "w_attn_proj": bf16(normal((H, H))), "b_attn_proj": jnp.zeros((H,), jnp.float32),
            "w_fc": bf16(normal((H, 4 * H))), "b_fc": jnp.zeros((4 * H,), jnp.float32),
            "w_proj": bf16(normal((4 * H, H))), "b_proj": jnp.zeros((H,), jnp.float32),
        })
    params["gpt"] = {
        "wpe": normal((N, H), std=0.01),
        "layers": layers,
        "lnf_g": jnp.ones((H,), jnp.float32),
        "lnf_b": jnp.zeros((H,), jnp.float32),
    }
    return params


# ----------------------------------------------------------------------------
# Forward pass
# ----------------------------------------------------------------------------
def st_llm_forward(params, history_data, adj, *, cfg):
    # history_data axes follow the PyTorch forward: (batch, input_dim, num_nodes, input_len)
    B, D, N, L = history_data.shape
    Cg = cfg["gpt_channel"]
    H = cfg["gpt_hidden"]
    n_heads = cfg["n_heads"]

    # --- TemporalEmbedding: feature channels 1 / 2 at the LAST time step (XLA glue) ---
    day_idx = jnp.clip((history_data[:, 1, :, -1] * cfg["time_steps"]).astype(jnp.int32),
                       0, cfg["time_steps"] - 1)                              # (B, N)
    week_idx = jnp.clip(history_data[:, 2, :, -1].astype(jnp.int32), 0, 6)    # (B, N)
    tem_emb = (jnp.take(params["time_day"], day_idx, axis=0) +
               jnp.take(params["time_week"], week_idx, axis=0)).astype(jnp.bfloat16)

    # --- GCN on the learned node embedding (Pallas, f32 aggregation) ---
    node_emb = gcn(params["node_emb"], params["gcn_w"], adj, params["gcn_b"])  # (N, Cg)
    node_emb = jnp.broadcast_to(node_emb[None], (B, N, Cg))

    # --- start_conv: 1x1 conv over flattened (input_dim*input_len) features ---
    x = jnp.transpose(history_data, (0, 2, 1, 3)).reshape(B * N, D * L)
    x = fused_linear(x, params["start_w"], params["start_b"]).reshape(B, N, Cg)

    # --- concat + feature_fusion 1x1 conv, GPT-2 wpe fused in as per-node residual ---
    gp = params["gpt"]
    data_cat = jnp.concatenate([x, tem_emb, node_emb], axis=-1)        # (B, N, 3Cg) bf16
    h2 = feature_fusion_with_pos(data_cat, params["fuse_w"], params["fuse_b"],
                                 gp["wpe"]).reshape(B * N, H)          # (B*N, H) bf16

    # --- PFA (GPT-2 style transformer over the node axis), fully fused layers ---
    for layer in gp["layers"]:
        # attention block: LN1 fused into the QKV matmul, residual fused into the proj
        qkv = fused_linear(h2, layer["w_attn"], layer["b_attn"],
                           ln_gamma=layer["ln1_g"], ln_beta=layer["ln1_b"])    # (B*N, 3H)
        attn = causal_attention(qkv.reshape(B, N, 3 * H), n_heads=n_heads, hidden=H)
        h2 = fused_linear(attn.reshape(B * N, H),
                          layer["w_attn_proj"], layer["b_attn_proj"], residual=h2)
        # MLP block: LN2 + GELU fused into fc, residual fused into proj
        m = fused_linear(h2, layer["w_fc"], layer["b_fc"],
                         ln_gamma=layer["ln2_g"], ln_beta=layer["ln2_b"],
                         activation="gelu")
        h2 = fused_linear(m, layer["w_proj"], layer["b_proj"], residual=h2)

    # --- regression head: ln_f fused in, output padded to a lane-dense 128-wide slab ---
    out = fused_linear(h2, params["reg_w"], params["reg_b"],
                       ln_gamma=gp["lnf_g"], ln_beta=gp["lnf_b"],
                       out_dtype=jnp.float32)                                  # (B*N, pad)
    out = out[:, :cfg["output_len"]].reshape(B, N, cfg["output_len"])
    prediction = jnp.transpose(out, (0, 2, 1))[..., None]                      # (B, out_len, N, 1)
    return prediction


# ----------------------------------------------------------------------------
if __name__ == "__main__":
    # Small, module-consistent configuration (scaled-down gpt_channel / hidden).
    cfg = dict(
        batch=2,
        input_dim=3,
        num_nodes=16,
        input_len=12,
        output_len=12,
        llm_layer=2,
        gpt_channel=64,          # module default 256
        gpt_hidden=192,          # == 3 * gpt_channel (module: 768 == 3 * 256)
        n_heads=3,               # head_dim = 64, as in GPT-2
        time_steps=288,          # num_nodes not in {250, 266} -> 288
    )

    key = jax.random.PRNGKey(0)
    k_param, k_hist, k_adj = jax.random.split(key, 3)

    params = init_params(k_param, cfg)

    # history_data values in [0,1): channel-1/2 entries give valid time-of-day /
    # day-of-week indices at the last time step.
    history_data = jax.random.uniform(
        k_hist, (cfg["batch"], cfg["input_dim"], cfg["num_nodes"], cfg["input_len"]),
        jnp.float32)

    adj = jax.random.uniform(k_adj, (cfg["num_nodes"], cfg["num_nodes"]), jnp.float32)
    adj = adj / jnp.sum(adj, axis=-1, keepdims=True)   # row-normalized adjacency

    forward = jax.jit(functools.partial(st_llm_forward, cfg=cfg))
    pred = forward(params, history_data, adj)
    jax.block_until_ready(pred)

    assert pred.shape == (cfg["batch"], cfg["output_len"], cfg["num_nodes"], 1)
    assert bool(jnp.all(jnp.isfinite(pred)))
    print("KERNEL_OK")
</pallas_src>

<mosaic_0001>
module attributes {stable_mosaic.version = 11 : i64} {
  func.func @_fused_linear_kernel(%arg0: i32, %arg1: i32, %arg2: memref<32x36xf32, #tpu.memory_space<vmem>>, %arg3: memref<36x64xbf16, #tpu.memory_space<vmem>>, %arg4: memref<1x64xf32, #tpu.memory_space<vmem>>, %arg5: memref<32x64xbf16, #tpu.memory_space<vmem>>) attributes {dimension_semantics = [#tpu.dimension_semantics<parallel>, #tpu.dimension_semantics<parallel>], iteration_bounds = array<i64: 1, 1>, scalar_prefetch = 0 : i64, scratch_operands = 0 : i64, tpu.core_type = #tpu.core_type<tc>, window_params = [{transform_indices = @transform_0, window_bounds = array<i64: 32, 36>}, {transform_indices = @transform_1, window_bounds = array<i64: 36, 64>}, {transform_indices = @transform_2, window_bounds = array<i64: 1, 64>}, {transform_indices = @transform_3, window_bounds = array<i64: 32, 64>}]} {
    %c0 = arith.constant 0 : index
    %c0_0 = arith.constant 0 : index
    %0 = vector.load %arg2[%c0, %c0_0] : memref<32x36xf32, #tpu.memory_space<vmem>>, vector<32x36xf32>
    %1 = arith.truncf %0 : vector<32x36xf32> to vector<32x36xbf16>
    %c0_1 = arith.constant 0 : index
    %c0_2 = arith.constant 0 : index
    %2 = vector.load %arg3[%c0_1, %c0_2] : memref<36x64xbf16, #tpu.memory_space<vmem>>, vector<36x64xbf16>
    %cst = arith.constant dense<0.000000e+00> : vector<32x64xf32>
    %3 = tpu.matmul %1, %2, %cst {dimension_numbers = #tpu.dot_dimension_numbers<[1], [0], [0], [1], [0, 0, 1, 1], [], []>} : vector<32x36xbf16>, vector<36x64xbf16>, vector<32x64xf32> -> vector<32x64xf32>
    %c0_3 = arith.constant 0 : index
    %c0_4 = arith.constant 0 : index
    %4 = vector.load %arg4[%c0_3, %c0_4] : memref<1x64xf32, #tpu.memory_space<vmem>>, vector<1x64xf32>
    %5 = vector.broadcast %4 : vector<1x64xf32> to vector<32x64xf32>
    %6 = arith.addf %3, %5 : vector<32x64xf32>
    %7 = arith.truncf %6 : vector<32x64xf32> to vector<32x64xbf16>
    %c0_5 = arith.constant 0 : index
    %c0_6 = arith.constant 0 : index
    %8 = vector.load %arg5[%c0_5, %c0_6] : memref<32x64xbf16, #tpu.memory_space<vmem>>, vector<32x64xbf16>
    tpu.vector_store %arg5[%c0_5, %c0_6], %7 {strides = array<i32>} : memref<32x64xbf16, #tpu.memory_space<vmem>>, vector<32x64xbf16>,
    return
  }
  func.func @transform_0(%arg0: i32, %arg1: i32) -> (i32, i32) {
    %c0_i32 = arith.constant 0 : i32
    %c0_i32_0 = arith.constant 0 : i32
    return %arg0, %c0_i32 : i32, i32
  }
  func.func @transform_1(%arg0: i32, %arg1: i32) -> (i32, i32) {
    %c0_i32 = arith.constant 0 : i32
    %c0_i32_0 = arith.constant 0 : i32
    return %c0_i32, %arg1 : i32, i32
  }
  func.func @transform_2(%arg0: i32, %arg1: i32) -> (i32, i32) {
    %c0_i32 = arith.constant 0 : i32
    %c0_i32_0 = arith.constant 0 : i32
    return %c0_i32, %arg1 : i32, i32
  }
  func.func @transform_3(%arg0: i32, %arg1: i32) -> (i32, i32) {
    %c0_i32 = arith.constant 0 : i32
    return %arg0, %arg1 : i32, i32
  }
}

module attributes {stable_mosaic.version = 11 : i64} {
  func.func @_gcn_kernel(%arg0: i32, %arg1: memref<16x64xf32, #tpu.memory_space<vmem>>, %arg2: memref<64x64xbf16, #tpu.memory_space<vmem>>, %arg3: memref<16x16xf32, #tpu.memory_space<vmem>>, %arg4: memref<1x64xf32, #tpu.memory_space<vmem>>, %arg5: memref<16x64xbf16, #tpu.memory_space<vmem>>) attributes {dimension_semantics = [#tpu.dimension_semantics<arbitrary>], iteration_bounds = array<i64: 1>, scalar_prefetch = 0 : i64, scratch_operands = 0 : i64, tpu.core_type = #tpu.core_type<tc>, window_params = [{pipeline_mode = #tpu.pipeline_mode<synchronous>, transform_indices = @transform_0, window_bounds = array<i64: 16, 64>}, {pipeline_mode = #tpu.pipeline_mode<synchronous>, transform_indices = @transform_1, window_bounds = array<i64: 64, 64>}, {pipeline_mode = #tpu.pipeline_mode<synchronous>, transform_indices = @transform_2, window_bounds = array<i64: 16, 16>}, {pipeline_mode = #tpu.pipeline_mode<synchronous>, transform_indices = @transform_3, window_bounds = array<i64: 1, 64>}, {pipeline_mode = #tpu.pipeline_mode<synchronous>, transform_indices = @transform_4, window_bounds = array<i64: 16, 64>}]} {
    %c0 = arith.constant 0 : index
    %c0_0 = arith.constant 0 : index
    %0 = vector.load %arg1[%c0, %c0_0] : memref<16x64xf32, #tpu.memory_space<vmem>>, vector<16x64xf32>
    %1 = arith.truncf %0 : vector<16x64xf32> to vector<16x64xbf16>
    %c0_1 = arith.constant 0 : index
    %c0_2 = arith.constant 0 : index
    %2 = vector.load %arg2[%c0_1, %c0_2] : memref<64x64xbf16, #tpu.memory_space<vmem>>, vector<64x64xbf16>
    %cst = arith.constant dense<0.000000e+00> : vector<16x64xf32>
    %3 = tpu.matmul %1, %2, %cst {dimension_numbers = #tpu.dot_dimension_numbers<[1], [0], [0], [1], [0, 0, 1, 1], [], []>} : vector<16x64xbf16>, vector<64x64xbf16>, vector<16x64xf32> -> vector<16x64xf32>
    %c0_3 = arith.constant 0 : index
    %c0_4 = arith.constant 0 : index
    %4 = vector.load %arg3[%c0_3, %c0_4] : memref<16x16xf32, #tpu.memory_space<vmem>>, vector<16x16xf32>
    %cst_5 = arith.constant dense<0.000000e+00> : vector<16x64xf32>
    %5 = tpu.matmul %4, %3, %cst_5 {dimension_numbers = #tpu.dot_dimension_numbers<[1], [0], [0], [1], [0, 0, 1, 1], [], []>} : vector<16x16xf32>, vector<16x64xf32>, vector<16x64xf32> -> vector<16x64xf32>
    %c0_6 = arith.constant 0 : index
    %c0_7 = arith.constant 0 : index
    %6 = vector.load %arg4[%c0_6, %c0_7] : memref<1x64xf32, #tpu.memory_space<vmem>>, vector<1x64xf32>
    %7 = vector.broadcast %6 : vector<1x64xf32> to vector<16x64xf32>
    %8 = arith.addf %5, %7 : vector<16x64xf32>
    %9 = arith.truncf %8 : vector<16x64xf32> to vector<16x64xbf16>
    %c0_8 = arith.constant 0 : index
    %c0_9 = arith.constant 0 : index
    %10 = vector.load %arg5[%c0_8, %c0_9] : memref<16x64xbf16, #tpu.memory_space<vmem>>, vector<16x64xbf16>
    tpu.vector_store %arg5[%c0_8, %c0_9], %9 {strides = array<i32>} : memref<16x64xbf16, #tpu.memory_space<vmem>>, vector<16x64xbf16>,
    return
  }
  func.func @transform_0(%arg0: i32) -> (i32, i32) {
    %c0_i32 = arith.constant 0 : i32
    %c0_i32_0 = arith.constant 0 : i32
    %c0_i32_1 = arith.constant 0 : i32
    return %c0_i32, %c0_i32_0 : i32, i32
  }
  func.func @transform_1(%arg0: i32) -> (i32, i32) {
    %c0_i32 = arith.constant 0 : i32
    %c0_i32_0 = arith.constant 0 : i32
    %c0_i32_1 = arith.constant 0 : i32
    return %c0_i32, %c0_i32_0 : i32, i32
  }
  func.func @transform_2(%arg0: i32) -> (i32, i32) {
    %c0_i32 = arith.constant 0 : i32
    %c0_i32_0 = arith.constant 0 : i32
    %c0_i32_1 = arith.constant 0 : i32
    return %c0_i32, %c0_i32_0 : i32, i32
  }
  func.func @transform_3(%arg0: i32) -> (i32, i32) {
    %c0_i32 = arith.constant 0 : i32
    %c0_i32_0 = arith.constant 0 : i32
    %c0_i32_1 = arith.constant 0 : i32
    return %c0_i32, %c0_i32_0 : i32, i32
  }
  func.func @transform_4(%arg0: i32) -> (i32, i32) {
    %c0_i32 = arith.constant 0 : i32
    %c0_i32_0 = arith.constant 0 : i32
    %c0_i32_1 = arith.constant 0 : i32
    return %c0_i32, %c0_i32_0 : i32, i32
  }
}

module attributes {stable_mosaic.version = 11 : i64} {
  func.func @_fusion_kernel(%arg0: i32, %arg1: memref<1x16x192xbf16, #tpu.memory_space<vmem>>, %arg2: memref<192x192xbf16, #tpu.memory_space<vmem>>, %arg3: memref<1x192xf32, #tpu.memory_space<vmem>>, %arg4: memref<16x192xf32, #tpu.memory_space<vmem>>, %arg5: memref<1x16x192xbf16, #tpu.memory_space<vmem>>) attributes {dimension_semantics = [#tpu.dimension_semantics<parallel>], iteration_bounds = array<i64: 2>, scalar_prefetch = 0 : i64, scratch_operands = 0 : i64, tpu.core_type = #tpu.core_type<tc>, window_params = [{transform_indices = @transform_0, window_bounds = array<i64: 1, 16, 192>}, {pipeline_mode = #tpu.pipeline_mode<synchronous>, transform_indices = @transform_1, window_bounds = array<i64: 192, 192>}, {pipeline_mode = #tpu.pipeline_mode<synchronous>, transform_indices = @transform_2, window_bounds = array<i64: 1, 192>}, {pipeline_mode = #tpu.pipeline_mode<synchronous>, transform_indices = @transform_3, window_bounds = array<i64: 16, 192>}, {transform_indices = @transform_4, window_bounds = array<i64: 1, 16, 192>}]} {
    %c0 = arith.constant 0 : index
    %c0_0 = arith.constant 0 : index
    %c0_1 = arith.constant 0 : index
    %0 = vector.load %arg1[%c0, %c0_0, %c0_1] : memref<1x16x192xbf16, #tpu.memory_space<vmem>>, vector<1x16x192xbf16>
    %1 = vector.shape_cast %0 : vector<1x16x192xbf16> to vector<16x192xbf16>
    %c0_2 = arith.constant 0 : index
    %c0_3 = arith.constant 0 : index
    %2 = vector.load %arg2[%c0_2, %c0_3] : memref<192x192xbf16, #tpu.memory_space<vmem>>, vector<192x192xbf16>
    %cst = arith.constant dense<0.000000e+00> : vector<16x192xf32>
    %3 = tpu.matmul %1, %2, %cst {dimension_numbers = #tpu.dot_dimension_numbers<[1], [0], [0], [1], [0, 0, 1, 1], [], []>} : vector<16x192xbf16>, vector<192x192xbf16>, vector<16x192xf32> -> vector<16x192xf32>
    %c0_4 = arith.constant 0 : index
    %c0_5 = arith.constant 0 : index
    %4 = vector.load %arg3[%c0_4, %c0_5] : memref<1x192xf32, #tpu.memory_space<vmem>>, vector<1x192xf32>
    %5 = vector.broadcast %4 : vector<1x192xf32> to vector<16x192xf32>
    %6 = arith.addf %3, %5 : vector<16x192xf32>
    %c0_6 = arith.constant 0 : index
    %c0_7 = arith.constant 0 : index
    %7 = vector.load %arg4[%c0_6, %c0_7] : memref<16x192xf32, #tpu.memory_space<vmem>>, vector<16x192xf32>
    %8 = arith.addf %6, %7 : vector<16x192xf32>
    %9 = arith.truncf %8 : vector<16x192xf32> to vector<16x192xbf16>
    %c0_8 = arith.constant 0 : index
    %c0_9 = arith.constant 0 : index
    %c0_10 = arith.constant 0 : index
    %10 = vector.load %arg5[%c0_8, %c0_9, %c0_10] : memref<1x16x192xbf16, #tpu.memory_space<vmem>>, vector<1x16x192xbf16>
    %11 = vector.shape_cast %10 : vector<1x16x192xbf16> to vector<16x192xbf16>
    %12 = vector.shape_cast %9 : vector<16x192xbf16> to vector<1x16x192xbf16>
    tpu.vector_store %arg5[%c0_8, %c0_9, %c0_10], %12 {strides = array<i32>} : memref<1x16x192xbf16, #tpu.memory_space<vmem>>, vector<1x16x192xbf16>,
    return
  }
  func.func @transform_0(%arg0: i32) -> (i32, i32, i32) {
    %c0_i32 = arith.constant 0 : i32
    %c0_i32_0 = arith.constant 0 : i32
    %c0_i32_1 = arith.constant 0 : i32
    return %arg0, %c0_i32, %c0_i32_0 : i32, i32, i32
  }
  func.func @transform_1(%arg0: i32) -> (i32, i32) {
    %c0_i32 = arith.constant 0 : i32
    %c0_i32_0 = arith.constant 0 : i32
    %c0_i32_1 = arith.constant 0 : i32
    return %c0_i32, %c0_i32_0 : i32, i32
  }
  func.func @transform_2(%arg0: i32) -> (i32, i32) {
    %c0_i32 = arith.constant 0 : i32
    %c0_i32_0 = arith.constant 0 : i32
    %c0_i32_1 = arith.constant 0 : i32
    return %c0_i32, %c0_i32_0 : i32, i32
  }
  func.func @transform_3(%arg0: i32) -> (i32, i32) {
    %c0_i32 = arith.constant 0 : i32
    %c0_i32_0 = arith.constant 0 : i32
    %c0_i32_1 = arith.constant 0 : i32
    return %c0_i32, %c0_i32_0 : i32, i32
  }
  func.func @transform_4(%arg0: i32) -> (i32, i32, i32) {
    %c0_i32 = arith.constant 0 : i32
    %c0_i32_0 = arith.constant 0 : i32
    %c0_i32_1 = arith.constant 0 : i32
    return %arg0, %c0_i32, %c0_i32_0 : i32, i32, i32
  }
}

module attributes {stable_mosaic.version = 11 : i64} {
  func.func @_fused_linear_kernel(%arg0: i32, %arg1: i32, %arg2: memref<32x192xbf16, #tpu.memory_space<vmem>>, %arg3: memref<192x512xbf16, #tpu.memory_space<vmem>>, %arg4: memref<1x512xf32, #tpu.memory_space<vmem>>, %arg5: memref<1x192xf32, #tpu.memory_space<vmem>>, %arg6: memref<1x192xf32, #tpu.memory_space<vmem>>, %arg7: memref<32x512xbf16, #tpu.memory_space<vmem>>, %arg8: memref<32x192xbf16, #tpu.memory_space<vmem>>) attributes {dimension_semantics = [#tpu.dimension_semantics<parallel>, #tpu.dimension_semantics<arbitrary>], iteration_bounds = array<i64: 1, 2>, scalar_prefetch = 0 : i64, scratch_operands = 1 : i64, tpu.core_type = #tpu.core_type<tc>, window_params = [{transform_indices = @transform_0, window_bounds = array<i64: 32, 192>}, {transform_indices = @transform_1, window_bounds = array<i64: 192, 512>}, {transform_indices = @transform_2, window_bounds = array<i64: 1, 512>}, {pipeline_mode = #tpu.pipeline_mode<synchronous>, transform_indices = @transform_3, window_bounds = array<i64: 1, 192>}, {pipeline_mode = #tpu.pipeline_mode<synchronous>, transform_indices = @transform_4, window_bounds = array<i64: 1, 192>}, {transform_indices = @transform_5, window_bounds = array<i64: 32, 512>}]} {
    %c0_i32 = arith.constant 0 : i32
    %0 = arith.cmpi eq, %arg1, %c0_i32 : i32
    %1 = arith.extui %0 : i1 to i32
    %c0_i32_0 = arith.constant 0 : i32
    %2 = arith.cmpi ne, %1, %c0_i32_0 : i32
    scf.if %2 {
      %c0_8 = arith.constant 0 : index
      %c0_9 = arith.constant 0 : index
      %11 = vector.load %arg2[%c0_8, %c0_9] : memref<32x192xbf16, #tpu.memory_space<vmem>>, vector<32x192xbf16>
      %12 = arith.extf %11 : vector<32x192xbf16> to vector<32x192xf32>
      %cst_10 = arith.constant dense<0.000000e+00> : vector<32xf32>
      %13 = vector.multi_reduction <add>, %12, %cst_10 [1] : vector<32x192xf32> to vector<32xf32>
      %14 = vector.shape_cast %13 : vector<32xf32> to vector<32x1xf32>
      %cst_11 = arith.constant 1.920000e+02 : f32
      %15 = vector.broadcast %cst_11 : f32 to vector<32x1xf32>
      %16 = arith.divf %14, %15 : vector<32x1xf32>
      %17 = vector.broadcast %16 : vector<32x1xf32> to vector<32x192xf32>
      %18 = arith.subf %12, %17 : vector<32x192xf32>
      %19 = arith.mulf %18, %18 : vector<32x192xf32>
      %cst_12 = arith.constant dense<0.000000e+00> : vector<32xf32>
      %20 = vector.multi_reduction <add>, %19, %cst_12 [1] : vector<32x192xf32> to vector<32xf32>
      %21 = vector.shape_cast %20 : vector<32xf32> to vector<32x1xf32>
      %cst_13 = arith.constant 1.920000e+02 : f32
      %22 = vector.broadcast %cst_13 : f32 to vector<32x1xf32>
      %23 = arith.divf %21, %22 : vector<32x1xf32>
      %24 = vector.broadcast %16 : vector<32x1xf32> to vector<32x192xf32>
      %25 = arith.subf %12, %24 : vector<32x192xf32>
      %cst_14 = arith.constant 9.99999974E-6 : f32
      %26 = vector.broadcast %cst_14 : f32 to vector<32x1xf32>
      %27 = arith.addf %23, %26 : vector<32x1xf32>
      %28 = math.rsqrt %27 : vector<32x1xf32>
      %29 = vector.broadcast %28 : vector<32x1xf32> to vector<32x192xf32>
      %30 = arith.mulf %25, %29 : vector<32x192xf32>
      %c0_15 = arith.constant 0 : index
      %c0_16 = arith.constant 0 : index
      %31 = vector.load %arg5[%c0_15, %c0_16] : memref<1x192xf32, #tpu.memory_space<vmem>>, vector<1x192xf32>
      %32 = vector.broadcast %31 : vector<1x192xf32> to vector<32x192xf32>
      %33 = arith.mulf %30, %32 : vector<32x192xf32>
      %c0_17 = arith.constant 0 : index
      %c0_18 = arith.constant 0 : index
      %34 = vector.load %arg6[%c0_17, %c0_18] : memref<1x192xf32, #tpu.memory_space<vmem>>, vector<1x192xf32>
      %35 = vector.broadcast %34 : vector<1x192xf32> to vector<32x192xf32>
      %36 = arith.addf %33, %35 : vector<32x192xf32>
      %37 = arith.truncf %36 : vector<32x192xf32> to vector<32x192xbf16>
      %c0_19 = arith.constant 0 : index
      %c0_20 = arith.constant 0 : index
      %38 = vector.load %arg8[%c0_19, %c0_20] : memref<32x192xbf16, #tpu.memory_space<vmem>>, vector<32x192xbf16>
      tpu.vector_store %arg8[%c0_19, %c0_20], %37 {strides = array<i32>} : memref<32x192xbf16, #tpu.memory_space<vmem>>, vector<32x192xbf16>,
    } else {
    }
    %c0 = arith.constant 0 : index
    %c0_1 = arith.constant 0 : index
    %3 = vector.load %arg8[%c0, %c0_1] : memref<32x192xbf16, #tpu.memory_space<vmem>>, vector<32x192xbf16>
    %c0_2 = arith.constant 0 : index
    %c0_3 = arith.constant 0 : index
    %4 = vector.load %arg3[%c0_2, %c0_3] : memref<192x512xbf16, #tpu.memory_space<vmem>>, vector<192x512xbf16>
    %cst = arith.constant dense<0.000000e+00> : vector<32x512xf32>
    %5 = tpu.matmul %3, %4, %cst {dimension_numbers = #tpu.dot_dimension_numbers<[1], [0], [0], [1], [0, 0, 1, 1], [], []>} : vector<32x192xbf16>, vector<192x512xbf16>, vector<32x512xf32> -> vector<32x512xf32>
    %c0_4 = arith.constant 0 : index
    %c0_5 = arith.constant 0 : index
    %6 = vector.load %arg4[%c0_4, %c0_5] : memref<1x512xf32, #tpu.memory_space<vmem>>, vector<1x512xf32>
    %7 = vector.broadcast %6 : vector<1x512xf32> to vector<32x512xf32>
    %8 = arith.addf %5, %7 : vector<32x512xf32>
    %9 = arith.truncf %8 : vector<32x512xf32> to vector<32x512xbf16>
    %c0_6 = arith.constant 0 : index
    %c0_7 = arith.constant 0 : index
    %10 = vector.load %arg7[%c0_6, %c0_7] : memref<32x512xbf16, #tpu.memory_space<vmem>>, vector<32x512xbf16>
    tpu.vector_store %arg7[%c0_6, %c0_7], %9 {strides = array<i32>} : memref<32x512xbf16, #tpu.memory_space<vmem>>, vector<32x512xbf16>,
    return
  }
  func.func @transform_0(%arg0: i32, %arg1: i32) -> (i32, i32) {
    %c0_i32 = arith.constant 0 : i32
    %c0_i32_0 = arith.constant 0 : i32
    return %arg0, %c0_i32 : i32, i32
  }
  func.func @transform_1(%arg0: i32, %arg1: i32) -> (i32, i32) {
    %c0_i32 = arith.constant 0 : i32
    %c0_i32_0 = arith.constant 0 : i32
    return %c0_i32, %arg1 : i32, i32
  }
  func.func @transform_2(%arg0: i32, %arg1: i32) -> (i32, i32) {
    %c0_i32 = arith.constant 0 : i32
    %c0_i32_0 = arith.constant 0 : i32
    return %c0_i32, %arg1 : i32, i32
  }
  func.func @transform_3(%arg0: i32, %arg1: i32) -> (i32, i32) {
    %c0_i32 = arith.constant 0 : i32
    %c0_i32_0 = arith.constant 0 : i32
    %c0_i32_1 = arith.constant 0 : i32
    return %c0_i32, %c0_i32_0 : i32, i32
  }
  func.func @transform_4(%arg0: i32, %arg1: i32) -> (i32, i32) {
    %c0_i32 = arith.constant 0 : i32
    %c0_i32_0 = arith.constant 0 : i32
    %c0_i32_1 = arith.constant 0 : i32
    return %c0_i32, %c0_i32_0 : i32, i32
  }
  func.func @transform_5(%arg0: i32, %arg1: i32) -> (i32, i32) {
    %c0_i32 = arith.constant 0 : i32
    return %arg0, %arg1 : i32, i32
  }
}

module attributes {stable_mosaic.version = 11 : i64} {
  func.func @_causal_attn_kernel(%arg0: i32, %arg1: memref<1x16x576xbf16, #tpu.memory_space<vmem>>, %arg2: memref<1x16x192xbf16, #tpu.memory_space<vmem>>) attributes {dimension_semantics = [#tpu.dimension_semantics<parallel>], iteration_bounds = array<i64: 2>, scalar_prefetch = 0 : i64, scratch_operands = 0 : i64, tpu.core_type = #tpu.core_type<tc>, window_params = [{transform_indices = @transform_0, window_bounds = array<i64: 1, 16, 576>}, {transform_indices = @transform_1, window_bounds = array<i64: 1, 16, 192>}]} {
    %c0 = arith.constant 0 : index
    %c0_0 = arith.constant 0 : index
    %c0_1 = arith.constant 0 : index
    %0 = vector.load %arg1[%c0, %c0_0, %c0_1] : memref<1x16x576xbf16, #tpu.memory_space<vmem>>, vector<1x16x576xbf16>
    %1 = vector.shape_cast %0 : vector<1x16x576xbf16> to vector<16x576xbf16>
    %2 = vector.extract_strided_slice %1 {offsets = [0, 0], sizes = [16, 192], strides = [1, 1]} : vector<16x576xbf16> to vector<16x192xbf16>
    %3 = vector.shape_cast %2 : vector<16x192xbf16> to vector<16x3x64xbf16>
    %4 = tpu.transpose %3, [1, 0, 2] : vector<16x3x64xbf16> -> vector<3x16x64xbf16>
    %5 = vector.extract_strided_slice %1 {offsets = [0, 192], sizes = [16, 192], strides = [1, 1]} : vector<16x576xbf16> to vector<16x192xbf16>
    %6 = vector.shape_cast %5 : vector<16x192xbf16> to vector<16x3x64xbf16>
    %7 = tpu.transpose %6, [1, 0, 2] : vector<16x3x64xbf16> -> vector<3x16x64xbf16>
    %8 = vector.extract_strided_slice %1 {offsets = [0, 384], sizes = [16, 192], strides = [1, 1]} : vector<16x576xbf16> to vector<16x192xbf16>
    %9 = vector.shape_cast %8 : vector<16x192xbf16> to vector<16x3x64xbf16>
    %10 = tpu.transpose %9, [1, 0, 2] : vector<16x3x64xbf16> -> vector<3x16x64xbf16>
    %cst = arith.constant dense<0.000000e+00> : vector<3x16x16xf32>
    %11 = tpu.matmul %4, %7, %cst {dimension_numbers = #tpu.dot_dimension_numbers<[2], [2], [1], [1], [0, 0, 0, 1, 1, 1], [0], [0]>} : vector<3x16x64xbf16>, vector<3x16x64xbf16>, vector<3x16x16xf32> -> vector<3x16x16xf32>
    %12 = tpu.iota {dimensions = array<i32: 0>} : vector<16x16xi32>
    %13 = tpu.iota {dimensions = array<i32: 1>} : vector<16x16xi32>
    %14 = arith.cmpi sle, %13, %12 : vector<16x16xi32>
    %15 = vector.shape_cast %14 : vector<16x16xi1> to vector<1x16x16xi1>
    %cst_2 = arith.constant -1.000000e+30 : f32
    %16 = vector.shape_cast %15 : vector<1x16x16xi1> to vector<1x16x16xi1>
    %17 = vector.broadcast %16 : vector<1x16x16xi1> to vector<3x16x16xi1>
    %18 = vector.broadcast %cst_2 : f32 to vector<3x16x16xf32>
    %19 = arith.select %17, %11, %18 : vector<3x16x16xi1>, vector<3x16x16xf32>
    %cst_3 = arith.constant dense<0xFF800000> : vector<3x16xf32>
    %20 = vector.multi_reduction <maximumf>, %19, %cst_3 [2] : vector<3x16x16xf32> to vector<3x16xf32>
    %21 = vector.shape_cast %20 : vector<3x16xf32> to vector<3x16x1xf32>
    %22 = vector.broadcast %21 : vector<3x16x1xf32> to vector<3x16x16xf32>
    %23 = arith.subf %19, %22 : vector<3x16x16xf32>
    %24 = math.exp %23 : vector<3x16x16xf32>
    %cst_4 = arith.constant dense<0.000000e+00> : vector<3x16xf32>
    %25 = vector.multi_reduction <add>, %24, %cst_4 [2] : vector<3x16x16xf32> to vector<3x16xf32>
    %26 = vector.shape_cast %25 : vector<3x16xf32> to vector<3x16x1xf32>
    %27 = tpu.reciprocal %26 {approx = true} : vector<3x16x1xf32> -> vector<3x16x1xf32>
    %28 = vector.broadcast %27 : vector<3x16x1xf32> to vector<3x16x16xf32>
    %29 = arith.mulf %24, %28 : vector<3x16x16xf32>
    %30 = arith.truncf %29 : vector<3x16x16xf32> to vector<3x16x16xbf16>
    %cst_5 = arith.constant dense<0.000000e+00> : vector<3x16x64xf32>
    %31 = tpu.matmul %30, %10, %cst_5 {dimension_numbers = #tpu.dot_dimension_numbers<[2], [1], [1], [2], [0, 0, 0, 1, 1, 2], [0], [0]>} : vector<3x16x16xbf16>, vector<3x16x64xbf16>, vector<3x16x64xf32> -> vector<3x16x64xf32>
    %32 = tpu.transpose %31, [1, 0, 2] : vector<3x16x64xf32> -> vector<16x3x64xf32>
    %33 = vector.shape_cast %32 : vector<16x3x64xf32> to vector<16x192xf32>
    %34 = arith.truncf %33 : vector<16x192xf32> to vector<16x192xbf16>
    %c0_6 = arith.constant 0 : index
    %c0_7 = arith.constant 0 : index
    %c0_8 = arith.constant 0 : index
    %35 = vector.load %arg2[%c0_6, %c0_7, %c0_8] : memref<1x16x192xbf16, #tpu.memory_space<vmem>>, vector<1x16x192xbf16>
    %36 = vector.shape_cast %35 : vector<1x16x192xbf16> to vector<16x192xbf16>
    %37 = vector.shape_cast %34 : vector<16x192xbf16> to vector<1x16x192xbf16>
    tpu.vector_store %arg2[%c0_6, %c0_7, %c0_8], %37 {strides = array<i32>} : memref<1x16x192xbf16, #tpu.memory_space<vmem>>, vector<1x16x192xbf16>,
    return
  }
  func.func @transform_0(%arg0: i32) -> (i32, i32, i32) {
    %c0_i32 = arith.constant 0 : i32
    %c0_i32_0 = arith.constant 0 : i32
    %c0_i32_1 = arith.constant 0 : i32
    return %arg0, %c0_i32, %c0_i32_0 : i32, i32, i32
  }
  func.func @transform_1(%arg0: i32) -> (i32, i32, i32) {
    %c0_i32 = arith.constant 0 : i32
    %c0_i32_0 = arith.constant 0 : i32
    %c0_i32_1 = arith.constant 0 : i32
    return %arg0, %c0_i32, %c0_i32_0 : i32, i32, i32
  }
}

module attributes {stable_mosaic.version = 11 : i64} {
  func.func @_fused_linear_kernel(%arg0: i32, %arg1: i32, %arg2: memref<32x192xbf16, #tpu.memory_space<vmem>>, %arg3: memref<192x192xbf16, #tpu.memory_space<vmem>>, %arg4: memref<1x192xf32, #tpu.memory_space<vmem>>, %arg5: memref<32x192xbf16, #tpu.memory_space<vmem>>, %arg6: memref<32x192xbf16, #tpu.memory_space<vmem>>) attributes {dimension_semantics = [#tpu.dimension_semantics<parallel>, #tpu.dimension_semantics<parallel>], iteration_bounds = array<i64: 1, 1>, scalar_prefetch = 0 : i64, scratch_operands = 0 : i64, tpu.core_type = #tpu.core_type<tc>, window_params = [{transform_indices = @transform_0, window_bounds = array<i64: 32, 192>}, {transform_indices = @transform_1, window_bounds = array<i64: 192, 192>}, {transform_indices = @transform_2, window_bounds = array<i64: 1, 192>}, {transform_indices = @transform_3, window_bounds = array<i64: 32, 192>}, {transform_indices = @transform_4, window_bounds = array<i64: 32, 192>}]} {
    %c0 = arith.constant 0 : index
    %c0_0 = arith.constant 0 : index
    %0 = vector.load %arg2[%c0, %c0_0] : memref<32x192xbf16, #tpu.memory_space<vmem>>, vector<32x192xbf16>
    %c0_1 = arith.constant 0 : index
    %c0_2 = arith.constant 0 : index
    %1 = vector.load %arg3[%c0_1, %c0_2] : memref<192x192xbf16, #tpu.memory_space<vmem>>, vector<192x192xbf16>
    %cst = arith.constant dense<0.000000e+00> : vector<32x192xf32>
    %2 = tpu.matmul %0, %1, %cst {dimension_numbers = #tpu.dot_dimension_numbers<[1], [0], [0], [1], [0, 0, 1, 1], [], []>} : vector<32x192xbf16>, vector<192x192xbf16>, vector<32x192xf32> -> vector<32x192xf32>
    %c0_3 = arith.constant 0 : index
    %c0_4 = arith.constant 0 : index
    %3 = vector.load %arg4[%c0_3, %c0_4] : memref<1x192xf32, #tpu.memory_space<vmem>>, vector<1x192xf32>
    %4 = vector.broadcast %3 : vector<1x192xf32> to vector<32x192xf32>
    %5 = arith.addf %2, %4 : vector<32x192xf32>
    %c0_5 = arith.constant 0 : index
    %c0_6 = arith.constant 0 : index
    %6 = vector.load %arg5[%c0_5, %c0_6] : memref<32x192xbf16, #tpu.memory_space<vmem>>, vector<32x192xbf16>
    %7 = arith.extf %6 : vector<32x192xbf16> to vector<32x192xf32>
    %8 = arith.addf %5, %7 : vector<32x192xf32>
    %9 = arith.truncf %8 : vector<32x192xf32> to vector<32x192xbf16>
    %c0_7 = arith.constant 0 : index
    %c0_8 = arith.constant 0 : index
    %10 = vector.load %arg6[%c0_7, %c0_8] : memref<32x192xbf16, #tpu.memory_space<vmem>>, vector<32x192xbf16>
    tpu.vector_store %arg6[%c0_7, %c0_8], %9 {strides = array<i32>} : memref<32x192xbf16, #tpu.memory_space<vmem>>, vector<32x192xbf16>,
    return
  }
  func.func @transform_0(%arg0: i32, %arg1: i32) -> (i32, i32) {
    %c0_i32 = arith.constant 0 : i32
    %c0_i32_0 = arith.constant 0 : i32
    return %arg0, %c0_i32 : i32, i32
  }
  func.func @transform_1(%arg0: i32, %arg1: i32) -> (i32, i32) {
    %c0_i32 = arith.constant 0 : i32
    %c0_i32_0 = arith.constant 0 : i32
    return %c0_i32, %arg1 : i32, i32
  }
  func.func @transform_2(%arg0: i32, %arg1: i32) -> (i32, i32) {
    %c0_i32 = arith.constant 0 : i32
    %c0_i32_0 = arith.constant 0 : i32
    return %c0_i32, %arg1 : i32, i32
  }
  func.func @transform_3(%arg0: i32, %arg1: i32) -> (i32, i32) {
    %c0_i32 = arith.constant 0 : i32
    return %arg0, %arg1 : i32, i32
  }
  func.func @transform_4(%arg0: i32, %arg1: i32) -> (i32, i32) {
    %c0_i32 = arith.constant 0 : i32
    return %arg0, %arg1 : i32, i32
  }
}

module attributes {stable_mosaic.version = 11 : i64} {
  func.func @_fused_linear_kernel(%arg0: i32, %arg1: i32, %arg2: memref<32x192xbf16, #tpu.memory_space<vmem>>, %arg3: memref<192x512xbf16, #tpu.memory_space<vmem>>, %arg4: memref<1x512xf32, #tpu.memory_space<vmem>>, %arg5: memref<1x192xf32, #tpu.memory_space<vmem>>, %arg6: memref<1x192xf32, #tpu.memory_space<vmem>>, %arg7: memref<32x512xbf16, #tpu.memory_space<vmem>>, %arg8: memref<32x192xbf16, #tpu.memory_space<vmem>>) attributes {dimension_semantics = [#tpu.dimension_semantics<parallel>, #tpu.dimension_semantics<arbitrary>], iteration_bounds = array<i64: 1, 2>, scalar_prefetch = 0 : i64, scratch_operands = 1 : i64, tpu.core_type = #tpu.core_type<tc>, window_params = [{transform_indices = @transform_0, window_bounds = array<i64: 32, 192>}, {transform_indices = @transform_1, window_bounds = array<i64: 192, 512>}, {transform_indices = @transform_2, window_bounds = array<i64: 1, 512>}, {pipeline_mode = #tpu.pipeline_mode<synchronous>, transform_indices = @transform_3, window_bounds = array<i64: 1, 192>}, {pipeline_mode = #tpu.pipeline_mode<synchronous>, transform_indices = @transform_4, window_bounds = array<i64: 1, 192>}, {transform_indices = @transform_5, window_bounds = array<i64: 32, 512>}]} {
    %c0_i32 = arith.constant 0 : i32
    %0 = arith.cmpi eq, %arg1, %c0_i32 : i32
    %1 = arith.extui %0 : i1 to i32
    %c0_i32_0 = arith.constant 0 : i32
    %2 = arith.cmpi ne, %1, %c0_i32_0 : i32
    scf.if %2 {
      %c0_12 = arith.constant 0 : index
      %c0_13 = arith.constant 0 : index
      %24 = vector.load %arg2[%c0_12, %c0_13] : memref<32x192xbf16, #tpu.memory_space<vmem>>, vector<32x192xbf16>
      %25 = arith.extf %24 : vector<32x192xbf16> to vector<32x192xf32>
      %cst_14 = arith.constant dense<0.000000e+00> : vector<32xf32>
      %26 = vector.multi_reduction <add>, %25, %cst_14 [1] : vector<32x192xf32> to vector<32xf32>
      %27 = vector.shape_cast %26 : vector<32xf32> to vector<32x1xf32>
      %cst_15 = arith.constant 1.920000e+02 : f32
      %28 = vector.broadcast %cst_15 : f32 to vector<32x1xf32>
      %29 = arith.divf %27, %28 : vector<32x1xf32>
      %30 = vector.broadcast %29 : vector<32x1xf32> to vector<32x192xf32>
      %31 = arith.subf %25, %30 : vector<32x192xf32>
      %32 = arith.mulf %31, %31 : vector<32x192xf32>
      %cst_16 = arith.constant dense<0.000000e+00> : vector<32xf32>
      %33 = vector.multi_reduction <add>, %32, %cst_16 [1] : vector<32x192xf32> to vector<32xf32>
      %34 = vector.shape_cast %33 : vector<32xf32> to vector<32x1xf32>
      %cst_17 = arith.constant 1.920000e+02 : f32
      %35 = vector.broadcast %cst_17 : f32 to vector<32x1xf32>
      %36 = arith.divf %34, %35 : vector<32x1xf32>
      %37 = vector.broadcast %29 : vector<32x1xf32> to vector<32x192xf32>
      %38 = arith.subf %25, %37 : vector<32x192xf32>
      %cst_18 = arith.constant 9.99999974E-6 : f32
      %39 = vector.broadcast %cst_18 : f32 to vector<32x1xf32>
      %40 = arith.addf %36, %39 : vector<32x1xf32>
      %41 = math.rsqrt %40 : vector<32x1xf32>
      %42 = vector.broadcast %41 : vector<32x1xf32> to vector<32x192xf32>
      %43 = arith.mulf %38, %42 : vector<32x192xf32>
      %c0_19 = arith.constant 0 : index
      %c0_20 = arith.constant 0 : index
      %44 = vector.load %arg5[%c0_19, %c0_20] : memref<1x192xf32, #tpu.memory_space<vmem>>, vector<1x192xf32>
      %45 = vector.broadcast %44 : vector<1x192xf32> to vector<32x192xf32>
      %46 = arith.mulf %43, %45 : vector<32x192xf32>
      %c0_21 = arith.constant 0 : index
      %c0_22 = arith.constant 0 : index
      %47 = vector.load %arg6[%c0_21, %c0_22] : memref<1x192xf32, #tpu.memory_space<vmem>>, vector<1x192xf32>
      %48 = vector.broadcast %47 : vector<1x192xf32> to vector<32x192xf32>
      %49 = arith.addf %46, %48 : vector<32x192xf32>
      %50 = arith.truncf %49 : vector<32x192xf32> to vector<32x192xbf16>
      %c0_23 = arith.constant 0 : index
      %c0_24 = arith.constant 0 : index
      %51 = vector.load %arg8[%c0_23, %c0_24] : memref<32x192xbf16, #tpu.memory_space<vmem>>, vector<32x192xbf16>
      tpu.vector_store %arg8[%c0_23, %c0_24], %50 {strides = array<i32>} : memref<32x192xbf16, #tpu.memory_space<vmem>>, vector<32x192xbf16>,
    } else {
    }
    %c0 = arith.constant 0 : index
    %c0_1 = arith.constant 0 : index
    %3 = vector.load %arg8[%c0, %c0_1] : memref<32x192xbf16, #tpu.memory_space<vmem>>, vector<32x192xbf16>
    %c0_2 = arith.constant 0 : index
    %c0_3 = arith.constant 0 : index
    %4 = vector.load %arg3[%c0_2, %c0_3] : memref<192x512xbf16, #tpu.memory_space<vmem>>, vector<192x512xbf16>
    %cst = arith.constant dense<0.000000e+00> : vector<32x512xf32>
    %5 = tpu.matmul %3, %4, %cst {dimension_numbers = #tpu.dot_dimension_numbers<[1], [0], [0], [1], [0, 0, 1, 1], [], []>} : vector<32x192xbf16>, vector<192x512xbf16>, vector<32x512xf32> -> vector<32x512xf32>
    %c0_4 = arith.constant 0 : index
    %c0_5 = arith.constant 0 : index
    %6 = vector.load %arg4[%c0_4, %c0_5] : memref<1x512xf32, #tpu.memory_space<vmem>>, vector<1x512xf32>
    %7 = vector.broadcast %6 : vector<1x512xf32> to vector<32x512xf32>
    %8 = arith.addf %5, %7 : vector<32x512xf32>
    %9 = arith.mulf %8, %8 : vector<32x512xf32>
    %10 = arith.mulf %8, %9 : vector<32x512xf32>
    %cst_6 = arith.constant 4.471500e-02 : f32
    %11 = vector.broadcast %cst_6 : f32 to vector<32x512xf32>
    %12 = arith.mulf %11, %10 : vector<32x512xf32>
    %13 = arith.addf %8, %12 : vector<32x512xf32>
    %cst_7 = arith.constant 0.797884583 : f32
    %14 = vector.broadcast %cst_7 : f32 to vector<32x512xf32>
    %15 = arith.mulf %14, %13 : vector<32x512xf32>
    %16 = math.tanh %15 : vector<32x512xf32>
    %cst_8 = arith.constant 1.000000e+00 : f32
    %17 = vector.broadcast %cst_8 : f32 to vector<32x512xf32>
    %18 = arith.addf %17, %16 : vector<32x512xf32>
    %cst_9 = arith.constant 5.000000e-01 : f32
    %19 = vector.broadcast %cst_9 : f32 to vector<32x512xf32>
    %20 = arith.mulf %19, %18 : vector<32x512xf32>
    %21 = arith.mulf %8, %20 : vector<32x512xf32>
    %22 = arith.truncf %21 : vector<32x512xf32> to vector<32x512xbf16>
    %c0_10 = arith.constant 0 : index
    %c0_11 = arith.constant 0 : index
    %23 = vector.load %arg7[%c0_10, %c0_11] : memref<32x512xbf16, #tpu.memory_space<vmem>>, vector<32x512xbf16>
    tpu.vector_store %arg7[%c0_10, %c0_11], %22 {strides = array<i32>} : memref<32x512xbf16, #tpu.memory_space<vmem>>, vector<32x512xbf16>,
    return
  }
  func.func @transform_0(%arg0: i32, %arg1: i32) -> (i32, i32) {
    %c0_i32 = arith.constant 0 : i32
    %c0_i32_0 = arith.constant 0 : i32
    return %arg0, %c0_i32 : i32, i32
  }
  func.func @transform_1(%arg0: i32, %arg1: i32) -> (i32, i32) {
    %c0_i32 = arith.constant 0 : i32
    %c0_i32_0 = arith.constant 0 : i32
    return %c0_i32, %arg1 : i32, i32
  }
  func.func @transform_2(%arg0: i32, %arg1: i32) -> (i32, i32) {
    %c0_i32 = arith.constant 0 : i32
    %c0_i32_0 = arith.constant 0 : i32
    return %c0_i32, %arg1 : i32, i32
  }
  func.func @transform_3(%arg0: i32, %arg1: i32) -> (i32, i32) {
    %c0_i32 = arith.constant 0 : i32
    %c0_i32_0 = arith.constant 0 : i32
    %c0_i32_1 = arith.constant 0 : i32
    return %c0_i32, %c0_i32_0 : i32, i32
  }
  func.func @transform_4(%arg0: i32, %arg1: i32) -> (i32, i32) {
    %c0_i32 = arith.constant 0 : i32
    %c0_i32_0 = arith.constant 0 : i32
    %c0_i32_1 = arith.constant 0 : i32
    return %c0_i32, %c0_i32_0 : i32, i32
  }
  func.func @transform_5(%arg0: i32, %arg1: i32) -> (i32, i32) {
    %c0_i32 = arith.constant 0 : i32
    return %arg0, %arg1 : i32, i32
  }
}

module attributes {stable_mosaic.version = 11 : i64} {
  func.func @_fused_linear_kernel(%arg0: i32, %arg1: i32, %arg2: memref<32x768xbf16, #tpu.memory_space<vmem>>, %arg3: memref<768x192xbf16, #tpu.memory_space<vmem>>, %arg4: memref<1x192xf32, #tpu.memory_space<vmem>>, %arg5: memref<32x192xbf16, #tpu.memory_space<vmem>>, %arg6: memref<32x192xbf16, #tpu.memory_space<vmem>>) attributes {dimension_semantics = [#tpu.dimension_semantics<parallel>, #tpu.dimension_semantics<parallel>], iteration_bounds = array<i64: 1, 1>, scalar_prefetch = 0 : i64, scratch_operands = 0 : i64, tpu.core_type = #tpu.core_type<tc>, window_params = [{transform_indices = @transform_0, window_bounds = array<i64: 32, 768>}, {transform_indices = @transform_1, window_bounds = array<i64: 768, 192>}, {transform_indices = @transform_2, window_bounds = array<i64: 1, 192>}, {transform_indices = @transform_3, window_bounds = array<i64: 32, 192>}, {transform_indices = @transform_4, window_bounds = array<i64: 32, 192>}]} {
    %c0 = arith.constant 0 : index
    %c0_0 = arith.constant 0 : index
    %0 = vector.load %arg2[%c0, %c0_0] : memref<32x768xbf16, #tpu.memory_space<vmem>>, vector<32x768xbf16>
    %c0_1 = arith.constant 0 : index
    %c0_2 = arith.constant 0 : index
    %1 = vector.load %arg3[%c0_1, %c0_2] : memref<768x192xbf16, #tpu.memory_space<vmem>>, vector<768x192xbf16>
    %cst = arith.constant dense<0.000000e+00> : vector<32x192xf32>
    %2 = tpu.matmul %0, %1, %cst {dimension_numbers = #tpu.dot_dimension_numbers<[1], [0], [0], [1], [0, 0, 1, 1], [], []>} : vector<32x768xbf16>, vector<768x192xbf16>, vector<32x192xf32> -> vector<32x192xf32>
    %c0_3 = arith.constant 0 : index
    %c0_4 = arith.constant 0 : index
    %3 = vector.load %arg4[%c0_3, %c0_4] : memref<1x192xf32, #tpu.memory_space<vmem>>, vector<1x192xf32>
    %4 = vector.broadcast %3 : vector<1x192xf32> to vector<32x192xf32>
    %5 = arith.addf %2, %4 : vector<32x192xf32>
    %c0_5 = arith.constant 0 : index
    %c0_6 = arith.constant 0 : index
    %6 = vector.load %arg5[%c0_5, %c0_6] : memref<32x192xbf16, #tpu.memory_space<vmem>>, vector<32x192xbf16>
    %7 = arith.extf %6 : vector<32x192xbf16> to vector<32x192xf32>
    %8 = arith.addf %5, %7 : vector<32x192xf32>
    %9 = arith.truncf %8 : vector<32x192xf32> to vector<32x192xbf16>
    %c0_7 = arith.constant 0 : index
    %c0_8 = arith.constant 0 : index
    %10 = vector.load %arg6[%c0_7, %c0_8] : memref<32x192xbf16, #tpu.memory_space<vmem>>, vector<32x192xbf16>
    tpu.vector_store %arg6[%c0_7, %c0_8], %9 {strides = array<i32>} : memref<32x192xbf16, #tpu.memory_space<vmem>>, vector<32x192xbf16>,
    return
  }
  func.func @transform_0(%arg0: i32, %arg1: i32) -> (i32, i32) {
    %c0_i32 = arith.constant 0 : i32
    %c0_i32_0 = arith.constant 0 : i32
    return %arg0, %c0_i32 : i32, i32
  }
  func.func @transform_1(%arg0: i32, %arg1: i32) -> (i32, i32) {
    %c0_i32 = arith.constant 0 : i32
    %c0_i32_0 = arith.constant 0 : i32
    return %c0_i32, %arg1 : i32, i32
  }
  func.func @transform_2(%arg0: i32, %arg1: i32) -> (i32, i32) {
    %c0_i32 = arith.constant 0 : i32
    %c0_i32_0 = arith.constant 0 : i32
    return %c0_i32, %arg1 : i32, i32
  }
  func.func @transform_3(%arg0: i32, %arg1: i32) -> (i32, i32) {
    %c0_i32 = arith.constant 0 : i32
    return %arg0, %arg1 : i32, i32
  }
  func.func @transform_4(%arg0: i32, %arg1: i32) -> (i32, i32) {
    %c0_i32 = arith.constant 0 : i32
    return %arg0, %arg1 : i32, i32
  }
}

module attributes {stable_mosaic.version = 11 : i64} {
  func.func @_fused_linear_kernel(%arg0: i32, %arg1: i32, %arg2: memref<32x192xbf16, #tpu.memory_space<vmem>>, %arg3: memref<192x128xbf16, #tpu.memory_space<vmem>>, %arg4: memref<1x128xf32, #tpu.memory_space<vmem>>, %arg5: memref<1x192xf32, #tpu.memory_space<vmem>>, %arg6: memref<1x192xf32, #tpu.memory_space<vmem>>, %arg7: memref<32x128xf32, #tpu.memory_space<vmem>>) attributes {dimension_semantics = [#tpu.dimension_semantics<parallel>, #tpu.dimension_semantics<parallel>], iteration_bounds = array<i64: 1, 1>, scalar_prefetch = 0 : i64, scratch_operands = 0 : i64, tpu.core_type = #tpu.core_type<tc>, window_params = [{transform_indices = @transform_0, window_bounds = array<i64: 32, 192>}, {transform_indices = @transform_1, window_bounds = array<i64: 192, 128>}, {transform_indices = @transform_2, window_bounds = array<i64: 1, 128>}, {pipeline_mode = #tpu.pipeline_mode<synchronous>, transform_indices = @transform_3, window_bounds = array<i64: 1, 192>}, {pipeline_mode = #tpu.pipeline_mode<synchronous>, transform_indices = @transform_4, window_bounds = array<i64: 1, 192>}, {transform_indices = @transform_5, window_bounds = array<i64: 32, 128>}]} {
    %c0 = arith.constant 0 : index
    %c0_0 = arith.constant 0 : index
    %0 = vector.load %arg2[%c0, %c0_0] : memref<32x192xbf16, #tpu.memory_space<vmem>>, vector<32x192xbf16>
    %1 = arith.extf %0 : vector<32x192xbf16> to vector<32x192xf32>
    %cst = arith.constant dense<0.000000e+00> : vector<32xf32>
    %2 = vector.multi_reduction <add>, %1, %cst [1] : vector<32x192xf32> to vector<32xf32>
    %3 = vector.shape_cast %2 : vector<32xf32> to vector<32x1xf32>
    %cst_1 = arith.constant 1.920000e+02 : f32
    %4 = vector.broadcast %cst_1 : f32 to vector<32x1xf32>
    %5 = arith.divf %3, %4 : vector<32x1xf32>
    %6 = vector.broadcast %5 : vector<32x1xf32> to vector<32x192xf32>
    %7 = arith.subf %1, %6 : vector<32x192xf32>
    %8 = arith.mulf %7, %7 : vector<32x192xf32>
    %cst_2 = arith.constant dense<0.000000e+00> : vector<32xf32>
    %9 = vector.multi_reduction <add>, %8, %cst_2 [1] : vector<32x192xf32> to vector<32xf32>
    %10 = vector.shape_cast %9 : vector<32xf32> to vector<32x1xf32>
    %cst_3 = arith.constant 1.920000e+02 : f32
    %11 = vector.broadcast %cst_3 : f32 to vector<32x1xf32>
    %12 = arith.divf %10, %11 : vector<32x1xf32>
    %13 = vector.broadcast %5 : vector<32x1xf32> to vector<32x192xf32>
    %14 = arith.subf %1, %13 : vector<32x192xf32>
    %cst_4 = arith.constant 9.99999974E-6 : f32
    %15 = vector.broadcast %cst_4 : f32 to vector<32x1xf32>
    %16 = arith.addf %12, %15 : vector<32x1xf32>
    %17 = math.rsqrt %16 : vector<32x1xf32>
    %18 = vector.broadcast %17 : vector<32x1xf32> to vector<32x192xf32>
    %19 = arith.mulf %14, %18 : vector<32x192xf32>
    %c0_5 = arith.constant 0 : index
    %c0_6 = arith.constant 0 : index
    %20 = vector.load %arg5[%c0_5, %c0_6] : memref<1x192xf32, #tpu.memory_space<vmem>>, vector<1x192xf32>
    %21 = vector.broadcast %20 : vector<1x192xf32> to vector<32x192xf32>
    %22 = arith.mulf %19, %21 : vector<32x192xf32>
    %c0_7 = arith.constant 0 : index
    %c0_8 = arith.constant 0 : index
    %23 = vector.load %arg6[%c0_7, %c0_8] : memref<1x192xf32, #tpu.memory_space<vmem>>, vector<1x192xf32>
    %24 = vector.broadcast %23 : vector<1x192xf32> to vector<32x192xf32>
    %25 = arith.addf %22, %24 : vector<32x192xf32>
    %26 = arith.truncf %25 : vector<32x192xf32> to vector<32x192xbf16>
    %c0_9 = arith.constant 0 : index
    %c0_10 = arith.constant 0 : index
    %27 = vector.load %arg3[%c0_9, %c0_10] : memref<192x128xbf16, #tpu.memory_space<vmem>>, vector<192x128xbf16>
    %cst_11 = arith.constant dense<0.000000e+00> : vector<32x128xf32>
    %28 = tpu.matmul %26, %27, %cst_11 {dimension_numbers = #tpu.dot_dimension_numbers<[1], [0], [0], [1], [0, 0, 1, 1], [], []>} : vector<32x192xbf16>, vector<192x128xbf16>, vector<32x128xf32> -> vector<32x128xf32>
    %c0_12 = arith.constant 0 : index
    %c0_13 = arith.constant 0 : index
    %29 = vector.load %arg4[%c0_12, %c0_13] : memref<1x128xf32, #tpu.memory_space<vmem>>, vector<1x128xf32>
    %30 = vector.broadcast %29 : vector<1x128xf32> to vector<32x128xf32>
    %31 = arith.addf %28, %30 : vector<32x128xf32>
    %c0_14 = arith.constant 0 : index
    %c0_15 = arith.constant 0 : index
    %32 = vector.load %arg7[%c0_14, %c0_15] : memref<32x128xf32, #tpu.memory_space<vmem>>, vector<32x128xf32>
    tpu.vector_store %arg7[%c0_14, %c0_15], %31 {strides = array<i32>} : memref<32x128xf32, #tpu.memory_space<vmem>>, vector<32x128xf32>,
    return
  }
  func.func @transform_0(%arg0: i32, %arg1: i32) -> (i32, i32) {
    %c0_i32 = arith.constant 0 : i32
    %c0_i32_0 = arith.constant 0 : i32
    return %arg0, %c0_i32 : i32, i32
  }
  func.func @transform_1(%arg0: i32, %arg1: i32) -> (i32, i32) {
    %c0_i32 = arith.constant 0 : i32
    %c0_i32_0 = arith.constant 0 : i32
    return %c0_i32, %arg1 : i32, i32
  }
  func.func @transform_2(%arg0: i32, %arg1: i32) -> (i32, i32) {
    %c0_i32 = arith.constant 0 : i32
    %c0_i32_0 = arith.constant 0 : i32
    return %c0_i32, %arg1 : i32, i32
  }
  func.func @transform_3(%arg0: i32, %arg1: i32) -> (i32, i32) {
    %c0_i32 = arith.constant 0 : i32
    %c0_i32_0 = arith.constant 0 : i32
    %c0_i32_1 = arith.constant 0 : i32
    return %c0_i32, %c0_i32_0 : i32, i32
  }
  func.func @transform_4(%arg0: i32, %arg1: i32) -> (i32, i32) {
    %c0_i32 = arith.constant 0 : i32
    %c0_i32_0 = arith.constant 0 : i32
    %c0_i32_1 = arith.constant 0 : i32
    return %c0_i32, %c0_i32_0 : i32, i32
  }
  func.func @transform_5(%arg0: i32, %arg1: i32) -> (i32, i32) {
    %c0_i32 = arith.constant 0 : i32
    return %arg0, %arg1 : i32, i32
  }
}

</mosaic_0001>

<llo_original>
// kernel: st_llm_forward.15
$region0: #{st_llm_forward.15}
  #allocation0 [shape = 'u32[]', space=smem, size = 0x4, offset = 0x4, fixed_abs, tag = 'smem constant byte address 0x4 - core index']
  #allocation1 [shape = 'u32[144,128]{1,0:T(1,128)}', space=vmem, size = 0x12000, scoped, tag = 'internal scratch']
  %s0 = inlined_call_operand.vmem [shape: f32[32,36], index: 0, kind: input, shape index: {}]
  %s1 = inlined_call_operand.vmem [shape: bf16[36,64], index: 1, kind: input, shape index: {}]
  %s2 = inlined_call_operand.vmem [shape: f32[1,64], index: 2, kind: input, shape index: {}]
  %s3 = inlined_call_operand.vmem [shape: bf16[32,64], index: 3, kind: output, shape index: {}]
  %s4 = sld [smem:[#allocation0]]
  $region22: #{st_llm_forward.15} parent=0
    _
  %s6 = ssub.s32 1, %s4
  %s7 = scalar_select 0, %s6, %s4
  // Predicated region
  $region2: #{st_llm_forward.15} parent=0 // pred_check
    _
  $region3: #{st_llm_forward.15} parent=0 // pred_check_branch
    %9 = sbr.rel (0) target = $region5
  $region4: #{st_llm_forward.15} parent=0 // pred_region
    _
  $region5: #{st_llm_forward.15} parent=0 // pred_fallthru
    _
  // Predicated region
  $region6: #{st_llm_forward.15} parent=0 // pred_check
    _
  $region7: #{st_llm_forward.15} parent=0 // pred_check_branch
    %11 = sbr.rel (0) target = $region9
  $region8: #{st_llm_forward.15} parent=0 // pred_region
    _
  $region9: #{st_llm_forward.15} parent=0 // pred_fallthru
    _
  // Predicated region
  $region10: #{st_llm_forward.15} parent=0 // pred_check
    _
  $region11: #{st_llm_forward.15} parent=0 // pred_check_branch
    %13 = sbr.rel (0) target = $region13
  $region12: #{st_llm_forward.15} parent=0 // pred_region
    _
  $region13: #{st_llm_forward.15} parent=0 // pred_fallthru
    _
  %v15 = vld [vmem:[%s0] sm:$0xff]
  %v16 = vld [vmem:[%s0 + $0x8] sm:$0xff]
  %v17 = vld [vmem:[%s0 + $0x10] sm:$0xff]
  %v18 = vld [vmem:[%s0 + $0x18] sm:$0xff]
  %v19 = vpack.c.bf16 %v16, %v15
  %v20 = vpack.c.bf16 %v18, %v17
  %v21 = vld [vmem:[%s1] sm:$0xf]
  %v22 = vld [vmem:[%s1 + $0x4] sm:$0xf]
  %v23 = vld [vmem:[%s1 + $0x8] sm:$0xf]
  %v24 = vld [vmem:[%s1 + $0xc] sm:$0xf]
  %v25 = vld [vmem:[%s1 + $0x10] sm:$0x3]
  %v26 = vld [vmem:[%s2] sm:$0x1]
  %v28 = vlaneseq
  %v29 = vshrl.u32 %v28, 7
  %v30 = vsub.s32 0, %v29
  %v31 = vrot.slane %v26, %v30
  %v38 = vunpack.c.l.b16 %v21
  %v39 = vunpack.c.l.b16 %v22
  %v40 = vunpack.c.l.b16 %v23
  %v41 = vunpack.c.l.b16 %v24
  %v42 = vunpack.c.l.b16 %v25
  %v43 = vpack.c.b16 %v39, %v38
  %v44 = vpack.c.b16 %v41, %v40
  %v45 = vpack.c.b16 %v42, %v42
  %vm48 = vcmask 293888
  %v50 = vsel %vm48, %v19, 0
  %v53 = vsel %vm48, %v20, 0
  %vm55 = vcmask 1041408
  %v57 = vsel %vm55, %v45, 0
  %59 = vmatprep.subr.bf16.mxu0 0
  %60 = vmatpush1.bf16.msra.mxu0 0
  %61 = vmatprep.subr.bf16.mxu0 0
  %62 = vmatpush1.bf16.msra.mxu0 0
  %63 = vmatprep.subr.bf16.mxu0 0
  %64 = vmatpush1.bf16.msra.mxu0 0
  %65 = vmatprep.subr.bf16.mxu0 0
  %66 = vmatpush1.bf16.msra.mxu0 0
  %67 = vmatprep.subr.bf16.mxu0 0
  %68 = vmatpush1.bf16.msra.mxu0 0
  %69 = vmatprep.subr.bf16.mxu0 0
  %70 = vmatpush1.bf16.msra.mxu0 %v57
  %71 = vmatprep.subr.bf16.mxu0 0
  %72 = vmatpush1.bf16.msra.mxu0 %v44
  %73 = vmatprep.subr.bf16.mxu0 0
  %74 = vmatpush1.bf16.msra.mxu0 %v43
  %75 = vmatprep.subr.bf16.mxu0 0
  %76 = vmatpush2.bf16.msra.mxu0 0
  %77 = vmatprep.subr.bf16.mxu0 0
  %78 = vmatpush2.bf16.msra.mxu0 0
  %79 = vmatprep.subr.bf16.mxu0 0
  %80 = vmatpush2.bf16.msra.mxu0 0
  %81 = vmatprep.subr.bf16.mxu0 0
  %82 = vmatpush2.bf16.msra.mxu0 0
  %83 = vmatprep.subr.bf16.mxu0 0
  %84 = vmatpush2.bf16.msra.mxu0 0
  %85 = vmatprep.subr.bf16.mxu0 0
  %86 = vmatpush2.bf16.msra.mxu0 0
  %87 = vmatprep.subr.bf16.mxu0 0
  %88 = vmatpush2.bf16.msra.mxu0 0
  %89 = vmatprep.subr.bf16.mxu0 0
  %90 = vmatpush2.bf16.msra.mxu0 0
  %91 = vmatprep.mubr.bf16.mxu0 0
  %92 = vmatmul.mubr.bf16.gmra.mxu0 %v50
  %v93 = vpop.f32.mrf.mxu0
  %v94 = vadd.f32 %v31, %v93
  %v95 = vpop.f32.mrf.mxu0
  %v96 = vpop.f32.mrf.mxu0
  %v97 = vadd.f32 %v31, %v96
  %v98 = vpop.f32.mrf.mxu0
  %99 = vmatprep.mubr.bf16.mxu0 0
  %100 = vmatmul.mubr.bf16.gmra.mxu0 %v53
  %v101 = vpop.f32.mrf.mxu0
  %v102 = vadd.f32 %v31, %v101
  %v103 = vpop.f32.mrf.mxu0
  %v104 = vpop.f32.mrf.mxu0
  %v105 = vadd.f32 %v31, %v104
  %v106 = vpop.f32.mrf.mxu0
  %107 = vdwg.mxu0
  %v108 = vpack.c.bf16 %v97, %v94
  %v109 = vpack.c.bf16 %v105, %v102
  %v112 = vunpack.c.l.b16 %v108
  %v113 = vunpack.c.h.b16 %v108
  %v114 = vunpack.c.l.b16 %v109
  %v115 = vunpack.c.h.b16 %v109
  %v116 = vpack.c.b16 %v112, %v112
  %v117 = vpack.c.b16 %v113, %v113
  %v118 = vpack.c.b16 %v114, %v114
  %v119 = vpack.c.b16 %v115, %v115
  %vm124 = vcmask 519168
  %125 = vst.msk [vmem:[%s3] sm:$0xf] %vm124, %v116
  %126 = vst.msk [vmem:[%s3 + $0x4] sm:$0xf] %vm124, %v117
  %127 = vst.msk [vmem:[%s3 + $0x8] sm:$0xf] %vm124, %v118
  %128 = vst.msk [vmem:[%s3 + $0xc] sm:$0xf] %vm124, %v119
  // Predicated region
  $region14: #{st_llm_forward.15} parent=0 // pred_check
    _
  $region15: #{st_llm_forward.15} parent=0 // pred_check_branch
    %130 = sbr.rel (0) target = $region17
  $region16: #{st_llm_forward.15} parent=0 // pred_region
    _
  $region17: #{st_llm_forward.15} parent=0 // pred_fallthru
    _
  // Predicated region
  $region18: #{st_llm_forward.15} parent=0 // pred_check
    _
  $region19: #{st_llm_forward.15} parent=0 // pred_check_branch
    %132 = sbr.rel (0) target = $region21
  $region20: #{st_llm_forward.15} parent=0 // pred_region
    _
  $region21: #{st_llm_forward.15} parent=0 // pred_fallthru
    _

// kernel: st_llm_forward.14
$region0: #{st_llm_forward.14}
  #allocation0 [shape = 'u32[]', space=smem, size = 0x4, offset = 0x4, fixed_abs, tag = 'smem constant byte address 0x4 - core index']
  #allocation1 [shape = 'u32[144,128]{1,0:T(1,128)}', space=vmem, size = 0x12000, scoped, tag = 'internal scratch']
  %s0 = inlined_call_operand.vmem [shape: f32[16,64], index: 0, kind: input, shape index: {}]
  %s1 = inlined_call_operand.vmem [shape: bf16[64,64], index: 1, kind: input, shape index: {}]
  %s2 = inlined_call_operand.vmem [shape: f32[16,16], index: 2, kind: input, shape index: {}]
  %s3 = inlined_call_operand.vmem [shape: f32[1,64], index: 3, kind: input, shape index: {}]
  %s4 = inlined_call_operand.vmem [shape: bf16[16,64], index: 4, kind: output, shape index: {}]
  %s5 = sld [smem:[#allocation0]]
  $region26: #{st_llm_forward.14} parent=0
    _
  %s7 = ssub.s32 1, %s5
  %s8 = scalar_select 0, %s7, %s5
  // Predicated region
  $region2: #{st_llm_forward.14} parent=0 // pred_check
    _
  $region3: #{st_llm_forward.14} parent=0 // pred_check_branch
    %10 = sbr.rel (0) target = $region5
  $region4: #{st_llm_forward.14} parent=0 // pred_region
    _
  $region5: #{st_llm_forward.14} parent=0 // pred_fallthru
    _
  // Predicated region
  $region6: #{st_llm_forward.14} parent=0 // pred_check
    _
  $region7: #{st_llm_forward.14} parent=0 // pred_check_branch
    %12 = sbr.rel (0) target = $region9
  $region8: #{st_llm_forward.14} parent=0 // pred_region
    _
  $region9: #{st_llm_forward.14} parent=0 // pred_fallthru
    _
  // Predicated region
  $region10: #{st_llm_forward.14} parent=0 // pred_check
    _
  $region11: #{st_llm_forward.14} parent=0 // pred_check_branch
    %14 = sbr.rel (0) target = $region13
  $region12: #{st_llm_forward.14} parent=0 // pred_region
    _
  $region13: #{st_llm_forward.14} parent=0 // pred_fallthru
    _
  // Predicated region
  $region14: #{st_llm_forward.14} parent=0 // pred_check
    _
  $region15: #{st_llm_forward.14} parent=0 // pred_check_branch
    %16 = sbr.rel (0) target = $region17
  $region16: #{st_llm_forward.14} parent=0 // pred_region
    _
  $region17: #{st_llm_forward.14} parent=0 // pred_fallthru
    _
  %v18 = vld [vmem:[%s0] sm:$0xff]
  %v19 = vld [vmem:[%s0 + $0x8] sm:$0xff]
  %v20 = vpack.c.bf16 %v19, %v18
  %v21 = vld [vmem:[%s1] sm:$0xf]
  %v22 = vld [vmem:[%s1 + $0x4] sm:$0xf]
  %v23 = vld [vmem:[%s1 + $0x8] sm:$0xf]
  %v24 = vld [vmem:[%s1 + $0xc] sm:$0xf]
  %v25 = vld [vmem:[%s1 + $0x10] sm:$0xf]
  %v26 = vld [vmem:[%s1 + $0x14] sm:$0xf]
  %v27 = vld [vmem:[%s1 + $0x18] sm:$0xf]
  %v28 = vld [vmem:[%s1 + $0x1c] sm:$0xf]
  %v37 = vunpack.c.l.b16 %v21
  %v38 = vunpack.c.l.b16 %v22
  %v39 = vunpack.c.l.b16 %v23
  %v40 = vunpack.c.l.b16 %v24
  %v41 = vunpack.c.l.b16 %v25
  %v42 = vunpack.c.l.b16 %v26
  %v43 = vunpack.c.l.b16 %v27
  %v44 = vunpack.c.l.b16 %v28
  %v45 = vpack.c.b16 %v38, %v37
  %v46 = vpack.c.b16 %v40, %v39
  %v47 = vpack.c.b16 %v42, %v41
  %v48 = vpack.c.b16 %v44, %v43
  %vm53 = vcmask 523264
  %v55 = vsel %vm53, %v20, 0
  %57 = vmatprep.subr.bf16.mxu0 0
  %58 = vmatpush1.bf16.msra.mxu0 0
  %59 = vmatprep.subr.bf16.mxu0 0
  %60 = vmatpush1.bf16.msra.mxu0 0
  %61 = vmatprep.subr.bf16.mxu0 0
  %62 = vmatpush1.bf16.msra.mxu0 0
  %63 = vmatprep.subr.bf16.mxu0 0
  %64 = vmatpush1.bf16.msra.mxu0 0
  %65 = vmatprep.subr.bf16.mxu0 0
  %66 = vmatpush1.bf16.msra.mxu0 %v48
  %67 = vmatprep.subr.bf16.mxu0 0
  %68 = vmatpush1.bf16.msra.mxu0 %v47
  %69 = vmatprep.subr.bf16.mxu0 0
  %70 = vmatpush1.bf16.msra.mxu0 %v46
  %71 = vmatprep.subr.bf16.mxu0 0
  %72 = vmatpush1.bf16.msra.mxu0 %v45
  %73 = vmatprep.subr.bf16.mxu0 0
  %74 = vmatpush2.bf16.msra.mxu0 0
  %75 = vmatprep.subr.bf16.mxu0 0
  %76 = vmatpush2.bf16.msra.mxu0 0
  %77 = vmatprep.subr.bf16.mxu0 0
  %78 = vmatpush2.bf16.msra.mxu0 0
  %79 = vmatprep.subr.bf16.mxu0 0
  %80 = vmatpush2.bf16.msra.mxu0 0
  %81 = vmatprep.subr.bf16.mxu0 0
  %82 = vmatpush2.bf16.msra.mxu0 0
  %83 = vmatprep.subr.bf16.mxu0 0
  %84 = vmatpush2.bf16.msra.mxu0 0
  %85 = vmatprep.subr.bf16.mxu0 0
  %86 = vmatpush2.bf16.msra.mxu0 0
  %87 = vmatprep.subr.bf16.mxu0 0
  %88 = vmatpush2.bf16.msra.mxu0 0
  %89 = vmatprep.mubr.bf16.mxu0 0
  %90 = vmatmul.mubr.bf16.gmra.mxu0 %v55
  %v91 = vpop.f32.mrf.mxu0
  %v92 = vadd.f32 0.0, %v91
  %v93 = vpop.f32.mrf.mxu0
  %v94 = vpop.f32.mrf.mxu0
  %v95 = vadd.f32 0.0, %v94
  %v96 = vpop.f32.mrf.mxu0
  %97 = vdwg.mxu0
  %v98 = vld [vmem:[%s2] sm:$0xff]
  %v99 = vld [vmem:[%s2 + $0x8] sm:$0xff]
  %v100 = vld [vmem:[%s3] sm:$0x1]
  %v102 = vlaneseq
  %v103 = vshrl.u32 %v102, 7
  %v104 = vsub.s32 0, %v103
  %v105 = vrot.slane %v100, %v104
  %vm107 = vcmask 130048
  %v109 = vsel %vm107, %v98, 0
  %v112 = vsel %vm107, %v99, 0
  %114 = vmatprep.subr.mxu0 0.0
  %115 = vmatpush1.msra.mxu0 0.0
  %116 = vmatprep.subr.mxu0 0.0
  %117 = vmatpush1.msra.mxu0 0.0
  %118 = vmatprep.subr.mxu0 0.0
  %119 = vmatpush1.msra.mxu0 0.0
  %120 = vmatprep.subr.mxu0 0.0
  %121 = vmatpush1.msra.mxu0 0.0
  %122 = vmatprep.subr.mxu0 0.0
  %123 = vmatpush1.msra.mxu0 0.0
  %124 = vmatprep.subr.mxu0 0.0
  %125 = vmatpush1.msra.mxu0 0.0
  %126 = vmatprep.subr.mxu0 0.0
  %127 = vmatpush1.msra.mxu0 0.0
  %128 = vmatprep.subr.mxu0 0.0
  %129 = vmatpush1.msra.mxu0 0.0
  %130 = vmatprep.subr.mxu0 0.0
  %131 = vmatpush1.msra.mxu0 0.0
  %132 = vmatprep.subr.mxu0 0.0
  %133 = vmatpush1.msra.mxu0 0.0
  %134 = vmatprep.subr.mxu0 0.0
  %135 = vmatpush1.msra.mxu0 0.0
  %136 = vmatprep.subr.mxu0 0.0
  %137 = vmatpush1.msra.mxu0 0.0
  %138 = vmatprep.subr.mxu0 0.0
  %139 = vmatpush1.msra.mxu0 0.0
  %140 = vmatprep.subr.mxu0 0.0
  %141 = vmatpush1.msra.mxu0 0.0
  %142 = vmatprep.subr.mxu0 0.0
  %143 = vmatpush1.msra.mxu0 %v95
  %144 = vmatprep.subr.mxu0 0.0
  %145 = vmatpush1.msra.mxu0 %v92
  %146 = vmatprep.subr.mxu0 0.0
  %147 = vmatpush2.msra.mxu0 0.0
  %148 = vmatprep.subr.mxu0 0.0
  %149 = vmatpush2.msra.mxu0 0.0
  %150 = vmatprep.subr.mxu0 0.0
  %151 = vmatpush2.msra.mxu0 0.0
  %152 = vmatprep.subr.mxu0 0.0
  %153 = vmatpush2.msra.mxu0 0.0
  %154 = vmatprep.subr.mxu0 0.0
  %155 = vmatpush2.msra.mxu0 0.0
  %156 = vmatprep.subr.mxu0 0.0
  %157 = vmatpush2.msra.mxu0 0.0
  %158 = vmatprep.subr.mxu0 0.0
  %159 = vmatpush2.msra.mxu0 0.0
  %160 = vmatprep.subr.mxu0 0.0
  %161 = vmatpush2.msra.mxu0 0.0
  %162 = vmatprep.subr.mxu0 0.0
  %163 = vmatpush2.msra.mxu0 0.0
  %164 = vmatprep.subr.mxu0 0.0
  %165 = vmatpush2.msra.mxu0 0.0
  %166 = vmatprep.subr.mxu0 0.0
  %167 = vmatpush2.msra.mxu0 0.0
  %168 = vmatprep.subr.mxu0 0.0
  %169 = vmatpush2.msra.mxu0 0.0
  %170 = vmatprep.subr.mxu0 0.0
  %171 = vmatpush2.msra.mxu0 0.0
  %172 = vmatprep.subr.mxu0 0.0
  %173 = vmatpush2.msra.mxu0 0.0
  %174 = vmatprep.subr.mxu0 0.0
  %175 = vmatpush2.msra.mxu0 0.0
  %176 = vmatprep.subr.mxu0 0.0
  %177 = vmatpush2.msra.mxu0 0.0
  %178 = vmatprep.mubr.f32.mxu0 0.0
  %179 = vmatmul.mubr.f32.gmra.mxu0 %v109
  %v180 = vpop.f32.mrf.mxu0
  %v181 = vadd.f32 %v105, %v180
  %v182 = vpop.f32.mrf.mxu0
  %183 = vmatprep.mubr.f32.mxu0 0.0
  %184 = vmatmul.mubr.f32.gmra.mxu0 %v112
  %v185 = vpop.f32.mrf.mxu0
  %v186 = vadd.f32 %v105, %v185
  %v187 = vpop.f32.mrf.mxu0
  %188 = vdwg.mxu0
  %v189 = vpack.c.bf16 %v186, %v181
  %v191 = vunpack.c.l.b16 %v189
  %v192 = vunpack.c.h.b16 %v189
  %v193 = vpack.c.b16 %v191, %v191
  %v194 = vpack.c.b16 %v192, %v192
  %vm197 = vcmask 519168
  %198 = vst.msk [vmem:[%s4] sm:$0xf] %vm197, %v193
  %199 = vst.msk [vmem:[%s4 + $0x4] sm:$0xf] %vm197, %v194
  // Predicated region
  $region18: #{st_llm_forward.14} parent=0 // pred_check
    _
  $region19: #{st_llm_forward.14} parent=0 // pred_check_branch
    %201 = sbr.rel (0) target = $region21
  $region20: #{st_llm_forward.14} parent=0 // pred_region
    _
  $region21: #{st_llm_forward.14} parent=0 // pred_fallthru
    _
  // Predicated region
  $region22: #{st_llm_forward.14} parent=0 // pred_check
    _
  $region23: #{st_llm_forward.14} parent=0 // pred_check_branch
    %203 = sbr.rel (0) target = $region25
  $region24: #{st_llm_forward.14} parent=0 // pred_region
    _
  $region25: #{st_llm_forward.14} parent=0 // pred_fallthru
    _

// kernel: st_llm_forward.16
$region0: #{st_llm_forward.16}
  #allocation0 [shape = 'u32[]', space=smem, size = 0x4, offset = 0x4, fixed_abs, tag = 'smem constant byte address 0x4 - core index']
  #allocation1 [shape = 'u32[144,128]{1,0:T(1,128)}', space=vmem, size = 0x12000, scoped, tag = 'internal scratch']
  %s0 = inlined_call_operand.vmem [shape: bf16[2,16,192], index: 0, kind: input, shape index: {}]
  %s1 = inlined_call_operand.vmem [shape: bf16[192,192], index: 1, kind: input, shape index: {}]
  %s2 = inlined_call_operand.vmem [shape: f32[1,192], index: 2, kind: input, shape index: {}]
  %s3 = inlined_call_operand.vmem [shape: f32[16,192], index: 3, kind: input, shape index: {}]
  %s4 = inlined_call_operand.vmem [shape: bf16[2,16,192], index: 4, kind: output, shape index: {}]
  %s5 = sld [smem:[#allocation0]]
  $region49: #{st_llm_forward.16} parent=0
    _
  %s7 = ssub.s32 1, %s5
  %s8 = scalar_select 0, %s7, %s5
  loop: start=0, step=1, limit=4
  $region2: #{st_llm_forward.16} parent=0 // loop_pre_header
    _
  $region3: #{st_llm_forward.16} parent=0 // loop_header
    %s10 = sphi 0, %s14
    %p11 = scmp.ge.s32.totalorder %s10, 4
    %s20 = sphi 0, %s22
    %s23 = sphi 0, %s20
    %s24 = sphi 0, %s23
    %s40 = sphi 0, %s24
    %s44 = sphi 0, %s44
    %s46 = sphi 0, %s44
    %s47 = sphi 0, %s46
    %s61 = sphi 0, %s47
    %s65 = sphi 0, %s65
    %s67 = sphi 0, %s65
    %s68 = sphi 0, %s67
    %s82 = sphi 0, %s68
    %s86 = sphi 0, %s86
    %s88 = sphi 0, %s86
    %s89 = sphi 0, %s88
    %s103 = sphi 0, %s89
    %s109 = sphi 0, %s111
    %s112 = sphi 0, %s109
    %s113 = sphi 0, %s112
    %s129 = sphi 0, %s113
  $region4: #{st_llm_forward.16} parent=0 // loop_header_branch
    %13 = sbr.rel (%p11) target = $region8
  $region5: #{st_llm_forward.16} parent=0 // loop_body
    %s15 = ssub.s32 %s10, 1
    %s16 = ssub.s32 %s10, 2
    %s17 = sadd.s32 %s10, 1
    %s18 = ssub.s32 %s10, %s17
    %p19 = scmp.eq.s32.totalorder %s18, 0
    %s21 = sadd.s32 %s20, 1
    %s22 = scalar_select %p19, %s20, %s21
    %p25 = pneg %p19
    %p26 = scmp.eq.s32.totalorder %s10, 1
    %p27 = por %p25, %p26
    %p28 = scmp.ne.s32.totalorder %s20, %s23
    %p29 = scmp.eq.s32.totalorder %s10, 0
    %p30 = por %p28, %p29
    %p31 = scmp.ne.s32.totalorder %s20, %s23
    %p32 = scmp.eq.s32.totalorder %s15, 1
    %p33 = por %p31, %p32
    %p34 = scmp.ne.s32.totalorder %s23, %s24
    %p35 = scmp.eq.s32.totalorder %s15, 0
    %p36 = por %p34, %p35
    %p37 = scmp.ne.s32.totalorder %s23, %s24
    %p38 = scmp.eq.s32.totalorder %s16, 1
    %p39 = por %p37, %p38
    %p41 = scmp.ne.s32.totalorder %s24, %s40
    %p42 = scmp.eq.s32.totalorder %s16, 0
    %p43 = por %p41, %p42
    %s45 = sadd.s32 %s44, 1
    %p48 = scmp.eq.s32.totalorder %s10, 1
    %p49 = scmp.ne.s32.totalorder %s44, %s46
    %p50 = scmp.eq.s32.totalorder %s10, 0
    %p51 = por %p49, %p50
    %p52 = scmp.ne.s32.totalorder %s44, %s46
    %p53 = scmp.eq.s32.totalorder %s15, 1
    %p54 = por %p52, %p53
    %p55 = scmp.ne.s32.totalorder %s46, %s47
    %p56 = scmp.eq.s32.totalorder %s15, 0
    %p57 = por %p55, %p56
    %p58 = scmp.ne.s32.totalorder %s46, %s47
    %p59 = scmp.eq.s32.totalorder %s16, 1
    %p60 = por %p58, %p59
    %p62 = scmp.ne.s32.totalorder %s47, %s61
    %p63 = scmp.eq.s32.totalorder %s16, 0
    %p64 = por %p62, %p63
    %s66 = sadd.s32 %s65, 1
    %p69 = scmp.eq.s32.totalorder %s10, 1
    %p70 = scmp.ne.s32.totalorder %s65, %s67
    %p71 = scmp.eq.s32.totalorder %s10, 0
    %p72 = por %p70, %p71
    %p73 = scmp.ne.s32.totalorder %s65, %s67
    %p74 = scmp.eq.s32.totalorder %s15, 1
    %p75 = por %p73, %p74
    %p76 = scmp.ne.s32.totalorder %s67, %s68
    %p77 = scmp.eq.s32.totalorder %s15, 0
    %p78 = por %p76, %p77
    %p79 = scmp.ne.s32.totalorder %s67, %s68
    %p80 = scmp.eq.s32.totalorder %s16, 1
    %p81 = por %p79, %p80
    %p83 = scmp.ne.s32.totalorder %s68, %s82
    %p84 = scmp.eq.s32.totalorder %s16, 0
    %p85 = por %p83, %p84
    %s87 = sadd.s32 %s86, 1
    %p90 = scmp.eq.s32.totalorder %s10, 1
    %p91 = scmp.ne.s32.totalorder %s86, %s88
    %p92 = scmp.eq.s32.totalorder %s10, 0
    %p93 = por %p91, %p92
    %p94 = scmp.ne.s32.totalorder %s86, %s88
    %p95 = scmp.eq.s32.totalorder %s15, 1
    %p96 = por %p94, %p95
    %p97 = scmp.ne.s32.totalorder %s88, %s89
    %p98 = scmp.eq.s32.totalorder %s15, 0
    %p99 = por %p97, %p98
    %p100 = scmp.ne.s32.totalorder %s88, %s89
    %p101 = scmp.eq.s32.totalorder %s16, 1
    %p102 = por %p100, %p101
    %p104 = scmp.ne.s32.totalorder %s89, %s103
    %p105 = scmp.eq.s32.totalorder %s16, 0
    %p106 = por %p104, %p105
    %s107 = ssub.s32 %s10, %s17
    %p108 = scmp.eq.s32.totalorder %s107, 0
    %s110 = sadd.s32 %s109, 1
    %s111 = scalar_select %p108, %s109, %s110
    %p114 = pneg %p108
    %p115 = scmp.eq.s32.totalorder %s10, 1
    %p116 = por %p114, %p115
    %p117 = scmp.ne.s32.totalorder %s109, %s112
    %p118 = scmp.eq.s32.totalorder %s10, 0
    %p119 = por %p117, %p118
    %p120 = scmp.ne.s32.totalorder %s109, %s112
    %p121 = scmp.eq.s32.totalorder %s15, 1
    %p122 = por %p120, %p121
    %p123 = scmp.ne.s32.totalorder %s112, %s113
    %p124 = scmp.eq.s32.totalorder %s15, 0
    %p125 = por %p123, %p124
    %p126 = scmp.ne.s32.totalorder %s112, %s113
    %p127 = scmp.eq.s32.totalorder %s16, 1
    %p128 = por %p126, %p127
    %p130 = scmp.ne.s32.totalorder %s113, %s129
    %p131 = scmp.eq.s32.totalorder %s16, 0
    %p132 = por %p130, %p131
    %p133 = scmp.le.s32.totalorder 1, %s10
    %p134 = scmp.lt.s32.totalorder %s10, 3
    %p135 = pnand %p133, %p134
    %p136 = pneg %p135
    // Predicated region
    $region9: #{st_llm_forward.16} parent=5 // pred_check
      _
    $region10: #{st_llm_forward.16} parent=5 // pred_check_branch
      %138 = sbr.rel (%p135) target = $region12
    $region11: #{st_llm_forward.16} parent=5 // pred_region
      %s139 = ssub.s32 %s10, 1
      // Predicated region
      $region13: #{st_llm_forward.16} parent=11 // pred_check
        %p140 = pneg %p57
      $region14: #{st_llm_forward.16} parent=11 // pred_check_branch
        %142 = sbr.rel (%p140) target = $region16
      $region15: #{st_llm_forward.16} parent=11 // pred_region
        _
      $region16: #{st_llm_forward.16} parent=11 // pred_fallthru
        _
      // Predicated region
      $region17: #{st_llm_forward.16} parent=11 // pred_check
        %p143 = pneg %p78
      $region18: #{st_llm_forward.16} parent=11 // pred_check_branch
        %145 = sbr.rel (%p143) target = $region20
      $region19: #{st_llm_forward.16} parent=11 // pred_region
        _
      $region20: #{st_llm_forward.16} parent=11 // pred_fallthru
        _
      // Predicated region
      $region21: #{st_llm_forward.16} parent=11 // pred_check
        %p146 = pneg %p99
      $region22: #{st_llm_forward.16} parent=11 // pred_check_branch
        %148 = sbr.rel (%p146) target = $region24
      $region23: #{st_llm_forward.16} parent=11 // pred_region
        _
      $region24: #{st_llm_forward.16} parent=11 // pred_fallthru
        _
    $region12: #{st_llm_forward.16} parent=5 // pred_fallthru
      _
    %p149 = scmp.lt.s32.totalorder %s10, 2
    // Predicated region
    $region25: #{st_llm_forward.16} parent=5 // pred_check
      %p150 = pneg %p149
    $region26: #{st_llm_forward.16} parent=5 // pred_check_branch
      %152 = sbr.rel (%p150) target = $region28
    $region27: #{st_llm_forward.16} parent=5 // pred_region
      // Predicated region
      $region29: #{st_llm_forward.16} parent=27 // pred_check
        %p153 = pneg %p30
      $region30: #{st_llm_forward.16} parent=27 // pred_check_branch
        %155 = sbr.rel (%p153) target = $region32
      $region31: #{st_llm_forward.16} parent=27 // pred_region
        %p156 = scmp.lt.s32.totalorder %s10, 1
        %s157 = scalar_select %p156, %s10, 1
        %s158 = smul.addr %s157, 4
        %s159 = smul.addr %s158, 4
        %s160 = scalar_lea.vmem %s0, %s159
      $region32: #{st_llm_forward.16} parent=27 // pred_fallthru
        _
    $region28: #{st_llm_forward.16} parent=5 // pred_fallthru
      _
    %p161 = scmp.le.s32.totalorder 1, %s10
    %p162 = scmp.lt.s32.totalorder %s10, 3
    %p163 = pnand %p161, %p162
    %p164 = pneg %p163
    // Predicated region
    $region33: #{st_llm_forward.16} parent=5 // pred_check
      _
    $region34: #{st_llm_forward.16} parent=5 // pred_check_branch
      %166 = sbr.rel (%p163) target = $region36
    $region35: #{st_llm_forward.16} parent=5 // pred_region
      %s167 = ssub.s32 %s10, 1
      %p168 = scmp.lt.s32.totalorder %s15, 1
      %s169 = scalar_select %p168, %s15, 1
      %s170 = smul.addr %s169, 4
      %s171 = smul.addr %s170, 4
      %s172 = scalar_lea.vmem %s0, %s171
      %p173 = pneg %p36
      %p174 = pneg %p33
      %p175 = pneg %p57
      %p176 = pneg %p54
      %p177 = pneg %p78
      %p178 = pneg %p75
      %p179 = pneg %p99
      %p180 = pneg %p96
      %p181 = pneg %p125
      %p182 = pneg %p122
      %p183 = scmp.lt.s32.totalorder %s15, 1
      %s184 = scalar_select %p183, %s15, 1
      %s185 = smul.addr %s184, 4
      %s186 = smul.addr %s185, 4
      %s187 = scalar_lea.vmem %s4, %s186
      %p188 = scmp.lt.s32.totalorder %s15, 1
      %s189 = scalar_select %p188, %s15, 1
      %s190 = smul.addr %s189, 4
      %s191 = smul.addr %s190, 4
      %s192 = scalar_lea.vmem %s0, %s191
      %p193 = scmp.lt.s32.totalorder %s15, 1
      %s194 = scalar_select %p193, %s15, 1
      %s195 = smul.addr %s194, 4
      %s196 = smul.addr %s195, 4
      %s197 = scalar_lea.vmem %s4, %s196
      %v199 = vld [vmem:[%s192] sm:$0xff]
      %v200 = vld [vmem:[%s192 + $0x8] sm:$0xff]
      %v201 = vld [vmem:[%s1] sm:$0xff]
      %v202 = vld [vmem:[%s1 + $0x8] sm:$0xff]
      %v203 = vld [vmem:[%s1 + $0x10] sm:$0xff]
      %v204 = vld [vmem:[%s1 + $0x18] sm:$0xff]
      %v205 = vld [vmem:[%s1 + $0x20] sm:$0xff]
      %v206 = vld [vmem:[%s1 + $0x28] sm:$0xff]
      %v207 = vld [vmem:[%s1 + $0x30] sm:$0xff]
      %v208 = vld [vmem:[%s1 + $0x38] sm:$0xff]
      %v209 = vld [vmem:[%s1 + $0x40] sm:$0xff]
      %v210 = vld [vmem:[%s1 + $0x48] sm:$0xff]
      %v211 = vld [vmem:[%s1 + $0x50] sm:$0xff]
      %v212 = vld [vmem:[%s1 + $0x58] sm:$0xff]
      %v213 = vld [vmem:[%s1 + $0x60] sm:$0xff]
      %v214 = vld [vmem:[%s1 + $0x68] sm:$0xff]
      %v215 = vld [vmem:[%s1 + $0x70] sm:$0xff]
      %v216 = vld [vmem:[%s1 + $0x78] sm:$0xff]
      %v217 = vld [vmem:[%s1 + $0x80] sm:$0xff]
      %v218 = vld [vmem:[%s1 + $0x88] sm:$0xff]
      %v219 = vld [vmem:[%s1 + $0x90] sm:$0xff]
      %v220 = vld [vmem:[%s1 + $0x98] sm:$0xff]
      %v221 = vld [vmem:[%s1 + $0xa0] sm:$0xff]
      %v222 = vld [vmem:[%s1 + $0xa8] sm:$0xff]
      %v223 = vld [vmem:[%s1 + $0xb0] sm:$0xff]
      %v224 = vld [vmem:[%s1 + $0xb8] sm:$0xff]
      %v225 = vld [vmem:[%s2] sm:$0x3]
      %v227 = vlaneseq
      %v228 = vshrl.u32 %v227, 7
      %v229 = vsub.s32 0, %v228
      %v230 = vrot.slane %v225, %v229
      %v231 = vlaneseq
      %v232 = vshrl.u32 %v231, 7
      %v233 = vsub.s32 1, %v232
      %v234 = vrot.slane %v225, %v233
      %v239 = vunpack.c.l.b16 %v199
      %v240 = vunpack.c.h.b16 %v199
      %v241 = vunpack.c.l.b16 %v200
      %v242 = vunpack.c.h.b16 %v200
      %v243 = vpack.c.b16 %v241, %v239
      %v244 = vpack.c.b16 %v242, %v240
      %v270 = vunpack.c.l.b16 %v201
      %v271 = vunpack.c.h.b16 %v201
      %v272 = vunpack.c.l.b16 %v202
      %v273 = vunpack.c.h.b16 %v202
      %v274 = vunpack.c.l.b16 %v203
      %v275 = vunpack.c.h.b16 %v203
      %v276 = vunpack.c.l.b16 %v204
      %v277 = vunpack.c.h.b16 %v204
      %v278 = vunpack.c.l.b16 %v205
      %v279 = vunpack.c.h.b16 %v205
      %v280 = vunpack.c.l.b16 %v206
      %v281 = vunpack.c.h.b16 %v206
      %v282 = vunpack.c.l.b16 %v207
      %v283 = vunpack.c.h.b16 %v207
      %v284 = vunpack.c.l.b16 %v208
      %v285 = vunpack.c.h.b16 %v208
      %v286 = vunpack.c.l.b16 %v209
      %v287 = vunpack.c.h.b16 %v209
      %v288 = vunpack.c.l.b16 %v210
      %v289 = vunpack.c.h.b16 %v210
      %v290 = vunpack.c.l.b16 %v211
      %v291 = vunpack.c.h.b16 %v211
      %v292 = vunpack.c.l.b16 %v212
      %v293 = vunpack.c.h.b16 %v212
      %v294 = vunpack.c.l.b16 %v213
      %v295 = vunpack.c.h.b16 %v213
      %v296 = vunpack.c.l.b16 %v214
      %v297 = vunpack.c.h.b16 %v214
      %v298 = vunpack.c.l.b16 %v215
      %v299 = vunpack.c.h.b16 %v215
      %v300 = vunpack.c.l.b16 %v216
      %v301 = vunpack.c.h.b16 %v216
      %v302 = vunpack.c.l.b16 %v217
      %v303 = vunpack.c.h.b16 %v217
      %v304 = vunpack.c.l.b16 %v218
      %v305 = vunpack.c.h.b16 %v218
      %v306 = vunpack.c.l.b16 %v219
      %v307 = vunpack.c.h.b16 %v219
      %v308 = vunpack.c.l.b16 %v220
      %v309 = vunpack.c.h.b16 %v220
      %v310 = vunpack.c.l.b16 %v221
      %v311 = vunpack.c.h.b16 %v221
      %v312 = vunpack.c.l.b16 %v222
      %v313 = vunpack.c.h.b16 %v222
      %v314 = vunpack.c.l.b16 %v223
      %v315 = vunpack.c.h.b16 %v223
      %v316 = vunpack.c.l.b16 %v224
      %v317 = vunpack.c.h.b16 %v224
      %v318 = vpack.c.b16 %v272, %v270
      %v319 = vpack.c.b16 %v273, %v271
      %v320 = vpack.c.b16 %v276, %v274
      %v321 = vpack.c.b16 %v277, %v275
      %v322 = vpack.c.b16 %v280, %v278
      %v323 = vpack.c.b16 %v281, %v279
      %v324 = vpack.c.b16 %v284, %v282
      %v325 = vpack.c.b16 %v285, %v283
      %v326 = vpack.c.b16 %v288, %v286
      %v327 = vpack.c.b16 %v289, %v287
      %v328 = vpack.c.b16 %v292, %v290
      %v329 = vpack.c.b16 %v293, %v291
      %v330 = vpack.c.b16 %v296, %v294
      %v331 = vpack.c.b16 %v297, %v295
      %v332 = vpack.c.b16 %v300, %v298
      %v333 = vpack.c.b16 %v301, %v299
      %v334 = vpack.c.b16 %v304, %v302
      %v335 = vpack.c.b16 %v305, %v303
      %v336 = vpack.c.b16 %v308, %v306
      %v337 = vpack.c.b16 %v309, %v307
      %v338 = vpack.c.b16 %v312, %v310
      %v339 = vpack.c.b16 %v313, %v311
      %v340 = vpack.c.b16 %v316, %v314
      %v341 = vpack.c.b16 %v317, %v315
      %vm366 = vcmask 523264
      %v368 = vsel %vm366, %v244, 0
      %370 = vmatprep.subr.bf16.mxu0 %v333
      %371 = vmatpush1.bf16.msra.mxu0 %v332
      %372 = vmatprep.subr.bf16.mxu0 %v331
      %373 = vmatpush1.bf16.msra.mxu0 %v330
      %374 = vmatprep.subr.bf16.mxu0 %v329
      %375 = vmatpush1.bf16.msra.mxu0 %v328
      %376 = vmatprep.subr.bf16.mxu0 %v327
      %377 = vmatpush1.bf16.msra.mxu0 %v326
      %378 = vmatprep.subr.bf16.mxu0 %v325
      %379 = vmatpush1.bf16.msra.mxu0 %v324
      %380 = vmatprep.subr.bf16.mxu0 %v323
      %381 = vmatpush1.bf16.msra.mxu0 %v322
      %382 = vmatprep.subr.bf16.mxu0 %v321
      %383 = vmatpush1.bf16.msra.mxu0 %v320
      %384 = vmatprep.subr.bf16.mxu0 %v319
      %385 = vmatpush1.bf16.msra.mxu0 %v318
      %386 = vmatprep.subr.bf16.mxu0 0
      %387 = vmatpush2.bf16.msra.mxu0 0
      %388 = vmatprep.subr.bf16.mxu0 0
      %389 = vmatpush2.bf16.msra.mxu0 0
      %390 = vmatprep.subr.bf16.mxu0 0
      %391 = vmatpush2.bf16.msra.mxu0 0
      %392 = vmatprep.subr.bf16.mxu0 0
      %393 = vmatpush2.bf16.msra.mxu0 0
      %394 = vmatprep.subr.bf16.mxu0 %v341
      %395 = vmatpush2.bf16.msra.mxu0 %v340
      %396 = vmatprep.subr.bf16.mxu0 %v339
      %397 = vmatpush2.bf16.msra.mxu0 %v338
      %398 = vmatprep.subr.bf16.mxu0 %v337
      %399 = vmatpush2.bf16.msra.mxu0 %v336
      %400 = vmatprep.subr.bf16.mxu0 %v335
      %401 = vmatpush2.bf16.msra.mxu0 %v334
      %402 = vmatprep.mubr.bf16.mxu0 %v368
      %403 = vmatmul.mubr.bf16.gmra.mxu0 %v243
      %v404 = vpop.f32.mrf.mxu0
      %v405 = vadd.f32 %v230, %v404
      %v406 = vpop.f32.mrf.mxu0
      %v407 = vadd.f32 %v234, %v406
      %v408 = vpop.f32.mrf.mxu0
      %v409 = vadd.f32 %v230, %v408
      %v410 = vpop.f32.mrf.mxu0
      %v411 = vadd.f32 %v234, %v410
      %412 = vdwg.mxu0
      %v413 = vld [vmem:[%s3] sm:$0xff]
      %v414 = vld [vmem:[%s3 + $0x8] sm:$0xff]
      %v415 = vld [vmem:[%s3 + $0x10] sm:$0xff]
      %v416 = vld [vmem:[%s3 + $0x18] sm:$0xff]
      %v417 = vadd.f32 %v405, %v413
      %v418 = vadd.f32 %v407, %v414
      %v419 = vadd.f32 %v409, %v415
      %v420 = vadd.f32 %v411, %v416
      %v421 = vpack.c.bf16 %v419, %v417
      %v422 = vpack.c.bf16 %v420, %v418
      %v425 = vunpack.c.l.b16 %v421
      %v426 = vunpack.c.l.b16 %v422
      %v427 = vunpack.c.h.b16 %v421
      %v428 = vunpack.c.h.b16 %v422
      %v429 = vpack.c.b16 %v426, %v425
      %v430 = vpack.c.b16 %v428, %v427
      %vm433 = vcmask 1043456
      %vm434 = vcmask 523268
      %vm435 = vmor %vm434, %vm433
      %436 = vst.msk [vmem:[%s197] sm:$0xff] %vm435, %v429
      %437 = vst.msk [vmem:[%s197 + $0x8] sm:$0xff] %vm435, %v430
      %p438 = scmp.lt.s32.totalorder %s15, 1
      %s439 = scalar_select %p438, %s15, 1
      %s440 = smul.addr %s439, 4
      %s441 = smul.addr %s440, 4
      %s442 = scalar_lea.vmem %s4, %s441
      // Predicated region
      $region37: #{st_llm_forward.16} parent=35 // pred_check
        %p443 = pneg %p122
      $region38: #{st_llm_forward.16} parent=35 // pred_check_branch
        %445 = sbr.rel (%p443) target = $region40
      $region39: #{st_llm_forward.16} parent=35 // pred_region
        _
      $region40: #{st_llm_forward.16} parent=35 // pred_fallthru
        _
    $region36: #{st_llm_forward.16} parent=5 // pred_fallthru
      _
    %p446 = scmp.le.s32.totalorder 2, %s10
    // Predicated region
    $region41: #{st_llm_forward.16} parent=5 // pred_check
      %p447 = pneg %p446
    $region42: #{st_llm_forward.16} parent=5 // pred_check_branch
      %449 = sbr.rel (%p447) target = $region44
    $region43: #{st_llm_forward.16} parent=5 // pred_region
      %s450 = ssub.s32 %s10, 2
      // Predicated region
      $region45: #{st_llm_forward.16} parent=43 // pred_check
        %p451 = pneg %p128
      $region46: #{st_llm_forward.16} parent=43 // pred_check_branch
        %453 = sbr.rel (%p451) target = $region48
      $region47: #{st_llm_forward.16} parent=43 // pred_region
        %p454 = scmp.lt.s32.totalorder %s16, 1
        %s455 = scalar_select %p454, %s16, 1
        %s456 = smul.addr %s455, 4
        %s457 = smul.addr %s456, 4
        %s458 = scalar_lea.vmem %s4, %s457
      $region48: #{st_llm_forward.16} parent=43 // pred_fallthru
        _
    $region44: #{st_llm_forward.16} parent=5 // pred_fallthru
      _
  $region6: #{st_llm_forward.16} parent=0 // loop_footer
    %s14 = sadd.s32 1, %s10
  $region7: #{st_llm_forward.16} parent=0 // loop_footer_branch
    %9 = sbr.rel target = $region3
  $region8: #{st_llm_forward.16} parent=0 // loop_exit
    _

// kernel: st_llm_forward.17
$region0: #{st_llm_forward.17}
  #allocation0 [shape = 'u32[]', space=smem, size = 0x4, offset = 0x4, fixed_abs, tag = 'smem constant byte address 0x4 - core index']
  #allocation1 [shape = 'u32[144,128]{1,0:T(1,128)}', space=vmem, size = 0x12000, scoped, tag = 'internal scratch']
  #allocation2 [shape = 'bf16[32,192]{1,0:T(8,128)(2,1)}', space=vmem, size = 0x4000, scoped, tag = 'scratch operand']
  %s0 = inlined_call_operand.vmem [shape: bf16[32,192], index: 0, kind: input, shape index: {}]
  %s1 = inlined_call_operand.vmem [shape: bf16[192,576], index: 1, kind: input, shape index: {}]
  %s2 = inlined_call_operand.vmem [shape: f32[1,576], index: 2, kind: input, shape index: {}]
  %s3 = inlined_call_operand.vmem [shape: f32[1,192], index: 3, kind: input, shape index: {}]
  %s4 = inlined_call_operand.vmem [shape: f32[1,192], index: 4, kind: input, shape index: {}]
  %s5 = inlined_call_operand.vmem [shape: bf16[32,576], index: 5, kind: output, shape index: {}]
  %s6 = sld [smem:[#allocation0]]
  $region185: #{st_llm_forward.17} parent=0
    _
  %s8 = ssub.s32 1, %s6
  %s9 = scalar_select 0, %s8, %s6
  $region1: #{st_llm_forward.17} parent=0
    #allocation3 [shape = 'u8[393216]{0}', space=vmem, size = 0x60000, scoped, tag = 'input window, operand 1']
    #allocation4 [shape = 'u8[65536]{0}', space=vmem, size = 0x10000, scoped, tag = 'output window, operand 0']
    loop: start=0, step=1, limit=4
    $region2: #{st_llm_forward.17} parent=1 // loop_pre_header
      _
    $region3: #{st_llm_forward.17} parent=1 // loop_header
      %s11 = sphi 0, %s15
      %p12 = scmp.ge.s32.totalorder %s11, 4
      %s18 = sphi 0, %s30
      %s19 = sphi 0, %s26
      %s20 = sphi 0, %s18
      %s21 = sphi 0, %s19
      %s22 = sphi 0, %s20
      %s23 = sphi 0, %s21
      %s33 = sphi 0, %s35
      %s36 = sphi 0, %s33
      %s37 = sphi 0, %s36
      %s53 = sphi 0, %s37
      %s59 = sphi 0, %s61
      %s62 = sphi 0, %s59
      %s63 = sphi 0, %s62
      %s79 = sphi 0, %s63
      %s85 = sphi 0, %s87
      %s88 = sphi 0, %s85
      %s89 = sphi 0, %s88
      %s105 = sphi 0, %s89
      %s109 = sphi 0, %s109
      %s111 = sphi 0, %s109
      %s112 = sphi 0, %s111
      %s126 = sphi 0, %s112
      %s130 = sphi 0, %s130
      %s132 = sphi 0, %s130
      %s133 = sphi 0, %s132
      %s147 = sphi 0, %s133
      %s155 = sphi 0, %s157
      %s158 = sphi 0, %s155
      %s159 = sphi 0, %s158
      %s175 = sphi 0, %s159
    $region4: #{st_llm_forward.17} parent=1 // loop_header_branch
      %14 = sbr.rel (%p12) target = $region8
    $region5: #{st_llm_forward.17} parent=1 // loop_body
      %s16 = ssub.s32 %s11, 1
      %s17 = ssub.s32 %s11, 2
      %s24 = sadd.s32 1, %s19
      %p25 = scmp.ge.s32.totalorder %s24, 2
      %s26 = scalar_select %p25, 0, %s24
      %s27 = sadd.s32 1, %s18
      %s28 = scalar_select %p25, %s27, %s18
      %p29 = scmp.ge.s32.totalorder %s28, 1
      %s30 = scalar_select %p29, 0, %s28
      %s31 = ssub.s32 %s18, %s30
      %p32 = scmp.eq.s32.totalorder %s31, 0
      %s34 = sadd.s32 %s33, 1
      %s35 = scalar_select %p32, %s33, %s34
      %p38 = pneg %p32
      %p39 = scmp.eq.s32.totalorder %s11, 1
      %p40 = por %p38, %p39
      %p41 = scmp.ne.s32.totalorder %s33, %s36
      %p42 = scmp.eq.s32.totalorder %s11, 0
      %p43 = por %p41, %p42
      %p44 = scmp.ne.s32.totalorder %s33, %s36
      %p45 = scmp.eq.s32.totalorder %s16, 1
      %p46 = por %p44, %p45
      %p47 = scmp.ne.s32.totalorder %s36, %s37
      %p48 = scmp.eq.s32.totalorder %s16, 0
      %p49 = por %p47, %p48
      %p50 = scmp.ne.s32.totalorder %s36, %s37
      %p51 = scmp.eq.s32.totalorder %s17, 1
      %p52 = por %p50, %p51
      %p54 = scmp.ne.s32.totalorder %s37, %s53
      %p55 = scmp.eq.s32.totalorder %s17, 0
      %p56 = por %p54, %p55
      %s57 = ssub.s32 %s19, %s26
      %p58 = scmp.eq.s32.totalorder %s57, 0
      %s60 = sadd.s32 %s59, 1
      %s61 = scalar_select %p58, %s59, %s60
      %p64 = pneg %p58
      %p65 = scmp.eq.s32.totalorder %s11, 1
      %p66 = por %p64, %p65
      %p67 = scmp.ne.s32.totalorder %s59, %s62
      %p68 = scmp.eq.s32.totalorder %s11, 0
      %p69 = por %p67, %p68
      %p70 = scmp.ne.s32.totalorder %s59, %s62
      %p71 = scmp.eq.s32.totalorder %s16, 1
      %p72 = por %p70, %p71
      %p73 = scmp.ne.s32.totalorder %s62, %s63
      %p74 = scmp.eq.s32.totalorder %s16, 0
      %p75 = por %p73, %p74
      %p76 = scmp.ne.s32.totalorder %s62, %s63
      %p77 = scmp.eq.s32.totalorder %s17, 1
      %p78 = por %p76, %p77
      %p80 = scmp.ne.s32.totalorder %s63, %s79
      %p81 = scmp.eq.s32.totalorder %s17, 0
      %p82 = por %p80, %p81
      %s83 = ssub.s32 %s19, %s26
      %p84 = scmp.eq.s32.totalorder %s83, 0
      %s86 = sadd.s32 %s85, 1
      %s87 = scalar_select %p84, %s85, %s86
      %p90 = pneg %p84
      %p91 = scmp.eq.s32.totalorder %s11, 1
      %p92 = por %p90, %p91
      %p93 = scmp.ne.s32.totalorder %s85, %s88
      %p94 = scmp.eq.s32.totalorder %s11, 0
      %p95 = por %p93, %p94
      %p96 = scmp.ne.s32.totalorder %s85, %s88
      %p97 = scmp.eq.s32.totalorder %s16, 1
      %p98 = por %p96, %p97
      %p99 = scmp.ne.s32.totalorder %s88, %s89
      %p100 = scmp.eq.s32.totalorder %s16, 0
      %p101 = por %p99, %p100
      %p102 = scmp.ne.s32.totalorder %s88, %s89
      %p103 = scmp.eq.s32.totalorder %s17, 1
      %p104 = por %p102, %p103
      %p106 = scmp.ne.s32.totalorder %s89, %s105
      %p107 = scmp.eq.s32.totalorder %s17, 0
      %p108 = por %p106, %p107
      %s110 = sadd.s32 %s109, 1
      %p113 = scmp.eq.s32.totalorder %s11, 1
      %p114 = scmp.ne.s32.totalorder %s109, %s111
      %p115 = scmp.eq.s32.totalorder %s11, 0
      %p116 = por %p114, %p115
      %p117 = scmp.ne.s32.totalorder %s109, %s111
      %p118 = scmp.eq.s32.totalorder %s16, 1
      %p119 = por %p117, %p118
      %p120 = scmp.ne.s32.totalorder %s111, %s112
      %p121 = scmp.eq.s32.totalorder %s16, 0
      %p122 = por %p120, %p121
      %p123 = scmp.ne.s32.totalorder %s111, %s112
      %p124 = scmp.eq.s32.totalorder %s17, 1
      %p125 = por %p123, %p124
      %p127 = scmp.ne.s32.totalorder %s112, %s126
      %p128 = scmp.eq.s32.totalorder %s17, 0
      %p129 = por %p127, %p128
      %s131 = sadd.s32 %s130, 1
      %p134 = scmp.eq.s32.totalorder %s11, 1
      %p135 = scmp.ne.s32.totalorder %s130, %s132
      %p136 = scmp.eq.s32.totalorder %s11, 0
      %p137 = por %p135, %p136
      %p138 = scmp.ne.s32.totalorder %s130, %s132
      %p139 = scmp.eq.s32.totalorder %s16, 1
      %p140 = por %p138, %p139
      %p141 = scmp.ne.s32.totalorder %s132, %s133
      %p142 = scmp.eq.s32.totalorder %s16, 0
      %p143 = por %p141, %p142
      %p144 = scmp.ne.s32.totalorder %s132, %s133
      %p145 = scmp.eq.s32.totalorder %s17, 1
      %p146 = por %p144, %p145
      %p148 = scmp.ne.s32.totalorder %s133, %s147
      %p149 = scmp.eq.s32.totalorder %s17, 0
      %p150 = por %p148, %p149
      %s151 = ssub.s32 %s18, %s30
      %s152 = ssub.s32 %s19, %s26
      %s153 = sor.u32 %s151, %s152
      %p154 = scmp.eq.s32.totalorder %s153, 0
      %s156 = sadd.s32 %s155, 1
      %s157 = scalar_select %p154, %s155, %s156
      %p160 = pneg %p154
      %p161 = scmp.eq.s32.totalorder %s11, 1
      %p162 = por %p160, %p161
      %p163 = scmp.ne.s32.totalorder %s155, %s158
      %p164 = scmp.eq.s32.totalorder %s11, 0
      %p165 = por %p163, %p164
      %p166 = scmp.ne.s32.totalorder %s155, %s158
      %p167 = scmp.eq.s32.totalorder %s16, 1
      %p168 = por %p166, %p167
      %p169 = scmp.ne.s32.totalorder %s158, %s159
      %p170 = scmp.eq.s32.totalorder %s16, 0
      %p171 = por %p169, %p170
      %p172 = scmp.ne.s32.totalorder %s158, %s159
      %p173 = scmp.eq.s32.totalorder %s17, 1
      %p174 = por %p172, %p173
      %p176 = scmp.ne.s32.totalorder %s159, %s175
      %p177 = scmp.eq.s32.totalorder %s17, 0
      %p178 = por %p176, %p177
      %p179 = scmp.le.s32.totalorder 1, %s11
      %p180 = scmp.lt.s32.totalorder %s11, 3
      %p181 = pnand %p179, %p180
      %p182 = pneg %p181
      // Predicated region
      $region9: #{st_llm_forward.17} parent=5 // pred_check
        _
      $region10: #{st_llm_forward.17} parent=5 // pred_check_branch
        %184 = sbr.rel (%p181) target = $region12
      $region11: #{st_llm_forward.17} parent=5 // pred_region
        %s185 = ssub.s32 %s11, 1
        // Predicated region
        $region13: #{st_llm_forward.17} parent=11 // pred_check
          %p186 = pneg %p49
        $region14: #{st_llm_forward.17} parent=11 // pred_check_branch
          %188 = sbr.rel (%p186) target = $region16
        $region15: #{st_llm_forward.17} parent=11 // pred_region
          %s189 = smul.u32 4, %s20
          %p190 = scmp.lt.s32.totalorder %s189, 3
          %s191 = scalar_select %p190, %s189, 3
          %s192 = smul.addr %s191, 2
          %s193 = smul.addr %s192, 4
          %s194 = scalar_lea.vmem %s0, %s193
          %s195 = smul.u32 4, %s20
        $region16: #{st_llm_forward.17} parent=11 // pred_fallthru
          _
        // Predicated region
        $region17: #{st_llm_forward.17} parent=11 // pred_check
          %p196 = pneg %p122
        $region18: #{st_llm_forward.17} parent=11 // pred_check_branch
          %198 = sbr.rel (%p196) target = $region20
        $region19: #{st_llm_forward.17} parent=11 // pred_region
          _
        $region20: #{st_llm_forward.17} parent=11 // pred_fallthru
          _
        // Predicated region
        $region21: #{st_llm_forward.17} parent=11 // pred_check
          %p199 = pneg %p143
        $region22: #{st_llm_forward.17} parent=11 // pred_check_branch
          %201 = sbr.rel (%p199) target = $region24
        $region23: #{st_llm_forward.17} parent=11 // pred_region
          _
        $region24: #{st_llm_forward.17} parent=11 // pred_fallthru
          _
      $region12: #{st_llm_forward.17} parent=5 // pred_fallthru
        _
      %p202 = scmp.lt.s32.totalorder %s11, 2
      // Predicated region
      $region25: #{st_llm_forward.17} parent=5 // pred_check
        %p203 = pneg %p202
      $region26: #{st_llm_forward.17} parent=5 // pred_check_branch
        %205 = sbr.rel (%p203) target = $region28
      $region27: #{st_llm_forward.17} parent=5 // pred_region
        // Predicated region
        $region29: #{st_llm_forward.17} parent=27 // pred_check
          %p206 = pneg %p69
        $region30: #{st_llm_forward.17} parent=27 // pred_check_branch
          %208 = sbr.rel (%p206) target = $region32
        $region31: #{st_llm_forward.17} parent=27 // pred_region
          %s209 = sand.u32 %s59, 1
          %s210 = sand.u32 %s59, 1
          %s211 = smul.addr %s210, 384
          %s212 = scalar_lea.vmem [#allocation3], %s211
          %s213 = smul.u32 4, %s19
          %s214 = ssub.s32 5, %s213
          %p215 = scmp.lt.s32.totalorder %s214, 4
          %s216 = scalar_select %p215, %s214, 4
          %s217 = smul.u32 1536, %s216
          %p218 = scmp.ne.s32.totalorder 0, %s217
          %s219 = smul.addr %s213, 4
          %s220 = scalar_lea.vmem %s1, %s219
          %s221 = smul.u32 %s216, 4
          // Predicated region
          $region33: #{st_llm_forward.17} parent=31 // pred_check
            %p222 = pneg %p218
          $region34: #{st_llm_forward.17} parent=31 // pred_check_branch
            %224 = sbr.rel (%p222) target = $region36
          $region35: #{st_llm_forward.17} parent=31 // pred_region
            %p225 = scmp.lt.u32.totalorder %s221, 8
            %p226 = pneg %p225
            // Predicated region
            $region37: #{st_llm_forward.17} parent=35 // pred_check
              _
            $region38: #{st_llm_forward.17} parent=35 // pred_check_branch
              %228 = sbr.rel (%p225) target = $region40
            $region39: #{st_llm_forward.17} parent=35 // pred_region
              %s290 = sand.u32 %s221, 7
              %p291 = scmp.eq.s32.totalorder %s290, 0
              // Predicated region
              $region52: #{st_llm_forward.17} parent=39 // pred_check
                %p292 = pneg %p291
              $region53: #{st_llm_forward.17} parent=39 // pred_check_branch
                %294 = sbr.rel (%p292) target = $region55
              $region54: #{st_llm_forward.17} parent=39 // pred_region
                %s295 = sshrl.u32 %s221, 3
                %s296 = sdiv.u32.pop %s295, 3
                %s297 = srem.u32.pop %s295, 3
                // While loop
                $region56: #{st_llm_forward.17} parent=54 // loop_pre_header
                  _
                $region57: #{st_llm_forward.17} parent=54 // loop_header
                  %s301 = sphi 0, %s303
                  %p302 = scmp.ge.s32.totalorder %s301, %s296
                  %s306 = sphi 0, %s455
                  %s307 = sphi %s220, %s458
                  %s308 = sphi %s212, %s459
                $region58: #{st_llm_forward.17} parent=54 // loop_header_branch
                  %305 = sbr.rel (%p302) target = $region62
                $region59: #{st_llm_forward.17} parent=54 // loop_body
                  %v309 = vld [vmem:[%s307] sm:$0xff]
                  %310 = vst [vmem:[%s308] sm:$0xff] %v309
                  %v311 = vld [vmem:[%s307 + $0x8] sm:$0xff]
                  %312 = vst [vmem:[%s308 + $0x8] sm:$0xff] %v311
                  %v313 = vld [vmem:[%s307 + $0x10] sm:$0xff]
                  %314 = vst [vmem:[%s308 + $0x10] sm:$0xff] %v313
                  %v315 = vld [vmem:[%s307 + $0x14] sm:$0xff]
                  %316 = vst [vmem:[%s308 + $0x10] sm:$0xff] %v315
                  %v317 = vld [vmem:[%s307 + $0x1c] sm:$0xff]
                  %318 = vst [vmem:[%s308 + $0x18] sm:$0xff] %v317
                  %v319 = vld [vmem:[%s307 + $0x24] sm:$0xff]
                  %320 = vst [vmem:[%s308 + $0x20] sm:$0xff] %v319
                  %v321 = vld [vmem:[%s307 + $0x28] sm:$0xff]
                  %322 = vst [vmem:[%s308 + $0x20] sm:$0xff] %v321
                  %v323 = vld [vmem:[%s307 + $0x30] sm:$0xff]
                  %324 = vst [vmem:[%s308 + $0x28] sm:$0xff] %v323
                  %v325 = vld [vmem:[%s307 + $0x38] sm:$0xff]
                  %326 = vst [vmem:[%s308 + $0x30] sm:$0xff] %v325
                  %v327 = vld [vmem:[%s307 + $0x3c] sm:$0xff]
                  %328 = vst [vmem:[%s308 + $0x30] sm:$0xff] %v327
                  %v329 = vld [vmem:[%s307 + $0x44] sm:$0xff]
                  %330 = vst [vmem:[%s308 + $0x38] sm:$0xff] %v329
                  %v331 = vld [vmem:[%s307 + $0x4c] sm:$0xff]
                  %332 = vst [vmem:[%s308 + $0x40] sm:$0xff] %v331
                  %v333 = vld [vmem:[%s307 + $0x50] sm:$0xff]
                  %334 = vst [vmem:[%s308 + $0x40] sm:$0xff] %v333
                  %v335 = vld [vmem:[%s307 + $0x58] sm:$0xff]
                  %336 = vst [vmem:[%s308 + $0x48] sm:$0xff] %v335
                  %v337 = vld [vmem:[%s307 + $0x60] sm:$0xff]
                  %338 = vst [vmem:[%s308 + $0x50] sm:$0xff] %v337
                  %v339 = vld [vmem:[%s307 + $0x64] sm:$0xff]
                  %340 = vst [vmem:[%s308 + $0x50] sm:$0xff] %v339
                  %v341 = vld [vmem:[%s307 + $0x6c] sm:$0xff]
                  %342 = vst [vmem:[%s308 + $0x58] sm:$0xff] %v341
                  %v343 = vld [vmem:[%s307 + $0x74] sm:$0xff]
                  %344 = vst [vmem:[%s308 + $0x60] sm:$0xff] %v343
                  %v345 = vld [vmem:[%s307 + $0x78] sm:$0xff]
                  %346 = vst [vmem:[%s308 + $0x60] sm:$0xff] %v345
                  %v347 = vld [vmem:[%s307 + $0x80] sm:$0xff]
                  %348 = vst [vmem:[%s308 + $0x68] sm:$0xff] %v347
                  %v349 = vld [vmem:[%s307 + $0x88] sm:$0xff]
                  %350 = vst [vmem:[%s308 + $0x70] sm:$0xff] %v349
                  %v351 = vld [vmem:[%s307 + $0x8c] sm:$0xff]
                  %352 = vst [vmem:[%s308 + $0x70] sm:$0xff] %v351
                  %v353 = vld [vmem:[%s307 + $0x94] sm:$0xff]
                  %354 = vst [vmem:[%s308 + $0x78] sm:$0xff] %v353
                  %v355 = vld [vmem:[%s307 + $0x9c] sm:$0xff]
                  %356 = vst [vmem:[%s308 + $0x80] sm:$0xff] %v355
                  %v357 = vld [vmem:[%s307 + $0xa0] sm:$0xff]
                  %358 = vst [vmem:[%s308 + $0x80] sm:$0xff] %v357
                  %v359 = vld [vmem:[%s307 + $0xa8] sm:$0xff]
                  %360 = vst [vmem:[%s308 + $0x88] sm:$0xff] %v359
                  %v361 = vld [vmem:[%s307 + $0xb0] sm:$0xff]
                  %362 = vst [vmem:[%s308 + $0x90] sm:$0xff] %v361
                  %v363 = vld [vmem:[%s307 + $0xb4] sm:$0xff]
                  %364 = vst [vmem:[%s308 + $0x90] sm:$0xff] %v363
                  %v365 = vld [vmem:[%s307 + $0xbc] sm:$0xff]
                  %366 = vst [vmem:[%s308 + $0x98] sm:$0xff] %v365
                  %v367 = vld [vmem:[%s307 + $0xc4] sm:$0xff]
                  %368 = vst [vmem:[%s308 + $0xa0] sm:$0xff] %v367
                  %v369 = vld [vmem:[%s307 + $0xc8] sm:$0xff]
                  %370 = vst [vmem:[%s308 + $0xa0] sm:$0xff] %v369
                  %v371 = vld [vmem:[%s307 + $0xd0] sm:$0xff]
                  %372 = vst [vmem:[%s308 + $0xa8] sm:$0xff] %v371
                  %v373 = vld [vmem:[%s307 + $0xd8] sm:$0xff]
                  %374 = vst [vmem:[%s308 + $0xb0] sm:$0xff] %v373
                  %v375 = vld [vmem:[%s307 + $0xdc] sm:$0xff]
                  %376 = vst [vmem:[%s308 + $0xb0] sm:$0xff] %v375
                  %v377 = vld [vmem:[%s307 + $0xe4] sm:$0xff]
                  %378 = vst [vmem:[%s308 + $0xb8] sm:$0xff] %v377
                  %v379 = vld [vmem:[%s307 + $0xec] sm:$0xff]
                  %380 = vst [vmem:[%s308 + $0xc0] sm:$0xff] %v379
                  %v381 = vld [vmem:[%s307 + $0xf0] sm:$0xff]
                  %382 = vst [vmem:[%s308 + $0xc0] sm:$0xff] %v381
                  %v383 = vld [vmem:[%s307 + $0xf8] sm:$0xff]
                  %384 = vst [vmem:[%s308 + $0xc8] sm:$0xff] %v383
                  %v385 = vld [vmem:[%s307 + $0x100] sm:$0xff]
                  %386 = vst [vmem:[%s308 + $0xd0] sm:$0xff] %v385
                  %v387 = vld [vmem:[%s307 + $0x104] sm:$0xff]
                  %388 = vst [vmem:[%s308 + $0xd0] sm:$0xff] %v387
                  %v389 = vld [vmem:[%s307 + $0x10c] sm:$0xff]
                  %390 = vst [vmem:[%s308 + $0xd8] sm:$0xff] %v389
                  %v391 = vld [vmem:[%s307 + $0x114] sm:$0xff]
                  %392 = vst [vmem:[%s308 + $0xe0] sm:$0xff] %v391
                  %v393 = vld [vmem:[%s307 + $0x118] sm:$0xff]
                  %394 = vst [vmem:[%s308 + $0xe0] sm:$0xff] %v393
                  %v395 = vld [vmem:[%s307 + $0x120] sm:$0xff]
                  %396 = vst [vmem:[%s308 + $0xe8] sm:$0xff] %v395
                  %v397 = vld [vmem:[%s307 + $0x128] sm:$0xff]
                  %398 = vst [vmem:[%s308 + $0xf0] sm:$0xff] %v397
                  %v399 = vld [vmem:[%s307 + $0x12c] sm:$0xff]
                  %400 = vst [vmem:[%s308 + $0xf0] sm:$0xff] %v399
                  %v401 = vld [vmem:[%s307 + $0x134] sm:$0xff]
                  %402 = vst [vmem:[%s308 + $0xf8] sm:$0xff] %v401
                  %v403 = vld [vmem:[%s307 + $0x13c] sm:$0xff]
                  %404 = vst [vmem:[%s308 + $0x100] sm:$0xff] %v403
                  %v405 = vld [vmem:[%s307 + $0x140] sm:$0xff]
                  %406 = vst [vmem:[%s308 + $0x100] sm:$0xff] %v405
                  %v407 = vld [vmem:[%s307 + $0x148] sm:$0xff]
                  %408 = vst [vmem:[%s308 + $0x108] sm:$0xff] %v407
                  %v409 = vld [vmem:[%s307 + $0x150] sm:$0xff]
                  %410 = vst [vmem:[%s308 + $0x110] sm:$0xff] %v409
                  %v411 = vld [vmem:[%s307 + $0x154] sm:$0xff]
                  %412 = vst [vmem:[%s308 + $0x110] sm:$0xff] %v411
                  %v413 = vld [vmem:[%s307 + $0x15c] sm:$0xff]
                  %414 = vst [vmem:[%s308 + $0x118] sm:$0xff] %v413
                  %v415 = vld [vmem:[%s307 + $0x164] sm:$0xff]
                  %416 = vst [vmem:[%s308 + $0x120] sm:$0xff] %v415
                  %v417 = vld [vmem:[%s307 + $0x168] sm:$0xff]
                  %418 = vst [vmem:[%s308 + $0x120] sm:$0xff] %v417
                  %v419 = vld [vmem:[%s307 + $0x170] sm:$0xff]
                  %420 = vst [vmem:[%s308 + $0x128] sm:$0xff] %v419
                  %v421 = vld [vmem:[%s307 + $0x178] sm:$0xff]
                  %422 = vst [vmem:[%s308 + $0x130] sm:$0xff] %v421
                  %v423 = vld [vmem:[%s307 + $0x17c] sm:$0xff]
                  %424 = vst [vmem:[%s308 + $0x130] sm:$0xff] %v423
                  %v425 = vld [vmem:[%s307 + $0x184] sm:$0xff]
                  %426 = vst [vmem:[%s308 + $0x138] sm:$0xff] %v425
                  %v427 = vld [vmem:[%s307 + $0x18c] sm:$0xff]
                  %428 = vst [vmem:[%s308 + $0x140] sm:$0xff] %v427
                  %v429 = vld [vmem:[%s307 + $0x190] sm:$0xff]
                  %430 = vst [vmem:[%s308 + $0x140] sm:$0xff] %v429
                  %v431 = vld [vmem:[%s307 + $0x198] sm:$0xff]
                  %432 = vst [vmem:[%s308 + $0x148] sm:$0xff] %v431
                  %v433 = vld [vmem:[%s307 + $0x1a0] sm:$0xff]
                  %434 = vst [vmem:[%s308 + $0x150] sm:$0xff] %v433
                  %v435 = vld [vmem:[%s307 + $0x1a4] sm:$0xff]
                  %436 = vst [vmem:[%s308 + $0x150] sm:$0xff] %v435
                  %v437 = vld [vmem:[%s307 + $0x1ac] sm:$0xff]
                  %438 = vst [vmem:[%s308 + $0x158] sm:$0xff] %v437
                  %v439 = vld [vmem:[%s307 + $0x1b4] sm:$0xff]
                  %440 = vst [vmem:[%s308 + $0x160] sm:$0xff] %v439
                  %v441 = vld [vmem:[%s307 + $0x1b8] sm:$0xff]
                  %442 = vst [vmem:[%s308 + $0x160] sm:$0xff] %v441
                  %v443 = vld [vmem:[%s307 + $0x1c0] sm:$0xff]
                  %444 = vst [vmem:[%s308 + $0x168] sm:$0xff] %v443
                  %v445 = vld [vmem:[%s307 + $0x1c8] sm:$0xff]
                  %446 = vst [vmem:[%s308 + $0x170] sm:$0xff] %v445
                  %v447 = vld [vmem:[%s307 + $0x1cc] sm:$0xff]
                  %448 = vst [vmem:[%s308 + $0x170] sm:$0xff] %v447
                  %v449 = vld [vmem:[%s307 + $0x1d4] sm:$0xff]
                  %450 = vst [vmem:[%s308 + $0x178] sm:$0xff] %v449
                  %v451 = vld [vmem:[%s307 + $0x1dc] sm:$0xff]
                  %452 = vst [vmem:[%s308 + $0x180] sm:$0xff] %v451
                  %s453 = sadd.s32 1, %s306
                  %p454 = scmp.ge.s32.totalorder %s453, %s296
                  %s455 = scalar_select %p454, 0, %s453
                  %s456 = smul.u32 %s455, 24
                  %s457 = smul.u32 %s455, 24
                  %s458 = scalar_lea.vmem %s220, %s456
                  %s459 = scalar_lea.vmem %s212, %s457 [#allocation3]
                $region60: #{st_llm_forward.17} parent=54 // loop_footer
                  %s303 = sadd.s32 %s301, 1
                $region61: #{st_llm_forward.17} parent=54 // loop_footer_branch
                  %300 = sbr.rel target = $region57
                $region62: #{st_llm_forward.17} parent=54 // loop_exit
                  _
                %s460 = sdiv.u32.pop %s295, 3
                %s461 = srem.u32.pop %s295, 3
                %s462 = smul.u32 %s460, 3
                %s463 = smul.u32 128, %s462
                %s464 = sshra.s32 %s463, 4
                %s465 = scalar_lea.vmem %s220, %s464
                %s466 = smul.u32 128, %s462
                %s467 = sshra.s32 %s466, 4
                %s468 = scalar_lea.vmem %s212, %s467 [#allocation3]
                // While loop
                $region63: #{st_llm_forward.17} parent=54 // loop_pre_header
                  _
                $region64: #{st_llm_forward.17} parent=54 // loop_header
                  %s472 = sphi 0, %s474
                  %p473 = scmp.ge.s32.totalorder %s472, %s461
                  %s477 = sphi 0, %s530
                  %s478 = sphi %s465, %s533
                  %s479 = sphi %s468, %s534
                $region65: #{st_llm_forward.17} parent=54 // loop_header_branch
                  %476 = sbr.rel (%p473) target = $region69
                $region66: #{st_llm_forward.17} parent=54 // loop_body
                  %v480 = vld [vmem:[%s478] sm:$0xff]
                  %481 = vst [vmem:[%s479] sm:$0xff] %v480
                  %v482 = vld [vmem:[%s478 + $0x14] sm:$0xff]
                  %483 = vst [vmem:[%s479 + $0x10] sm:$0xff] %v482
                  %v484 = vld [vmem:[%s478 + $0x28] sm:$0xff]
                  %485 = vst [vmem:[%s479 + $0x20] sm:$0xff] %v484
                  %v486 = vld [vmem:[%s478 + $0x3c] sm:$0xff]
                  %487 = vst [vmem:[%s479 + $0x30] sm:$0xff] %v486
                  %v488 = vld [vmem:[%s478 + $0x50] sm:$0xff]
                  %489 = vst [vmem:[%s479 + $0x40] sm:$0xff] %v488
                  %v490 = vld [vmem:[%s478 + $0x64] sm:$0xff]
                  %491 = vst [vmem:[%s479 + $0x50] sm:$0xff] %v490
                  %v492 = vld [vmem:[%s478 + $0x78] sm:$0xff]
                  %493 = vst [vmem:[%s479 + $0x60] sm:$0xff] %v492
                  %v494 = vld [vmem:[%s478 + $0x8c] sm:$0xff]
                  %495 = vst [vmem:[%s479 + $0x70] sm:$0xff] %v494
                  %v496 = vld [vmem:[%s478 + $0xa0] sm:$0xff]
                  %497 = vst [vmem:[%s479 + $0x80] sm:$0xff] %v496
                  %v498 = vld [vmem:[%s478 + $0xb4] sm:$0xff]
                  %499 = vst [vmem:[%s479 + $0x90] sm:$0xff] %v498
                  %v500 = vld [vmem:[%s478 + $0xc8] sm:$0xff]
                  %501 = vst [vmem:[%s479 + $0xa0] sm:$0xff] %v500
                  %v502 = vld [vmem:[%s478 + $0xdc] sm:$0xff]
                  %503 = vst [vmem:[%s479 + $0xb0] sm:$0xff] %v502
                  %v504 = vld [vmem:[%s478 + $0xf0] sm:$0xff]
                  %505 = vst [vmem:[%s479 + $0xc0] sm:$0xff] %v504
                  %v506 = vld [vmem:[%s478 + $0x104] sm:$0xff]
                  %507 = vst [vmem:[%s479 + $0xd0] sm:$0xff] %v506
                  %v508 = vld [vmem:[%s478 + $0x118] sm:$0xff]
                  %509 = vst [vmem:[%s479 + $0xe0] sm:$0xff] %v508
                  %v510 = vld [vmem:[%s478 + $0x12c] sm:$0xff]
                  %511 = vst [vmem:[%s479 + $0xf0] sm:$0xff] %v510
                  %v512 = vld [vmem:[%s478 + $0x140] sm:$0xff]
                  %513 = vst [vmem:[%s479 + $0x100] sm:$0xff] %v512
                  %v514 = vld [vmem:[%s478 + $0x154] sm:$0xff]
                  %515 = vst [vmem:[%s479 + $0x110] sm:$0xff] %v514
                  %v516 = vld [vmem:[%s478 + $0x168] sm:$0xff]
                  %517 = vst [vmem:[%s479 + $0x120] sm:$0xff] %v516
                  %v518 = vld [vmem:[%s478 + $0x17c] sm:$0xff]
                  %519 = vst [vmem:[%s479 + $0x130] sm:$0xff] %v518
                  %v520 = vld [vmem:[%s478 + $0x190] sm:$0xff]
                  %521 = vst [vmem:[%s479 + $0x140] sm:$0xff] %v520
                  %v522 = vld [vmem:[%s478 + $0x1a4] sm:$0xff]
                  %523 = vst [vmem:[%s479 + $0x150] sm:$0xff] %v522
                  %v524 = vld [vmem:[%s478 + $0x1b8] sm:$0xff]
                  %525 = vst [vmem:[%s479 + $0x160] sm:$0xff] %v524
                  %v526 = vld [vmem:[%s478 + $0x1cc] sm:$0xff]
                  %527 = vst [vmem:[%s479 + $0x170] sm:$0xff] %v526
                  %s528 = sadd.s32 1, %s477
                  %p529 = scmp.ge.s32.totalorder %s528, %s461
                  %s530 = scalar_select %p529, 0, %s528
                  %s531 = smul.u32 %s530, 8
                  %s532 = smul.u32 %s530, 8
                  %s533 = scalar_lea.vmem %s465, %s531
                  %s534 = scalar_lea.vmem %s468, %s532 [#allocation3]
                $region67: #{st_llm_forward.17} parent=54 // loop_footer
                  %s474 = sadd.s32 %s472, 1
                $region68: #{st_llm_forward.17} parent=54 // loop_footer_branch
                  %471 = sbr.rel target = $region64
                $region69: #{st_llm_forward.17} parent=54 // loop_exit
                  _
              $region55: #{st_llm_forward.17} parent=39 // pred_fallthru
                _
              %p535 = pneg %p291
              // Predicated region
              $region70: #{st_llm_forward.17} parent=39 // pred_check
                _
              $region71: #{st_llm_forward.17} parent=39 // pred_check_branch
                %537 = sbr.rel (%p291) target = $region73
              $region72: #{st_llm_forward.17} parent=39 // pred_region
                %s538 = sand.u32 %s221, 7
                %s539 = ssub.s32 %s221, %s538
                %s540 = scalar_lea.vmem %s220, %s539
                %s541 = ssub.s32 %s221, %s538
                %s542 = scalar_lea.vmem %s212, %s541 [#allocation3]
                %s543 = sshrl.u32 %s221, 3
                %s544 = sdiv.u32.pop %s543, 3
                %s545 = srem.u32.pop %s543, 3
                // While loop
                $region74: #{st_llm_forward.17} parent=72 // loop_pre_header
                  _
                $region75: #{st_llm_forward.17} parent=72 // loop_header
                  %s549 = sphi 0, %s551
                  %p550 = scmp.ge.s32.totalorder %s549, %s544
                  %s554 = sphi 0, %s703
                  %s555 = sphi %s220, %s706
                  %s556 = sphi %s212, %s707
                $region76: #{st_llm_forward.17} parent=72 // loop_header_branch
                  %553 = sbr.rel (%p550) target = $region80
                $region77: #{st_llm_forward.17} parent=72 // loop_body
                  %v557 = vld [vmem:[%s555] sm:$0xff]
                  %558 = vst [vmem:[%s556] sm:$0xff] %v557
                  %v559 = vld [vmem:[%s555 + $0x8] sm:$0xff]
                  %560 = vst [vmem:[%s556 + $0x8] sm:$0xff] %v559
                  %v561 = vld [vmem:[%s555 + $0x10] sm:$0xff]
                  %562 = vst [vmem:[%s556 + $0x10] sm:$0xff] %v561
                  %v563 = vld [vmem:[%s555 + $0x14] sm:$0xff]
                  %564 = vst [vmem:[%s556 + $0x10] sm:$0xff] %v563
                  %v565 = vld [vmem:[%s555 + $0x1c] sm:$0xff]
                  %566 = vst [vmem:[%s556 + $0x18] sm:$0xff] %v565
                  %v567 = vld [vmem:[%s555 + $0x24] sm:$0xff]
                  %568 = vst [vmem:[%s556 + $0x20] sm:$0xff] %v567
                  %v569 = vld [vmem:[%s555 + $0x28] sm:$0xff]
                  %570 = vst [vmem:[%s556 + $0x20] sm:$0xff] %v569
                  %v571 = vld [vmem:[%s555 + $0x30] sm:$0xff]
                  %572 = vst [vmem:[%s556 + $0x28] sm:$0xff] %v571
                  %v573 = vld [vmem:[%s555 + $0x38] sm:$0xff]
                  %574 = vst [vmem:[%s556 + $0x30] sm:$0xff] %v573
                  %v575 = vld [vmem:[%s555 + $0x3c] sm:$0xff]
                  %576 = vst [vmem:[%s556 + $0x30] sm:$0xff] %v575
                  %v577 = vld [vmem:[%s555 + $0x44] sm:$0xff]
                  %578 = vst [vmem:[%s556 + $0x38] sm:$0xff] %v577
                  %v579 = vld [vmem:[%s555 + $0x4c] sm:$0xff]
                  %580 = vst [vmem:[%s556 + $0x40] sm:$0xff] %v579
                  %v581 = vld [vmem:[%s555 + $0x50] sm:$0xff]
                  %582 = vst [vmem:[%s556 + $0x40] sm:$0xff] %v581
                  %v583 = vld [vmem:[%s555 + $0x58] sm:$0xff]
                  %584 = vst [vmem:[%s556 + $0x48] sm:$0xff] %v583
                  %v585 = vld [vmem:[%s555 + $0x60] sm:$0xff]
                  %586 = vst [vmem:[%s556 + $0x50] sm:$0xff] %v585
                  %v587 = vld [vmem:[%s555 + $0x64] sm:$0xff]
                  %588 = vst [vmem:[%s556 + $0x50] sm:$0xff] %v587
                  %v589 = vld [vmem:[%s555 + $0x6c] sm:$0xff]
                  %590 = vst [vmem:[%s556 + $0x58] sm:$0xff] %v589
                  %v591 = vld [vmem:[%s555 + $0x74] sm:$0xff]
                  %592 = vst [vmem:[%s556 + $0x60] sm:$0xff] %v591
                  %v593 = vld [vmem:[%s555 + $0x78] sm:$0xff]
                  %594 = vst [vmem:[%s556 + $0x60] sm:$0xff] %v593
                  %v595 = vld [vmem:[%s555 + $0x80] sm:$0xff]
                  %596 = vst [vmem:[%s556 + $0x68] sm:$0xff] %v595
                  %v597 = vld [vmem:[%s555 + $0x88] sm:$0xff]
                  %598 = vst [vmem:[%s556 + $0x70] sm:$0xff] %v597
                  %v599 = vld [vmem:[%s555 + $0x8c] sm:$0xff]
                  %600 = vst [vmem:[%s556 + $0x70] sm:$0xff] %v599
                  %v601 = vld [vmem:[%s555 + $0x94] sm:$0xff]
                  %602 = vst [vmem:[%s556 + $0x78] sm:$0xff] %v601
                  %v603 = vld [vmem:[%s555 + $0x9c] sm:$0xff]
                  %604 = vst [vmem:[%s556 + $0x80] sm:$0xff] %v603
                  %v605 = vld [vmem:[%s555 + $0xa0] sm:$0xff]
                  %606 = vst [vmem:[%s556 + $0x80] sm:$0xff] %v605
                  %v607 = vld [vmem:[%s555 + $0xa8] sm:$0xff]
                  %608 = vst [vmem:[%s556 + $0x88] sm:$0xff] %v607
                  %v609 = vld [vmem:[%s555 + $0xb0] sm:$0xff]
                  %610 = vst [vmem:[%s556 + $0x90] sm:$0xff] %v609
                  %v611 = vld [vmem:[%s555 + $0xb4] sm:$0xff]
                  %612 = vst [vmem:[%s556 + $0x90] sm:$0xff] %v611
                  %v613 = vld [vmem:[%s555 + $0xbc] sm:$0xff]
                  %614 = vst [vmem:[%s556 + $0x98] sm:$0xff] %v613
                  %v615 = vld [vmem:[%s555 + $0xc4] sm:$0xff]
                  %616 = vst [vmem:[%s556 + $0xa0] sm:$0xff] %v615
                  %v617 = vld [vmem:[%s555 + $0xc8] sm:$0xff]
                  %618 = vst [vmem:[%s556 + $0xa0] sm:$0xff] %v617
                  %v619 = vld [vmem:[%s555 + $0xd0] sm:$0xff]
                  %620 = vst [vmem:[%s556 + $0xa8] sm:$0xff] %v619
                  %v621 = vld [vmem:[%s555 + $0xd8] sm:$0xff]
                  %622 = vst [vmem:[%s556 + $0xb0] sm:$0xff] %v621
                  %v623 = vld [vmem:[%s555 + $0xdc] sm:$0xff]
                  %624 = vst [vmem:[%s556 + $0xb0] sm:$0xff] %v623
                  %v625 = vld [vmem:[%s555 + $0xe4] sm:$0xff]
                  %626 = vst [vmem:[%s556 + $0xb8] sm:$0xff] %v625
                  %v627 = vld [vmem:[%s555 + $0xec] sm:$0xff]
                  %628 = vst [vmem:[%s556 + $0xc0] sm:$0xff] %v627
                  %v629 = vld [vmem:[%s555 + $0xf0] sm:$0xff]
                  %630 = vst [vmem:[%s556 + $0xc0] sm:$0xff] %v629
                  %v631 = vld [vmem:[%s555 + $0xf8] sm:$0xff]
                  %632 = vst [vmem:[%s556 + $0xc8] sm:$0xff] %v631
                  %v633 = vld [vmem:[%s555 + $0x100] sm:$0xff]
                  %634 = vst [vmem:[%s556 + $0xd0] sm:$0xff] %v633
                  %v635 = vld [vmem:[%s555 + $0x104] sm:$0xff]
                  %636 = vst [vmem:[%s556 + $0xd0] sm:$0xff] %v635
                  %v637 = vld [vmem:[%s555 + $0x10c] sm:$0xff]
                  %638 = vst [vmem:[%s556 + $0xd8] sm:$0xff] %v637
                  %v639 = vld [vmem:[%s555 + $0x114] sm:$0xff]
                  %640 = vst [vmem:[%s556 + $0xe0] sm:$0xff] %v639
                  %v641 = vld [vmem:[%s555 + $0x118] sm:$0xff]
                  %642 = vst [vmem:[%s556 + $0xe0] sm:$0xff] %v641
                  %v643 = vld [vmem:[%s555 + $0x120] sm:$0xff]
                  %644 = vst [vmem:[%s556 + $0xe8] sm:$0xff] %v643
                  %v645 = vld [vmem:[%s555 + $0x128] sm:$0xff]
                  %646 = vst [vmem:[%s556 + $0xf0] sm:$0xff] %v645
                  %v647 = vld [vmem:[%s555 + $0x12c] sm:$0xff]
                  %648 = vst [vmem:[%s556 + $0xf0] sm:$0xff] %v647
                  %v649 = vld [vmem:[%s555 + $0x134] sm:$0xff]
                  %650 = vst [vmem:[%s556 + $0xf8] sm:$0xff] %v649
                  %v651 = vld [vmem:[%s555 + $0x13c] sm:$0xff]
                  %652 = vst [vmem:[%s556 + $0x100] sm:$0xff] %v651
                  %v653 = vld [vmem:[%s555 + $0x140] sm:$0xff]
                  %654 = vst [vmem:[%s556 + $0x100] sm:$0xff] %v653
                  %v655 = vld [vmem:[%s555 + $0x148] sm:$0xff]
                  %656 = vst [vmem:[%s556 + $0x108] sm:$0xff] %v655
                  %v657 = vld [vmem:[%s555 + $0x150] sm:$0xff]
                  %658 = vst [vmem:[%s556 + $0x110] sm:$0xff] %v657
                  %v659 = vld [vmem:[%s555 + $0x154] sm:$0xff]
                  %660 = vst [vmem:[%s556 + $0x110] sm:$0xff] %v659
                  %v661 = vld [vmem:[%s555 + $0x15c] sm:$0xff]
                  %662 = vst [vmem:[%s556 + $0x118] sm:$0xff] %v661
                  %v663 = vld [vmem:[%s555 + $0x164] sm:$0xff]
                  %664 = vst [vmem:[%s556 + $0x120] sm:$0xff] %v663
                  %v665 = vld [vmem:[%s555 + $0x168] sm:$0xff]
                  %666 = vst [vmem:[%s556 + $0x120] sm:$0xff] %v665
                  %v667 = vld [vmem:[%s555 + $0x170] sm:$0xff]
                  %668 = vst [vmem:[%s556 + $0x128] sm:$0xff] %v667
                  %v669 = vld [vmem:[%s555 + $0x178] sm:$0xff]
                  %670 = vst [vmem:[%s556 + $0x130] sm:$0xff] %v669
                  %v671 = vld [vmem:[%s555 + $0x17c] sm:$0xff]
                  %672 = vst [vmem:[%s556 + $0x130] sm:$0xff] %v671
                  %v673 = vld [vmem:[%s555 + $0x184] sm:$0xff]
                  %674 = vst [vmem:[%s556 + $0x138] sm:$0xff] %v673
                  %v675 = vld [vmem:[%s555 + $0x18c] sm:$0xff]
                  %676 = vst [vmem:[%s556 + $0x140] sm:$0xff] %v675
                  %v677 = vld [vmem:[%s555 + $0x190] sm:$0xff]
                  %678 = vst [vmem:[%s556 + $0x140] sm:$0xff] %v677
                  %v679 = vld [vmem:[%s555 + $0x198] sm:$0xff]
                  %680 = vst [vmem:[%s556 + $0x148] sm:$0xff] %v679
                  %v681 = vld [vmem:[%s555 + $0x1a0] sm:$0xff]
                  %682 = vst [vmem:[%s556 + $0x150] sm:$0xff] %v681
                  %v683 = vld [vmem:[%s555 + $0x1a4] sm:$0xff]
                  %684 = vst [vmem:[%s556 + $0x150] sm:$0xff] %v683
                  %v685 = vld [vmem:[%s555 + $0x1ac] sm:$0xff]
                  %686 = vst [vmem:[%s556 + $0x158] sm:$0xff] %v685
                  %v687 = vld [vmem:[%s555 + $0x1b4] sm:$0xff]
                  %688 = vst [vmem:[%s556 + $0x160] sm:$0xff] %v687
                  %v689 = vld [vmem:[%s555 + $0x1b8] sm:$0xff]
                  %690 = vst [vmem:[%s556 + $0x160] sm:$0xff] %v689
                  %v691 = vld [vmem:[%s555 + $0x1c0] sm:$0xff]
                  %692 = vst [vmem:[%s556 + $0x168] sm:$0xff] %v691
                  %v693 = vld [vmem:[%s555 + $0x1c8] sm:$0xff]
                  %694 = vst [vmem:[%s556 + $0x170] sm:$0xff] %v693
                  %v695 = vld [vmem:[%s555 + $0x1cc] sm:$0xff]
                  %696 = vst [vmem:[%s556 + $0x170] sm:$0xff] %v695
                  %v697 = vld [vmem:[%s555 + $0x1d4] sm:$0xff]
                  %698 = vst [vmem:[%s556 + $0x178] sm:$0xff] %v697
                  %v699 = vld [vmem:[%s555 + $0x1dc] sm:$0xff]
                  %700 = vst [vmem:[%s556 + $0x180] sm:$0xff] %v699
                  %s701 = sadd.s32 1, %s554
                  %p702 = scmp.ge.s32.totalorder %s701, %s544
                  %s703 = scalar_select %p702, 0, %s701
                  %s704 = smul.u32 %s703, 24
                  %s705 = smul.u32 %s703, 24
                  %s706 = scalar_lea.vmem %s220, %s704
                  %s707 = scalar_lea.vmem %s212, %s705 [#allocation3]
                $region78: #{st_llm_forward.17} parent=72 // loop_footer
                  %s551 = sadd.s32 %s549, 1
                $region79: #{st_llm_forward.17} parent=72 // loop_footer_branch
                  %548 = sbr.rel target = $region75
                $region80: #{st_llm_forward.17} parent=72 // loop_exit
                  _
                %s708 = sdiv.u32.pop %s543, 3
                %s709 = srem.u32.pop %s543, 3
                %s710 = smul.u32 %s708, 3
                %s711 = smul.u32 128, %s710
                %s712 = sshra.s32 %s711, 4
                %s713 = scalar_lea.vmem %s220, %s712
                %s714 = smul.u32 128, %s710
                %s715 = sshra.s32 %s714, 4
                %s716 = scalar_lea.vmem %s212, %s715 [#allocation3]
                // While loop
                $region81: #{st_llm_forward.17} parent=72 // loop_pre_header
                  _
                $region82: #{st_llm_forward.17} parent=72 // loop_header
                  %s720 = sphi 0, %s722
                  %p721 = scmp.ge.s32.totalorder %s720, %s709
                  %s725 = sphi 0, %s778
                  %s726 = sphi %s713, %s781
                  %s727 = sphi %s716, %s782
                $region83: #{st_llm_forward.17} parent=72 // loop_header_branch
                  %724 = sbr.rel (%p721) target = $region87
                $region84: #{st_llm_forward.17} parent=72 // loop_body
                  %v728 = vld [vmem:[%s726] sm:$0xff]
                  %729 = vst [vmem:[%s727] sm:$0xff] %v728
                  %v730 = vld [vmem:[%s726 + $0x14] sm:$0xff]
                  %731 = vst [vmem:[%s727 + $0x10] sm:$0xff] %v730
                  %v732 = vld [vmem:[%s726 + $0x28] sm:$0xff]
                  %733 = vst [vmem:[%s727 + $0x20] sm:$0xff] %v732
                  %v734 = vld [vmem:[%s726 + $0x3c] sm:$0xff]
                  %735 = vst [vmem:[%s727 + $0x30] sm:$0xff] %v734
                  %v736 = vld [vmem:[%s726 + $0x50] sm:$0xff]
                  %737 = vst [vmem:[%s727 + $0x40] sm:$0xff] %v736
                  %v738 = vld [vmem:[%s726 + $0x64] sm:$0xff]
                  %739 = vst [vmem:[%s727 + $0x50] sm:$0xff] %v738
                  %v740 = vld [vmem:[%s726 + $0x78] sm:$0xff]
                  %741 = vst [vmem:[%s727 + $0x60] sm:$0xff] %v740
                  %v742 = vld [vmem:[%s726 + $0x8c] sm:$0xff]
                  %743 = vst [vmem:[%s727 + $0x70] sm:$0xff] %v742
                  %v744 = vld [vmem:[%s726 + $0xa0] sm:$0xff]
                  %745 = vst [vmem:[%s727 + $0x80] sm:$0xff] %v744
                  %v746 = vld [vmem:[%s726 + $0xb4] sm:$0xff]
                  %747 = vst [vmem:[%s727 + $0x90] sm:$0xff] %v746
                  %v748 = vld [vmem:[%s726 + $0xc8] sm:$0xff]
                  %749 = vst [vmem:[%s727 + $0xa0] sm:$0xff] %v748
                  %v750 = vld [vmem:[%s726 + $0xdc] sm:$0xff]
                  %751 = vst [vmem:[%s727 + $0xb0] sm:$0xff] %v750
                  %v752 = vld [vmem:[%s726 + $0xf0] sm:$0xff]
                  %753 = vst [vmem:[%s727 + $0xc0] sm:$0xff] %v752
                  %v754 = vld [vmem:[%s726 + $0x104] sm:$0xff]
                  %755 = vst [vmem:[%s727 + $0xd0] sm:$0xff] %v754
                  %v756 = vld [vmem:[%s726 + $0x118] sm:$0xff]
                  %757 = vst [vmem:[%s727 + $0xe0] sm:$0xff] %v756
                  %v758 = vld [vmem:[%s726 + $0x12c] sm:$0xff]
                  %759 = vst [vmem:[%s727 + $0xf0] sm:$0xff] %v758
                  %v760 = vld [vmem:[%s726 + $0x140] sm:$0xff]
                  %761 = vst [vmem:[%s727 + $0x100] sm:$0xff] %v760
                  %v762 = vld [vmem:[%s726 + $0x154] sm:$0xff]
                  %763 = vst [vmem:[%s727 + $0x110] sm:$0xff] %v762
                  %v764 = vld [vmem:[%s726 + $0x168] sm:$0xff]
                  %765 = vst [vmem:[%s727 + $0x120] sm:$0xff] %v764
                  %v766 = vld [vmem:[%s726 + $0x17c] sm:$0xff]
                  %767 = vst [vmem:[%s727 + $0x130] sm:$0xff] %v766
                  %v768 = vld [vmem:[%s726 + $0x190] sm:$0xff]
                  %769 = vst [vmem:[%s727 + $0x140] sm:$0xff] %v768
                  %v770 = vld [vmem:[%s726 + $0x1a4] sm:$0xff]
                  %771 = vst [vmem:[%s727 + $0x150] sm:$0xff] %v770
                  %v772 = vld [vmem:[%s726 + $0x1b8] sm:$0xff]
                  %773 = vst [vmem:[%s727 + $0x160] sm:$0xff] %v772
                  %v774 = vld [vmem:[%s726 + $0x1cc] sm:$0xff]
                  %775 = vst [vmem:[%s727 + $0x170] sm:$0xff] %v774
                  %s776 = sadd.s32 1, %s725
                  %p777 = scmp.ge.s32.totalorder %s776, %s709
                  %s778 = scalar_select %p777, 0, %s776
                  %s779 = smul.u32 %s778, 8
                  %s780 = smul.u32 %s778, 8
                  %s781 = scalar_lea.vmem %s713, %s779
                  %s782 = scalar_lea.vmem %s716, %s780 [#allocation3]
                $region85: #{st_llm_forward.17} parent=72 // loop_footer
                  %s722 = sadd.s32 %s720, 1
                $region86: #{st_llm_forward.17} parent=72 // loop_footer_branch
                  %719 = sbr.rel target = $region82
                $region87: #{st_llm_forward.17} parent=72 // loop_exit
                  _
                %s783 = sshll.u32 1, %s538
                %s784 = ssub.s32 %s783, 1
                loop: start=0, step=1, limit=1
                $region88: #{st_llm_forward.17} parent=72 // loop_pre_header
                  _
                $region89: #{st_llm_forward.17} parent=72 // loop_header
                  %s786 = sphi 0, %s790
                  %p787 = scmp.ge.s32.totalorder %s786, 1
                  %s791 = sphi %s540, %s540
                  %s792 = sphi %s542, %s542
                $region90: #{st_llm_forward.17} parent=72 // loop_header_branch
                  %789 = sbr.rel (%p787) target = $region94
                $region91: #{st_llm_forward.17} parent=72 // loop_body
                  %v793 = vld [vmem:[%s791] sm:%s784]
                  %794 = vst [vmem:[%s792] sm:%s784] %v793
                  %v795 = vld [vmem:[%s791 + $0x14] sm:%s784]
                  %796 = vst [vmem:[%s792 + $0x10] sm:%s784] %v795
                  %v797 = vld [vmem:[%s791 + $0x28] sm:%s784]
                  %798 = vst [vmem:[%s792 + $0x20] sm:%s784] %v797
                  %v799 = vld [vmem:[%s791 + $0x3c] sm:%s784]
                  %800 = vst [vmem:[%s792 + $0x30] sm:%s784] %v799
                  %v801 = vld [vmem:[%s791 + $0x50] sm:%s784]
                  %802 = vst [vmem:[%s792 + $0x40] sm:%s784] %v801
                  %v803 = vld [vmem:[%s791 + $0x64] sm:%s784]
                  %804 = vst [vmem:[%s792 + $0x50] sm:%s784] %v803
                  %v805 = vld [vmem:[%s791 + $0x78] sm:%s784]
                  %806 = vst [vmem:[%s792 + $0x60] sm:%s784] %v805
                  %v807 = vld [vmem:[%s791 + $0x8c] sm:%s784]
                  %808 = vst [vmem:[%s792 + $0x70] sm:%s784] %v807
                  %v809 = vld [vmem:[%s791 + $0xa0] sm:%s784]
                  %810 = vst [vmem:[%s792 + $0x80] sm:%s784] %v809
                  %v811 = vld [vmem:[%s791 + $0xb4] sm:%s784]
                  %812 = vst [vmem:[%s792 + $0x90] sm:%s784] %v811
                  %v813 = vld [vmem:[%s791 + $0xc8] sm:%s784]
                  %814 = vst [vmem:[%s792 + $0xa0] sm:%s784] %v813
                  %v815 = vld [vmem:[%s791 + $0xdc] sm:%s784]
                  %816 = vst [vmem:[%s792 + $0xb0] sm:%s784] %v815
                  %v817 = vld [vmem:[%s791 + $0xf0] sm:%s784]
                  %818 = vst [vmem:[%s792 + $0xc0] sm:%s784] %v817
                  %v819 = vld [vmem:[%s791 + $0x104] sm:%s784]
                  %820 = vst [vmem:[%s792 + $0xd0] sm:%s784] %v819
                  %v821 = vld [vmem:[%s791 + $0x118] sm:%s784]
                  %822 = vst [vmem:[%s792 + $0xe0] sm:%s784] %v821
                  %v823 = vld [vmem:[%s791 + $0x12c] sm:%s784]
                  %824 = vst [vmem:[%s792 + $0xf0] sm:%s784] %v823
                  %v825 = vld [vmem:[%s791 + $0x140] sm:%s784]
                  %826 = vst [vmem:[%s792 + $0x100] sm:%s784] %v825
                  %v827 = vld [vmem:[%s791 + $0x154] sm:%s784]
                  %828 = vst [vmem:[%s792 + $0x110] sm:%s784] %v827
                  %v829 = vld [vmem:[%s791 + $0x168] sm:%s784]
                  %830 = vst [vmem:[%s792 + $0x120] sm:%s784] %v829
                  %v831 = vld [vmem:[%s791 + $0x17c] sm:%s784]
                  %832 = vst [vmem:[%s792 + $0x130] sm:%s784] %v831
                  %v833 = vld [vmem:[%s791 + $0x190] sm:%s784]
                  %834 = vst [vmem:[%s792 + $0x140] sm:%s784] %v833
                  %v835 = vld [vmem:[%s791 + $0x1a4] sm:%s784]
                  %836 = vst [vmem:[%s792 + $0x150] sm:%s784] %v835
                  %v837 = vld [vmem:[%s791 + $0x1b8] sm:%s784]
                  %838 = vst [vmem:[%s792 + $0x160] sm:%s784] %v837
                  %v839 = vld [vmem:[%s791 + $0x1cc] sm:%s784]
                  %840 = vst [vmem:[%s792 + $0x170] sm:%s784] %v839
                $region92: #{st_llm_forward.17} parent=72 // loop_footer
                  %s790 = sadd.s32 1, %s786
                $region93: #{st_llm_forward.17} parent=72 // loop_footer_branch
                  %785 = sbr.rel target = $region89
                $region94: #{st_llm_forward.17} parent=72 // loop_exit
                  _
              $region73: #{st_llm_forward.17} parent=39 // pred_fallthru
                _
            $region40: #{st_llm_forward.17} parent=35 // pred_fallthru
              _
            // Predicated region
            $region41: #{st_llm_forward.17} parent=35 // pred_check
              %p229 = pneg %p225
            $region42: #{st_llm_forward.17} parent=35 // pred_check_branch
              %231 = sbr.rel (%p229) target = $region44
            $region43: #{st_llm_forward.17} parent=35 // pred_region
              %s232 = sshll.u32 1, %s221
              %s233 = ssub.s32 %s232, 1
              loop: start=0, step=1, limit=1
              $region45: #{st_llm_forward.17} parent=43 // loop_pre_header
                _
              $region46: #{st_llm_forward.17} parent=43 // loop_header
                %s235 = sphi 0, %s239
                %p236 = scmp.ge.s32.totalorder %s235, 1
                %s240 = sphi %s220, %s220
                %s241 = sphi %s212, %s212
              $region47: #{st_llm_forward.17} parent=43 // loop_header_branch
                %238 = sbr.rel (%p236) target = $region51
              $region48: #{st_llm_forward.17} parent=43 // loop_body
                %v242 = vld [vmem:[%s240] sm:%s233]
                %243 = vst [vmem:[%s241] sm:%s233] %v242
                %v244 = vld [vmem:[%s240 + $0x14] sm:%s233]
                %245 = vst [vmem:[%s241 + $0x10] sm:%s233] %v244
                %v246 = vld [vmem:[%s240 + $0x28] sm:%s233]
                %247 = vst [vmem:[%s241 + $0x20] sm:%s233] %v246
                %v248 = vld [vmem:[%s240 + $0x3c] sm:%s233]
                %249 = vst [vmem:[%s241 + $0x30] sm:%s233] %v248
                %v250 = vld [vmem:[%s240 + $0x50] sm:%s233]
                %251 = vst [vmem:[%s241 + $0x40] sm:%s233] %v250
                %v252 = vld [vmem:[%s240 + $0x64] sm:%s233]
                %253 = vst [vmem:[%s241 + $0x50] sm:%s233] %v252
                %v254 = vld [vmem:[%s240 + $0x78] sm:%s233]
                %255 = vst [vmem:[%s241 + $0x60] sm:%s233] %v254
                %v256 = vld [vmem:[%s240 + $0x8c] sm:%s233]
                %257 = vst [vmem:[%s241 + $0x70] sm:%s233] %v256
                %v258 = vld [vmem:[%s240 + $0xa0] sm:%s233]
                %259 = vst [vmem:[%s241 + $0x80] sm:%s233] %v258
                %v260 = vld [vmem:[%s240 + $0xb4] sm:%s233]
                %261 = vst [vmem:[%s241 + $0x90] sm:%s233] %v260
                %v262 = vld [vmem:[%s240 + $0xc8] sm:%s233]
                %263 = vst [vmem:[%s241 + $0xa0] sm:%s233] %v262
                %v264 = vld [vmem:[%s240 + $0xdc] sm:%s233]
                %265 = vst [vmem:[%s241 + $0xb0] sm:%s233] %v264
                %v266 = vld [vmem:[%s240 + $0xf0] sm:%s233]
                %267 = vst [vmem:[%s241 + $0xc0] sm:%s233] %v266
                %v268 = vld [vmem:[%s240 + $0x104] sm:%s233]
                %269 = vst [vmem:[%s241 + $0xd0] sm:%s233] %v268
                %v270 = vld [vmem:[%s240 + $0x118] sm:%s233]
                %271 = vst [vmem:[%s241 + $0xe0] sm:%s233] %v270
                %v272 = vld [vmem:[%s240 + $0x12c] sm:%s233]
                %273 = vst [vmem:[%s241 + $0xf0] sm:%s233] %v272
                %v274 = vld [vmem:[%s240 + $0x140] sm:%s233]
                %275 = vst [vmem:[%s241 + $0x100] sm:%s233] %v274
                %v276 = vld [vmem:[%s240 + $0x154] sm:%s233]
                %277 = vst [vmem:[%s241 + $0x110] sm:%s233] %v276
                %v278 = vld [vmem:[%s240 + $0x168] sm:%s233]
                %279 = vst [vmem:[%s241 + $0x120] sm:%s233] %v278
                %v280 = vld [vmem:[%s240 + $0x17c] sm:%s233]
                %281 = vst [vmem:[%s241 + $0x130] sm:%s233] %v280
                %v282 = vld [vmem:[%s240 + $0x190] sm:%s233]
                %283 = vst [vmem:[%s241 + $0x140] sm:%s233] %v282
                %v284 = vld [vmem:[%s240 + $0x1a4] sm:%s233]
                %285 = vst [vmem:[%s241 + $0x150] sm:%s233] %v284
                %v286 = vld [vmem:[%s240 + $0x1b8] sm:%s233]
                %287 = vst [vmem:[%s241 + $0x160] sm:%s233] %v286
                %v288 = vld [vmem:[%s240 + $0x1cc] sm:%s233]
                %289 = vst [vmem:[%s241 + $0x170] sm:%s233] %v288
              $region49: #{st_llm_forward.17} parent=43 // loop_footer
                %s239 = sadd.s32 1, %s235
              $region50: #{st_llm_forward.17} parent=43 // loop_footer_branch
                %234 = sbr.rel target = $region46
              $region51: #{st_llm_forward.17} parent=43 // loop_exit
                _
            $region44: #{st_llm_forward.17} parent=35 // pred_fallthru
              _
          $region36: #{st_llm_forward.17} parent=31 // pred_fallthru
            _
          %841 = vnop
        $region32: #{st_llm_forward.17} parent=27 // pred_fallthru
          _
        // Predicated region
        $region95: #{st_llm_forward.17} parent=27 // pred_check
          %p842 = pneg %p95
        $region96: #{st_llm_forward.17} parent=27 // pred_check_branch
          %844 = sbr.rel (%p842) target = $region98
        $region97: #{st_llm_forward.17} parent=27 // pred_region
          %s845 = smul.u32 4, %s19
          %s846 = ssub.s32 5, %s845
          %p847 = scmp.lt.s32.totalorder %s846, 4
          %s848 = scalar_select %p847, %s846, 4
          %s849 = smul.u32 16, %s848
          %p850 = scmp.lt.s32.totalorder %s845, 4
          %s851 = scalar_select %p850, %s845, 4
          %s852 = scalar_lea.vmem %s2, %s851
          %s853 = smul.u32 4, %s19
          %s854 = ssub.s32 5, %s853
          %p855 = scmp.lt.s32.totalorder %s854, 4
          %s856 = scalar_select %p855, %s854, 4
          %s857 = smul.u32 16, %s856
        $region98: #{st_llm_forward.17} parent=27 // pred_fallthru
          _
      $region28: #{st_llm_forward.17} parent=5 // pred_fallthru
        _
      %p858 = scmp.le.s32.totalorder 1, %s11
      %p859 = scmp.lt.s32.totalorder %s11, 3
      %p860 = pnand %p858, %p859
      %p861 = pneg %p860
      // Predicated region
      $region99: #{st_llm_forward.17} parent=5 // pred_check
        _
      $region100: #{st_llm_forward.17} parent=5 // pred_check_branch
        %863 = sbr.rel (%p860) target = $region102
      $region101: #{st_llm_forward.17} parent=5 // pred_region
        %s864 = ssub.s32 %s11, 1
        %s865 = sand.u32 %s62, 1
        %s866 = sand.u32 %s62, 1
        %s867 = smul.addr %s866, 384
        %s868 = scalar_lea.vmem [#allocation3], %s867
        // Predicated region
        $region103: #{st_llm_forward.17} parent=101 // pred_check
          %p869 = pneg %p75
        $region104: #{st_llm_forward.17} parent=101 // pred_check_branch
          %871 = sbr.rel (%p869) target = $region106
        $region105: #{st_llm_forward.17} parent=101 // pred_region
          _
        $region106: #{st_llm_forward.17} parent=101 // pred_fallthru
          _
        %s872 = smul.u32 4, %s20
        %p873 = scmp.lt.s32.totalorder %s872, 3
        %s874 = scalar_select %p873, %s872, 3
        %s875 = smul.addr %s874, 2
        %s876 = smul.addr %s875, 4
        %s877 = scalar_lea.vmem %s0, %s876
        %p878 = pneg %p49
        %p879 = pneg %p46
        %s880 = sand.u32 %s62, 1
        %s881 = sand.u32 %s62, 1
        %s882 = smul.addr %s881, 384
        %s883 = scalar_lea.vmem [#allocation3], %s882
        %p884 = pneg %p75
        %p885 = pneg %p72
        %s886 = smul.u32 4, %s21
        %s887 = ssub.s32 5, %s886
        %p888 = scmp.lt.s32.totalorder %s887, 4
        %s889 = scalar_select %p888, %s887, 4
        %s890 = smul.u32 16, %s889
        %p891 = scmp.lt.s32.totalorder %s886, 4
        %s892 = scalar_select %p891, %s886, 4
        %s893 = scalar_lea.vmem %s2, %s892
        %p894 = pneg %p101
        %p895 = pneg %p98
        %p896 = pneg %p122
        %p897 = pneg %p119
        %p898 = pneg %p143
        %p899 = pneg %p140
        %p900 = pneg %p171
        %p901 = pneg %p168
        %s902 = sand.u32 %s158, 1
        %s903 = sand.u32 %s158, 1
        %s904 = smul.addr %s903, 64
        %s905 = scalar_lea.vmem [#allocation4], %s904
        %s906 = smul.u32 4, %s20
        %p907 = scmp.lt.s32.totalorder %s906, 3
        %s908 = scalar_select %p907, %s906, 3
        %s909 = smul.addr %s908, 2
        %s910 = smul.addr %s909, 4
        %s911 = scalar_lea.vmem %s0, %s910
        %s912 = smul.u32 4, %s20
        %s913 = smul.u32 4, %s21
        %s914 = ssub.s32 5, %s913
        %p915 = scmp.lt.s32.totalorder %s914, 4
        %s916 = scalar_select %p915, %s914, 4
        %s917 = smul.u32 1536, %s916
        %s918 = smul.u32 4, %s21
        %s919 = ssub.s32 5, %s918
        %p920 = scmp.lt.s32.totalorder %s919, 4
        %s921 = scalar_select %p920, %s919, 4
        %s922 = smul.u32 16, %s921
        %p923 = scmp.lt.s32.totalorder %s918, 4
        %s924 = scalar_select %p923, %s918, 4
        %s925 = scalar_lea.vmem %s2, %s924
        %s926 = smul.u32 4, %s21
        %s927 = ssub.s32 5, %s926
        %p928 = scmp.lt.s32.totalorder %s927, 4
        %s929 = scalar_select %p928, %s927, 4
        %s930 = smul.u32 16, %s929
        %s931 = smul.u32 4, %s20
        %s932 = smul.u32 4, %s21
        %s933 = ssub.s32 5, %s932
        %p934 = scmp.lt.s32.totalorder %s933, 4
        %s935 = scalar_select %p934, %s933, 4
        %s936 = smul.u32 256, %s935
        %p938 = scmp.eq.s32.totalorder %s21, 0
        // Predicated region
        $region107: #{st_llm_forward.17} parent=101 // pred_check
          %p939 = pneg %p938
        $region108: #{st_llm_forward.17} parent=101 // pred_check_branch
          %941 = sbr.rel (%p939) target = $region110
        $region109: #{st_llm_forward.17} parent=101 // pred_region
          %v942 = vld [vmem:[%s911] sm:$0xff]
          %v943 = vld [vmem:[%s911 + $0x8] sm:$0xff]
          %v944 = vld [vmem:[%s911 + $0x10] sm:$0xff]
          %v945 = vld [vmem:[%s911 + $0x18] sm:$0xff]
          %v946 = vunpack.c.l.bf16 %v942
          %v947 = vunpack.c.h.bf16 %v942
          %v948 = vunpack.c.l.bf16 %v943
          %v949 = vunpack.c.h.bf16 %v943
          %v950 = vunpack.c.l.bf16 %v944
          %v951 = vunpack.c.h.bf16 %v944
          %v952 = vunpack.c.l.bf16 %v945
          %v953 = vunpack.c.h.bf16 %v945
          %vm954 = vcmask 523264
          %v955 = vsel %vm954, %v947, 0.0
          %v956 = vadd.f32 %v946, %v955
          %957 = vadd.xlane.f32.xlu0 %v956
          %v958 = vpop.xlane.xlu0 %957
          %v959 = vsel %vm954, %v949, 0.0
          %v960 = vadd.f32 %v948, %v959
          %961 = vadd.xlane.f32.xlu0 %v960
          %v962 = vpop.xlane.xlu0 %961
          %v963 = vsel %vm954, %v951, 0.0
          %v964 = vadd.f32 %v950, %v963
          %965 = vadd.xlane.f32.xlu0 %v964
          %v966 = vpop.xlane.xlu0 %965
          %v967 = vsel %vm954, %v953, 0.0
          %v968 = vadd.f32 %v952, %v967
          %969 = vadd.xlane.f32.xlu0 %v968
          %v970 = vpop.xlane.xlu0 %969
          %v971 = vrcp.pop 192.0
          %v972 = vmul.f32 %v958, %v971
          %v973 = vmul.f32 %v962, %v971
          %v974 = vmul.f32 %v966, %v971
          %v975 = vmul.f32 %v970, %v971
          %v976 = vsub.f32 %v946, %v972
          %v977 = vsub.f32 %v947, %v972
          %v978 = vsub.f32 %v948, %v973
          %v979 = vsub.f32 %v949, %v973
          %v980 = vsub.f32 %v950, %v974
          %v981 = vsub.f32 %v951, %v974
          %v982 = vsub.f32 %v952, %v975
          %v983 = vsub.f32 %v953, %v975
          %v984 = vmul.f32 %v976, %v976
          %v985 = vmul.f32 %v977, %v977
          %v986 = vmul.f32 %v978, %v978
          %v987 = vmul.f32 %v979, %v979
          %v988 = vmul.f32 %v980, %v980
          %v989 = vmul.f32 %v981, %v981
          %v990 = vmul.f32 %v982, %v982
          %v991 = vmul.f32 %v983, %v983
          %v992 = vsel %vm954, %v985, 0.0
          %v993 = vadd.f32 %v984, %v992
          %994 = vadd.xlane.f32.xlu0 %v993
          %v995 = vpop.xlane.xlu0 %994
          %v996 = vsel %vm954, %v987, 0.0
          %v997 = vadd.f32 %v986, %v996
          %998 = vadd.xlane.f32.xlu0 %v997
          %v999 = vpop.xlane.xlu0 %998
          %v1000 = vsel %vm954, %v989, 0.0
          %v1001 = vadd.f32 %v988, %v1000
          %1002 = vadd.xlane.f32.xlu0 %v1001
          %v1003 = vpop.xlane.xlu0 %1002
          %v1004 = vsel %vm954, %v991, 0.0
          %v1005 = vadd.f32 %v990, %v1004
          %1006 = vadd.xlane.f32.xlu0 %v1005
          %v1007 = vpop.xlane.xlu0 %1006
          %v1008 = vmul.f32 %v995, %v971
          %v1009 = vmul.f32 %v999, %v971
          %v1010 = vmul.f32 %v1003, %v971
          %v1011 = vmul.f32 %v1007, %v971
          %v1012 = vadd.f32 %v1008, 1e-05
          %v1013 = vadd.f32 %v1009, 1e-05
          %v1014 = vadd.f32 %v1010, 1e-05
          %v1015 = vadd.f32 %v1011, 1e-05
          %v1016 = vrsqrt.pop %v1012
          %v1017 = vrsqrt.pop %v1013
          %v1018 = vrsqrt.pop %v1014
          %v1019 = vrsqrt.pop %v1015
          %v1020 = vmul.f32 %v976, %v1016
          %v1021 = vmul.f32 %v977, %v1016
          %v1022 = vmul.f32 %v978, %v1017
          %v1023 = vmul.f32 %v979, %v1017
          %v1024 = vmul.f32 %v980, %v1018
          %v1025 = vmul.f32 %v981, %v1018
          %v1026 = vmul.f32 %v982, %v1019
          %v1027 = vmul.f32 %v983, %v1019
          %v1028 = vld [vmem:[%s3] sm:$0x3]
          %v1030 = vlaneseq
          %v1031 = vshrl.u32 %v1030, 7
          %v1032 = vsub.s32 0, %v1031
          %v1033 = vrot.slane %v1028, %v1032
          %v1034 = vlaneseq
          %v1035 = vshrl.u32 %v1034, 7
          %v1036 = vsub.s32 1, %v1035
          %v1037 = vrot.slane %v1028, %v1036
          %v1040 = vmul.f32 %v1020, %v1033
          %v1041 = vmul.f32 %v1021, %v1037
          %v1042 = vmul.f32 %v1022, %v1033
          %v1043 = vmul.f32 %v1023, %v1037
          %v1044 = vmul.f32 %v1024, %v1033
          %v1045 = vmul.f32 %v1025, %v1037
          %v1046 = vmul.f32 %v1026, %v1033
          %v1047 = vmul.f32 %v1027, %v1037
          %v1048 = vld [vmem:[%s4] sm:$0x3]
          %v1050 = vlaneseq
          %v1051 = vshrl.u32 %v1050, 7
          %v1052 = vsub.s32 0, %v1051
          %v1053 = vrot.slane %v1048, %v1052
          %v1054 = vlaneseq
          %v1055 = vshrl.u32 %v1054, 7
          %v1056 = vsub.s32 1, %v1055
          %v1057 = vrot.slane %v1048, %v1056
          %v1060 = vadd.f32 %v1040, %v1053
          %v1061 = vadd.f32 %v1041, %v1057
          %v1062 = vadd.f32 %v1042, %v1053
          %v1063 = vadd.f32 %v1043, %v1057
          %v1064 = vadd.f32 %v1044, %v1053
          %v1065 = vadd.f32 %v1045, %v1057
          %v1066 = vadd.f32 %v1046, %v1053
          %v1067 = vadd.f32 %v1047, %v1057
          %v1068 = vpack.c.bf16 %v1062, %v1060
          %v1069 = vpack.c.bf16 %v1063, %v1061
          %v1070 = vpack.c.bf16 %v1066, %v1064
          %v1071 = vpack.c.bf16 %v1067, %v1065
          %v1076 = vunpack.c.l.b16 %v1068
          %v1077 = vunpack.c.l.b16 %v1069
          %v1078 = vunpack.c.h.b16 %v1068
          %v1079 = vunpack.c.h.b16 %v1069
          %v1080 = vunpack.c.l.b16 %v1070
          %v1081 = vunpack.c.l.b16 %v1071
          %v1082 = vunpack.c.h.b16 %v1070
          %v1083 = vunpack.c.h.b16 %v1071
          %v1084 = vpack.c.b16 %v1077, %v1076
          %v1085 = vpack.c.b16 %v1079, %v1078
          %v1086 = vpack.c.b16 %v1081, %v1080
          %v1087 = vpack.c.b16 %v1083, %v1082
          %vm1092 = vcmask 1043456
          %vm1093 = vcmask 523268
          %vm1094 = vmor %vm1093, %vm1092
          %1095 = vst.msk [vmem:[#allocation2] sm:$0xff] %vm1094, %v1084
          %1096 = vst.msk [vmem:[#allocation2 + $0x8] sm:$0xff] %vm1094, %v1085
          %1097 = vst.msk [vmem:[#allocation2 + $0x10] sm:$0xff] %vm1094, %v1086
          %1098 = vst.msk [vmem:[#allocation2 + $0x18] sm:$0xff] %vm1094, %v1087
        $region110: #{st_llm_forward.17} parent=101 // pred_fallthru
          _
        %v1099 = vld [vmem:[#allocation2] sm:$0xff]
        %v1100 = vld [vmem:[#allocation2 + $0x8] sm:$0xff]
        %v1101 = vld [vmem:[#allocation2 + $0x10] sm:$0xff]
        %v1102 = vld [vmem:[#allocation2 + $0x18] sm:$0xff]
        %v1103 = vld [vmem:[%s868] sm:$0xff]
        %v1104 = vld [vmem:[%s868 + $0x8] sm:$0xff]
        %v1105 = vld [vmem:[%s868 + $0x10] sm:$0xff]
        %v1106 = vld [vmem:[%s868 + $0x18] sm:$0xff]
        %v1107 = vld [vmem:[%s868 + $0x20] sm:$0xff]
        %v1108 = vld [vmem:[%s868 + $0x28] sm:$0xff]
        %v1109 = vld [vmem:[%s868 + $0x30] sm:$0xff]
        %v1110 = vld [vmem:[%s868 + $0x38] sm:$0xff]
        %v1111 = vld [vmem:[%s868 + $0x40] sm:$0xff]
        %v1112 = vld [vmem:[%s868 + $0x48] sm:$0xff]
        %v1113 = vld [vmem:[%s868 + $0x50] sm:$0xff]
        %v1114 = vld [vmem:[%s868 + $0x58] sm:$0xff]
        %v1115 = vld [vmem:[%s868 + $0x60] sm:$0xff]
        %v1116 = vld [vmem:[%s868 + $0x68] sm:$0xff]
        %v1117 = vld [vmem:[%s868 + $0x70] sm:$0xff]
        %v1118 = vld [vmem:[%s868 + $0x78] sm:$0xff]
        %v1119 = vld [vmem:[%s868 + $0x80] sm:$0xff]
        %v1120 = vld [vmem:[%s868 + $0x88] sm:$0xff]
        %v1121 = vld [vmem:[%s868 + $0x90] sm:$0xff]
        %v1122 = vld [vmem:[%s868 + $0x98] sm:$0xff]
        %v1123 = vld [vmem:[%s868 + $0xa0] sm:$0xff]
        %v1124 = vld [vmem:[%s868 + $0xa8] sm:$0xff]
        %v1125 = vld [vmem:[%s868 + $0xb0] sm:$0xff]
        %v1126 = vld [vmem:[%s868 + $0xb8] sm:$0xff]
        %v1127 = vld [vmem:[%s868 + $0xc0] sm:$0xff]
        %v1128 = vld [vmem:[%s868 + $0xc8] sm:$0xff]
        %v1129 = vld [vmem:[%s868 + $0xd0] sm:$0xff]
        %v1130 = vld [vmem:[%s868 + $0xd8] sm:$0xff]
        %v1131 = vld [vmem:[%s868 + $0xe0] sm:$0xff]
        %v1132 = vld [vmem:[%s868 + $0xe8] sm:$0xff]
        %v1133 = vld [vmem:[%s868 + $0xf0] sm:$0xff]
        %v1134 = vld [vmem:[%s868 + $0xf8] sm:$0xff]
        %v1135 = vld [vmem:[%s868 + $0x100] sm:$0xff]
        %v1136 = vld [vmem:[%s868 + $0x108] sm:$0xff]
        %v1137 = vld [vmem:[%s868 + $0x110] sm:$0xff]
        %v1138 = vld [vmem:[%s868 + $0x118] sm:$0xff]
        %v1139 = vld [vmem:[%s868 + $0x120] sm:$0xff]
        %v1140 = vld [vmem:[%s868 + $0x128] sm:$0xff]
        %v1141 = vld [vmem:[%s868 + $0x130] sm:$0xff]
        %v1142 = vld [vmem:[%s868 + $0x138] sm:$0xff]
        %v1143 = vld [vmem:[%s868 + $0x140] sm:$0xff]
        %v1144 = vld [vmem:[%s868 + $0x148] sm:$0xff]
        %v1145 = vld [vmem:[%s868 + $0x150] sm:$0xff]
        %v1146 = vld [vmem:[%s868 + $0x158] sm:$0xff]
        %v1147 = vld [vmem:[%s868 + $0x160] sm:$0xff]
        %v1148 = vld [vmem:[%s868 + $0x168] sm:$0xff]
        %v1149 = vld [vmem:[%s868 + $0x170] sm:$0xff]
        %v1150 = vld [vmem:[%s868 + $0x178] sm:$0xff]
        %v1151 = vld [vmem:[%s925] sm:$0xf]
        %v1153 = vlaneseq
        %v1154 = vshrl.u32 %v1153, 7
        %v1155 = vsub.s32 0, %v1154
        %v1156 = vrot.slane %v1151, %v1155
        %v1157 = vlaneseq
        %v1158 = vshrl.u32 %v1157, 7
        %v1159 = vsub.s32 1, %v1158
        %v1160 = vrot.slane %v1151, %v1159
        %v1161 = vlaneseq
        %v1162 = vshrl.u32 %v1161, 7
        %v1163 = vsub.s32 2, %v1162
        %v1164 = vrot.slane %v1151, %v1163
        %v1165 = vlaneseq
        %v1166 = vshrl.u32 %v1165, 7
        %v1167 = vsub.s32 3, %v1166
        %v1168 = vrot.slane %v1151, %v1167
        %v1177 = vunpack.c.l.b16 %v1099
        %v1178 = vunpack.c.h.b16 %v1099
        %v1179 = vunpack.c.l.b16 %v1100
        %v1180 = vunpack.c.h.b16 %v1100
        %v1181 = vunpack.c.l.b16 %v1101
        %v1182 = vunpack.c.h.b16 %v1101
        %v1183 = vunpack.c.l.b16 %v1102
        %v1184 = vunpack.c.h.b16 %v1102
        %v1185 = vpack.c.b16 %v1179, %v1177
        %v1186 = vpack.c.b16 %v1180, %v1178
        %v1187 = vpack.c.b16 %v1183, %v1181
        %v1188 = vpack.c.b16 %v1184, %v1182
        %v1239 = vunpack.c.l.b16 %v1103
        %v1240 = vunpack.c.h.b16 %v1103
        %v1241 = vunpack.c.l.b16 %v1104
        %v1242 = vunpack.c.h.b16 %v1104
        %v1243 = vunpack.c.l.b16 %v1105
        %v1244 = vunpack.c.h.b16 %v1105
        %v1245 = vunpack.c.l.b16 %v1106
        %v1246 = vunpack.c.h.b16 %v1106
        %v1247 = vunpack.c.l.b16 %v1107
        %v1248 = vunpack.c.h.b16 %v1107
        %v1249 = vunpack.c.l.b16 %v1108
        %v1250 = vunpack.c.h.b16 %v1108
        %v1251 = vunpack.c.l.b16 %v1109
        %v1252 = vunpack.c.h.b16 %v1109
        %v1253 = vunpack.c.l.b16 %v1110
        %v1254 = vunpack.c.h.b16 %v1110
        %v1255 = vunpack.c.l.b16 %v1111
        %v1256 = vunpack.c.h.b16 %v1111
        %v1257 = vunpack.c.l.b16 %v1112
        %v1258 = vunpack.c.h.b16 %v1112
        %v1259 = vunpack.c.l.b16 %v1113
        %v1260 = vunpack.c.h.b16 %v1113
        %v1261 = vunpack.c.l.b16 %v1114
        %v1262 = vunpack.c.h.b16 %v1114
        %v1263 = vunpack.c.l.b16 %v1115
        %v1264 = vunpack.c.h.b16 %v1115
        %v1265 = vunpack.c.l.b16 %v1116
        %v1266 = vunpack.c.h.b16 %v1116
        %v1267 = vunpack.c.l.b16 %v1117
        %v1268 = vunpack.c.h.b16 %v1117
        %v1269 = vunpack.c.l.b16 %v1118
        %v1270 = vunpack.c.h.b16 %v1118
        %v1271 = vunpack.c.l.b16 %v1119
        %v1272 = vunpack.c.h.b16 %v1119
        %v1273 = vunpack.c.l.b16 %v1120
        %v1274 = vunpack.c.h.b16 %v1120
        %v1275 = vunpack.c.l.b16 %v1121
        %v1276 = vunpack.c.h.b16 %v1121
        %v1277 = vunpack.c.l.b16 %v1122
        %v1278 = vunpack.c.h.b16 %v1122
        %v1279 = vunpack.c.l.b16 %v1123
        %v1280 = vunpack.c.h.b16 %v1123
        %v1281 = vunpack.c.l.b16 %v1124
        %v1282 = vunpack.c.h.b16 %v1124
        %v1283 = vunpack.c.l.b16 %v1125
        %v1284 = vunpack.c.h.b16 %v1125
        %v1285 = vunpack.c.l.b16 %v1126
        %v1286 = vunpack.c.h.b16 %v1126
        %v1287 = vunpack.c.l.b16 %v1127
        %v1288 = vunpack.c.h.b16 %v1127
        %v1289 = vunpack.c.l.b16 %v1128
        %v1290 = vunpack.c.h.b16 %v1128
        %v1291 = vunpack.c.l.b16 %v1129
        %v1292 = vunpack.c.h.b16 %v1129
        %v1293 = vunpack.c.l.b16 %v1130
        %v1294 = vunpack.c.h.b16 %v1130
        %v1295 = vunpack.c.l.b16 %v1131
        %v1296 = vunpack.c.h.b16 %v1131
        %v1297 = vunpack.c.l.b16 %v1132
        %v1298 = vunpack.c.h.b16 %v1132
        %v1299 = vunpack.c.l.b16 %v1133
        %v1300 = vunpack.c.h.b16 %v1133
        %v1301 = vunpack.c.l.b16 %v1134
        %v1302 = vunpack.c.h.b16 %v1134
        %v1303 = vunpack.c.l.b16 %v1135
        %v1304 = vunpack.c.h.b16 %v1135
        %v1305 = vunpack.c.l.b16 %v1136
        %v1306 = vunpack.c.h.b16 %v1136
        %v1307 = vunpack.c.l.b16 %v1137
        %v1308 = vunpack.c.h.b16 %v1137
        %v1309 = vunpack.c.l.b16 %v1138
        %v1310 = vunpack.c.h.b16 %v1138
        %v1311 = vunpack.c.l.b16 %v1139
        %v1312 = vunpack.c.h.b16 %v1139
        %v1313 = vunpack.c.l.b16 %v1140
        %v1314 = vunpack.c.h.b16 %v1140
        %v1315 = vunpack.c.l.b16 %v1141
        %v1316 = vunpack.c.h.b16 %v1141
        %v1317 = vunpack.c.l.b16 %v1142
        %v1318 = vunpack.c.h.b16 %v1142
        %v1319 = vunpack.c.l.b16 %v1143
        %v1320 = vunpack.c.h.b16 %v1143
        %v1321 = vunpack.c.l.b16 %v1144
        %v1322 = vunpack.c.h.b16 %v1144
        %v1323 = vunpack.c.l.b16 %v1145
        %v1324 = vunpack.c.h.b16 %v1145
        %v1325 = vunpack.c.l.b16 %v1146
        %v1326 = vunpack.c.h.b16 %v1146
        %v1327 = vunpack.c.l.b16 %v1147
        %v1328 = vunpack.c.h.b16 %v1147
        %v1329 = vunpack.c.l.b16 %v1148
        %v1330 = vunpack.c.h.b16 %v1148
        %v1331 = vunpack.c.l.b16 %v1149
        %v1332 = vunpack.c.h.b16 %v1149
        %v1333 = vunpack.c.l.b16 %v1150
        %v1334 = vunpack.c.h.b16 %v1150
        %v1335 = vpack.c.b16 %v1243, %v1239
        %v1336 = vpack.c.b16 %v1244, %v1240
        %v1337 = vpack.c.b16 %v1245, %v1241
        %v1338 = vpack.c.b16 %v1246, %v1242
        %v1339 = vpack.c.b16 %v1251, %v1247
        %v1340 = vpack.c.b16 %v1252, %v1248
        %v1341 = vpack.c.b16 %v1253, %v1249
        %v1342 = vpack.c.b16 %v1254, %v1250
        %v1343 = vpack.c.b16 %v1259, %v1255
        %v1344 = vpack.c.b16 %v1260, %v1256
        %v1345 = vpack.c.b16 %v1261, %v1257
        %v1346 = vpack.c.b16 %v1262, %v1258
        %v1347 = vpack.c.b16 %v1267, %v1263
        %v1348 = vpack.c.b16 %v1268, %v1264
        %v1349 = vpack.c.b16 %v1269, %v1265
        %v1350 = vpack.c.b16 %v1270, %v1266
        %v1351 = vpack.c.b16 %v1275, %v1271
        %v1352 = vpack.c.b16 %v1276, %v1272
        %v1353 = vpack.c.b16 %v1277, %v1273
        %v1354 = vpack.c.b16 %v1278, %v1274
        %v1355 = vpack.c.b16 %v1283, %v1279
        %v1356 = vpack.c.b16 %v1284, %v1280
        %v1357 = vpack.c.b16 %v1285, %v1281
        %v1358 = vpack.c.b16 %v1286, %v1282
        %v1359 = vpack.c.b16 %v1291, %v1287
        %v1360 = vpack.c.b16 %v1292, %v1288
        %v1361 = vpack.c.b16 %v1293, %v1289
        %v1362 = vpack.c.b16 %v1294, %v1290
        %v1363 = vpack.c.b16 %v1299, %v1295
        %v1364 = vpack.c.b16 %v1300, %v1296
        %v1365 = vpack.c.b16 %v1301, %v1297
        %v1366 = vpack.c.b16 %v1302, %v1298
        %v1367 = vpack.c.b16 %v1307, %v1303
        %v1368 = vpack.c.b16 %v1308, %v1304
        %v1369 = vpack.c.b16 %v1309, %v1305
        %v1370 = vpack.c.b16 %v1310, %v1306
        %v1371 = vpack.c.b16 %v1315, %v1311
        %v1372 = vpack.c.b16 %v1316, %v1312
        %v1373 = vpack.c.b16 %v1317, %v1313
        %v1374 = vpack.c.b16 %v1318, %v1314
        %v1375 = vpack.c.b16 %v1323, %v1319
        %v1376 = vpack.c.b16 %v1324, %v1320
        %v1377 = vpack.c.b16 %v1325, %v1321
        %v1378 = vpack.c.b16 %v1326, %v1322
        %v1379 = vpack.c.b16 %v1331, %v1327
        %v1380 = vpack.c.b16 %v1332, %v1328
        %v1381 = vpack.c.b16 %v1333, %v1329
        %v1382 = vpack.c.b16 %v1334, %v1330
        %vm1431 = vcmask 523264
        %v1433 = vsel %vm1431, %v1186, 0
        %v1436 = vsel %vm1431, %v1188, 0
        %1438 = vmatprep.subr.bf16.mxu0 %v1364
        %1439 = vmatpush1.bf16.msra.mxu0 %v1363
        %1440 = vmatprep.subr.bf16.mxu0 %v1360
        %1441 = vmatpush1.bf16.msra.mxu0 %v1359
        %1442 = vmatprep.subr.bf16.mxu0 %v1356
        %1443 = vmatpush1.bf16.msra.mxu0 %v1355
        %1444 = vmatprep.subr.bf16.mxu0 %v1352
        %1445 = vmatpush1.bf16.msra.mxu0 %v1351
        %1446 = vmatprep.subr.bf16.mxu0 %v1348
        %1447 = vmatpush1.bf16.msra.mxu0 %v1347
        %1448 = vmatprep.subr.bf16.mxu0 %v1344
        %1449 = vmatpush1.bf16.msra.mxu0 %v1343
        %1450 = vmatprep.subr.bf16.mxu0 %v1340
        %1451 = vmatpush1.bf16.msra.mxu0 %v1339
        %1452 = vmatprep.subr.bf16.mxu0 %v1336
        %1453 = vmatpush1.bf16.msra.mxu0 %v1335
        %1454 = vmatprep.subr.bf16.mxu0 0
        %1455 = vmatpush2.bf16.msra.mxu0 0
        %1456 = vmatprep.subr.bf16.mxu0 0
        %1457 = vmatpush2.bf16.msra.mxu0 0
        %1458 = vmatprep.subr.bf16.mxu0 0
        %1459 = vmatpush2.bf16.msra.mxu0 0
        %1460 = vmatprep.subr.bf16.mxu0 0
        %1461 = vmatpush2.bf16.msra.mxu0 0
        %1462 = vmatprep.subr.bf16.mxu0 %v1380
        %1463 = vmatpush2.bf16.msra.mxu0 %v1379
        %1464 = vmatprep.subr.bf16.mxu0 %v1376
        %1465 = vmatpush2.bf16.msra.mxu0 %v1375
        %1466 = vmatprep.subr.bf16.mxu0 %v1372
        %1467 = vmatpush2.bf16.msra.mxu0 %v1371
        %1468 = vmatprep.subr.bf16.mxu0 %v1368
        %1469 = vmatpush2.bf16.msra.mxu0 %v1367
        %1470 = vmatprep.mubr.bf16.mxu0 %v1433
        %1471 = vmatmul.mubr.bf16.gmra.mxu0 %v1185
        %v1472 = vpop.f32.mrf.mxu0
        %v1473 = vadd.f32 %v1156, %v1472
        %v1474 = vpop.f32.mrf.mxu0
        %v1475 = vadd.f32 %v1160, %v1474
        %v1476 = vpop.f32.mrf.mxu0
        %v1477 = vadd.f32 %v1156, %v1476
        %v1478 = vpop.f32.mrf.mxu0
        %v1479 = vadd.f32 %v1160, %v1478
        %1480 = vmatprep.mubr.bf16.mxu0 %v1436
        %1481 = vmatmul.mubr.bf16.gmra.mxu0 %v1187
        %v1482 = vpop.f32.mrf.mxu0
        %v1483 = vadd.f32 %v1156, %v1482
        %v1484 = vpop.f32.mrf.mxu0
        %v1485 = vadd.f32 %v1160, %v1484
        %v1486 = vpop.f32.mrf.mxu0
        %v1487 = vadd.f32 %v1156, %v1486
        %v1488 = vpop.f32.mrf.mxu0
        %v1489 = vadd.f32 %v1160, %v1488
        %1490 = vdwg.mxu0
        %1491 = vmatprep.subr.bf16.mxu0 %v1366
        %1492 = vmatpush1.bf16.msra.mxu0 %v1365
        %1493 = vmatprep.subr.bf16.mxu0 %v1362
        %1494 = vmatpush1.bf16.msra.mxu0 %v1361
        %1495 = vmatprep.subr.bf16.mxu0 %v1358
        %1496 = vmatpush1.bf16.msra.mxu0 %v1357
        %1497 = vmatprep.subr.bf16.mxu0 %v1354
        %1498 = vmatpush1.bf16.msra.mxu0 %v1353
        %1499 = vmatprep.subr.bf16.mxu0 %v1350
        %1500 = vmatpush1.bf16.msra.mxu0 %v1349
        %1501 = vmatprep.subr.bf16.mxu0 %v1346
        %1502 = vmatpush1.bf16.msra.mxu0 %v1345
        %1503 = vmatprep.subr.bf16.mxu0 %v1342
        %1504 = vmatpush1.bf16.msra.mxu0 %v1341
        %1505 = vmatprep.subr.bf16.mxu0 %v1338
        %1506 = vmatpush1.bf16.msra.mxu0 %v1337
        %1507 = vmatprep.subr.bf16.mxu0 0
        %1508 = vmatpush2.bf16.msra.mxu0 0
        %1509 = vmatprep.subr.bf16.mxu0 0
        %1510 = vmatpush2.bf16.msra.mxu0 0
        %1511 = vmatprep.subr.bf16.mxu0 0
        %1512 = vmatpush2.bf16.msra.mxu0 0
        %1513 = vmatprep.subr.bf16.mxu0 0
        %1514 = vmatpush2.bf16.msra.mxu0 0
        %1515 = vmatprep.subr.bf16.mxu0 %v1382
        %1516 = vmatpush2.bf16.msra.mxu0 %v1381
        %1517 = vmatprep.subr.bf16.mxu0 %v1378
        %1518 = vmatpush2.bf16.msra.mxu0 %v1377
        %1519 = vmatprep.subr.bf16.mxu0 %v1374
        %1520 = vmatpush2.bf16.msra.mxu0 %v1373
        %1521 = vmatprep.subr.bf16.mxu0 %v1370
        %1522 = vmatpush2.bf16.msra.mxu0 %v1369
        %1523 = vmatprep.mubr.bf16.mxu0 %v1433
        %1524 = vmatmul.mubr.bf16.gmra.mxu0 %v1185
        %v1525 = vpop.f32.mrf.mxu0
        %v1526 = vadd.f32 %v1164, %v1525
        %v1527 = vpop.f32.mrf.mxu0
        %v1528 = vadd.f32 %v1168, %v1527
        %v1529 = vpop.f32.mrf.mxu0
        %v1530 = vadd.f32 %v1164, %v1529
        %v1531 = vpop.f32.mrf.mxu0
        %v1532 = vadd.f32 %v1168, %v1531
        %1533 = vmatprep.mubr.bf16.mxu0 %v1436
        %1534 = vmatmul.mubr.bf16.gmra.mxu0 %v1187
        %v1535 = vpop.f32.mrf.mxu0
        %v1536 = vadd.f32 %v1164, %v1535
        %v1537 = vpop.f32.mrf.mxu0
        %v1538 = vadd.f32 %v1168, %v1537
        %v1539 = vpop.f32.mrf.mxu0
        %v1540 = vadd.f32 %v1164, %v1539
        %v1541 = vpop.f32.mrf.mxu0
        %v1542 = vadd.f32 %v1168, %v1541
        %1543 = vdwg.mxu0
        %v1544 = vpack.c.bf16 %v1477, %v1473
        %v1545 = vpack.c.bf16 %v1479, %v1475
        %v1546 = vpack.c.bf16 %v1530, %v1526
        %v1547 = vpack.c.bf16 %v1532, %v1528
        %v1548 = vpack.c.bf16 %v1487, %v1483
        %v1549 = vpack.c.bf16 %v1489, %v1485
        %v1550 = vpack.c.bf16 %v1540, %v1536
        %v1551 = vpack.c.bf16 %v1542, %v1538
        %v1560 = vunpack.c.l.b16 %v1544
        %v1561 = vunpack.c.l.b16 %v1545
        %v1562 = vunpack.c.l.b16 %v1546
        %v1563 = vunpack.c.l.b16 %v1547
        %v1564 = vunpack.c.h.b16 %v1544
        %v1565 = vunpack.c.h.b16 %v1545
        %v1566 = vunpack.c.h.b16 %v1546
        %v1567 = vunpack.c.h.b16 %v1547
        %v1568 = vunpack.c.l.b16 %v1548
        %v1569 = vunpack.c.l.b16 %v1549
        %v1570 = vunpack.c.l.b16 %v1550
        %v1571 = vunpack.c.l.b16 %v1551
        %v1572 = vunpack.c.h.b16 %v1548
        %v1573 = vunpack.c.h.b16 %v1549
        %v1574 = vunpack.c.h.b16 %v1550
        %v1575 = vunpack.c.h.b16 %v1551
        %v1576 = vpack.c.b16 %v1561, %v1560
        %v1577 = vpack.c.b16 %v1563, %v1562
        %v1578 = vpack.c.b16 %v1565, %v1564
        %v1579 = vpack.c.b16 %v1567, %v1566
        %v1580 = vpack.c.b16 %v1569, %v1568
        %v1581 = vpack.c.b16 %v1571, %v1570
        %v1582 = vpack.c.b16 %v1573, %v1572
        %v1583 = vpack.c.b16 %v1575, %v1574
        %1592 = vst [vmem:[%s905] sm:$0xff] %v1576
        %1593 = vst [vmem:[%s905 + $0x8] sm:$0xff] %v1577
        %1594 = vst [vmem:[%s905 + $0x10] sm:$0xff] %v1578
        %1595 = vst [vmem:[%s905 + $0x18] sm:$0xff] %v1579
        %1596 = vst [vmem:[%s905 + $0x20] sm:$0xff] %v1580
        %1597 = vst [vmem:[%s905 + $0x28] sm:$0xff] %v1581
        %1598 = vst [vmem:[%s905 + $0x30] sm:$0xff] %v1582
        %1599 = vst [vmem:[%s905 + $0x38] sm:$0xff] %v1583
        %s1600 = sand.u32 %s158, 1
        %s1601 = sand.u32 %s158, 1
        %s1602 = smul.addr %s1601, 64
        %s1603 = scalar_lea.vmem [#allocation4], %s1602
        // Predicated region
        $region111: #{st_llm_forward.17} parent=101 // pred_check
          %p1604 = pneg %p168
        $region112: #{st_llm_forward.17} parent=101 // pred_check_branch
          %1606 = sbr.rel (%p1604) target = $region114
        $region113: #{st_llm_forward.17} parent=101 // pred_region
          %s1607 = smul.u32 4, %s20
          %s1608 = smul.u32 4, %s21
          %s1609 = ssub.s32 5, %s1608
          %p1610 = scmp.lt.s32.totalorder %s1609, 4
          %s1611 = scalar_select %p1610, %s1609, 4
          %s1612 = smul.u32 256, %s1611
          %p1613 = scmp.ne.s32.totalorder 0, %s1612
          %s1614 = smul.addr %s1607, 5
          %s1615 = sadd.s32 %s1608, %s1614
          %s1616 = smul.addr %s1615, 4
          %s1617 = scalar_lea.vmem %s5, %s1616
          %s1618 = smul.u32 %s1611, 4
          // Predicated region
          $region115: #{st_llm_forward.17} parent=113 // pred_check
            %p1619 = pneg %p1613
          $region116: #{st_llm_forward.17} parent=113 // pred_check_branch
            %1621 = sbr.rel (%p1619) target = $region118
          $region117: #{st_llm_forward.17} parent=113 // pred_region
            %p1622 = scmp.lt.u32.totalorder %s1618, 8
            %p1623 = pneg %p1622
            // Predicated region
            $region119: #{st_llm_forward.17} parent=117 // pred_check
              _
            $region120: #{st_llm_forward.17} parent=117 // pred_check_branch
              %1625 = sbr.rel (%p1622) target = $region122
            $region121: #{st_llm_forward.17} parent=117 // pred_region
              %s1647 = sand.u32 %s1618, 7
              %p1648 = scmp.eq.s32.totalorder %s1647, 0
              // Predicated region
              $region134: #{st_llm_forward.17} parent=121 // pred_check
                %p1649 = pneg %p1648
              $region135: #{st_llm_forward.17} parent=121 // pred_check_branch
                %1651 = sbr.rel (%p1649) target = $region137
              $region136: #{st_llm_forward.17} parent=121 // pred_region
                %s1652 = sshrl.u32 %s1618, 3
                %s1653 = sshrl.u32 %s1652, 4
                // While loop
                $region138: #{st_llm_forward.17} parent=136 // loop_pre_header
                  _
                $region139: #{st_llm_forward.17} parent=136 // loop_header
                  %s1657 = sphi 0, %s1659
                  %p1658 = scmp.ge.s32.totalorder %s1657, %s1653
                  %s1662 = sphi 0, %s1795
                  %s1663 = sphi %s1603, %s1798
                  %s1664 = sphi %s1617, %s1799
                $region140: #{st_llm_forward.17} parent=136 // loop_header_branch
                  %1661 = sbr.rel (%p1658) target = $region144
                $region141: #{st_llm_forward.17} parent=136 // loop_body
                  %v1665 = vld [vmem:[%s1663] sm:$0xff]
                  %1666 = vst [vmem:[%s1664] sm:$0xff] %v1665
                  %v1667 = vld [vmem:[%s1663 + $0x8] sm:$0xff]
                  %1668 = vst [vmem:[%s1664 + $0x8] sm:$0xff] %v1667
                  %v1669 = vld [vmem:[%s1663 + $0x10] sm:$0xff]
                  %1670 = vst [vmem:[%s1664 + $0x10] sm:$0xff] %v1669
                  %v1671 = vld [vmem:[%s1663 + $0x18] sm:$0xff]
                  %1672 = vst [vmem:[%s1664 + $0x18] sm:$0xff] %v1671
                  %v1673 = vld [vmem:[%s1663 + $0x20] sm:$0xff]
                  %1674 = vst [vmem:[%s1664 + $0x20] sm:$0xff] %v1673
                  %v1675 = vld [vmem:[%s1663 + $0x28] sm:$0xff]
                  %1676 = vst [vmem:[%s1664 + $0x28] sm:$0xff] %v1675
                  %v1677 = vld [vmem:[%s1663 + $0x30] sm:$0xff]
                  %1678 = vst [vmem:[%s1664 + $0x30] sm:$0xff] %v1677
                  %v1679 = vld [vmem:[%s1663 + $0x38] sm:$0xff]
                  %1680 = vst [vmem:[%s1664 + $0x38] sm:$0xff] %v1679
                  %v1681 = vld [vmem:[%s1663 + $0x40] sm:$0xff]
                  %1682 = vst [vmem:[%s1664 + $0x40] sm:$0xff] %v1681
                  %v1683 = vld [vmem:[%s1663 + $0x48] sm:$0xff]
                  %1684 = vst [vmem:[%s1664 + $0x48] sm:$0xff] %v1683
                  %v1685 = vld [vmem:[%s1663 + $0x50] sm:$0xff]
                  %1686 = vst [vmem:[%s1664 + $0x50] sm:$0xff] %v1685
                  %v1687 = vld [vmem:[%s1663 + $0x58] sm:$0xff]
                  %1688 = vst [vmem:[%s1664 + $0x58] sm:$0xff] %v1687
                  %v1689 = vld [vmem:[%s1663 + $0x60] sm:$0xff]
                  %1690 = vst [vmem:[%s1664 + $0x60] sm:$0xff] %v1689
                  %v1691 = vld [vmem:[%s1663 + $0x68] sm:$0xff]
                  %1692 = vst [vmem:[%s1664 + $0x68] sm:$0xff] %v1691
                  %v1693 = vld [vmem:[%s1663 + $0x70] sm:$0xff]
                  %1694 = vst [vmem:[%s1664 + $0x70] sm:$0xff] %v1693
                  %v1695 = vld [vmem:[%s1663 + $0x78] sm:$0xff]
                  %1696 = vst [vmem:[%s1664 + $0x78] sm:$0xff] %v1695
                  %v1697 = vld [vmem:[%s1663 + $0x10] sm:$0xff]
                  %1698 = vst [vmem:[%s1664 + $0x14] sm:$0xff] %v1697
                  %v1699 = vld [vmem:[%s1663 + $0x18] sm:$0xff]
                  %1700 = vst [vmem:[%s1664 + $0x1c] sm:$0xff] %v1699
                  %v1701 = vld [vmem:[%s1663 + $0x20] sm:$0xff]
                  %1702 = vst [vmem:[%s1664 + $0x24] sm:$0xff] %v1701
                  %v1703 = vld [vmem:[%s1663 + $0x28] sm:$0xff]
                  %1704 = vst [vmem:[%s1664 + $0x2c] sm:$0xff] %v1703
                  %v1705 = vld [vmem:[%s1663 + $0x30] sm:$0xff]
                  %1706 = vst [vmem:[%s1664 + $0x34] sm:$0xff] %v1705
                  %v1707 = vld [vmem:[%s1663 + $0x38] sm:$0xff]
                  %1708 = vst [vmem:[%s1664 + $0x3c] sm:$0xff] %v1707
                  %v1709 = vld [vmem:[%s1663 + $0x40] sm:$0xff]
                  %1710 = vst [vmem:[%s1664 + $0x44] sm:$0xff] %v1709
                  %v1711 = vld [vmem:[%s1663 + $0x48] sm:$0xff]
                  %1712 = vst [vmem:[%s1664 + $0x4c] sm:$0xff] %v1711
                  %v1713 = vld [vmem:[%s1663 + $0x50] sm:$0xff]
                  %1714 = vst [vmem:[%s1664 + $0x54] sm:$0xff] %v1713
                  %v1715 = vld [vmem:[%s1663 + $0x58] sm:$0xff]
                  %1716 = vst [vmem:[%s1664 + $0x5c] sm:$0xff] %v1715
                  %v1717 = vld [vmem:[%s1663 + $0x60] sm:$0xff]
                  %1718 = vst [vmem:[%s1664 + $0x64] sm:$0xff] %v1717
                  %v1719 = vld [vmem:[%s1663 + $0x68] sm:$0xff]
                  %1720 = vst [vmem:[%s1664 + $0x6c] sm:$0xff] %v1719
                  %v1721 = vld [vmem:[%s1663 + $0x70] sm:$0xff]
                  %1722 = vst [vmem:[%s1664 + $0x74] sm:$0xff] %v1721
                  %v1723 = vld [vmem:[%s1663 + $0x78] sm:$0xff]
                  %1724 = vst [vmem:[%s1664 + $0x7c] sm:$0xff] %v1723
                  %v1725 = vld [vmem:[%s1663 + $0x80] sm:$0xff]
                  %1726 = vst [vmem:[%s1664 + $0x84] sm:$0xff] %v1725
                  %v1727 = vld [vmem:[%s1663 + $0x88] sm:$0xff]
                  %1728 = vst [vmem:[%s1664 + $0x8c] sm:$0xff] %v1727
                  %v1729 = vld [vmem:[%s1663 + $0x20] sm:$0xff]
                  %1730 = vst [vmem:[%s1664 + $0x28] sm:$0xff] %v1729
                  %v1731 = vld [vmem:[%s1663 + $0x28] sm:$0xff]
                  %1732 = vst [vmem:[%s1664 + $0x30] sm:$0xff] %v1731
                  %v1733 = vld [vmem:[%s1663 + $0x30] sm:$0xff]
                  %1734 = vst [vmem:[%s1664 + $0x38] sm:$0xff] %v1733
                  %v1735 = vld [vmem:[%s1663 + $0x38] sm:$0xff]
                  %1736 = vst [vmem:[%s1664 + $0x40] sm:$0xff] %v1735
                  %v1737 = vld [vmem:[%s1663 + $0x40] sm:$0xff]
                  %1738 = vst [vmem:[%s1664 + $0x48] sm:$0xff] %v1737
                  %v1739 = vld [vmem:[%s1663 + $0x48] sm:$0xff]
                  %1740 = vst [vmem:[%s1664 + $0x50] sm:$0xff] %v1739
                  %v1741 = vld [vmem:[%s1663 + $0x50] sm:$0xff]
                  %1742 = vst [vmem:[%s1664 + $0x58] sm:$0xff] %v1741
                  %v1743 = vld [vmem:[%s1663 + $0x58] sm:$0xff]
                  %1744 = vst [vmem:[%s1664 + $0x60] sm:$0xff] %v1743
                  %v1745 = vld [vmem:[%s1663 + $0x60] sm:$0xff]
                  %1746 = vst [vmem:[%s1664 + $0x68] sm:$0xff] %v1745
                  %v1747 = vld [vmem:[%s1663 + $0x68] sm:$0xff]
                  %1748 = vst [vmem:[%s1664 + $0x70] sm:$0xff] %v1747
                  %v1749 = vld [vmem:[%s1663 + $0x70] sm:$0xff]
                  %1750 = vst [vmem:[%s1664 + $0x78] sm:$0xff] %v1749
                  %v1751 = vld [vmem:[%s1663 + $0x78] sm:$0xff]
                  %1752 = vst [vmem:[%s1664 + $0x80] sm:$0xff] %v1751
                  %v1753 = vld [vmem:[%s1663 + $0x80] sm:$0xff]
                  %1754 = vst [vmem:[%s1664 + $0x88] sm:$0xff] %v1753
                  %v1755 = vld [vmem:[%s1663 + $0x88] sm:$0xff]
                  %1756 = vst [vmem:[%s1664 + $0x90] sm:$0xff] %v1755
                  %v1757 = vld [vmem:[%s1663 + $0x90] sm:$0xff]
                  %1758 = vst [vmem:[%s1664 + $0x98] sm:$0xff] %v1757
                  %v1759 = vld [vmem:[%s1663 + $0x98] sm:$0xff]
                  %1760 = vst [vmem:[%s1664 + $0xa0] sm:$0xff] %v1759
                  %v1761 = vld [vmem:[%s1663 + $0x30] sm:$0xff]
                  %1762 = vst [vmem:[%s1664 + $0x3c] sm:$0xff] %v1761
                  %v1763 = vld [vmem:[%s1663 + $0x38] sm:$0xff]
                  %1764 = vst [vmem:[%s1664 + $0x44] sm:$0xff] %v1763
                  %v1765 = vld [vmem:[%s1663 + $0x40] sm:$0xff]
                  %1766 = vst [vmem:[%s1664 + $0x4c] sm:$0xff] %v1765
                  %v1767 = vld [vmem:[%s1663 + $0x48] sm:$0xff]
                  %1768 = vst [vmem:[%s1664 + $0x54] sm:$0xff] %v1767
                  %v1769 = vld [vmem:[%s1663 + $0x50] sm:$0xff]
                  %1770 = vst [vmem:[%s1664 + $0x5c] sm:$0xff] %v1769
                  %v1771 = vld [vmem:[%s1663 + $0x58] sm:$0xff]
                  %1772 = vst [vmem:[%s1664 + $0x64] sm:$0xff] %v1771
                  %v1773 = vld [vmem:[%s1663 + $0x60] sm:$0xff]
                  %1774 = vst [vmem:[%s1664 + $0x6c] sm:$0xff] %v1773
                  %v1775 = vld [vmem:[%s1663 + $0x68] sm:$0xff]
                  %1776 = vst [vmem:[%s1664 + $0x74] sm:$0xff] %v1775
                  %v1777 = vld [vmem:[%s1663 + $0x70] sm:$0xff]
                  %1778 = vst [vmem:[%s1664 + $0x7c] sm:$0xff] %v1777
                  %v1779 = vld [vmem:[%s1663 + $0x78] sm:$0xff]
                  %1780 = vst [vmem:[%s1664 + $0x84] sm:$0xff] %v1779
                  %v1781 = vld [vmem:[%s1663 + $0x80] sm:$0xff]
                  %1782 = vst [vmem:[%s1664 + $0x8c] sm:$0xff] %v1781
                  %v1783 = vld [vmem:[%s1663 + $0x88] sm:$0xff]
                  %1784 = vst [vmem:[%s1664 + $0x94] sm:$0xff] %v1783
                  %v1785 = vld [vmem:[%s1663 + $0x90] sm:$0xff]
                  %1786 = vst [vmem:[%s1664 + $0x9c] sm:$0xff] %v1785
                  %v1787 = vld [vmem:[%s1663 + $0x98] sm:$0xff]
                  %1788 = vst [vmem:[%s1664 + $0xa4] sm:$0xff] %v1787
                  %v1789 = vld [vmem:[%s1663 + $0xa0] sm:$0xff]
                  %1790 = vst [vmem:[%s1664 + $0xac] sm:$0xff] %v1789
                  %v1791 = vld [vmem:[%s1663 + $0xa8] sm:$0xff]
                  %1792 = vst [vmem:[%s1664 + $0xb4] sm:$0xff] %v1791
                  %s1793 = sadd.s32 1, %s1662
                  %p1794 = scmp.ge.s32.totalorder %s1793, %s1653
                  %s1795 = scalar_select %p1794, 0, %s1793
                  %s1796 = smul.u32 %s1795, 128
                  %s1797 = smul.u32 %s1795, 128
                  %s1798 = scalar_lea.vmem %s1603, %s1796 [#allocation4]
                  %s1799 = scalar_lea.vmem %s1617, %s1797
                $region142: #{st_llm_forward.17} parent=136 // loop_footer
                  %s1659 = sadd.s32 %s1657, 1
                $region143: #{st_llm_forward.17} parent=136 // loop_footer_branch
                  %1656 = sbr.rel target = $region139
                $region144: #{st_llm_forward.17} parent=136 // loop_exit
                  _
                %s1800 = sshrl.u32 %s1652, 4
                %s1801 = sand.u32 %s1652, 15
                %s1802 = smul.u32 %s1800, 16
                %s1803 = smul.u32 128, %s1802
                %s1804 = sshra.s32 %s1803, 4
                %s1805 = scalar_lea.vmem %s1603, %s1804 [#allocation4]
                %s1806 = smul.u32 128, %s1802
                %s1807 = sshra.s32 %s1806, 4
                %s1808 = scalar_lea.vmem %s1617, %s1807
                // While loop
                $region145: #{st_llm_forward.17} parent=136 // loop_pre_header
                  _
                $region146: #{st_llm_forward.17} parent=136 // loop_header
                  %s1812 = sphi 0, %s1814
                  %p1813 = scmp.ge.s32.totalorder %s1812, %s1801
                  %s1817 = sphi 0, %s1830
                  %s1818 = sphi %s1805, %s1833
                  %s1819 = sphi %s1808, %s1834
                $region147: #{st_llm_forward.17} parent=136 // loop_header_branch
                  %1816 = sbr.rel (%p1813) target = $region151
                $region148: #{st_llm_forward.17} parent=136 // loop_body
                  %v1820 = vld [vmem:[%s1818] sm:$0xff]
                  %1821 = vst [vmem:[%s1819] sm:$0xff] %v1820
                  %v1822 = vld [vmem:[%s1818 + $0x10] sm:$0xff]
                  %1823 = vst [vmem:[%s1819 + $0x14] sm:$0xff] %v1822
                  %v1824 = vld [vmem:[%s1818 + $0x20] sm:$0xff]
                  %1825 = vst [vmem:[%s1819 + $0x28] sm:$0xff] %v1824
                  %v1826 = vld [vmem:[%s1818 + $0x30] sm:$0xff]
                  %1827 = vst [vmem:[%s1819 + $0x3c] sm:$0xff] %v1826
                  %s1828 = sadd.s32 1, %s1817
                  %p1829 = scmp.ge.s32.totalorder %s1828, %s1801
                  %s1830 = scalar_select %p1829, 0, %s1828
                  %s1831 = smul.u32 %s1830, 8
                  %s1832 = smul.u32 %s1830, 8
                  %s1833 = scalar_lea.vmem %s1805, %s1831 [#allocation4]
                  %s1834 = scalar_lea.vmem %s1808, %s1832
                $region149: #{st_llm_forward.17} parent=136 // loop_footer
                  %s1814 = sadd.s32 %s1812, 1
                $region150: #{st_llm_forward.17} parent=136 // loop_footer_branch
                  %1811 = sbr.rel target = $region146
                $region151: #{st_llm_forward.17} parent=136 // loop_exit
                  _
              $region137: #{st_llm_forward.17} parent=121 // pred_fallthru
                _
              %p1835 = pneg %p1648
              // Predicated region
              $region152: #{st_llm_forward.17} parent=121 // pred_check
                _
              $region153: #{st_llm_forward.17} parent=121 // pred_check_branch
                %1837 = sbr.rel (%p1648) target = $region155
              $region154: #{st_llm_forward.17} parent=121 // pred_region
                %s1838 = sand.u32 %s1618, 7
                %s1839 = ssub.s32 %s1618, %s1838
                %s1840 = scalar_lea.vmem %s1603, %s1839 [#allocation4]
                %s1841 = ssub.s32 %s1618, %s1838
                %s1842 = scalar_lea.vmem %s1617, %s1841
                %s1843 = sshrl.u32 %s1618, 3
                %s1844 = sshrl.u32 %s1843, 4
                // While loop
                $region156: #{st_llm_forward.17} parent=154 // loop_pre_header
                  _
                $region157: #{st_llm_forward.17} parent=154 // loop_header
                  %s1848 = sphi 0, %s1850
                  %p1849 = scmp.ge.s32.totalorder %s1848, %s1844
                  %s1853 = sphi 0, %s1986
                  %s1854 = sphi %s1603, %s1989
                  %s1855 = sphi %s1617, %s1990
                $region158: #{st_llm_forward.17} parent=154 // loop_header_branch
                  %1852 = sbr.rel (%p1849) target = $region162
                $region159: #{st_llm_forward.17} parent=154 // loop_body
                  %v1856 = vld [vmem:[%s1854] sm:$0xff]
                  %1857 = vst [vmem:[%s1855] sm:$0xff] %v1856
                  %v1858 = vld [vmem:[%s1854 + $0x8] sm:$0xff]
                  %1859 = vst [vmem:[%s1855 + $0x8] sm:$0xff] %v1858
                  %v1860 = vld [vmem:[%s1854 + $0x10] sm:$0xff]
                  %1861 = vst [vmem:[%s1855 + $0x10] sm:$0xff] %v1860
                  %v1862 = vld [vmem:[%s1854 + $0x18] sm:$0xff]
                  %1863 = vst [vmem:[%s1855 + $0x18] sm:$0xff] %v1862
                  %v1864 = vld [vmem:[%s1854 + $0x20] sm:$0xff]
                  %1865 = vst [vmem:[%s1855 + $0x20] sm:$0xff] %v1864
                  %v1866 = vld [vmem:[%s1854 + $0x28] sm:$0xff]
                  %1867 = vst [vmem:[%s1855 + $0x28] sm:$0xff] %v1866
                  %v1868 = vld [vmem:[%s1854 + $0x30] sm:$0xff]
                  %1869 = vst [vmem:[%s1855 + $0x30] sm:$0xff] %v1868
                  %v1870 = vld [vmem:[%s1854 + $0x38] sm:$0xff]
                  %1871 = vst [vmem:[%s1855 + $0x38] sm:$0xff] %v1870
                  %v1872 = vld [vmem:[%s1854 + $0x40] sm:$0xff]
                  %1873 = vst [vmem:[%s1855 + $0x40] sm:$0xff] %v1872
                  %v1874 = vld [vmem:[%s1854 + $0x48] sm:$0xff]
                  %1875 = vst [vmem:[%s1855 + $0x48] sm:$0xff] %v1874
                  %v1876 = vld [vmem:[%s1854 + $0x50] sm:$0xff]
                  %1877 = vst [vmem:[%s1855 + $0x50] sm:$0xff] %v1876
                  %v1878 = vld [vmem:[%s1854 + $0x58] sm:$0xff]
                  %1879 = vst [vmem:[%s1855 + $0x58] sm:$0xff] %v1878
                  %v1880 = vld [vmem:[%s1854 + $0x60] sm:$0xff]
                  %1881 = vst [vmem:[%s1855 + $0x60] sm:$0xff] %v1880
                  %v1882 = vld [vmem:[%s1854 + $0x68] sm:$0xff]
                  %1883 = vst [vmem:[%s1855 + $0x68] sm:$0xff] %v1882
                  %v1884 = vld [vmem:[%s1854 + $0x70] sm:$0xff]
                  %1885 = vst [vmem:[%s1855 + $0x70] sm:$0xff] %v1884
                  %v1886 = vld [vmem:[%s1854 + $0x78] sm:$0xff]
                  %1887 = vst [vmem:[%s1855 + $0x78] sm:$0xff] %v1886
                  %v1888 = vld [vmem:[%s1854 + $0x10] sm:$0xff]
                  %1889 = vst [vmem:[%s1855 + $0x14] sm:$0xff] %v1888
                  %v1890 = vld [vmem:[%s1854 + $0x18] sm:$0xff]
                  %1891 = vst [vmem:[%s1855 + $0x1c] sm:$0xff] %v1890
                  %v1892 = vld [vmem:[%s1854 + $0x20] sm:$0xff]
                  %1893 = vst [vmem:[%s1855 + $0x24] sm:$0xff] %v1892
                  %v1894 = vld [vmem:[%s1854 + $0x28] sm:$0xff]
                  %1895 = vst [vmem:[%s1855 + $0x2c] sm:$0xff] %v1894
                  %v1896 = vld [vmem:[%s1854 + $0x30] sm:$0xff]
                  %1897 = vst [vmem:[%s1855 + $0x34] sm:$0xff] %v1896
                  %v1898 = vld [vmem:[%s1854 + $0x38] sm:$0xff]
                  %1899 = vst [vmem:[%s1855 + $0x3c] sm:$0xff] %v1898
                  %v1900 = vld [vmem:[%s1854 + $0x40] sm:$0xff]
                  %1901 = vst [vmem:[%s1855 + $0x44] sm:$0xff] %v1900
                  %v1902 = vld [vmem:[%s1854 + $0x48] sm:$0xff]
                  %1903 = vst [vmem:[%s1855 + $0x4c] sm:$0xff] %v1902
                  %v1904 = vld [vmem:[%s1854 + $0x50] sm:$0xff]
                  %1905 = vst [vmem:[%s1855 + $0x54] sm:$0xff] %v1904
                  %v1906 = vld [vmem:[%s1854 + $0x58] sm:$0xff]
                  %1907 = vst [vmem:[%s1855 + $0x5c] sm:$0xff] %v1906
                  %v1908 = vld [vmem:[%s1854 + $0x60] sm:$0xff]
                  %1909 = vst [vmem:[%s1855 + $0x64] sm:$0xff] %v1908
                  %v1910 = vld [vmem:[%s1854 + $0x68] sm:$0xff]
                  %1911 = vst [vmem:[%s1855 + $0x6c] sm:$0xff] %v1910
                  %v1912 = vld [vmem:[%s1854 + $0x70] sm:$0xff]
                  %1913 = vst [vmem:[%s1855 + $0x74] sm:$0xff] %v1912
                  %v1914 = vld [vmem:[%s1854 + $0x78] sm:$0xff]
                  %1915 = vst [vmem:[%s1855 + $0x7c] sm:$0xff] %v1914
                  %v1916 = vld [vmem:[%s1854 + $0x80] sm:$0xff]
                  %1917 = vst [vmem:[%s1855 + $0x84] sm:$0xff] %v1916
                  %v1918 = vld [vmem:[%s1854 + $0x88] sm:$0xff]
                  %1919 = vst [vmem:[%s1855 + $0x8c] sm:$0xff] %v1918
                  %v1920 = vld [vmem:[%s1854 + $0x20] sm:$0xff]
                  %1921 = vst [vmem:[%s1855 + $0x28] sm:$0xff] %v1920
                  %v1922 = vld [vmem:[%s1854 + $0x28] sm:$0xff]
                  %1923 = vst [vmem:[%s1855 + $0x30] sm:$0xff] %v1922
                  %v1924 = vld [vmem:[%s1854 + $0x30] sm:$0xff]
                  %1925 = vst [vmem:[%s1855 + $0x38] sm:$0xff] %v1924
                  %v1926 = vld [vmem:[%s1854 + $0x38] sm:$0xff]
                  %1927 = vst [vmem:[%s1855 + $0x40] sm:$0xff] %v1926
                  %v1928 = vld [vmem:[%s1854 + $0x40] sm:$0xff]
                  %1929 = vst [vmem:[%s1855 + $0x48] sm:$0xff] %v1928
                  %v1930 = vld [vmem:[%s1854 + $0x48] sm:$0xff]
                  %1931 = vst [vmem:[%s1855 + $0x50] sm:$0xff] %v1930
                  %v1932 = vld [vmem:[%s1854 + $0x50] sm:$0xff]
                  %1933 = vst [vmem:[%s1855 + $0x58] sm:$0xff] %v1932
                  %v1934 = vld [vmem:[%s1854 + $0x58] sm:$0xff]
                  %1935 = vst [vmem:[%s1855 + $0x60] sm:$0xff] %v1934
                  %v1936 = vld [vmem:[%s1854 + $0x60] sm:$0xff]
                  %1937 = vst [vmem:[%s1855 + $0x68] sm:$0xff] %v1936
                  %v1938 = vld [vmem:[%s1854 + $0x68] sm:$0xff]
                  %1939 = vst [vmem:[%s1855 + $0x70] sm:$0xff] %v1938
                  %v1940 = vld [vmem:[%s1854 + $0x70] sm:$0xff]
                  %1941 = vst [vmem:[%s1855 + $0x78] sm:$0xff] %v1940
                  %v1942 = vld [vmem:[%s1854 + $0x78] sm:$0xff]
                  %1943 = vst [vmem:[%s1855 + $0x80] sm:$0xff] %v1942
                  %v1944 = vld [vmem:[%s1854 + $0x80] sm:$0xff]
                  %1945 = vst [vmem:[%s1855 + $0x88] sm:$0xff] %v1944
                  %v1946 = vld [vmem:[%s1854 + $0x88] sm:$0xff]
                  %1947 = vst [vmem:[%s1855 + $0x90] sm:$0xff] %v1946
                  %v1948 = vld [vmem:[%s1854 + $0x90] sm:$0xff]
                  %1949 = vst [vmem:[%s1855 + $0x98] sm:$0xff] %v1948
                  %v1950 = vld [vmem:[%s1854 + $0x98] sm:$0xff]
                  %1951 = vst [vmem:[%s1855 + $0xa0] sm:$0xff] %v1950
                  %v1952 = vld [vmem:[%s1854 + $0x30] sm:$0xff]
                  %1953 = vst [vmem:[%s1855 + $0x3c] sm:$0xff] %v1952
                  %v1954 = vld [vmem:[%s1854 + $0x38] sm:$0xff]
                  %1955 = vst [vmem:[%s1855 + $0x44] sm:$0xff] %v1954
                  %v1956 = vld [vmem:[%s1854 + $0x40] sm:$0xff]
                  %1957 = vst [vmem:[%s1855 + $0x4c] sm:$0xff] %v1956
                  %v1958 = vld [vmem:[%s1854 + $0x48] sm:$0xff]
                  %1959 = vst [vmem:[%s1855 + $0x54] sm:$0xff] %v1958
                  %v1960 = vld [vmem:[%s1854 + $0x50] sm:$0xff]
                  %1961 = vst [vmem:[%s1855 + $0x5c] sm:$0xff] %v1960
                  %v1962 = vld [vmem:[%s1854 + $0x58] sm:$0xff]
                  %1963 = vst [vmem:[%s1855 + $0x64] sm:$0xff] %v1962
                  %v1964 = vld [vmem:[%s1854 + $0x60] sm:$0xff]
                  %1965 = vst [vmem:[%s1855 + $0x6c] sm:$0xff] %v1964
                  %v1966 = vld [vmem:[%s1854 + $0x68] sm:$0xff]
                  %1967 = vst [vmem:[%s1855 + $0x74] sm:$0xff] %v1966
                  %v1968 = vld [vmem:[%s1854 + $0x70] sm:$0xff]
                  %1969 = vst [vmem:[%s1855 + $0x7c] sm:$0xff] %v1968
                  %v1970 = vld [vmem:[%s1854 + $0x78] sm:$0xff]
                  %1971 = vst [vmem:[%s1855 + $0x84] sm:$0xff] %v1970
                  %v1972 = vld [vmem:[%s1854 + $0x80] sm:$0xff]
                  %1973 = vst [vmem:[%s1855 + $0x8c] sm:$0xff] %v1972
                  %v1974 = vld [vmem:[%s1854 + $0x88] sm:$0xff]
                  %1975 = vst [vmem:[%s1855 + $0x94] sm:$0xff] %v1974
                  %v1976 = vld [vmem:[%s1854 + $0x90] sm:$0xff]
                  %1977 = vst [vmem:[%s1855 + $0x9c] sm:$0xff] %v1976
                  %v1978 = vld [vmem:[%s1854 + $0x98] sm:$0xff]
                  %1979 = vst [vmem:[%s1855 + $0xa4] sm:$0xff] %v1978
                  %v1980 = vld [vmem:[%s1854 + $0xa0] sm:$0xff]
                  %1981 = vst [vmem:[%s1855 + $0xac] sm:$0xff] %v1980
                  %v1982 = vld [vmem:[%s1854 + $0xa8] sm:$0xff]
                  %1983 = vst [vmem:[%s1855 + $0xb4] sm:$0xff] %v1982
                  %s1984 = sadd.s32 1, %s1853
                  %p1985 = scmp.ge.s32.totalorder %s1984, %s1844
                  %s1986 = scalar_select %p1985, 0, %s1984
                  %s1987 = smul.u32 %s1986, 128
                  %s1988 = smul.u32 %s1986, 128
                  %s1989 = scalar_lea.vmem %s1603, %s1987 [#allocation4]
                  %s1990 = scalar_lea.vmem %s1617, %s1988
                $region160: #{st_llm_forward.17} parent=154 // loop_footer
                  %s1850 = sadd.s32 %s1848, 1
                $region161: #{st_llm_forward.17} parent=154 // loop_footer_branch
                  %1847 = sbr.rel target = $region157
                $region162: #{st_llm_forward.17} parent=154 // loop_exit
                  _
                %s1991 = sshrl.u32 %s1843, 4
                %s1992 = sand.u32 %s1843, 15
                %s1993 = smul.u32 %s1991, 16
                %s1994 = smul.u32 128, %s1993
                %s1995 = sshra.s32 %s1994, 4
                %s1996 = scalar_lea.vmem %s1603, %s1995 [#allocation4]
                %s1997 = smul.u32 128, %s1993
                %s1998 = sshra.s32 %s1997, 4
                %s1999 = scalar_lea.vmem %s1617, %s1998
                // While loop
                $region163: #{st_llm_forward.17} parent=154 // loop_pre_header
                  _
                $region164: #{st_llm_forward.17} parent=154 // loop_header
                  %s2003 = sphi 0, %s2005
                  %p2004 = scmp.ge.s32.totalorder %s2003, %s1992
                  %s2008 = sphi 0, %s2021
                  %s2009 = sphi %s1996, %s2024
                  %s2010 = sphi %s1999, %s2025
                $region165: #{st_llm_forward.17} parent=154 // loop_header_branch
                  %2007 = sbr.rel (%p2004) target = $region169
                $region166: #{st_llm_forward.17} parent=154 // loop_body
                  %v2011 = vld [vmem:[%s2009] sm:$0xff]
                  %2012 = vst [vmem:[%s2010] sm:$0xff] %v2011
                  %v2013 = vld [vmem:[%s2009 + $0x10] sm:$0xff]
                  %2014 = vst [vmem:[%s2010 + $0x14] sm:$0xff] %v2013
                  %v2015 = vld [vmem:[%s2009 + $0x20] sm:$0xff]
                  %2016 = vst [vmem:[%s2010 + $0x28] sm:$0xff] %v2015
                  %v2017 = vld [vmem:[%s2009 + $0x30] sm:$0xff]
                  %2018 = vst [vmem:[%s2010 + $0x3c] sm:$0xff] %v2017
                  %s2019 = sadd.s32 1, %s2008
                  %p2020 = scmp.ge.s32.totalorder %s2019, %s1992
                  %s2021 = scalar_select %p2020, 0, %s2019
                  %s2022 = smul.u32 %s2021, 8
                  %s2023 = smul.u32 %s2021, 8
                  %s2024 = scalar_lea.vmem %s1996, %s2022 [#allocation4]
                  %s2025 = scalar_lea.vmem %s1999, %s2023
                $region167: #{st_llm_forward.17} parent=154 // loop_footer
                  %s2005 = sadd.s32 %s2003, 1
                $region168: #{st_llm_forward.17} parent=154 // loop_footer_branch
                  %2002 = sbr.rel target = $region164
                $region169: #{st_llm_forward.17} parent=154 // loop_exit
                  _
                %s2026 = sshll.u32 1, %s1838
                %s2027 = ssub.s32 %s2026, 1
                loop: start=0, step=1, limit=1
                $region170: #{st_llm_forward.17} parent=154 // loop_pre_header
                  _
                $region171: #{st_llm_forward.17} parent=154 // loop_header
                  %s2029 = sphi 0, %s2033
                  %p2030 = scmp.ge.s32.totalorder %s2029, 1
                  %s2034 = sphi %s1840, %s1840
                  %s2035 = sphi %s1842, %s1842
                $region172: #{st_llm_forward.17} parent=154 // loop_header_branch
                  %2032 = sbr.rel (%p2030) target = $region176
                $region173: #{st_llm_forward.17} parent=154 // loop_body
                  %v2036 = vld [vmem:[%s2034] sm:%s2027]
                  %2037 = vst [vmem:[%s2035] sm:%s2027] %v2036
                  %v2038 = vld [vmem:[%s2034 + $0x10] sm:%s2027]
                  %2039 = vst [vmem:[%s2035 + $0x14] sm:%s2027] %v2038
                  %v2040 = vld [vmem:[%s2034 + $0x20] sm:%s2027]
                  %2041 = vst [vmem:[%s2035 + $0x28] sm:%s2027] %v2040
                  %v2042 = vld [vmem:[%s2034 + $0x30] sm:%s2027]
                  %2043 = vst [vmem:[%s2035 + $0x3c] sm:%s2027] %v2042
                $region174: #{st_llm_forward.17} parent=154 // loop_footer
                  %s2033 = sadd.s32 1, %s2029
                $region175: #{st_llm_forward.17} parent=154 // loop_footer_branch
                  %2028 = sbr.rel target = $region171
                $region176: #{st_llm_forward.17} parent=154 // loop_exit
                  _
              $region155: #{st_llm_forward.17} parent=121 // pred_fallthru
                _
            $region122: #{st_llm_forward.17} parent=117 // pred_fallthru
              _
            // Predicated region
            $region123: #{st_llm_forward.17} parent=117 // pred_check
              %p1626 = pneg %p1622
            $region124: #{st_llm_forward.17} parent=117 // pred_check_branch
              %1628 = sbr.rel (%p1626) target = $region126
            $region125: #{st_llm_forward.17} parent=117 // pred_region
              %s1629 = sshll.u32 1, %s1618
              %s1630 = ssub.s32 %s1629, 1
              loop: start=0, step=1, limit=1
              $region127: #{st_llm_forward.17} parent=125 // loop_pre_header
                _
              $region128: #{st_llm_forward.17} parent=125 // loop_header
                %s1632 = sphi 0, %s1636
                %p1633 = scmp.ge.s32.totalorder %s1632, 1
                %s1637 = sphi %s1603, %s1603
                %s1638 = sphi %s1617, %s1617
              $region129: #{st_llm_forward.17} parent=125 // loop_header_branch
                %1635 = sbr.rel (%p1633) target = $region133
              $region130: #{st_llm_forward.17} parent=125 // loop_body
                %v1639 = vld [vmem:[%s1637] sm:%s1630]
                %1640 = vst [vmem:[%s1638] sm:%s1630] %v1639
                %v1641 = vld [vmem:[%s1637 + $0x10] sm:%s1630]
                %1642 = vst [vmem:[%s1638 + $0x14] sm:%s1630] %v1641
                %v1643 = vld [vmem:[%s1637 + $0x20] sm:%s1630]
                %1644 = vst [vmem:[%s1638 + $0x28] sm:%s1630] %v1643
                %v1645 = vld [vmem:[%s1637 + $0x30] sm:%s1630]
                %1646 = vst [vmem:[%s1638 + $0x3c] sm:%s1630] %v1645
              $region131: #{st_llm_forward.17} parent=125 // loop_footer
                %s1636 = sadd.s32 1, %s1632
              $region132: #{st_llm_forward.17} parent=125 // loop_footer_branch
                %1631 = sbr.rel target = $region128
              $region133: #{st_llm_forward.17} parent=125 // loop_exit
                _
            $region126: #{st_llm_forward.17} parent=117 // pred_fallthru
              _
          $region118: #{st_llm_forward.17} parent=113 // pred_fallthru
            _
          %2044 = vnop
        $region114: #{st_llm_forward.17} parent=101 // pred_fallthru
          _
      $region102: #{st_llm_forward.17} parent=5 // pred_fallthru
        _
      %p2045 = scmp.le.s32.totalorder 2, %s11
      // Predicated region
      $region177: #{st_llm_forward.17} parent=5 // pred_check
        %p2046 = pneg %p2045
      $region178: #{st_llm_forward.17} parent=5 // pred_check_branch
        %2048 = sbr.rel (%p2046) target = $region180
      $region179: #{st_llm_forward.17} parent=5 // pred_region
        %s2049 = ssub.s32 %s11, 2
        // Predicated region
        $region181: #{st_llm_forward.17} parent=179 // pred_check
          %p2050 = pneg %p174
        $region182: #{st_llm_forward.17} parent=179 // pred_check_branch
          %2052 = sbr.rel (%p2050) target = $region184
        $region183: #{st_llm_forward.17} parent=179 // pred_region
          %s2053 = sand.u32 %s159, 1
          %s2054 = sand.u32 %s159, 1
          %s2055 = smul.addr %s2054, 64
          %s2056 = scalar_lea.vmem [#allocation4], %s2055
        $region184: #{st_llm_forward.17} parent=179 // pred_fallthru
          _
      $region180: #{st_llm_forward.17} parent=5 // pred_fallthru
        _
    $region6: #{st_llm_forward.17} parent=1 // loop_footer
      %s15 = sadd.s32 1, %s11
    $region7: #{st_llm_forward.17} parent=1 // loop_footer_branch
      %10 = sbr.rel target = $region3
    $region8: #{st_llm_forward.17} parent=1 // loop_exit
      _

// kernel: st_llm_forward.19
$region0: #{st_llm_forward.19}
  #allocation0 [shape = 'u32[]', space=smem, size = 0x4, offset = 0x4, fixed_abs, tag = 'smem constant byte address 0x4 - core index']
  #allocation1 [shape = 'u32[144,128]{1,0:T(1,128)}', space=vmem, size = 0x12000, scoped, tag = 'internal scratch']
  %s0 = inlined_call_operand.vmem [shape: bf16[32,192], index: 0, kind: input, shape index: {}]
  %s1 = inlined_call_operand.vmem [shape: bf16[192,192], index: 1, kind: input, shape index: {}]
  %s2 = inlined_call_operand.vmem [shape: f32[1,192], index: 2, kind: input, shape index: {}]
  %s3 = inlined_call_operand.vmem [shape: bf16[32,192], index: 3, kind: input, shape index: {}]
  %s4 = inlined_call_operand.vmem [shape: bf16[32,192], index: 4, kind: output, shape index: {}]
  %s5 = sld [smem:[#allocation0]]
  $region26: #{st_llm_forward.19} parent=0
    _
  %s7 = ssub.s32 1, %s5
  %s8 = scalar_select 0, %s7, %s5
  // Predicated region
  $region2: #{st_llm_forward.19} parent=0 // pred_check
    _
  $region3: #{st_llm_forward.19} parent=0 // pred_check_branch
    %10 = sbr.rel (0) target = $region5
  $region4: #{st_llm_forward.19} parent=0 // pred_region
    _
  $region5: #{st_llm_forward.19} parent=0 // pred_fallthru
    _
  // Predicated region
  $region6: #{st_llm_forward.19} parent=0 // pred_check
    _
  $region7: #{st_llm_forward.19} parent=0 // pred_check_branch
    %12 = sbr.rel (0) target = $region9
  $region8: #{st_llm_forward.19} parent=0 // pred_region
    _
  $region9: #{st_llm_forward.19} parent=0 // pred_fallthru
    _
  // Predicated region
  $region10: #{st_llm_forward.19} parent=0 // pred_check
    _
  $region11: #{st_llm_forward.19} parent=0 // pred_check_branch
    %14 = sbr.rel (0) target = $region13
  $region12: #{st_llm_forward.19} parent=0 // pred_region
    _
  $region13: #{st_llm_forward.19} parent=0 // pred_fallthru
    _
  // Predicated region
  $region14: #{st_llm_forward.19} parent=0 // pred_check
    _
  $region15: #{st_llm_forward.19} parent=0 // pred_check_branch
    %16 = sbr.rel (0) target = $region17
  $region16: #{st_llm_forward.19} parent=0 // pred_region
    _
  $region17: #{st_llm_forward.19} parent=0 // pred_fallthru
    _
  %v18 = vld [vmem:[%s0] sm:$0xff]
  %v19 = vld [vmem:[%s0 + $0x8] sm:$0xff]
  %v20 = vld [vmem:[%s0 + $0x10] sm:$0xff]
  %v21 = vld [vmem:[%s0 + $0x18] sm:$0xff]
  %v22 = vld [vmem:[%s1] sm:$0xff]
  %v23 = vld [vmem:[%s1 + $0x8] sm:$0xff]
  %v24 = vld [vmem:[%s1 + $0x10] sm:$0xff]
  %v25 = vld [vmem:[%s1 + $0x18] sm:$0xff]
  %v26 = vld [vmem:[%s1 + $0x20] sm:$0xff]
  %v27 = vld [vmem:[%s1 + $0x28] sm:$0xff]
  %v28 = vld [vmem:[%s1 + $0x30] sm:$0xff]
  %v29 = vld [vmem:[%s1 + $0x38] sm:$0xff]
  %v30 = vld [vmem:[%s1 + $0x40] sm:$0xff]
  %v31 = vld [vmem:[%s1 + $0x48] sm:$0xff]
  %v32 = vld [vmem:[%s1 + $0x50] sm:$0xff]
  %v33 = vld [vmem:[%s1 + $0x58] sm:$0xff]
  %v34 = vld [vmem:[%s1 + $0x60] sm:$0xff]
  %v35 = vld [vmem:[%s1 + $0x68] sm:$0xff]
  %v36 = vld [vmem:[%s1 + $0x70] sm:$0xff]
  %v37 = vld [vmem:[%s1 + $0x78] sm:$0xff]
  %v38 = vld [vmem:[%s1 + $0x80] sm:$0xff]
  %v39 = vld [vmem:[%s1 + $0x88] sm:$0xff]
  %v40 = vld [vmem:[%s1 + $0x90] sm:$0xff]
  %v41 = vld [vmem:[%s1 + $0x98] sm:$0xff]
  %v42 = vld [vmem:[%s1 + $0xa0] sm:$0xff]
  %v43 = vld [vmem:[%s1 + $0xa8] sm:$0xff]
  %v44 = vld [vmem:[%s1 + $0xb0] sm:$0xff]
  %v45 = vld [vmem:[%s1 + $0xb8] sm:$0xff]
  %v46 = vld [vmem:[%s2] sm:$0x3]
  %v48 = vlaneseq
  %v49 = vshrl.u32 %v48, 7
  %v50 = vsub.s32 0, %v49
  %v51 = vrot.slane %v46, %v50
  %v52 = vlaneseq
  %v53 = vshrl.u32 %v52, 7
  %v54 = vsub.s32 1, %v53
  %v55 = vrot.slane %v46, %v54
  %v62 = vunpack.c.l.b16 %v18
  %v63 = vunpack.c.h.b16 %v18
  %v64 = vunpack.c.l.b16 %v19
  %v65 = vunpack.c.h.b16 %v19
  %v66 = vunpack.c.l.b16 %v20
  %v67 = vunpack.c.h.b16 %v20
  %v68 = vunpack.c.l.b16 %v21
  %v69 = vunpack.c.h.b16 %v21
  %v70 = vpack.c.b16 %v64, %v62
  %v71 = vpack.c.b16 %v65, %v63
  %v72 = vpack.c.b16 %v68, %v66
  %v73 = vpack.c.b16 %v69, %v67
  %v100 = vunpack.c.l.b16 %v22
  %v101 = vunpack.c.h.b16 %v22
  %v102 = vunpack.c.l.b16 %v23
  %v103 = vunpack.c.h.b16 %v23
  %v104 = vunpack.c.l.b16 %v24
  %v105 = vunpack.c.h.b16 %v24
  %v106 = vunpack.c.l.b16 %v25
  %v107 = vunpack.c.h.b16 %v25
  %v108 = vunpack.c.l.b16 %v26
  %v109 = vunpack.c.h.b16 %v26
  %v110 = vunpack.c.l.b16 %v27
  %v111 = vunpack.c.h.b16 %v27
  %v112 = vunpack.c.l.b16 %v28
  %v113 = vunpack.c.h.b16 %v28
  %v114 = vunpack.c.l.b16 %v29
  %v115 = vunpack.c.h.b16 %v29
  %v116 = vunpack.c.l.b16 %v30
  %v117 = vunpack.c.h.b16 %v30
  %v118 = vunpack.c.l.b16 %v31
  %v119 = vunpack.c.h.b16 %v31
  %v120 = vunpack.c.l.b16 %v32
  %v121 = vunpack.c.h.b16 %v32
  %v122 = vunpack.c.l.b16 %v33
  %v123 = vunpack.c.h.b16 %v33
  %v124 = vunpack.c.l.b16 %v34
  %v125 = vunpack.c.h.b16 %v34
  %v126 = vunpack.c.l.b16 %v35
  %v127 = vunpack.c.h.b16 %v35
  %v128 = vunpack.c.l.b16 %v36
  %v129 = vunpack.c.h.b16 %v36
  %v130 = vunpack.c.l.b16 %v37
  %v131 = vunpack.c.h.b16 %v37
  %v132 = vunpack.c.l.b16 %v38
  %v133 = vunpack.c.h.b16 %v38
  %v134 = vunpack.c.l.b16 %v39
  %v135 = vunpack.c.h.b16 %v39
  %v136 = vunpack.c.l.b16 %v40
  %v137 = vunpack.c.h.b16 %v40
  %v138 = vunpack.c.l.b16 %v41
  %v139 = vunpack.c.h.b16 %v41
  %v140 = vunpack.c.l.b16 %v42
  %v141 = vunpack.c.h.b16 %v42
  %v142 = vunpack.c.l.b16 %v43
  %v143 = vunpack.c.h.b16 %v43
  %v144 = vunpack.c.l.b16 %v44
  %v145 = vunpack.c.h.b16 %v44
  %v146 = vunpack.c.l.b16 %v45
  %v147 = vunpack.c.h.b16 %v45
  %v148 = vpack.c.b16 %v102, %v100
  %v149 = vpack.c.b16 %v103, %v101
  %v150 = vpack.c.b16 %v106, %v104
  %v151 = vpack.c.b16 %v107, %v105
  %v152 = vpack.c.b16 %v110, %v108
  %v153 = vpack.c.b16 %v111, %v109
  %v154 = vpack.c.b16 %v114, %v112
  %v155 = vpack.c.b16 %v115, %v113
  %v156 = vpack.c.b16 %v118, %v116
  %v157 = vpack.c.b16 %v119, %v117
  %v158 = vpack.c.b16 %v122, %v120
  %v159 = vpack.c.b16 %v123, %v121
  %v160 = vpack.c.b16 %v126, %v124
  %v161 = vpack.c.b16 %v127, %v125
  %v162 = vpack.c.b16 %v130, %v128
  %v163 = vpack.c.b16 %v131, %v129
  %v164 = vpack.c.b16 %v134, %v132
  %v165 = vpack.c.b16 %v135, %v133
  %v166 = vpack.c.b16 %v138, %v136
  %v167 = vpack.c.b16 %v139, %v137
  %v168 = vpack.c.b16 %v142, %v140
  %v169 = vpack.c.b16 %v143, %v141
  %v170 = vpack.c.b16 %v146, %v144
  %v171 = vpack.c.b16 %v147, %v145
  %vm196 = vcmask 523264
  %v198 = vsel %vm196, %v71, 0
  %v201 = vsel %vm196, %v73, 0
  %203 = vmatprep.subr.bf16.mxu0 %v163
  %204 = vmatpush1.bf16.msra.mxu0 %v162
  %205 = vmatprep.subr.bf16.mxu0 %v161
  %206 = vmatpush1.bf16.msra.mxu0 %v160
  %207 = vmatprep.subr.bf16.mxu0 %v159
  %208 = vmatpush1.bf16.msra.mxu0 %v158
  %209 = vmatprep.subr.bf16.mxu0 %v157
  %210 = vmatpush1.bf16.msra.mxu0 %v156
  %211 = vmatprep.subr.bf16.mxu0 %v155
  %212 = vmatpush1.bf16.msra.mxu0 %v154
  %213 = vmatprep.subr.bf16.mxu0 %v153
  %214 = vmatpush1.bf16.msra.mxu0 %v152
  %215 = vmatprep.subr.bf16.mxu0 %v151
  %216 = vmatpush1.bf16.msra.mxu0 %v150
  %217 = vmatprep.subr.bf16.mxu0 %v149
  %218 = vmatpush1.bf16.msra.mxu0 %v148
  %219 = vmatprep.subr.bf16.mxu0 0
  %220 = vmatpush2.bf16.msra.mxu0 0
  %221 = vmatprep.subr.bf16.mxu0 0
  %222 = vmatpush2.bf16.msra.mxu0 0
  %223 = vmatprep.subr.bf16.mxu0 0
  %224 = vmatpush2.bf16.msra.mxu0 0
  %225 = vmatprep.subr.bf16.mxu0 0
  %226 = vmatpush2.bf16.msra.mxu0 0
  %227 = vmatprep.subr.bf16.mxu0 %v171
  %228 = vmatpush2.bf16.msra.mxu0 %v170
  %229 = vmatprep.subr.bf16.mxu0 %v169
  %230 = vmatpush2.bf16.msra.mxu0 %v168
  %231 = vmatprep.subr.bf16.mxu0 %v167
  %232 = vmatpush2.bf16.msra.mxu0 %v166
  %233 = vmatprep.subr.bf16.mxu0 %v165
  %234 = vmatpush2.bf16.msra.mxu0 %v164
  %235 = vmatprep.mubr.bf16.mxu0 %v198
  %236 = vmatmul.mubr.bf16.gmra.mxu0 %v70
  %v237 = vpop.f32.mrf.mxu0
  %v238 = vadd.f32 %v51, %v237
  %v239 = vpop.f32.mrf.mxu0
  %v240 = vadd.f32 %v55, %v239
  %v241 = vpop.f32.mrf.mxu0
  %v242 = vadd.f32 %v51, %v241
  %v243 = vpop.f32.mrf.mxu0
  %v244 = vadd.f32 %v55, %v243
  %245 = vmatprep.mubr.bf16.mxu0 %v201
  %246 = vmatmul.mubr.bf16.gmra.mxu0 %v72
  %v247 = vpop.f32.mrf.mxu0
  %v248 = vadd.f32 %v51, %v247
  %v249 = vpop.f32.mrf.mxu0
  %v250 = vadd.f32 %v55, %v249
  %v251 = vpop.f32.mrf.mxu0
  %v252 = vadd.f32 %v51, %v251
  %v253 = vpop.f32.mrf.mxu0
  %v254 = vadd.f32 %v55, %v253
  %255 = vdwg.mxu0
  %v256 = vld [vmem:[%s3] sm:$0xff]
  %v257 = vld [vmem:[%s3 + $0x8] sm:$0xff]
  %v258 = vld [vmem:[%s3 + $0x10] sm:$0xff]
  %v259 = vld [vmem:[%s3 + $0x18] sm:$0xff]
  %v260 = vunpack.c.l.bf16 %v256
  %v261 = vunpack.c.h.bf16 %v256
  %v262 = vunpack.c.l.bf16 %v257
  %v263 = vunpack.c.h.bf16 %v257
  %v264 = vunpack.c.l.bf16 %v258
  %v265 = vunpack.c.h.bf16 %v258
  %v266 = vunpack.c.l.bf16 %v259
  %v267 = vunpack.c.h.bf16 %v259
  %v268 = vadd.f32 %v238, %v260
  %v269 = vadd.f32 %v240, %v261
  %v270 = vadd.f32 %v242, %v262
  %v271 = vadd.f32 %v244, %v263
  %v272 = vadd.f32 %v248, %v264
  %v273 = vadd.f32 %v250, %v265
  %v274 = vadd.f32 %v252, %v266
  %v275 = vadd.f32 %v254, %v267
  %v276 = vpack.c.bf16 %v270, %v268
  %v277 = vpack.c.bf16 %v271, %v269
  %v278 = vpack.c.bf16 %v274, %v272
  %v279 = vpack.c.bf16 %v275, %v273
  %v284 = vunpack.c.l.b16 %v276
  %v285 = vunpack.c.l.b16 %v277
  %v286 = vunpack.c.h.b16 %v276
  %v287 = vunpack.c.h.b16 %v277
  %v288 = vunpack.c.l.b16 %v278
  %v289 = vunpack.c.l.b16 %v279
  %v290 = vunpack.c.h.b16 %v278
  %v291 = vunpack.c.h.b16 %v279
  %v292 = vpack.c.b16 %v285, %v284
  %v293 = vpack.c.b16 %v287, %v286
  %v294 = vpack.c.b16 %v289, %v288
  %v295 = vpack.c.b16 %v291, %v290
  %vm300 = vcmask 1043456
  %vm301 = vcmask 523268
  %vm302 = vmor %vm301, %vm300
  %303 = vst.msk [vmem:[%s4] sm:$0xff] %vm302, %v292
  %304 = vst.msk [vmem:[%s4 + $0x8] sm:$0xff] %vm302, %v293
  %305 = vst.msk [vmem:[%s4 + $0x10] sm:$0xff] %vm302, %v294
  %306 = vst.msk [vmem:[%s4 + $0x18] sm:$0xff] %vm302, %v295
  // Predicated region
  $region18: #{st_llm_forward.19} parent=0 // pred_check
    _
  $region19: #{st_llm_forward.19} parent=0 // pred_check_branch
    %308 = sbr.rel (0) target = $region21
  $region20: #{st_llm_forward.19} parent=0 // pred_region
    _
  $region21: #{st_llm_forward.19} parent=0 // pred_fallthru
    _
  // Predicated region
  $region22: #{st_llm_forward.19} parent=0 // pred_check
    _
  $region23: #{st_llm_forward.19} parent=0 // pred_check_branch
    %310 = sbr.rel (0) target = $region25
  $region24: #{st_llm_forward.19} parent=0 // pred_region
    _
  $region25: #{st_llm_forward.19} parent=0 // pred_fallthru
    _

// kernel: st_llm_forward.18
$region0: #{st_llm_forward.18}
  #allocation0 [shape = 'u32[]', space=smem, size = 0x4, offset = 0x4, fixed_abs, tag = 'smem constant byte address 0x4 - core index']
  #allocation1 [shape = 'u32[144,128]{1,0:T(1,128)}', space=vmem, size = 0x12000, scoped, tag = 'internal scratch']
  %s0 = inlined_call_operand.vmem [shape: bf16[2,16,576], index: 0, kind: input, shape index: {}]
  %s1 = inlined_call_operand.vmem [shape: bf16[2,16,192], index: 1, kind: output, shape index: {}]
  %s2 = sld [smem:[#allocation0]]
  $region37: #{st_llm_forward.18} parent=0
    _
  %s4 = ssub.s32 1, %s2
  %s5 = scalar_select 0, %s4, %s2
  loop: start=0, step=1, limit=4
  $region2: #{st_llm_forward.18} parent=0 // loop_pre_header
    _
  $region3: #{st_llm_forward.18} parent=0 // loop_header
    %s7 = sphi 0, %s11
    %p8 = scmp.ge.s32.totalorder %s7, 4
    %s17 = sphi 0, %s19
    %s20 = sphi 0, %s17
    %s21 = sphi 0, %s20
    %s37 = sphi 0, %s21
    %s43 = sphi 0, %s45
    %s46 = sphi 0, %s43
    %s47 = sphi 0, %s46
    %s63 = sphi 0, %s47
  $region4: #{st_llm_forward.18} parent=0 // loop_header_branch
    %10 = sbr.rel (%p8) target = $region8
  $region5: #{st_llm_forward.18} parent=0 // loop_body
    %s12 = ssub.s32 %s7, 1
    %s13 = ssub.s32 %s7, 2
    %s14 = sadd.s32 %s7, 1
    %s15 = ssub.s32 %s7, %s14
    %p16 = scmp.eq.s32.totalorder %s15, 0
    %s18 = sadd.s32 %s17, 1
    %s19 = scalar_select %p16, %s17, %s18
    %p22 = pneg %p16
    %p23 = scmp.eq.s32.totalorder %s7, 1
    %p24 = por %p22, %p23
    %p25 = scmp.ne.s32.totalorder %s17, %s20
    %p26 = scmp.eq.s32.totalorder %s7, 0
    %p27 = por %p25, %p26
    %p28 = scmp.ne.s32.totalorder %s17, %s20
    %p29 = scmp.eq.s32.totalorder %s12, 1
    %p30 = por %p28, %p29
    %p31 = scmp.ne.s32.totalorder %s20, %s21
    %p32 = scmp.eq.s32.totalorder %s12, 0
    %p33 = por %p31, %p32
    %p34 = scmp.ne.s32.totalorder %s20, %s21
    %p35 = scmp.eq.s32.totalorder %s13, 1
    %p36 = por %p34, %p35
    %p38 = scmp.ne.s32.totalorder %s21, %s37
    %p39 = scmp.eq.s32.totalorder %s13, 0
    %p40 = por %p38, %p39
    %s41 = ssub.s32 %s7, %s14
    %p42 = scmp.eq.s32.totalorder %s41, 0
    %s44 = sadd.s32 %s43, 1
    %s45 = scalar_select %p42, %s43, %s44
    %p48 = pneg %p42
    %p49 = scmp.eq.s32.totalorder %s7, 1
    %p50 = por %p48, %p49
    %p51 = scmp.ne.s32.totalorder %s43, %s46
    %p52 = scmp.eq.s32.totalorder %s7, 0
    %p53 = por %p51, %p52
    %p54 = scmp.ne.s32.totalorder %s43, %s46
    %p55 = scmp.eq.s32.totalorder %s12, 1
    %p56 = por %p54, %p55
    %p57 = scmp.ne.s32.totalorder %s46, %s47
    %p58 = scmp.eq.s32.totalorder %s12, 0
    %p59 = por %p57, %p58
    %p60 = scmp.ne.s32.totalorder %s46, %s47
    %p61 = scmp.eq.s32.totalorder %s13, 1
    %p62 = por %p60, %p61
    %p64 = scmp.ne.s32.totalorder %s47, %s63
    %p65 = scmp.eq.s32.totalorder %s13, 0
    %p66 = por %p64, %p65
    %p67 = scmp.le.s32.totalorder 1, %s7
    %p68 = scmp.lt.s32.totalorder %s7, 3
    %p69 = pnand %p67, %p68
    %p70 = pneg %p69
    // Predicated region
    $region9: #{st_llm_forward.18} parent=5 // pred_check
      _
    $region10: #{st_llm_forward.18} parent=5 // pred_check_branch
      %72 = sbr.rel (%p69) target = $region12
    $region11: #{st_llm_forward.18} parent=5 // pred_region
      %s73 = ssub.s32 %s7, 1
    $region12: #{st_llm_forward.18} parent=5 // pred_fallthru
      _
    %p74 = scmp.lt.s32.totalorder %s7, 2
    // Predicated region
    $region13: #{st_llm_forward.18} parent=5 // pred_check
      %p75 = pneg %p74
    $region14: #{st_llm_forward.18} parent=5 // pred_check_branch
      %77 = sbr.rel (%p75) target = $region16
    $region15: #{st_llm_forward.18} parent=5 // pred_region
      // Predicated region
      $region17: #{st_llm_forward.18} parent=15 // pred_check
        %p78 = pneg %p27
      $region18: #{st_llm_forward.18} parent=15 // pred_check_branch
        %80 = sbr.rel (%p78) target = $region20
      $region19: #{st_llm_forward.18} parent=15 // pred_region
        %p81 = scmp.lt.s32.totalorder %s7, 1
        %s82 = scalar_select %p81, %s7, 1
        %s83 = smul.addr %s82, 10
        %s84 = smul.addr %s83, 4
        %s85 = scalar_lea.vmem %s0, %s84
      $region20: #{st_llm_forward.18} parent=15 // pred_fallthru
        _
    $region16: #{st_llm_forward.18} parent=5 // pred_fallthru
      _
    %p86 = scmp.le.s32.totalorder 1, %s7
    %p87 = scmp.lt.s32.totalorder %s7, 3
    %p88 = pnand %p86, %p87
    %p89 = pneg %p88
    // Predicated region
    $region21: #{st_llm_forward.18} parent=5 // pred_check
      _
    $region22: #{st_llm_forward.18} parent=5 // pred_check_branch
      %91 = sbr.rel (%p88) target = $region24
    $region23: #{st_llm_forward.18} parent=5 // pred_region
      %s92 = ssub.s32 %s7, 1
      %p93 = scmp.lt.s32.totalorder %s12, 1
      %s94 = scalar_select %p93, %s12, 1
      %s95 = smul.addr %s94, 10
      %s96 = smul.addr %s95, 4
      %s97 = scalar_lea.vmem %s0, %s96
      %p98 = pneg %p33
      %p99 = pneg %p30
      %p100 = pneg %p59
      %p101 = pneg %p56
      %p102 = scmp.lt.s32.totalorder %s12, 1
      %s103 = scalar_select %p102, %s12, 1
      %s104 = smul.addr %s103, 4
      %s105 = smul.addr %s104, 4
      %s106 = scalar_lea.vmem %s1, %s105
      %p107 = scmp.lt.s32.totalorder %s12, 1
      %s108 = scalar_select %p107, %s12, 1
      %s109 = smul.addr %s108, 10
      %s110 = smul.addr %s109, 4
      %s111 = scalar_lea.vmem %s0, %s110
      %p112 = scmp.lt.s32.totalorder %s12, 1
      %s113 = scalar_select %p112, %s12, 1
      %s114 = smul.addr %s113, 4
      %s115 = smul.addr %s114, 4
      %s116 = scalar_lea.vmem %s1, %s115
      %v118 = vld [vmem:[%s111] sm:$0xff]
      %v119 = vld [vmem:[%s111 + $0x8] sm:$0xff]
      %v120 = vld [vmem:[%s111 + $0x10] sm:$0xf]
      %v121 = vld [vmem:[%s111 + $0x14] sm:$0xff]
      %v122 = vld [vmem:[%s111 + $0x1c] sm:$0xff]
      %v123 = vld [vmem:[%s111 + $0x24] sm:$0xf]
      %v126 = vrot.slane %v118, 4
      %v127 = vrot.slane %v121, 4
      %128 = vrot.lane.b32.xlu0 %v118, 64
      %v129 = vpop.permute.xlu0 %128
      %130 = vrot.lane.b32.xlu0 %v121, 64
      %v131 = vpop.permute.xlu0 %130
      %v134 = vpack.i.b16 %v129, %v118
      %v135 = vshrl.u32 %v118, 16
      %v136 = vshrl.u32 %v129, 16
      %v137 = vpack.i.b16 %v136, %v135
      %v140 = vpack.i.b16 0, %v126
      %v141 = vshrl.u32 %v126, 16
      %v142 = vshrl.u32 0, 16
      %v143 = vpack.i.b16 %v142, %v141
      %v146 = vpack.i.b16 %v131, %v121
      %v147 = vshrl.u32 %v121, 16
      %v148 = vshrl.u32 %v131, 16
      %v149 = vpack.i.b16 %v148, %v147
      %v151 = vpack.i.b16 0, %v127
      %v152 = vshrl.u32 %v127, 16
      %v153 = vpack.i.b16 %v142, %v152
      %v156 = vunpack.c.l.s4 1983009808
      %v157 = vunpack.c.0.s8 %v156
      %v158 = vlaneseq
      %v159 = vshrl.u32 %v158, 7
      %v160 = vsub.s32 %v157, %v159
      %v161 = vrot.slane %v134, %v160
      %v164 = vunpack.c.l.s4 1983009808
      %v165 = vunpack.c.0.s8 %v164
      %v166 = vlaneseq
      %v167 = vshrl.u32 %v166, 7
      %v168 = vsub.s32 %v165, %v167
      %v169 = vrot.slane %v140, %v168
      %v170 = vcombine.low %v161, %v169
      %v171 = vcombine.high %v161, %v169
      %v173 = vunpack.c.l.s4 1934713408
      %v174 = vunpack.c.0.s8 %v173
      %v175 = vlaneseq
      %v176 = vshrl.u32 %v175, 7
      %v177 = vsub.s32 %v174, %v176
      %v178 = vrot.slane %v170, %v177
      %v180 = vunpack.c.l.s4 1934713408
      %v181 = vunpack.c.0.s8 %v180
      %v182 = vlaneseq
      %v183 = vshrl.u32 %v182, 7
      %v184 = vsub.s32 %v181, %v183
      %v185 = vrot.slane %v171, %v184
      %v186 = vcombine.high %v178, 0
      %v187 = vcombine.high %v185, 0
      %v190 = vunpack.c.l.s4 1983009808
      %v191 = vunpack.c.0.s8 %v190
      %v192 = vlaneseq
      %v193 = vshrl.u32 %v192, 7
      %v194 = vsub.s32 %v191, %v193
      %v195 = vrot.slane %v137, %v194
      %v198 = vunpack.c.l.s4 1983009808
      %v199 = vunpack.c.0.s8 %v198
      %v200 = vlaneseq
      %v201 = vshrl.u32 %v200, 7
      %v202 = vsub.s32 %v199, %v201
      %v203 = vrot.slane %v143, %v202
      %v204 = vcombine.low %v195, %v203
      %v205 = vcombine.high %v195, %v203
      %v207 = vunpack.c.l.s4 1934713408
      %v208 = vunpack.c.0.s8 %v207
      %v209 = vlaneseq
      %v210 = vshrl.u32 %v209, 7
      %v211 = vsub.s32 %v208, %v210
      %v212 = vrot.slane %v204, %v211
      %v214 = vunpack.c.l.s4 1934713408
      %v215 = vunpack.c.0.s8 %v214
      %v216 = vlaneseq
      %v217 = vshrl.u32 %v216, 7
      %v218 = vsub.s32 %v215, %v217
      %v219 = vrot.slane %v205, %v218
      %v220 = vcombine.high %v212, 0
      %v221 = vcombine.high %v219, 0
      %v224 = vunpack.c.l.s4 1983009808
      %v225 = vunpack.c.0.s8 %v224
      %v226 = vlaneseq
      %v227 = vshrl.u32 %v226, 7
      %v228 = vsub.s32 %v225, %v227
      %v229 = vrot.slane %v146, %v228
      %v232 = vunpack.c.l.s4 1983009808
      %v233 = vunpack.c.0.s8 %v232
      %v234 = vlaneseq
      %v235 = vshrl.u32 %v234, 7
      %v236 = vsub.s32 %v233, %v235
      %v237 = vrot.slane %v151, %v236
      %v238 = vcombine.low %v229, %v237
      %v239 = vcombine.high %v229, %v237
      %v241 = vunpack.c.l.s4 1934713408
      %v242 = vunpack.c.0.s8 %v241
      %v243 = vlaneseq
      %v244 = vshrl.u32 %v243, 7
      %v245 = vsub.s32 %v242, %v244
      %v246 = vrot.slane %v238, %v245
      %v248 = vunpack.c.l.s4 1934713408
      %v249 = vunpack.c.0.s8 %v248
      %v250 = vlaneseq
      %v251 = vshrl.u32 %v250, 7
      %v252 = vsub.s32 %v249, %v251
      %v253 = vrot.slane %v239, %v252
      %v254 = vcombine.high %v246, 0
      %v255 = vcombine.high %v253, 0
      %v258 = vunpack.c.l.s4 1983009808
      %v259 = vunpack.c.0.s8 %v258
      %v260 = vlaneseq
      %v261 = vshrl.u32 %v260, 7
      %v262 = vsub.s32 %v259, %v261
      %v263 = vrot.slane %v149, %v262
      %v266 = vunpack.c.l.s4 1983009808
      %v267 = vunpack.c.0.s8 %v266
      %v268 = vlaneseq
      %v269 = vshrl.u32 %v268, 7
      %v270 = vsub.s32 %v267, %v269
      %v271 = vrot.slane %v153, %v270
      %v272 = vcombine.low %v263, %v271
      %v273 = vcombine.high %v263, %v271
      %v275 = vunpack.c.l.s4 1934713408
      %v276 = vunpack.c.0.s8 %v275
      %v277 = vlaneseq
      %v278 = vshrl.u32 %v277, 7
      %v279 = vsub.s32 %v276, %v278
      %v280 = vrot.slane %v272, %v279
      %v282 = vunpack.c.l.s4 1934713408
      %v283 = vunpack.c.0.s8 %v282
      %v284 = vlaneseq
      %v285 = vshrl.u32 %v284, 7
      %v286 = vsub.s32 %v283, %v285
      %v287 = vrot.slane %v273, %v286
      %v288 = vcombine.high %v280, 0
      %v289 = vcombine.high %v287, 0
      %v290 = vcombine.low %v178, %v185
      %v292 = vunpack.c.l.s4 1983009808
      %v293 = vunpack.c.0.s8 %v292
      %v294 = vlaneseq
      %v295 = vshrl.u32 %v294, 7
      %v296 = vsub.s32 %v293, %v295
      %v297 = vrot.slane %v290, %v296
      %v298 = vcombine.low %v186, %v187
      %v300 = vunpack.c.l.s4 1983009808
      %v301 = vunpack.c.0.s8 %v300
      %v302 = vlaneseq
      %v303 = vshrl.u32 %v302, 7
      %v304 = vsub.s32 %v301, %v303
      %v305 = vrot.slane %v298, %v304
      %v306 = vcombine.low %v297, %v305
      %v308 = vunpack.c.l.s4 1934713408
      %v309 = vunpack.c.0.s8 %v308
      %v310 = vlaneseq
      %v311 = vshrl.u32 %v310, 7
      %v312 = vsub.s32 %v309, %v311
      %v313 = vrot.slane %v306, %v312
      %v314 = vcombine.high %v313, 0
      %v315 = vcombine.low %v212, %v219
      %v317 = vunpack.c.l.s4 1983009808
      %v318 = vunpack.c.0.s8 %v317
      %v319 = vlaneseq
      %v320 = vshrl.u32 %v319, 7
      %v321 = vsub.s32 %v318, %v320
      %v322 = vrot.slane %v315, %v321
      %v323 = vcombine.low %v220, %v221
      %v325 = vunpack.c.l.s4 1983009808
      %v326 = vunpack.c.0.s8 %v325
      %v327 = vlaneseq
      %v328 = vshrl.u32 %v327, 7
      %v329 = vsub.s32 %v326, %v328
      %v330 = vrot.slane %v323, %v329
      %v331 = vcombine.low %v322, %v330
      %v333 = vunpack.c.l.s4 1934713408
      %v334 = vunpack.c.0.s8 %v333
      %v335 = vlaneseq
      %v336 = vshrl.u32 %v335, 7
      %v337 = vsub.s32 %v334, %v336
      %v338 = vrot.slane %v331, %v337
      %v339 = vcombine.high %v338, 0
      %v340 = vcombine.low %v246, %v253
      %v342 = vunpack.c.l.s4 1983009808
      %v343 = vunpack.c.0.s8 %v342
      %v344 = vlaneseq
      %v345 = vshrl.u32 %v344, 7
      %v346 = vsub.s32 %v343, %v345
      %v347 = vrot.slane %v340, %v346
      %v348 = vcombine.low %v254, %v255
      %v350 = vunpack.c.l.s4 1983009808
      %v351 = vunpack.c.0.s8 %v350
      %v352 = vlaneseq
      %v353 = vshrl.u32 %v352, 7
      %v354 = vsub.s32 %v351, %v353
      %v355 = vrot.slane %v348, %v354
      %v356 = vcombine.low %v347, %v355
      %v358 = vunpack.c.l.s4 1934713408
      %v359 = vunpack.c.0.s8 %v358
      %v360 = vlaneseq
      %v361 = vshrl.u32 %v360, 7
      %v362 = vsub.s32 %v359, %v361
      %v363 = vrot.slane %v356, %v362
      %v364 = vcombine.high %v363, 0
      %v365 = vcombine.low %v280, %v287
      %v367 = vunpack.c.l.s4 1983009808
      %v368 = vunpack.c.0.s8 %v367
      %v369 = vlaneseq
      %v370 = vshrl.u32 %v369, 7
      %v371 = vsub.s32 %v368, %v370
      %v372 = vrot.slane %v365, %v371
      %v373 = vcombine.low %v288, %v289
      %v375 = vunpack.c.l.s4 1983009808
      %v376 = vunpack.c.0.s8 %v375
      %v377 = vlaneseq
      %v378 = vshrl.u32 %v377, 7
      %v379 = vsub.s32 %v376, %v378
      %v380 = vrot.slane %v373, %v379
      %v381 = vcombine.low %v372, %v380
      %v383 = vunpack.c.l.s4 1934713408
      %v384 = vunpack.c.0.s8 %v383
      %v385 = vlaneseq
      %v386 = vshrl.u32 %v385, 7
      %v387 = vsub.s32 %v384, %v386
      %v388 = vrot.slane %v381, %v387
      %v389 = vcombine.high %v388, 0
      %v392 = vpack.i.b16 %v338, %v313
      %v393 = vshrl.u32 %v313, 16
      %v394 = vshrl.u32 %v338, 16
      %v395 = vpack.i.b16 %v394, %v393
      %v398 = vpack.i.b16 %v339, %v314
      %v401 = vpack.i.b16 %v388, %v363
      %v402 = vshrl.u32 %v363, 16
      %v403 = vshrl.u32 %v388, 16
      %v404 = vpack.i.b16 %v403, %v402
      %v407 = vpack.i.b16 %v389, %v364
      %v408 = vrot.slane %v129, 4
      %v409 = vrot.slane %v131, 4
      %412 = vrot.lane.b32.xlu0 %v119, 64
      %v413 = vpop.permute.xlu0 %412
      %414 = vrot.lane.b32.xlu0 %v122, 64
      %v415 = vpop.permute.xlu0 %414
      %v418 = vpack.i.b16 %v119, %v408
      %v419 = vshrl.u32 %v408, 16
      %v420 = vshrl.u32 %v119, 16
      %v421 = vpack.i.b16 %v420, %v419
      %v423 = vpack.i.b16 0, %v413
      %v424 = vshrl.u32 %v413, 16
      %v425 = vpack.i.b16 %v142, %v424
      %v428 = vpack.i.b16 %v122, %v409
      %v429 = vshrl.u32 %v409, 16
      %v430 = vshrl.u32 %v122, 16
      %v431 = vpack.i.b16 %v430, %v429
      %v433 = vpack.i.b16 0, %v415
      %v434 = vshrl.u32 %v415, 16
      %v435 = vpack.i.b16 %v142, %v434
      %v438 = vunpack.c.l.s4 1983009808
      %v439 = vunpack.c.0.s8 %v438
      %v440 = vlaneseq
      %v441 = vshrl.u32 %v440, 7
      %v442 = vsub.s32 %v439, %v441
      %v443 = vrot.slane %v418, %v442
      %v446 = vunpack.c.l.s4 1983009808
      %v447 = vunpack.c.0.s8 %v446
      %v448 = vlaneseq
      %v449 = vshrl.u32 %v448, 7
      %v450 = vsub.s32 %v447, %v449
      %v451 = vrot.slane %v423, %v450
      %v452 = vcombine.low %v443, %v451
      %v453 = vcombine.high %v443, %v451
      %v455 = vunpack.c.l.s4 1934713408
      %v456 = vunpack.c.0.s8 %v455
      %v457 = vlaneseq
      %v458 = vshrl.u32 %v457, 7
      %v459 = vsub.s32 %v456, %v458
      %v460 = vrot.slane %v452, %v459
      %v462 = vunpack.c.l.s4 1934713408
      %v463 = vunpack.c.0.s8 %v462
      %v464 = vlaneseq
      %v465 = vshrl.u32 %v464, 7
      %v466 = vsub.s32 %v463, %v465
      %v467 = vrot.slane %v453, %v466
      %v468 = vcombine.high %v460, 0
      %v469 = vcombine.high %v467, 0
      %v472 = vunpack.c.l.s4 1983009808
      %v473 = vunpack.c.0.s8 %v472
      %v474 = vlaneseq
      %v475 = vshrl.u32 %v474, 7
      %v476 = vsub.s32 %v473, %v475
      %v477 = vrot.slane %v421, %v476
      %v480 = vunpack.c.l.s4 1983009808
      %v481 = vunpack.c.0.s8 %v480
      %v482 = vlaneseq
      %v483 = vshrl.u32 %v482, 7
      %v484 = vsub.s32 %v481, %v483
      %v485 = vrot.slane %v425, %v484
      %v486 = vcombine.low %v477, %v485
      %v487 = vcombine.high %v477, %v485
      %v489 = vunpack.c.l.s4 1934713408
      %v490 = vunpack.c.0.s8 %v489
      %v491 = vlaneseq
      %v492 = vshrl.u32 %v491, 7
      %v493 = vsub.s32 %v490, %v492
      %v494 = vrot.slane %v486, %v493
      %v496 = vunpack.c.l.s4 1934713408
      %v497 = vunpack.c.0.s8 %v496
      %v498 = vlaneseq
      %v499 = vshrl.u32 %v498, 7
      %v500 = vsub.s32 %v497, %v499
      %v501 = vrot.slane %v487, %v500
      %v502 = vcombine.high %v494, 0
      %v503 = vcombine.high %v501, 0
      %v506 = vunpack.c.l.s4 1983009808
      %v507 = vunpack.c.0.s8 %v506
      %v508 = vlaneseq
      %v509 = vshrl.u32 %v508, 7
      %v510 = vsub.s32 %v507, %v509
      %v511 = vrot.slane %v428, %v510
      %v514 = vunpack.c.l.s4 1983009808
      %v515 = vunpack.c.0.s8 %v514
      %v516 = vlaneseq
      %v517 = vshrl.u32 %v516, 7
      %v518 = vsub.s32 %v515, %v517
      %v519 = vrot.slane %v433, %v518
      %v520 = vcombine.low %v511, %v519
      %v521 = vcombine.high %v511, %v519
      %v523 = vunpack.c.l.s4 1934713408
      %v524 = vunpack.c.0.s8 %v523
      %v525 = vlaneseq
      %v526 = vshrl.u32 %v525, 7
      %v527 = vsub.s32 %v524, %v526
      %v528 = vrot.slane %v520, %v527
      %v530 = vunpack.c.l.s4 1934713408
      %v531 = vunpack.c.0.s8 %v530
      %v532 = vlaneseq
      %v533 = vshrl.u32 %v532, 7
      %v534 = vsub.s32 %v531, %v533
      %v535 = vrot.slane %v521, %v534
      %v536 = vcombine.high %v528, 0
      %v537 = vcombine.high %v535, 0
      %v540 = vunpack.c.l.s4 1983009808
      %v541 = vunpack.c.0.s8 %v540
      %v542 = vlaneseq
      %v543 = vshrl.u32 %v542, 7
      %v544 = vsub.s32 %v541, %v543
      %v545 = vrot.slane %v431, %v544
      %v548 = vunpack.c.l.s4 1983009808
      %v549 = vunpack.c.0.s8 %v548
      %v550 = vlaneseq
      %v551 = vshrl.u32 %v550, 7
      %v552 = vsub.s32 %v549, %v551
      %v553 = vrot.slane %v435, %v552
      %v554 = vcombine.low %v545, %v553
      %v555 = vcombine.high %v545, %v553
      %v557 = vunpack.c.l.s4 1934713408
      %v558 = vunpack.c.0.s8 %v557
      %v559 = vlaneseq
      %v560 = vshrl.u32 %v559, 7
      %v561 = vsub.s32 %v558, %v560
      %v562 = vrot.slane %v554, %v561
      %v564 = vunpack.c.l.s4 1934713408
      %v565 = vunpack.c.0.s8 %v564
      %v566 = vlaneseq
      %v567 = vshrl.u32 %v566, 7
      %v568 = vsub.s32 %v565, %v567
      %v569 = vrot.slane %v555, %v568
      %v570 = vcombine.high %v562, 0
      %v571 = vcombine.high %v569, 0
      %v572 = vcombine.low %v460, %v467
      %v574 = vunpack.c.l.s4 1983009808
      %v575 = vunpack.c.0.s8 %v574
      %v576 = vlaneseq
      %v577 = vshrl.u32 %v576, 7
      %v578 = vsub.s32 %v575, %v577
      %v579 = vrot.slane %v572, %v578
      %v580 = vcombine.low %v468, %v469
      %v582 = vunpack.c.l.s4 1983009808
      %v583 = vunpack.c.0.s8 %v582
      %v584 = vlaneseq
      %v585 = vshrl.u32 %v584, 7
      %v586 = vsub.s32 %v583, %v585
      %v587 = vrot.slane %v580, %v586
      %v588 = vcombine.low %v579, %v587
      %v590 = vunpack.c.l.s4 1934713408
      %v591 = vunpack.c.0.s8 %v590
      %v592 = vlaneseq
      %v593 = vshrl.u32 %v592, 7
      %v594 = vsub.s32 %v591, %v593
      %v595 = vrot.slane %v588, %v594
      %v596 = vcombine.high %v595, 0
      %v597 = vcombine.low %v494, %v501
      %v599 = vunpack.c.l.s4 1983009808
      %v600 = vunpack.c.0.s8 %v599
      %v601 = vlaneseq
      %v602 = vshrl.u32 %v601, 7
      %v603 = vsub.s32 %v600, %v602
      %v604 = vrot.slane %v597, %v603
      %v605 = vcombine.low %v502, %v503
      %v607 = vunpack.c.l.s4 1983009808
      %v608 = vunpack.c.0.s8 %v607
      %v609 = vlaneseq
      %v610 = vshrl.u32 %v609, 7
      %v611 = vsub.s32 %v608, %v610
      %v612 = vrot.slane %v605, %v611
      %v613 = vcombine.low %v604, %v612
      %v615 = vunpack.c.l.s4 1934713408
      %v616 = vunpack.c.0.s8 %v615
      %v617 = vlaneseq
      %v618 = vshrl.u32 %v617, 7
      %v619 = vsub.s32 %v616, %v618
      %v620 = vrot.slane %v613, %v619
      %v621 = vcombine.high %v620, 0
      %v622 = vcombine.low %v528, %v535
      %v624 = vunpack.c.l.s4 1983009808
      %v625 = vunpack.c.0.s8 %v624
      %v626 = vlaneseq
      %v627 = vshrl.u32 %v626, 7
      %v628 = vsub.s32 %v625, %v627
      %v629 = vrot.slane %v622, %v628
      %v630 = vcombine.low %v536, %v537
      %v632 = vunpack.c.l.s4 1983009808
      %v633 = vunpack.c.0.s8 %v632
      %v634 = vlaneseq
      %v635 = vshrl.u32 %v634, 7
      %v636 = vsub.s32 %v633, %v635
      %v637 = vrot.slane %v630, %v636
      %v638 = vcombine.low %v629, %v637
      %v640 = vunpack.c.l.s4 1934713408
      %v641 = vunpack.c.0.s8 %v640
      %v642 = vlaneseq
      %v643 = vshrl.u32 %v642, 7
      %v644 = vsub.s32 %v641, %v643
      %v645 = vrot.slane %v638, %v644
      %v646 = vcombine.high %v645, 0
      %v647 = vcombine.low %v562, %v569
      %v649 = vunpack.c.l.s4 1983009808
      %v650 = vunpack.c.0.s8 %v649
      %v651 = vlaneseq
      %v652 = vshrl.u32 %v651, 7
      %v653 = vsub.s32 %v650, %v652
      %v654 = vrot.slane %v647, %v653
      %v655 = vcombine.low %v570, %v571
      %v657 = vunpack.c.l.s4 1983009808
      %v658 = vunpack.c.0.s8 %v657
      %v659 = vlaneseq
      %v660 = vshrl.u32 %v659, 7
      %v661 = vsub.s32 %v658, %v660
      %v662 = vrot.slane %v655, %v661
      %v663 = vcombine.low %v654, %v662
      %v665 = vunpack.c.l.s4 1934713408
      %v666 = vunpack.c.0.s8 %v665
      %v667 = vlaneseq
      %v668 = vshrl.u32 %v667, 7
      %v669 = vsub.s32 %v666, %v668
      %v670 = vrot.slane %v663, %v669
      %v671 = vcombine.high %v670, 0
      %v674 = vpack.i.b16 %v620, %v595
      %v675 = vshrl.u32 %v595, 16
      %v676 = vshrl.u32 %v620, 16
      %v677 = vpack.i.b16 %v676, %v675
      %v680 = vpack.i.b16 %v621, %v596
      %v683 = vpack.i.b16 %v670, %v645
      %v684 = vshrl.u32 %v645, 16
      %v685 = vshrl.u32 %v670, 16
      %v686 = vpack.i.b16 %v685, %v684
      %v689 = vpack.i.b16 %v671, %v646
      %v690 = vrot.slane %v119, 4
      %v691 = vrot.slane %v122, 4
      %v692 = vrot.slane %v413, 4
      %v693 = vrot.slane %v415, 4
      %v696 = vpack.i.b16 %v692, %v690
      %v697 = vshrl.u32 %v690, 16
      %v698 = vshrl.u32 %v692, 16
      %v699 = vpack.i.b16 %v698, %v697
      %v701 = vpack.i.b16 0, %v120
      %v702 = vshrl.u32 %v120, 16
      %v703 = vpack.i.b16 %v142, %v702
      %v706 = vpack.i.b16 %v693, %v691
      %v707 = vshrl.u32 %v691, 16
      %v708 = vshrl.u32 %v693, 16
      %v709 = vpack.i.b16 %v708, %v707
      %v711 = vpack.i.b16 0, %v123
      %v712 = vshrl.u32 %v123, 16
      %v713 = vpack.i.b16 %v142, %v712
      %v716 = vunpack.c.l.s4 1983009808
      %v717 = vunpack.c.0.s8 %v716
      %v718 = vlaneseq
      %v719 = vshrl.u32 %v718, 7
      %v720 = vsub.s32 %v717, %v719
      %v721 = vrot.slane %v696, %v720
      %v724 = vunpack.c.l.s4 1983009808
      %v725 = vunpack.c.0.s8 %v724
      %v726 = vlaneseq
      %v727 = vshrl.u32 %v726, 7
      %v728 = vsub.s32 %v725, %v727
      %v729 = vrot.slane %v701, %v728
      %v730 = vcombine.low %v721, %v729
      %v731 = vcombine.high %v721, %v729
      %v733 = vunpack.c.l.s4 1934713408
      %v734 = vunpack.c.0.s8 %v733
      %v735 = vlaneseq
      %v736 = vshrl.u32 %v735, 7
      %v737 = vsub.s32 %v734, %v736
      %v738 = vrot.slane %v730, %v737
      %v740 = vunpack.c.l.s4 1934713408
      %v741 = vunpack.c.0.s8 %v740
      %v742 = vlaneseq
      %v743 = vshrl.u32 %v742, 7
      %v744 = vsub.s32 %v741, %v743
      %v745 = vrot.slane %v731, %v744
      %v746 = vcombine.high %v738, 0
      %v747 = vcombine.high %v745, 0
      %v750 = vunpack.c.l.s4 1983009808
      %v751 = vunpack.c.0.s8 %v750
      %v752 = vlaneseq
      %v753 = vshrl.u32 %v752, 7
      %v754 = vsub.s32 %v751, %v753
      %v755 = vrot.slane %v699, %v754
      %v758 = vunpack.c.l.s4 1983009808
      %v759 = vunpack.c.0.s8 %v758
      %v760 = vlaneseq
      %v761 = vshrl.u32 %v760, 7
      %v762 = vsub.s32 %v759, %v761
      %v763 = vrot.slane %v703, %v762
      %v764 = vcombine.low %v755, %v763
      %v765 = vcombine.high %v755, %v763
      %v767 = vunpack.c.l.s4 1934713408
      %v768 = vunpack.c.0.s8 %v767
      %v769 = vlaneseq
      %v770 = vshrl.u32 %v769, 7
      %v771 = vsub.s32 %v768, %v770
      %v772 = vrot.slane %v764, %v771
      %v774 = vunpack.c.l.s4 1934713408
      %v775 = vunpack.c.0.s8 %v774
      %v776 = vlaneseq
      %v777 = vshrl.u32 %v776, 7
      %v778 = vsub.s32 %v775, %v777
      %v779 = vrot.slane %v765, %v778
      %v780 = vcombine.high %v772, 0
      %v781 = vcombine.high %v779, 0
      %v784 = vunpack.c.l.s4 1983009808
      %v785 = vunpack.c.0.s8 %v784
      %v786 = vlaneseq
      %v787 = vshrl.u32 %v786, 7
      %v788 = vsub.s32 %v785, %v787
      %v789 = vrot.slane %v706, %v788
      %v792 = vunpack.c.l.s4 1983009808
      %v793 = vunpack.c.0.s8 %v792
      %v794 = vlaneseq
      %v795 = vshrl.u32 %v794, 7
      %v796 = vsub.s32 %v793, %v795
      %v797 = vrot.slane %v711, %v796
      %v798 = vcombine.low %v789, %v797
      %v799 = vcombine.high %v789, %v797
      %v801 = vunpack.c.l.s4 1934713408
      %v802 = vunpack.c.0.s8 %v801
      %v803 = vlaneseq
      %v804 = vshrl.u32 %v803, 7
      %v805 = vsub.s32 %v802, %v804
      %v806 = vrot.slane %v798, %v805
      %v808 = vunpack.c.l.s4 1934713408
      %v809 = vunpack.c.0.s8 %v808
      %v810 = vlaneseq
      %v811 = vshrl.u32 %v810, 7
      %v812 = vsub.s32 %v809, %v811
      %v813 = vrot.slane %v799, %v812
      %v814 = vcombine.high %v806, 0
      %v815 = vcombine.high %v813, 0
      %v818 = vunpack.c.l.s4 1983009808
      %v819 = vunpack.c.0.s8 %v818
      %v820 = vlaneseq
      %v821 = vshrl.u32 %v820, 7
      %v822 = vsub.s32 %v819, %v821
      %v823 = vrot.slane %v709, %v822
      %v826 = vunpack.c.l.s4 1983009808
      %v827 = vunpack.c.0.s8 %v826
      %v828 = vlaneseq
      %v829 = vshrl.u32 %v828, 7
      %v830 = vsub.s32 %v827, %v829
      %v831 = vrot.slane %v713, %v830
      %v832 = vcombine.low %v823, %v831
      %v833 = vcombine.high %v823, %v831
      %v835 = vunpack.c.l.s4 1934713408
      %v836 = vunpack.c.0.s8 %v835
      %v837 = vlaneseq
      %v838 = vshrl.u32 %v837, 7
      %v839 = vsub.s32 %v836, %v838
      %v840 = vrot.slane %v832, %v839
      %v842 = vunpack.c.l.s4 1934713408
      %v843 = vunpack.c.0.s8 %v842
      %v844 = vlaneseq
      %v845 = vshrl.u32 %v844, 7
      %v846 = vsub.s32 %v843, %v845
      %v847 = vrot.slane %v833, %v846
      %v848 = vcombine.high %v840, 0
      %v849 = vcombine.high %v847, 0
      %v850 = vcombine.low %v738, %v745
      %v852 = vunpack.c.l.s4 1983009808
      %v853 = vunpack.c.0.s8 %v852
      %v854 = vlaneseq
      %v855 = vshrl.u32 %v854, 7
      %v856 = vsub.s32 %v853, %v855
      %v857 = vrot.slane %v850, %v856
      %v858 = vcombine.low %v746, %v747
      %v860 = vunpack.c.l.s4 1983009808
      %v861 = vunpack.c.0.s8 %v860
      %v862 = vlaneseq
      %v863 = vshrl.u32 %v862, 7
      %v864 = vsub.s32 %v861, %v863
      %v865 = vrot.slane %v858, %v864
      %v866 = vcombine.low %v857, %v865
      %v868 = vunpack.c.l.s4 1934713408
      %v869 = vunpack.c.0.s8 %v868
      %v870 = vlaneseq
      %v871 = vshrl.u32 %v870, 7
      %v872 = vsub.s32 %v869, %v871
      %v873 = vrot.slane %v866, %v872
      %v874 = vcombine.high %v873, 0
      %v875 = vcombine.low %v772, %v779
      %v877 = vunpack.c.l.s4 1983009808
      %v878 = vunpack.c.0.s8 %v877
      %v879 = vlaneseq
      %v880 = vshrl.u32 %v879, 7
      %v881 = vsub.s32 %v878, %v880
      %v882 = vrot.slane %v875, %v881
      %v883 = vcombine.low %v780, %v781
      %v885 = vunpack.c.l.s4 1983009808
      %v886 = vunpack.c.0.s8 %v885
      %v887 = vlaneseq
      %v888 = vshrl.u32 %v887, 7
      %v889 = vsub.s32 %v886, %v888
      %v890 = vrot.slane %v883, %v889
      %v891 = vcombine.low %v882, %v890
      %v893 = vunpack.c.l.s4 1934713408
      %v894 = vunpack.c.0.s8 %v893
      %v895 = vlaneseq
      %v896 = vshrl.u32 %v895, 7
      %v897 = vsub.s32 %v894, %v896
      %v898 = vrot.slane %v891, %v897
      %v899 = vcombine.high %v898, 0
      %v900 = vcombine.low %v806, %v813
      %v902 = vunpack.c.l.s4 1983009808
      %v903 = vunpack.c.0.s8 %v902
      %v904 = vlaneseq
      %v905 = vshrl.u32 %v904, 7
      %v906 = vsub.s32 %v903, %v905
      %v907 = vrot.slane %v900, %v906
      %v908 = vcombine.low %v814, %v815
      %v910 = vunpack.c.l.s4 1983009808
      %v911 = vunpack.c.0.s8 %v910
      %v912 = vlaneseq
      %v913 = vshrl.u32 %v912, 7
      %v914 = vsub.s32 %v911, %v913
      %v915 = vrot.slane %v908, %v914
      %v916 = vcombine.low %v907, %v915
      %v918 = vunpack.c.l.s4 1934713408
      %v919 = vunpack.c.0.s8 %v918
      %v920 = vlaneseq
      %v921 = vshrl.u32 %v920, 7
      %v922 = vsub.s32 %v919, %v921
      %v923 = vrot.slane %v916, %v922
      %v924 = vcombine.high %v923, 0
      %v925 = vcombine.low %v840, %v847
      %v927 = vunpack.c.l.s4 1983009808
      %v928 = vunpack.c.0.s8 %v927
      %v929 = vlaneseq
      %v930 = vshrl.u32 %v929, 7
      %v931 = vsub.s32 %v928, %v930
      %v932 = vrot.slane %v925, %v931
      %v933 = vcombine.low %v848, %v849
      %v935 = vunpack.c.l.s4 1983009808
      %v936 = vunpack.c.0.s8 %v935
      %v937 = vlaneseq
      %v938 = vshrl.u32 %v937, 7
      %v939 = vsub.s32 %v936, %v938
      %v940 = vrot.slane %v933, %v939
      %v941 = vcombine.low %v932, %v940
      %v943 = vunpack.c.l.s4 1934713408
      %v944 = vunpack.c.0.s8 %v943
      %v945 = vlaneseq
      %v946 = vshrl.u32 %v945, 7
      %v947 = vsub.s32 %v944, %v946
      %v948 = vrot.slane %v941, %v947
      %v949 = vcombine.high %v948, 0
      %v952 = vpack.i.b16 %v898, %v873
      %v953 = vshrl.u32 %v873, 16
      %v954 = vshrl.u32 %v898, 16
      %v955 = vpack.i.b16 %v954, %v953
      %v958 = vpack.i.b16 %v899, %v874
      %v961 = vpack.i.b16 %v948, %v923
      %v962 = vshrl.u32 %v923, 16
      %v963 = vshrl.u32 %v948, 16
      %v964 = vpack.i.b16 %v963, %v962
      %v967 = vpack.i.b16 %v949, %v924
      %v968 = vunpack.c.l.b16 %v392
      %v969 = vunpack.c.l.b16 %v401
      %v970 = vpack.c.b16 %v969, %v968
      %v971 = vunpack.c.l.b16 %v674
      %v972 = vunpack.c.l.b16 %v683
      %v973 = vpack.c.b16 %v972, %v971
      %vm974 = vcmask 523264
      %v976 = vsel %vm974, %v970, 0
      %v979 = vsel %vm974, %v973, 0
      %981 = vmatprep.subr.bf16.mxu0 0
      %982 = vmatpush1.bf16.xpose.msra.mxu0 0
      %983 = vmatprep.subr.bf16.mxu0 0
      %984 = vmatpush1.bf16.xpose.msra.mxu0 0
      %985 = vmatprep.subr.bf16.mxu0 0
      %986 = vmatpush1.bf16.xpose.msra.mxu0 0
      %987 = vmatprep.subr.bf16.mxu0 0
      %988 = vmatpush1.bf16.xpose.msra.mxu0 0
      %989 = vmatprep.subr.bf16.mxu0 0
      %990 = vmatpush1.bf16.xpose.msra.mxu0 0
      %991 = vmatprep.subr.bf16.mxu0 0
      %992 = vmatpush1.bf16.xpose.msra.mxu0 0
      %993 = vmatprep.subr.bf16.mxu0 0
      %994 = vmatpush1.bf16.xpose.msra.mxu0 0
      %995 = vmatprep.subr.bf16.mxu0 0
      %996 = vmatpush1.bf16.xpose.msra.mxu0 %v979
      %997 = vmatprep.subr.bf16.mxu0 0
      %998 = vmatpush2.bf16.xpose.msra.mxu0 0
      %999 = vmatprep.subr.bf16.mxu0 0
      %1000 = vmatpush2.bf16.xpose.msra.mxu0 0
      %1001 = vmatprep.subr.bf16.mxu0 0
      %1002 = vmatpush2.bf16.xpose.msra.mxu0 0
      %1003 = vmatprep.subr.bf16.mxu0 0
      %1004 = vmatpush2.bf16.xpose.msra.mxu0 0
      %1005 = vmatprep.subr.bf16.mxu0 0
      %1006 = vmatpush2.bf16.xpose.msra.mxu0 0
      %1007 = vmatprep.subr.bf16.mxu0 0
      %1008 = vmatpush2.bf16.xpose.msra.mxu0 0
      %1009 = vmatprep.subr.bf16.mxu0 0
      %1010 = vmatpush2.bf16.xpose.msra.mxu0 0
      %1011 = vmatprep.subr.bf16.mxu0 0
      %1012 = vmatpush2.bf16.xpose.msra.mxu0 0
      %1013 = vmatprep.mubr.bf16.mxu0 0
      %1014 = vmatmul.mubr.bf16.gmra.mxu0 %v976
      %v1015 = vpop.f32.mrf.mxu0
      %v1016 = vadd.f32 0.0, %v1015
      %v1017 = vpop.f32.mrf.mxu0
      %v1018 = vpop.f32.mrf.mxu0
      %v1019 = vadd.f32 0.0, %v1018
      %v1020 = vpop.f32.mrf.mxu0
      %1021 = vdwg.mxu0
      %v1022 = vunpack.c.l.b16 %v395
      %v1023 = vunpack.c.l.b16 %v404
      %v1024 = vpack.c.b16 %v1023, %v1022
      %v1025 = vunpack.c.l.b16 %v677
      %v1026 = vunpack.c.l.b16 %v686
      %v1027 = vpack.c.b16 %v1026, %v1025
      %v1029 = vsel %vm974, %v1024, 0
      %v1032 = vsel %vm974, %v1027, 0
      %1034 = vmatprep.subr.bf16.mxu0 0
      %1035 = vmatpush1.bf16.xpose.msra.mxu0 0
      %1036 = vmatprep.subr.bf16.mxu0 0
      %1037 = vmatpush1.bf16.xpose.msra.mxu0 0
      %1038 = vmatprep.subr.bf16.mxu0 0
      %1039 = vmatpush1.bf16.xpose.msra.mxu0 0
      %1040 = vmatprep.subr.bf16.mxu0 0
      %1041 = vmatpush1.bf16.xpose.msra.mxu0 0
      %1042 = vmatprep.subr.bf16.mxu0 0
      %1043 = vmatpush1.bf16.xpose.msra.mxu0 0
      %1044 = vmatprep.subr.bf16.mxu0 0
      %1045 = vmatpush1.bf16.xpose.msra.mxu0 0
      %1046 = vmatprep.subr.bf16.mxu0 0
      %1047 = vmatpush1.bf16.xpose.msra.mxu0 0
      %1048 = vmatprep.subr.bf16.mxu0 0
      %1049 = vmatpush1.bf16.xpose.msra.mxu0 %v1032
      %1050 = vmatprep.subr.bf16.mxu0 0
      %1051 = vmatpush2.bf16.xpose.msra.mxu0 0
      %1052 = vmatprep.subr.bf16.mxu0 0
      %1053 = vmatpush2.bf16.xpose.msra.mxu0 0
      %1054 = vmatprep.subr.bf16.mxu0 0
      %1055 = vmatpush2.bf16.xpose.msra.mxu0 0
      %1056 = vmatprep.subr.bf16.mxu0 0
      %1057 = vmatpush2.bf16.xpose.msra.mxu0 0
      %1058 = vmatprep.subr.bf16.mxu0 0
      %1059 = vmatpush2.bf16.xpose.msra.mxu0 0
      %1060 = vmatprep.subr.bf16.mxu0 0
      %1061 = vmatpush2.bf16.xpose.msra.mxu0 0
      %1062 = vmatprep.subr.bf16.mxu0 0
      %1063 = vmatpush2.bf16.xpose.msra.mxu0 0
      %1064 = vmatprep.subr.bf16.mxu0 0
      %1065 = vmatpush2.bf16.xpose.msra.mxu0 0
      %1066 = vmatprep.mubr.bf16.mxu0 0
      %1067 = vmatmul.mubr.bf16.gmra.mxu0 %v1029
      %v1068 = vpop.f32.mrf.mxu0
      %v1069 = vadd.f32 0.0, %v1068
      %v1070 = vpop.f32.mrf.mxu0
      %v1071 = vpop.f32.mrf.mxu0
      %v1072 = vadd.f32 0.0, %v1071
      %v1073 = vpop.f32.mrf.mxu0
      %1074 = vdwg.mxu0
      %v1075 = vunpack.c.l.b16 %v398
      %v1076 = vunpack.c.l.b16 %v407
      %v1077 = vpack.c.b16 %v1076, %v1075
      %v1078 = vunpack.c.l.b16 %v680
      %v1079 = vunpack.c.l.b16 %v689
      %v1080 = vpack.c.b16 %v1079, %v1078
      %v1082 = vsel %vm974, %v1077, 0
      %v1085 = vsel %vm974, %v1080, 0
      %1087 = vmatprep.subr.bf16.mxu0 0
      %1088 = vmatpush1.bf16.xpose.msra.mxu0 0
      %1089 = vmatprep.subr.bf16.mxu0 0
      %1090 = vmatpush1.bf16.xpose.msra.mxu0 0
      %1091 = vmatprep.subr.bf16.mxu0 0
      %1092 = vmatpush1.bf16.xpose.msra.mxu0 0
      %1093 = vmatprep.subr.bf16.mxu0 0
      %1094 = vmatpush1.bf16.xpose.msra.mxu0 0
      %1095 = vmatprep.subr.bf16.mxu0 0
      %1096 = vmatpush1.bf16.xpose.msra.mxu0 0
      %1097 = vmatprep.subr.bf16.mxu0 0
      %1098 = vmatpush1.bf16.xpose.msra.mxu0 0
      %1099 = vmatprep.subr.bf16.mxu0 0
      %1100 = vmatpush1.bf16.xpose.msra.mxu0 0
      %1101 = vmatprep.subr.bf16.mxu0 0
      %1102 = vmatpush1.bf16.xpose.msra.mxu0 %v1085
      %1103 = vmatprep.subr.bf16.mxu0 0
      %1104 = vmatpush2.bf16.xpose.msra.mxu0 0
      %1105 = vmatprep.subr.bf16.mxu0 0
      %1106 = vmatpush2.bf16.xpose.msra.mxu0 0
      %1107 = vmatprep.subr.bf16.mxu0 0
      %1108 = vmatpush2.bf16.xpose.msra.mxu0 0
      %1109 = vmatprep.subr.bf16.mxu0 0
      %1110 = vmatpush2.bf16.xpose.msra.mxu0 0
      %1111 = vmatprep.subr.bf16.mxu0 0
      %1112 = vmatpush2.bf16.xpose.msra.mxu0 0
      %1113 = vmatprep.subr.bf16.mxu0 0
      %1114 = vmatpush2.bf16.xpose.msra.mxu0 0
      %1115 = vmatprep.subr.bf16.mxu0 0
      %1116 = vmatpush2.bf16.xpose.msra.mxu0 0
      %1117 = vmatprep.subr.bf16.mxu0 0
      %1118 = vmatpush2.bf16.xpose.msra.mxu0 0
      %1119 = vmatprep.mubr.bf16.mxu0 0
      %1120 = vmatmul.mubr.bf16.gmra.mxu0 %v1082
      %v1121 = vpop.f32.mrf.mxu0
      %v1122 = vadd.f32 0.0, %v1121
      %v1123 = vpop.f32.mrf.mxu0
      %v1124 = vpop.f32.mrf.mxu0
      %v1125 = vadd.f32 0.0, %v1124
      %v1126 = vpop.f32.mrf.mxu0
      %1127 = vdwg.mxu0
      %v1128 = vlaneseq
      %v1129 = vshrl.u32 %v1128, 7
      %v1130 = vadd.s32 %v1129, 8
      %v1131 = vlaneseq
      %v1132 = vand.u32 %v1131, 127
      %vm1133 = vcmp.le.s32.totalorder %v1132, %v1129
      %vm1134 = vcmp.le.s32.totalorder %v1132, %v1130
      %v1135 = vsel %vm1133, 1, 0
      %v1136 = vsel %vm1134, 1, 0
      %vm1137 = vcmp.eq.s32.totalorder %v1135, 1
      %vm1138 = vcmp.eq.s32.totalorder %v1136, 1
      %v1139 = vsel %vm1137, %v1016, -1e+30
      %v1140 = vsel %vm1138, %v1019, -1e+30
      %v1141 = vsel %vm1137, %v1069, -1e+30
      %v1142 = vsel %vm1138, %v1072, -1e+30
      %v1143 = vsel %vm1137, %v1122, -1e+30
      %v1144 = vsel %vm1138, %v1125, -1e+30
      %vm1145 = vcmask 130048
      %v1146 = vsel %vm1145, %v1139, -inf
      %1147 = vmax.xlane.f32.xlu0 %v1146
      %v1148 = vpop.xlane.xlu0 %1147
      %v1149 = vsel %vm1145, %v1140, -inf
      %1150 = vmax.xlane.f32.xlu0 %v1149
      %v1151 = vpop.xlane.xlu0 %1150
      %v1152 = vsel %vm1145, %v1141, -inf
      %1153 = vmax.xlane.f32.xlu0 %v1152
      %v1154 = vpop.xlane.xlu0 %1153
      %v1155 = vsel %vm1145, %v1142, -inf
      %1156 = vmax.xlane.f32.xlu0 %v1155
      %v1157 = vpop.xlane.xlu0 %1156
      %v1158 = vsel %vm1145, %v1143, -inf
      %1159 = vmax.xlane.f32.xlu0 %v1158
      %v1160 = vpop.xlane.xlu0 %1159
      %v1161 = vsel %vm1145, %v1144, -inf
      %1162 = vmax.xlane.f32.xlu0 %v1161
      %v1163 = vpop.xlane.xlu0 %1162
      %v1164 = vsub.f32 %v1139, %v1148
      %v1165 = vsub.f32 %v1140, %v1151
      %v1166 = vsub.f32 %v1141, %v1154
      %v1167 = vsub.f32 %v1142, %v1157
      %v1168 = vsub.f32 %v1143, %v1160
      %v1169 = vsub.f32 %v1144, %v1163
      %v1170 = vmul.f32 %v1164, 1.442695
      %v1171 = vpow.pop %v1170
      %v1172 = vmul.f32 %v1165, 1.442695
      %v1173 = vpow.pop %v1172
      %v1174 = vmul.f32 %v1166, 1.442695
      %v1175 = vpow.pop %v1174
      %v1176 = vmul.f32 %v1167, 1.442695
      %v1177 = vpow.pop %v1176
      %v1178 = vmul.f32 %v1168, 1.442695
      %v1179 = vpow.pop %v1178
      %v1180 = vmul.f32 %v1169, 1.442695
      %v1181 = vpow.pop %v1180
      %v1182 = vsel %vm1145, %v1171, 0.0
      %1183 = vadd.xlane.f32.xlu0 %v1182
      %v1184 = vpop.xlane.xlu0 %1183
      %v1185 = vsel %vm1145, %v1173, 0.0
      %1186 = vadd.xlane.f32.xlu0 %v1185
      %v1187 = vpop.xlane.xlu0 %1186
      %v1188 = vsel %vm1145, %v1175, 0.0
      %1189 = vadd.xlane.f32.xlu0 %v1188
      %v1190 = vpop.xlane.xlu0 %1189
      %v1191 = vsel %vm1145, %v1177, 0.0
      %1192 = vadd.xlane.f32.xlu0 %v1191
      %v1193 = vpop.xlane.xlu0 %1192
      %v1194 = vsel %vm1145, %v1179, 0.0
      %1195 = vadd.xlane.f32.xlu0 %v1194
      %v1196 = vpop.xlane.xlu0 %1195
      %v1197 = vsel %vm1145, %v1181, 0.0
      %1198 = vadd.xlane.f32.xlu0 %v1197
      %v1199 = vpop.xlane.xlu0 %1198
      %v1200 = vrcp.pop %v1184
      %v1201 = vrcp.pop %v1187
      %v1202 = vrcp.pop %v1190
      %v1203 = vrcp.pop %v1193
      %v1204 = vrcp.pop %v1196
      %v1205 = vrcp.pop %v1199
      %v1206 = vmul.f32 %v1171, %v1200
      %v1207 = vmul.f32 %v1173, %v1201
      %v1208 = vmul.f32 %v1175, %v1202
      %v1209 = vmul.f32 %v1177, %v1203
      %v1210 = vmul.f32 %v1179, %v1204
      %v1211 = vmul.f32 %v1181, %v1205
      %v1212 = vpack.c.bf16 %v1207, %v1206
      %v1213 = vpack.c.bf16 %v1209, %v1208
      %v1214 = vpack.c.bf16 %v1211, %v1210
      %v1215 = vunpack.c.l.b16 %v952
      %v1216 = vunpack.c.l.b16 %v961
      %v1217 = vpack.c.b16 %v1216, %v1215
      %v1220 = vsel %vm1145, %v1212, 0
      %1222 = vmatprep.subr.bf16.mxu0 0
      %1223 = vmatpush1.bf16.msra.mxu0 0
      %1224 = vmatprep.subr.bf16.mxu0 0
      %1225 = vmatpush1.bf16.msra.mxu0 0
      %1226 = vmatprep.subr.bf16.mxu0 0
      %1227 = vmatpush1.bf16.msra.mxu0 0
      %1228 = vmatprep.subr.bf16.mxu0 0
      %1229 = vmatpush1.bf16.msra.mxu0 0
      %1230 = vmatprep.subr.bf16.mxu0 0
      %1231 = vmatpush1.bf16.msra.mxu0 0
      %1232 = vmatprep.subr.bf16.mxu0 0
      %1233 = vmatpush1.bf16.msra.mxu0 0
      %1234 = vmatprep.subr.bf16.mxu0 0
      %1235 = vmatpush1.bf16.msra.mxu0 0
      %1236 = vmatprep.subr.bf16.mxu0 0
      %1237 = vmatpush1.bf16.msra.mxu0 %v1217
      %1238 = vmatprep.subr.bf16.mxu0 0
      %1239 = vmatpush2.bf16.msra.mxu0 0
      %1240 = vmatprep.subr.bf16.mxu0 0
      %1241 = vmatpush2.bf16.msra.mxu0 0
      %1242 = vmatprep.subr.bf16.mxu0 0
      %1243 = vmatpush2.bf16.msra.mxu0 0
      %1244 = vmatprep.subr.bf16.mxu0 0
      %1245 = vmatpush2.bf16.msra.mxu0 0
      %1246 = vmatprep.subr.bf16.mxu0 0
      %1247 = vmatpush2.bf16.msra.mxu0 0
      %1248 = vmatprep.subr.bf16.mxu0 0
      %1249 = vmatpush2.bf16.msra.mxu0 0
      %1250 = vmatprep.subr.bf16.mxu0 0
      %1251 = vmatpush2.bf16.msra.mxu0 0
      %1252 = vmatprep.subr.bf16.mxu0 0
      %1253 = vmatpush2.bf16.msra.mxu0 0
      %1254 = vmatprep.mubr.bf16.mxu0 0
      %1255 = vmatmul.mubr.bf16.gmra.mxu0 %v1220
      %v1256 = vpop.f32.mrf.mxu0
      %v1257 = vadd.f32 0.0, %v1256
      %v1258 = vpop.f32.mrf.mxu0
      %v1259 = vpop.f32.mrf.mxu0
      %v1260 = vadd.f32 0.0, %v1259
      %v1261 = vpop.f32.mrf.mxu0
      %1262 = vdwg.mxu0
      %v1263 = vunpack.c.l.b16 %v955
      %v1264 = vunpack.c.l.b16 %v964
      %v1265 = vpack.c.b16 %v1264, %v1263
      %v1268 = vsel %vm1145, %v1213, 0
      %1270 = vmatprep.subr.bf16.mxu0 0
      %1271 = vmatpush1.bf16.msra.mxu0 0
      %1272 = vmatprep.subr.bf16.mxu0 0
      %1273 = vmatpush1.bf16.msra.mxu0 0
      %1274 = vmatprep.subr.bf16.mxu0 0
      %1275 = vmatpush1.bf16.msra.mxu0 0
      %1276 = vmatprep.subr.bf16.mxu0 0
      %1277 = vmatpush1.bf16.msra.mxu0 0
      %1278 = vmatprep.subr.bf16.mxu0 0
      %1279 = vmatpush1.bf16.msra.mxu0 0
      %1280 = vmatprep.subr.bf16.mxu0 0
      %1281 = vmatpush1.bf16.msra.mxu0 0
      %1282 = vmatprep.subr.bf16.mxu0 0
      %1283 = vmatpush1.bf16.msra.mxu0 0
      %1284 = vmatprep.subr.bf16.mxu0 0
      %1285 = vmatpush1.bf16.msra.mxu0 %v1265
      %1286 = vmatprep.subr.bf16.mxu0 0
      %1287 = vmatpush2.bf16.msra.mxu0 0
      %1288 = vmatprep.subr.bf16.mxu0 0
      %1289 = vmatpush2.bf16.msra.mxu0 0
      %1290 = vmatprep.subr.bf16.mxu0 0
      %1291 = vmatpush2.bf16.msra.mxu0 0
      %1292 = vmatprep.subr.bf16.mxu0 0
      %1293 = vmatpush2.bf16.msra.mxu0 0
      %1294 = vmatprep.subr.bf16.mxu0 0
      %1295 = vmatpush2.bf16.msra.mxu0 0
      %1296 = vmatprep.subr.bf16.mxu0 0
      %1297 = vmatpush2.bf16.msra.mxu0 0
      %1298 = vmatprep.subr.bf16.mxu0 0
      %1299 = vmatpush2.bf16.msra.mxu0 0
      %1300 = vmatprep.subr.bf16.mxu0 0
      %1301 = vmatpush2.bf16.msra.mxu0 0
      %1302 = vmatprep.mubr.bf16.mxu0 0
      %1303 = vmatmul.mubr.bf16.gmra.mxu0 %v1268
      %v1304 = vpop.f32.mrf.mxu0
      %v1305 = vadd.f32 0.0, %v1304
      %v1306 = vpop.f32.mrf.mxu0
      %v1307 = vpop.f32.mrf.mxu0
      %v1308 = vadd.f32 0.0, %v1307
      %v1309 = vpop.f32.mrf.mxu0
      %1310 = vdwg.mxu0
      %v1311 = vunpack.c.l.b16 %v958
      %v1312 = vunpack.c.l.b16 %v967
      %v1313 = vpack.c.b16 %v1312, %v1311
      %v1316 = vsel %vm1145, %v1214, 0
      %1318 = vmatprep.subr.bf16.mxu0 0
      %1319 = vmatpush1.bf16.msra.mxu0 0
      %1320 = vmatprep.subr.bf16.mxu0 0
      %1321 = vmatpush1.bf16.msra.mxu0 0
      %1322 = vmatprep.subr.bf16.mxu0 0
      %1323 = vmatpush1.bf16.msra.mxu0 0
      %1324 = vmatprep.subr.bf16.mxu0 0
      %1325 = vmatpush1.bf16.msra.mxu0 0
      %1326 = vmatprep.subr.bf16.mxu0 0
      %1327 = vmatpush1.bf16.msra.mxu0 0
      %1328 = vmatprep.subr.bf16.mxu0 0
      %1329 = vmatpush1.bf16.msra.mxu0 0
      %1330 = vmatprep.subr.bf16.mxu0 0
      %1331 = vmatpush1.bf16.msra.mxu0 0
      %1332 = vmatprep.subr.bf16.mxu0 0
      %1333 = vmatpush1.bf16.msra.mxu0 %v1313
      %1334 = vmatprep.subr.bf16.mxu0 0
      %1335 = vmatpush2.bf16.msra.mxu0 0
      %1336 = vmatprep.subr.bf16.mxu0 0
      %1337 = vmatpush2.bf16.msra.mxu0 0
      %1338 = vmatprep.subr.bf16.mxu0 0
      %1339 = vmatpush2.bf16.msra.mxu0 0
      %1340 = vmatprep.subr.bf16.mxu0 0
      %1341 = vmatpush2.bf16.msra.mxu0 0
      %1342 = vmatprep.subr.bf16.mxu0 0
      %1343 = vmatpush2.bf16.msra.mxu0 0
      %1344 = vmatprep.subr.bf16.mxu0 0
      %1345 = vmatpush2.bf16.msra.mxu0 0
      %1346 = vmatprep.subr.bf16.mxu0 0
      %1347 = vmatpush2.bf16.msra.mxu0 0
      %1348 = vmatprep.subr.bf16.mxu0 0
      %1349 = vmatpush2.bf16.msra.mxu0 0
      %1350 = vmatprep.mubr.bf16.mxu0 0
      %1351 = vmatmul.mubr.bf16.gmra.mxu0 %v1316
      %v1352 = vpop.f32.mrf.mxu0
      %v1353 = vadd.f32 0.0, %v1352
      %v1354 = vpop.f32.mrf.mxu0
      %v1355 = vpop.f32.mrf.mxu0
      %v1356 = vadd.f32 0.0, %v1355
      %v1357 = vpop.f32.mrf.mxu0
      %1358 = vdwg.mxu0
      %v1359 = vcombine.low %v1257, %v1353
      %v1360 = vcombine.high %v1257, %v1353
      %v1362 = vunpack.c.l.s4 1983009808
      %v1363 = vunpack.c.0.s8 %v1362
      %v1364 = vlaneseq
      %v1365 = vshrl.u32 %v1364, 7
      %v1366 = vsub.s32 %v1363, %v1365
      %v1367 = vrot.slane %v1359, %v1366
      %v1369 = vunpack.c.l.s4 1983009808
      %v1370 = vunpack.c.0.s8 %v1369
      %v1371 = vlaneseq
      %v1372 = vshrl.u32 %v1371, 7
      %v1373 = vsub.s32 %v1370, %v1372
      %v1374 = vrot.slane %v1360, %v1373
      %v1375 = vcombine.high %v1305, 0.0
      %v1377 = vunpack.c.l.s4 1983009808
      %v1378 = vunpack.c.0.s8 %v1377
      %v1379 = vlaneseq
      %v1380 = vshrl.u32 %v1379, 7
      %v1381 = vsub.s32 %v1378, %v1380
      %v1382 = vrot.slane %v1305, %v1381
      %v1384 = vunpack.c.l.s4 1983009808
      %v1385 = vunpack.c.0.s8 %v1384
      %v1386 = vlaneseq
      %v1387 = vshrl.u32 %v1386, 7
      %v1388 = vsub.s32 %v1385, %v1387
      %v1389 = vrot.slane %v1375, %v1388
      %v1390 = vcombine.low %v1367, %v1382
      %v1391 = vcombine.high %v1367, %v1382
      %v1393 = vunpack.c.l.s4 1934713408
      %v1394 = vunpack.c.0.s8 %v1393
      %v1395 = vlaneseq
      %v1396 = vshrl.u32 %v1395, 7
      %v1397 = vsub.s32 %v1394, %v1396
      %v1398 = vrot.slane %v1390, %v1397
      %v1400 = vunpack.c.l.s4 1934713408
      %v1401 = vunpack.c.0.s8 %v1400
      %v1402 = vlaneseq
      %v1403 = vshrl.u32 %v1402, 7
      %v1404 = vsub.s32 %v1401, %v1403
      %v1405 = vrot.slane %v1391, %v1404
      %v1406 = vcombine.low %v1374, %v1389
      %v1407 = vcombine.high %v1374, %v1389
      %v1409 = vunpack.c.l.s4 1934713408
      %v1410 = vunpack.c.0.s8 %v1409
      %v1411 = vlaneseq
      %v1412 = vshrl.u32 %v1411, 7
      %v1413 = vsub.s32 %v1410, %v1412
      %v1414 = vrot.slane %v1406, %v1413
      %v1416 = vunpack.c.l.s4 1934713408
      %v1417 = vunpack.c.0.s8 %v1416
      %v1418 = vlaneseq
      %v1419 = vshrl.u32 %v1418, 7
      %v1420 = vsub.s32 %v1417, %v1419
      %v1421 = vrot.slane %v1407, %v1420
      %v1422 = vcombine.high %v1398, 0.0
      %v1423 = vcombine.high %v1405, 0.0
      %v1424 = vcombine.high %v1414, 0.0
      %v1425 = vcombine.high %v1421, 0.0
      %v1426 = vcombine.low %v1260, %v1356
      %v1427 = vcombine.high %v1260, %v1356
      %v1429 = vunpack.c.l.s4 1983009808
      %v1430 = vunpack.c.0.s8 %v1429
      %v1431 = vlaneseq
      %v1432 = vshrl.u32 %v1431, 7
      %v1433 = vsub.s32 %v1430, %v1432
      %v1434 = vrot.slane %v1426, %v1433
      %v1436 = vunpack.c.l.s4 1983009808
      %v1437 = vunpack.c.0.s8 %v1436
      %v1438 = vlaneseq
      %v1439 = vshrl.u32 %v1438, 7
      %v1440 = vsub.s32 %v1437, %v1439
      %v1441 = vrot.slane %v1427, %v1440
      %v1442 = vcombine.high %v1308, 0.0
      %v1444 = vunpack.c.l.s4 1983009808
      %v1445 = vunpack.c.0.s8 %v1444
      %v1446 = vlaneseq
      %v1447 = vshrl.u32 %v1446, 7
      %v1448 = vsub.s32 %v1445, %v1447
      %v1449 = vrot.slane %v1308, %v1448
      %v1451 = vunpack.c.l.s4 1983009808
      %v1452 = vunpack.c.0.s8 %v1451
      %v1453 = vlaneseq
      %v1454 = vshrl.u32 %v1453, 7
      %v1455 = vsub.s32 %v1452, %v1454
      %v1456 = vrot.slane %v1442, %v1455
      %v1457 = vcombine.low %v1434, %v1449
      %v1458 = vcombine.high %v1434, %v1449
      %v1460 = vunpack.c.l.s4 1934713408
      %v1461 = vunpack.c.0.s8 %v1460
      %v1462 = vlaneseq
      %v1463 = vshrl.u32 %v1462, 7
      %v1464 = vsub.s32 %v1461, %v1463
      %v1465 = vrot.slane %v1457, %v1464
      %v1467 = vunpack.c.l.s4 1934713408
      %v1468 = vunpack.c.0.s8 %v1467
      %v1469 = vlaneseq
      %v1470 = vshrl.u32 %v1469, 7
      %v1471 = vsub.s32 %v1468, %v1470
      %v1472 = vrot.slane %v1458, %v1471
      %v1473 = vcombine.low %v1441, %v1456
      %v1474 = vcombine.high %v1441, %v1456
      %v1476 = vunpack.c.l.s4 1934713408
      %v1477 = vunpack.c.0.s8 %v1476
      %v1478 = vlaneseq
      %v1479 = vshrl.u32 %v1478, 7
      %v1480 = vsub.s32 %v1477, %v1479
      %v1481 = vrot.slane %v1473, %v1480
      %v1483 = vunpack.c.l.s4 1934713408
      %v1484 = vunpack.c.0.s8 %v1483
      %v1485 = vlaneseq
      %v1486 = vshrl.u32 %v1485, 7
      %v1487 = vsub.s32 %v1484, %v1486
      %v1488 = vrot.slane %v1474, %v1487
      %v1489 = vcombine.high %v1465, 0.0
      %v1490 = vcombine.high %v1472, 0.0
      %v1491 = vcombine.high %v1481, 0.0
      %v1492 = vcombine.high %v1488, 0.0
      %v1493 = vcombine.low %v1398, %v1405
      %v1495 = vunpack.c.l.s4 1983009808
      %v1496 = vunpack.c.0.s8 %v1495
      %v1497 = vlaneseq
      %v1498 = vshrl.u32 %v1497, 7
      %v1499 = vsub.s32 %v1496, %v1498
      %v1500 = vrot.slane %v1493, %v1499
      %v1501 = vcombine.low %v1422, %v1423
      %v1503 = vunpack.c.l.s4 1983009808
      %v1504 = vunpack.c.0.s8 %v1503
      %v1505 = vlaneseq
      %v1506 = vshrl.u32 %v1505, 7
      %v1507 = vsub.s32 %v1504, %v1506
      %v1508 = vrot.slane %v1501, %v1507
      %v1509 = vcombine.low %v1414, %v1421
      %v1511 = vunpack.c.l.s4 1983009808
      %v1512 = vunpack.c.0.s8 %v1511
      %v1513 = vlaneseq
      %v1514 = vshrl.u32 %v1513, 7
      %v1515 = vsub.s32 %v1512, %v1514
      %v1516 = vrot.slane %v1509, %v1515
      %v1517 = vcombine.low %v1424, %v1425
      %v1519 = vunpack.c.l.s4 1983009808
      %v1520 = vunpack.c.0.s8 %v1519
      %v1521 = vlaneseq
      %v1522 = vshrl.u32 %v1521, 7
      %v1523 = vsub.s32 %v1520, %v1522
      %v1524 = vrot.slane %v1517, %v1523
      %v1525 = vcombine.low %v1500, %v1508
      %v1526 = vcombine.high %v1500, %v1508
      %v1528 = vunpack.c.l.s4 1934713408
      %v1529 = vunpack.c.0.s8 %v1528
      %v1530 = vlaneseq
      %v1531 = vshrl.u32 %v1530, 7
      %v1532 = vsub.s32 %v1529, %v1531
      %v1533 = vrot.slane %v1525, %v1532
      %v1535 = vunpack.c.l.s4 1934713408
      %v1536 = vunpack.c.0.s8 %v1535
      %v1537 = vlaneseq
      %v1538 = vshrl.u32 %v1537, 7
      %v1539 = vsub.s32 %v1536, %v1538
      %v1540 = vrot.slane %v1526, %v1539
      %v1541 = vcombine.low %v1516, %v1524
      %v1542 = vcombine.high %v1516, %v1524
      %v1544 = vunpack.c.l.s4 1934713408
      %v1545 = vunpack.c.0.s8 %v1544
      %v1546 = vlaneseq
      %v1547 = vshrl.u32 %v1546, 7
      %v1548 = vsub.s32 %v1545, %v1547
      %v1549 = vrot.slane %v1541, %v1548
      %v1551 = vunpack.c.l.s4 1934713408
      %v1552 = vunpack.c.0.s8 %v1551
      %v1553 = vlaneseq
      %v1554 = vshrl.u32 %v1553, 7
      %v1555 = vsub.s32 %v1552, %v1554
      %v1556 = vrot.slane %v1542, %v1555
      %v1557 = vcombine.low %v1533, %v1549
      %v1558 = vcombine.high %v1533, %v1549
      %v1559 = vcombine.low %v1540, %v1556
      %v1560 = vcombine.low %v1465, %v1472
      %v1562 = vunpack.c.l.s4 1983009808
      %v1563 = vunpack.c.0.s8 %v1562
      %v1564 = vlaneseq
      %v1565 = vshrl.u32 %v1564, 7
      %v1566 = vsub.s32 %v1563, %v1565
      %v1567 = vrot.slane %v1560, %v1566
      %v1568 = vcombine.low %v1489, %v1490
      %v1570 = vunpack.c.l.s4 1983009808
      %v1571 = vunpack.c.0.s8 %v1570
      %v1572 = vlaneseq
      %v1573 = vshrl.u32 %v1572, 7
      %v1574 = vsub.s32 %v1571, %v1573
      %v1575 = vrot.slane %v1568, %v1574
      %v1576 = vcombine.low %v1481, %v1488
      %v1578 = vunpack.c.l.s4 1983009808
      %v1579 = vunpack.c.0.s8 %v1578
      %v1580 = vlaneseq
      %v1581 = vshrl.u32 %v1580, 7
      %v1582 = vsub.s32 %v1579, %v1581
      %v1583 = vrot.slane %v1576, %v1582
      %v1584 = vcombine.low %v1491, %v1492
      %v1586 = vunpack.c.l.s4 1983009808
      %v1587 = vunpack.c.0.s8 %v1586
      %v1588 = vlaneseq
      %v1589 = vshrl.u32 %v1588, 7
      %v1590 = vsub.s32 %v1587, %v1589
      %v1591 = vrot.slane %v1584, %v1590
      %v1592 = vcombine.low %v1567, %v1575
      %v1593 = vcombine.high %v1567, %v1575
      %v1595 = vunpack.c.l.s4 1934713408
      %v1596 = vunpack.c.0.s8 %v1595
      %v1597 = vlaneseq
      %v1598 = vshrl.u32 %v1597, 7
      %v1599 = vsub.s32 %v1596, %v1598
      %v1600 = vrot.slane %v1592, %v1599
      %v1602 = vunpack.c.l.s4 1934713408
      %v1603 = vunpack.c.0.s8 %v1602
      %v1604 = vlaneseq
      %v1605 = vshrl.u32 %v1604, 7
      %v1606 = vsub.s32 %v1603, %v1605
      %v1607 = vrot.slane %v1593, %v1606
      %v1608 = vcombine.low %v1583, %v1591
      %v1609 = vcombine.high %v1583, %v1591
      %v1611 = vunpack.c.l.s4 1934713408
      %v1612 = vunpack.c.0.s8 %v1611
      %v1613 = vlaneseq
      %v1614 = vshrl.u32 %v1613, 7
      %v1615 = vsub.s32 %v1612, %v1614
      %v1616 = vrot.slane %v1608, %v1615
      %v1618 = vunpack.c.l.s4 1934713408
      %v1619 = vunpack.c.0.s8 %v1618
      %v1620 = vlaneseq
      %v1621 = vshrl.u32 %v1620, 7
      %v1622 = vsub.s32 %v1619, %v1621
      %v1623 = vrot.slane %v1609, %v1622
      %v1624 = vcombine.low %v1600, %v1616
      %v1625 = vcombine.high %v1600, %v1616
      %v1626 = vcombine.low %v1607, %v1623
      %1629 = vrot.lane.b32.xlu0 %v1558, 64
      %v1630 = vpop.permute.xlu0 %1629
      %1631 = vrot.lane.b32.xlu0 %v1625, 64
      %v1632 = vpop.permute.xlu0 %1631
      %v1635 = vsel %vm974, %v1557, %v1630
      %v1636 = vsel %vm974, %v1624, %v1632
      %v1637 = vpack.c.bf16 %v1636, %v1635
      %v1638 = vpack.c.bf16 %v1626, %v1559
      %v1641 = vunpack.c.l.b16 %v1637
      %v1642 = vunpack.c.l.b16 %v1638
      %v1643 = vunpack.c.h.b16 %v1637
      %v1644 = vunpack.c.h.b16 %v1638
      %v1645 = vpack.c.b16 %v1642, %v1641
      %v1646 = vpack.c.b16 %v1644, %v1643
      %vm1649 = vcmask 1043456
      %vm1650 = vcmask 523268
      %vm1651 = vmor %vm1650, %vm1649
      %1652 = vst.msk [vmem:[%s116] sm:$0xff] %vm1651, %v1645
      %1653 = vst.msk [vmem:[%s116 + $0x8] sm:$0xff] %vm1651, %v1646
      %p1654 = scmp.lt.s32.totalorder %s12, 1
      %s1655 = scalar_select %p1654, %s12, 1
      %s1656 = smul.addr %s1655, 4
      %s1657 = smul.addr %s1656, 4
      %s1658 = scalar_lea.vmem %s1, %s1657
      // Predicated region
      $region25: #{st_llm_forward.18} parent=23 // pred_check
        %p1659 = pneg %p56
      $region26: #{st_llm_forward.18} parent=23 // pred_check_branch
        %1661 = sbr.rel (%p1659) target = $region28
      $region27: #{st_llm_forward.18} parent=23 // pred_region
        _
      $region28: #{st_llm_forward.18} parent=23 // pred_fallthru
        _
    $region24: #{st_llm_forward.18} parent=5 // pred_fallthru
      _
    %p1662 = scmp.le.s32.totalorder 2, %s7
    // Predicated region
    $region29: #{st_llm_forward.18} parent=5 // pred_check
      %p1663 = pneg %p1662
    $region30: #{st_llm_forward.18} parent=5 // pred_check_branch
      %1665 = sbr.rel (%p1663) target = $region32
    $region31: #{st_llm_forward.18} parent=5 // pred_region
      %s1666 = ssub.s32 %s7, 2
      // Predicated region
      $region33: #{st_llm_forward.18} parent=31 // pred_check
        %p1667 = pneg %p62
      $region34: #{st_llm_forward.18} parent=31 // pred_check_branch
        %1669 = sbr.rel (%p1667) target = $region36
      $region35: #{st_llm_forward.18} parent=31 // pred_region
        %p1670 = scmp.lt.s32.totalorder %s13, 1
        %s1671 = scalar_select %p1670, %s13, 1
        %s1672 = smul.addr %s1671, 4
        %s1673 = smul.addr %s1672, 4
        %s1674 = scalar_lea.vmem %s1, %s1673
      $region36: #{st_llm_forward.18} parent=31 // pred_fallthru
        _
    $region32: #{st_llm_forward.18} parent=5 // pred_fallthru
      _
  $region6: #{st_llm_forward.18} parent=0 // loop_footer
    %s11 = sadd.s32 1, %s7
  $region7: #{st_llm_forward.18} parent=0 // loop_footer_branch
    %6 = sbr.rel target = $region3
  $region8: #{st_llm_forward.18} parent=0 // loop_exit
    _

// kernel: st_llm_forward.20
$region0: #{st_llm_forward.20}
  #allocation0 [shape = 'u32[]', space=smem, size = 0x4, offset = 0x4, fixed_abs, tag = 'smem constant byte address 0x4 - core index']
  #allocation1 [shape = 'u32[144,128]{1,0:T(1,128)}', space=vmem, size = 0x12000, scoped, tag = 'internal scratch']
  #allocation2 [shape = 'bf16[32,192]{1,0:T(8,128)(2,1)}', space=vmem, size = 0x4000, scoped, tag = 'scratch operand']
  %s0 = inlined_call_operand.vmem [shape: bf16[32,192], index: 0, kind: input, shape index: {}]
  %s1 = inlined_call_operand.vmem [shape: bf16[192,768], index: 1, kind: input, shape index: {}]
  %s2 = inlined_call_operand.vmem [shape: f32[1,768], index: 2, kind: input, shape index: {}]
  %s3 = inlined_call_operand.vmem [shape: f32[1,192], index: 3, kind: input, shape index: {}]
  %s4 = inlined_call_operand.vmem [shape: f32[1,192], index: 4, kind: input, shape index: {}]
  %s5 = inlined_call_operand.vmem [shape: bf16[32,768], index: 5, kind: output, shape index: {}]
  %s6 = sld [smem:[#allocation0]]
  $region185: #{st_llm_forward.20} parent=0
    _
  %s8 = ssub.s32 1, %s6
  %s9 = scalar_select 0, %s8, %s6
  $region1: #{st_llm_forward.20} parent=0
    #allocation3 [shape = 'u8[393216]{0}', space=vmem, size = 0x60000, scoped, tag = 'input window, operand 1']
    #allocation4 [shape = 'u8[65536]{0}', space=vmem, size = 0x10000, scoped, tag = 'output window, operand 0']
    loop: start=0, step=1, limit=4
    $region2: #{st_llm_forward.20} parent=1 // loop_pre_header
      _
    $region3: #{st_llm_forward.20} parent=1 // loop_header
      %s11 = sphi 0, %s15
      %p12 = scmp.ge.s32.totalorder %s11, 4
      %s18 = sphi 0, %s30
      %s19 = sphi 0, %s26
      %s20 = sphi 0, %s18
      %s21 = sphi 0, %s19
      %s22 = sphi 0, %s20
      %s23 = sphi 0, %s21
      %s33 = sphi 0, %s35
      %s36 = sphi 0, %s33
      %s37 = sphi 0, %s36
      %s53 = sphi 0, %s37
      %s59 = sphi 0, %s61
      %s62 = sphi 0, %s59
      %s63 = sphi 0, %s62
      %s79 = sphi 0, %s63
      %s85 = sphi 0, %s87
      %s88 = sphi 0, %s85
      %s89 = sphi 0, %s88
      %s105 = sphi 0, %s89
      %s109 = sphi 0, %s109
      %s111 = sphi 0, %s109
      %s112 = sphi 0, %s111
      %s126 = sphi 0, %s112
      %s130 = sphi 0, %s130
      %s132 = sphi 0, %s130
      %s133 = sphi 0, %s132
      %s147 = sphi 0, %s133
      %s155 = sphi 0, %s157
      %s158 = sphi 0, %s155
      %s159 = sphi 0, %s158
      %s175 = sphi 0, %s159
    $region4: #{st_llm_forward.20} parent=1 // loop_header_branch
      %14 = sbr.rel (%p12) target = $region8
    $region5: #{st_llm_forward.20} parent=1 // loop_body
      %s16 = ssub.s32 %s11, 1
      %s17 = ssub.s32 %s11, 2
      %s24 = sadd.s32 1, %s19
      %p25 = scmp.ge.s32.totalorder %s24, 2
      %s26 = scalar_select %p25, 0, %s24
      %s27 = sadd.s32 1, %s18
      %s28 = scalar_select %p25, %s27, %s18
      %p29 = scmp.ge.s32.totalorder %s28, 1
      %s30 = scalar_select %p29, 0, %s28
      %s31 = ssub.s32 %s18, %s30
      %p32 = scmp.eq.s32.totalorder %s31, 0
      %s34 = sadd.s32 %s33, 1
      %s35 = scalar_select %p32, %s33, %s34
      %p38 = pneg %p32
      %p39 = scmp.eq.s32.totalorder %s11, 1
      %p40 = por %p38, %p39
      %p41 = scmp.ne.s32.totalorder %s33, %s36
      %p42 = scmp.eq.s32.totalorder %s11, 0
      %p43 = por %p41, %p42
      %p44 = scmp.ne.s32.totalorder %s33, %s36
      %p45 = scmp.eq.s32.totalorder %s16, 1
      %p46 = por %p44, %p45
      %p47 = scmp.ne.s32.totalorder %s36, %s37
      %p48 = scmp.eq.s32.totalorder %s16, 0
      %p49 = por %p47, %p48
      %p50 = scmp.ne.s32.totalorder %s36, %s37
      %p51 = scmp.eq.s32.totalorder %s17, 1
      %p52 = por %p50, %p51
      %p54 = scmp.ne.s32.totalorder %s37, %s53
      %p55 = scmp.eq.s32.totalorder %s17, 0
      %p56 = por %p54, %p55
      %s57 = ssub.s32 %s19, %s26
      %p58 = scmp.eq.s32.totalorder %s57, 0
      %s60 = sadd.s32 %s59, 1
      %s61 = scalar_select %p58, %s59, %s60
      %p64 = pneg %p58
      %p65 = scmp.eq.s32.totalorder %s11, 1
      %p66 = por %p64, %p65
      %p67 = scmp.ne.s32.totalorder %s59, %s62
      %p68 = scmp.eq.s32.totalorder %s11, 0
      %p69 = por %p67, %p68
      %p70 = scmp.ne.s32.totalorder %s59, %s62
      %p71 = scmp.eq.s32.totalorder %s16, 1
      %p72 = por %p70, %p71
      %p73 = scmp.ne.s32.totalorder %s62, %s63
      %p74 = scmp.eq.s32.totalorder %s16, 0
      %p75 = por %p73, %p74
      %p76 = scmp.ne.s32.totalorder %s62, %s63
      %p77 = scmp.eq.s32.totalorder %s17, 1
      %p78 = por %p76, %p77
      %p80 = scmp.ne.s32.totalorder %s63, %s79
      %p81 = scmp.eq.s32.totalorder %s17, 0
      %p82 = por %p80, %p81
      %s83 = ssub.s32 %s19, %s26
      %p84 = scmp.eq.s32.totalorder %s83, 0
      %s86 = sadd.s32 %s85, 1
      %s87 = scalar_select %p84, %s85, %s86
      %p90 = pneg %p84
      %p91 = scmp.eq.s32.totalorder %s11, 1
      %p92 = por %p90, %p91
      %p93 = scmp.ne.s32.totalorder %s85, %s88
      %p94 = scmp.eq.s32.totalorder %s11, 0
      %p95 = por %p93, %p94
      %p96 = scmp.ne.s32.totalorder %s85, %s88
      %p97 = scmp.eq.s32.totalorder %s16, 1
      %p98 = por %p96, %p97
      %p99 = scmp.ne.s32.totalorder %s88, %s89
      %p100 = scmp.eq.s32.totalorder %s16, 0
      %p101 = por %p99, %p100
      %p102 = scmp.ne.s32.totalorder %s88, %s89
      %p103 = scmp.eq.s32.totalorder %s17, 1
      %p104 = por %p102, %p103
      %p106 = scmp.ne.s32.totalorder %s89, %s105
      %p107 = scmp.eq.s32.totalorder %s17, 0
      %p108 = por %p106, %p107
      %s110 = sadd.s32 %s109, 1
      %p113 = scmp.eq.s32.totalorder %s11, 1
      %p114 = scmp.ne.s32.totalorder %s109, %s111
      %p115 = scmp.eq.s32.totalorder %s11, 0
      %p116 = por %p114, %p115
      %p117 = scmp.ne.s32.totalorder %s109, %s111
      %p118 = scmp.eq.s32.totalorder %s16, 1
      %p119 = por %p117, %p118
      %p120 = scmp.ne.s32.totalorder %s111, %s112
      %p121 = scmp.eq.s32.totalorder %s16, 0
      %p122 = por %p120, %p121
      %p123 = scmp.ne.s32.totalorder %s111, %s112
      %p124 = scmp.eq.s32.totalorder %s17, 1
      %p125 = por %p123, %p124
      %p127 = scmp.ne.s32.totalorder %s112, %s126
      %p128 = scmp.eq.s32.totalorder %s17, 0
      %p129 = por %p127, %p128
      %s131 = sadd.s32 %s130, 1
      %p134 = scmp.eq.s32.totalorder %s11, 1
      %p135 = scmp.ne.s32.totalorder %s130, %s132
      %p136 = scmp.eq.s32.totalorder %s11, 0
      %p137 = por %p135, %p136
      %p138 = scmp.ne.s32.totalorder %s130, %s132
      %p139 = scmp.eq.s32.totalorder %s16, 1
      %p140 = por %p138, %p139
      %p141 = scmp.ne.s32.totalorder %s132, %s133
      %p142 = scmp.eq.s32.totalorder %s16, 0
      %p143 = por %p141, %p142
      %p144 = scmp.ne.s32.totalorder %s132, %s133
      %p145 = scmp.eq.s32.totalorder %s17, 1
      %p146 = por %p144, %p145
      %p148 = scmp.ne.s32.totalorder %s133, %s147
      %p149 = scmp.eq.s32.totalorder %s17, 0
      %p150 = por %p148, %p149
      %s151 = ssub.s32 %s18, %s30
      %s152 = ssub.s32 %s19, %s26
      %s153 = sor.u32 %s151, %s152
      %p154 = scmp.eq.s32.totalorder %s153, 0
      %s156 = sadd.s32 %s155, 1
      %s157 = scalar_select %p154, %s155, %s156
      %p160 = pneg %p154
      %p161 = scmp.eq.s32.totalorder %s11, 1
      %p162 = por %p160, %p161
      %p163 = scmp.ne.s32.totalorder %s155, %s158
      %p164 = scmp.eq.s32.totalorder %s11, 0
      %p165 = por %p163, %p164
      %p166 = scmp.ne.s32.totalorder %s155, %s158
      %p167 = scmp.eq.s32.totalorder %s16, 1
      %p168 = por %p166, %p167
      %p169 = scmp.ne.s32.totalorder %s158, %s159
      %p170 = scmp.eq.s32.totalorder %s16, 0
      %p171 = por %p169, %p170
      %p172 = scmp.ne.s32.totalorder %s158, %s159
      %p173 = scmp.eq.s32.totalorder %s17, 1
      %p174 = por %p172, %p173
      %p176 = scmp.ne.s32.totalorder %s159, %s175
      %p177 = scmp.eq.s32.totalorder %s17, 0
      %p178 = por %p176, %p177
      %p179 = scmp.le.s32.totalorder 1, %s11
      %p180 = scmp.lt.s32.totalorder %s11, 3
      %p181 = pnand %p179, %p180
      %p182 = pneg %p181
      // Predicated region
      $region9: #{st_llm_forward.20} parent=5 // pred_check
        _
      $region10: #{st_llm_forward.20} parent=5 // pred_check_branch
        %184 = sbr.rel (%p181) target = $region12
      $region11: #{st_llm_forward.20} parent=5 // pred_region
        %s185 = ssub.s32 %s11, 1
        // Predicated region
        $region13: #{st_llm_forward.20} parent=11 // pred_check
          %p186 = pneg %p49
        $region14: #{st_llm_forward.20} parent=11 // pred_check_branch
          %188 = sbr.rel (%p186) target = $region16
        $region15: #{st_llm_forward.20} parent=11 // pred_region
          %s189 = smul.u32 4, %s20
          %p190 = scmp.lt.s32.totalorder %s189, 3
          %s191 = scalar_select %p190, %s189, 3
          %s192 = smul.addr %s191, 2
          %s193 = smul.addr %s192, 4
          %s194 = scalar_lea.vmem %s0, %s193
          %s195 = smul.u32 4, %s20
        $region16: #{st_llm_forward.20} parent=11 // pred_fallthru
          _
        // Predicated region
        $region17: #{st_llm_forward.20} parent=11 // pred_check
          %p196 = pneg %p122
        $region18: #{st_llm_forward.20} parent=11 // pred_check_branch
          %198 = sbr.rel (%p196) target = $region20
        $region19: #{st_llm_forward.20} parent=11 // pred_region
          _
        $region20: #{st_llm_forward.20} parent=11 // pred_fallthru
          _
        // Predicated region
        $region21: #{st_llm_forward.20} parent=11 // pred_check
          %p199 = pneg %p143
        $region22: #{st_llm_forward.20} parent=11 // pred_check_branch
          %201 = sbr.rel (%p199) target = $region24
        $region23: #{st_llm_forward.20} parent=11 // pred_region
          _
        $region24: #{st_llm_forward.20} parent=11 // pred_fallthru
          _
      $region12: #{st_llm_forward.20} parent=5 // pred_fallthru
        _
      %p202 = scmp.lt.s32.totalorder %s11, 2
      // Predicated region
      $region25: #{st_llm_forward.20} parent=5 // pred_check
        %p203 = pneg %p202
      $region26: #{st_llm_forward.20} parent=5 // pred_check_branch
        %205 = sbr.rel (%p203) target = $region28
      $region27: #{st_llm_forward.20} parent=5 // pred_region
        // Predicated region
        $region29: #{st_llm_forward.20} parent=27 // pred_check
          %p206 = pneg %p69
        $region30: #{st_llm_forward.20} parent=27 // pred_check_branch
          %208 = sbr.rel (%p206) target = $region32
        $region31: #{st_llm_forward.20} parent=27 // pred_region
          %s209 = sand.u32 %s59, 1
          %s210 = sand.u32 %s59, 1
          %s211 = smul.addr %s210, 384
          %s212 = scalar_lea.vmem [#allocation3], %s211
          %s213 = smul.u32 4, %s19
          %s214 = ssub.s32 6, %s213
          %p215 = scmp.lt.s32.totalorder %s214, 4
          %s216 = scalar_select %p215, %s214, 4
          %s217 = smul.u32 1536, %s216
          %p218 = scmp.ne.s32.totalorder 0, %s217
          %s219 = smul.addr %s213, 4
          %s220 = scalar_lea.vmem %s1, %s219
          %s221 = smul.u32 %s216, 4
          // Predicated region
          $region33: #{st_llm_forward.20} parent=31 // pred_check
            %p222 = pneg %p218
          $region34: #{st_llm_forward.20} parent=31 // pred_check_branch
            %224 = sbr.rel (%p222) target = $region36
          $region35: #{st_llm_forward.20} parent=31 // pred_region
            %p225 = scmp.lt.u32.totalorder %s221, 8
            %p226 = pneg %p225
            // Predicated region
            $region37: #{st_llm_forward.20} parent=35 // pred_check
              _
            $region38: #{st_llm_forward.20} parent=35 // pred_check_branch
              %228 = sbr.rel (%p225) target = $region40
            $region39: #{st_llm_forward.20} parent=35 // pred_region
              %s290 = sand.u32 %s221, 7
              %p291 = scmp.eq.s32.totalorder %s290, 0
              // Predicated region
              $region52: #{st_llm_forward.20} parent=39 // pred_check
                %p292 = pneg %p291
              $region53: #{st_llm_forward.20} parent=39 // pred_check_branch
                %294 = sbr.rel (%p292) target = $region55
              $region54: #{st_llm_forward.20} parent=39 // pred_region
                %s295 = sshrl.u32 %s221, 3
                %s296 = sdiv.u32.pop %s295, 3
                %s297 = srem.u32.pop %s295, 3
                // While loop
                $region56: #{st_llm_forward.20} parent=54 // loop_pre_header
                  _
                $region57: #{st_llm_forward.20} parent=54 // loop_header
                  %s301 = sphi 0, %s303
                  %p302 = scmp.ge.s32.totalorder %s301, %s296
                  %s306 = sphi 0, %s455
                  %s307 = sphi %s220, %s458
                  %s308 = sphi %s212, %s459
                $region58: #{st_llm_forward.20} parent=54 // loop_header_branch
                  %305 = sbr.rel (%p302) target = $region62
                $region59: #{st_llm_forward.20} parent=54 // loop_body
                  %v309 = vld [vmem:[%s307] sm:$0xff]
                  %310 = vst [vmem:[%s308] sm:$0xff] %v309
                  %v311 = vld [vmem:[%s307 + $0x8] sm:$0xff]
                  %312 = vst [vmem:[%s308 + $0x8] sm:$0xff] %v311
                  %v313 = vld [vmem:[%s307 + $0x10] sm:$0xff]
                  %314 = vst [vmem:[%s308 + $0x10] sm:$0xff] %v313
                  %v315 = vld [vmem:[%s307 + $0x18] sm:$0xff]
                  %316 = vst [vmem:[%s308 + $0x10] sm:$0xff] %v315
                  %v317 = vld [vmem:[%s307 + $0x20] sm:$0xff]
                  %318 = vst [vmem:[%s308 + $0x18] sm:$0xff] %v317
                  %v319 = vld [vmem:[%s307 + $0x28] sm:$0xff]
                  %320 = vst [vmem:[%s308 + $0x20] sm:$0xff] %v319
                  %v321 = vld [vmem:[%s307 + $0x30] sm:$0xff]
                  %322 = vst [vmem:[%s308 + $0x20] sm:$0xff] %v321
                  %v323 = vld [vmem:[%s307 + $0x38] sm:$0xff]
                  %324 = vst [vmem:[%s308 + $0x28] sm:$0xff] %v323
                  %v325 = vld [vmem:[%s307 + $0x40] sm:$0xff]
                  %326 = vst [vmem:[%s308 + $0x30] sm:$0xff] %v325
                  %v327 = vld [vmem:[%s307 + $0x48] sm:$0xff]
                  %328 = vst [vmem:[%s308 + $0x30] sm:$0xff] %v327
                  %v329 = vld [vmem:[%s307 + $0x50] sm:$0xff]
                  %330 = vst [vmem:[%s308 + $0x38] sm:$0xff] %v329
                  %v331 = vld [vmem:[%s307 + $0x58] sm:$0xff]
                  %332 = vst [vmem:[%s308 + $0x40] sm:$0xff] %v331
                  %v333 = vld [vmem:[%s307 + $0x60] sm:$0xff]
                  %334 = vst [vmem:[%s308 + $0x40] sm:$0xff] %v333
                  %v335 = vld [vmem:[%s307 + $0x68] sm:$0xff]
                  %336 = vst [vmem:[%s308 + $0x48] sm:$0xff] %v335
                  %v337 = vld [vmem:[%s307 + $0x70] sm:$0xff]
                  %338 = vst [vmem:[%s308 + $0x50] sm:$0xff] %v337
                  %v339 = vld [vmem:[%s307 + $0x78] sm:$0xff]
                  %340 = vst [vmem:[%s308 + $0x50] sm:$0xff] %v339
                  %v341 = vld [vmem:[%s307 + $0x80] sm:$0xff]
                  %342 = vst [vmem:[%s308 + $0x58] sm:$0xff] %v341
                  %v343 = vld [vmem:[%s307 + $0x88] sm:$0xff]
                  %344 = vst [vmem:[%s308 + $0x60] sm:$0xff] %v343
                  %v345 = vld [vmem:[%s307 + $0x90] sm:$0xff]
                  %346 = vst [vmem:[%s308 + $0x60] sm:$0xff] %v345
                  %v347 = vld [vmem:[%s307 + $0x98] sm:$0xff]
                  %348 = vst [vmem:[%s308 + $0x68] sm:$0xff] %v347
                  %v349 = vld [vmem:[%s307 + $0xa0] sm:$0xff]
                  %350 = vst [vmem:[%s308 + $0x70] sm:$0xff] %v349
                  %v351 = vld [vmem:[%s307 + $0xa8] sm:$0xff]
                  %352 = vst [vmem:[%s308 + $0x70] sm:$0xff] %v351
                  %v353 = vld [vmem:[%s307 + $0xb0] sm:$0xff]
                  %354 = vst [vmem:[%s308 + $0x78] sm:$0xff] %v353
                  %v355 = vld [vmem:[%s307 + $0xb8] sm:$0xff]
                  %356 = vst [vmem:[%s308 + $0x80] sm:$0xff] %v355
                  %v357 = vld [vmem:[%s307 + $0xc0] sm:$0xff]
                  %358 = vst [vmem:[%s308 + $0x80] sm:$0xff] %v357
                  %v359 = vld [vmem:[%s307 + $0xc8] sm:$0xff]
                  %360 = vst [vmem:[%s308 + $0x88] sm:$0xff] %v359
                  %v361 = vld [vmem:[%s307 + $0xd0] sm:$0xff]
                  %362 = vst [vmem:[%s308 + $0x90] sm:$0xff] %v361
                  %v363 = vld [vmem:[%s307 + $0xd8] sm:$0xff]
                  %364 = vst [vmem:[%s308 + $0x90] sm:$0xff] %v363
                  %v365 = vld [vmem:[%s307 + $0xe0] sm:$0xff]
                  %366 = vst [vmem:[%s308 + $0x98] sm:$0xff] %v365
                  %v367 = vld [vmem:[%s307 + $0xe8] sm:$0xff]
                  %368 = vst [vmem:[%s308 + $0xa0] sm:$0xff] %v367
                  %v369 = vld [vmem:[%s307 + $0xf0] sm:$0xff]
                  %370 = vst [vmem:[%s308 + $0xa0] sm:$0xff] %v369
                  %v371 = vld [vmem:[%s307 + $0xf8] sm:$0xff]
                  %372 = vst [vmem:[%s308 + $0xa8] sm:$0xff] %v371
                  %v373 = vld [vmem:[%s307 + $0x100] sm:$0xff]
                  %374 = vst [vmem:[%s308 + $0xb0] sm:$0xff] %v373
                  %v375 = vld [vmem:[%s307 + $0x108] sm:$0xff]
                  %376 = vst [vmem:[%s308 + $0xb0] sm:$0xff] %v375
                  %v377 = vld [vmem:[%s307 + $0x110] sm:$0xff]
                  %378 = vst [vmem:[%s308 + $0xb8] sm:$0xff] %v377
                  %v379 = vld [vmem:[%s307 + $0x118] sm:$0xff]
                  %380 = vst [vmem:[%s308 + $0xc0] sm:$0xff] %v379
                  %v381 = vld [vmem:[%s307 + $0x120] sm:$0xff]
                  %382 = vst [vmem:[%s308 + $0xc0] sm:$0xff] %v381
                  %v383 = vld [vmem:[%s307 + $0x128] sm:$0xff]
                  %384 = vst [vmem:[%s308 + $0xc8] sm:$0xff] %v383
                  %v385 = vld [vmem:[%s307 + $0x130] sm:$0xff]
                  %386 = vst [vmem:[%s308 + $0xd0] sm:$0xff] %v385
                  %v387 = vld [vmem:[%s307 + $0x138] sm:$0xff]
                  %388 = vst [vmem:[%s308 + $0xd0] sm:$0xff] %v387
                  %v389 = vld [vmem:[%s307 + $0x140] sm:$0xff]
                  %390 = vst [vmem:[%s308 + $0xd8] sm:$0xff] %v389
                  %v391 = vld [vmem:[%s307 + $0x148] sm:$0xff]
                  %392 = vst [vmem:[%s308 + $0xe0] sm:$0xff] %v391
                  %v393 = vld [vmem:[%s307 + $0x150] sm:$0xff]
                  %394 = vst [vmem:[%s308 + $0xe0] sm:$0xff] %v393
                  %v395 = vld [vmem:[%s307 + $0x158] sm:$0xff]
                  %396 = vst [vmem:[%s308 + $0xe8] sm:$0xff] %v395
                  %v397 = vld [vmem:[%s307 + $0x160] sm:$0xff]
                  %398 = vst [vmem:[%s308 + $0xf0] sm:$0xff] %v397
                  %v399 = vld [vmem:[%s307 + $0x168] sm:$0xff]
                  %400 = vst [vmem:[%s308 + $0xf0] sm:$0xff] %v399
                  %v401 = vld [vmem:[%s307 + $0x170] sm:$0xff]
                  %402 = vst [vmem:[%s308 + $0xf8] sm:$0xff] %v401
                  %v403 = vld [vmem:[%s307 + $0x178] sm:$0xff]
                  %404 = vst [vmem:[%s308 + $0x100] sm:$0xff] %v403
                  %v405 = vld [vmem:[%s307 + $0x180] sm:$0xff]
                  %406 = vst [vmem:[%s308 + $0x100] sm:$0xff] %v405
                  %v407 = vld [vmem:[%s307 + $0x188] sm:$0xff]
                  %408 = vst [vmem:[%s308 + $0x108] sm:$0xff] %v407
                  %v409 = vld [vmem:[%s307 + $0x190] sm:$0xff]
                  %410 = vst [vmem:[%s308 + $0x110] sm:$0xff] %v409
                  %v411 = vld [vmem:[%s307 + $0x198] sm:$0xff]
                  %412 = vst [vmem:[%s308 + $0x110] sm:$0xff] %v411
                  %v413 = vld [vmem:[%s307 + $0x1a0] sm:$0xff]
                  %414 = vst [vmem:[%s308 + $0x118] sm:$0xff] %v413
                  %v415 = vld [vmem:[%s307 + $0x1a8] sm:$0xff]
                  %416 = vst [vmem:[%s308 + $0x120] sm:$0xff] %v415
                  %v417 = vld [vmem:[%s307 + $0x1b0] sm:$0xff]
                  %418 = vst [vmem:[%s308 + $0x120] sm:$0xff] %v417
                  %v419 = vld [vmem:[%s307 + $0x1b8] sm:$0xff]
                  %420 = vst [vmem:[%s308 + $0x128] sm:$0xff] %v419
                  %v421 = vld [vmem:[%s307 + $0x1c0] sm:$0xff]
                  %422 = vst [vmem:[%s308 + $0x130] sm:$0xff] %v421
                  %v423 = vld [vmem:[%s307 + $0x1c8] sm:$0xff]
                  %424 = vst [vmem:[%s308 + $0x130] sm:$0xff] %v423
                  %v425 = vld [vmem:[%s307 + $0x1d0] sm:$0xff]
                  %426 = vst [vmem:[%s308 + $0x138] sm:$0xff] %v425
                  %v427 = vld [vmem:[%s307 + $0x1d8] sm:$0xff]
                  %428 = vst [vmem:[%s308 + $0x140] sm:$0xff] %v427
                  %v429 = vld [vmem:[%s307 + $0x1e0] sm:$0xff]
                  %430 = vst [vmem:[%s308 + $0x140] sm:$0xff] %v429
                  %v431 = vld [vmem:[%s307 + $0x1e8] sm:$0xff]
                  %432 = vst [vmem:[%s308 + $0x148] sm:$0xff] %v431
                  %v433 = vld [vmem:[%s307 + $0x1f0] sm:$0xff]
                  %434 = vst [vmem:[%s308 + $0x150] sm:$0xff] %v433
                  %v435 = vld [vmem:[%s307 + $0x1f8] sm:$0xff]
                  %436 = vst [vmem:[%s308 + $0x150] sm:$0xff] %v435
                  %v437 = vld [vmem:[%s307 + $0x200] sm:$0xff]
                  %438 = vst [vmem:[%s308 + $0x158] sm:$0xff] %v437
                  %v439 = vld [vmem:[%s307 + $0x208] sm:$0xff]
                  %440 = vst [vmem:[%s308 + $0x160] sm:$0xff] %v439
                  %v441 = vld [vmem:[%s307 + $0x210] sm:$0xff]
                  %442 = vst [vmem:[%s308 + $0x160] sm:$0xff] %v441
                  %v443 = vld [vmem:[%s307 + $0x218] sm:$0xff]
                  %444 = vst [vmem:[%s308 + $0x168] sm:$0xff] %v443
                  %v445 = vld [vmem:[%s307 + $0x220] sm:$0xff]
                  %446 = vst [vmem:[%s308 + $0x170] sm:$0xff] %v445
                  %v447 = vld [vmem:[%s307 + $0x228] sm:$0xff]
                  %448 = vst [vmem:[%s308 + $0x170] sm:$0xff] %v447
                  %v449 = vld [vmem:[%s307 + $0x230] sm:$0xff]
                  %450 = vst [vmem:[%s308 + $0x178] sm:$0xff] %v449
                  %v451 = vld [vmem:[%s307 + $0x238] sm:$0xff]
                  %452 = vst [vmem:[%s308 + $0x180] sm:$0xff] %v451
                  %s453 = sadd.s32 1, %s306
                  %p454 = scmp.ge.s32.totalorder %s453, %s296
                  %s455 = scalar_select %p454, 0, %s453
                  %s456 = smul.u32 %s455, 24
                  %s457 = smul.u32 %s455, 24
                  %s458 = scalar_lea.vmem %s220, %s456
                  %s459 = scalar_lea.vmem %s212, %s457 [#allocation3]
                $region60: #{st_llm_forward.20} parent=54 // loop_footer
                  %s303 = sadd.s32 %s301, 1
                $region61: #{st_llm_forward.20} parent=54 // loop_footer_branch
                  %300 = sbr.rel target = $region57
                $region62: #{st_llm_forward.20} parent=54 // loop_exit
                  _
                %s460 = sdiv.u32.pop %s295, 3
                %s461 = srem.u32.pop %s295, 3
                %s462 = smul.u32 %s460, 3
                %s463 = smul.u32 128, %s462
                %s464 = sshra.s32 %s463, 4
                %s465 = scalar_lea.vmem %s220, %s464
                %s466 = smul.u32 128, %s462
                %s467 = sshra.s32 %s466, 4
                %s468 = scalar_lea.vmem %s212, %s467 [#allocation3]
                // While loop
                $region63: #{st_llm_forward.20} parent=54 // loop_pre_header
                  _
                $region64: #{st_llm_forward.20} parent=54 // loop_header
                  %s472 = sphi 0, %s474
                  %p473 = scmp.ge.s32.totalorder %s472, %s461
                  %s477 = sphi 0, %s530
                  %s478 = sphi %s465, %s533
                  %s479 = sphi %s468, %s534
                $region65: #{st_llm_forward.20} parent=54 // loop_header_branch
                  %476 = sbr.rel (%p473) target = $region69
                $region66: #{st_llm_forward.20} parent=54 // loop_body
                  %v480 = vld [vmem:[%s478] sm:$0xff]
                  %481 = vst [vmem:[%s479] sm:$0xff] %v480
                  %v482 = vld [vmem:[%s478 + $0x18] sm:$0xff]
                  %483 = vst [vmem:[%s479 + $0x10] sm:$0xff] %v482
                  %v484 = vld [vmem:[%s478 + $0x30] sm:$0xff]
                  %485 = vst [vmem:[%s479 + $0x20] sm:$0xff] %v484
                  %v486 = vld [vmem:[%s478 + $0x48] sm:$0xff]
                  %487 = vst [vmem:[%s479 + $0x30] sm:$0xff] %v486
                  %v488 = vld [vmem:[%s478 + $0x60] sm:$0xff]
                  %489 = vst [vmem:[%s479 + $0x40] sm:$0xff] %v488
                  %v490 = vld [vmem:[%s478 + $0x78] sm:$0xff]
                  %491 = vst [vmem:[%s479 + $0x50] sm:$0xff] %v490
                  %v492 = vld [vmem:[%s478 + $0x90] sm:$0xff]
                  %493 = vst [vmem:[%s479 + $0x60] sm:$0xff] %v492
                  %v494 = vld [vmem:[%s478 + $0xa8] sm:$0xff]
                  %495 = vst [vmem:[%s479 + $0x70] sm:$0xff] %v494
                  %v496 = vld [vmem:[%s478 + $0xc0] sm:$0xff]
                  %497 = vst [vmem:[%s479 + $0x80] sm:$0xff] %v496
                  %v498 = vld [vmem:[%s478 + $0xd8] sm:$0xff]
                  %499 = vst [vmem:[%s479 + $0x90] sm:$0xff] %v498
                  %v500 = vld [vmem:[%s478 + $0xf0] sm:$0xff]
                  %501 = vst [vmem:[%s479 + $0xa0] sm:$0xff] %v500
                  %v502 = vld [vmem:[%s478 + $0x108] sm:$0xff]
                  %503 = vst [vmem:[%s479 + $0xb0] sm:$0xff] %v502
                  %v504 = vld [vmem:[%s478 + $0x120] sm:$0xff]
                  %505 = vst [vmem:[%s479 + $0xc0] sm:$0xff] %v504
                  %v506 = vld [vmem:[%s478 + $0x138] sm:$0xff]
                  %507 = vst [vmem:[%s479 + $0xd0] sm:$0xff] %v506
                  %v508 = vld [vmem:[%s478 + $0x150] sm:$0xff]
                  %509 = vst [vmem:[%s479 + $0xe0] sm:$0xff] %v508
                  %v510 = vld [vmem:[%s478 + $0x168] sm:$0xff]
                  %511 = vst [vmem:[%s479 + $0xf0] sm:$0xff] %v510
                  %v512 = vld [vmem:[%s478 + $0x180] sm:$0xff]
                  %513 = vst [vmem:[%s479 + $0x100] sm:$0xff] %v512
                  %v514 = vld [vmem:[%s478 + $0x198] sm:$0xff]
                  %515 = vst [vmem:[%s479 + $0x110] sm:$0xff] %v514
                  %v516 = vld [vmem:[%s478 + $0x1b0] sm:$0xff]
                  %517 = vst [vmem:[%s479 + $0x120] sm:$0xff] %v516
                  %v518 = vld [vmem:[%s478 + $0x1c8] sm:$0xff]
                  %519 = vst [vmem:[%s479 + $0x130] sm:$0xff] %v518
                  %v520 = vld [vmem:[%s478 + $0x1e0] sm:$0xff]
                  %521 = vst [vmem:[%s479 + $0x140] sm:$0xff] %v520
                  %v522 = vld [vmem:[%s478 + $0x1f8] sm:$0xff]
                  %523 = vst [vmem:[%s479 + $0x150] sm:$0xff] %v522
                  %v524 = vld [vmem:[%s478 + $0x210] sm:$0xff]
                  %525 = vst [vmem:[%s479 + $0x160] sm:$0xff] %v524
                  %v526 = vld [vmem:[%s478 + $0x228] sm:$0xff]
                  %527 = vst [vmem:[%s479 + $0x170] sm:$0xff] %v526
                  %s528 = sadd.s32 1, %s477
                  %p529 = scmp.ge.s32.totalorder %s528, %s461
                  %s530 = scalar_select %p529, 0, %s528
                  %s531 = smul.u32 %s530, 8
                  %s532 = smul.u32 %s530, 8
                  %s533 = scalar_lea.vmem %s465, %s531
                  %s534 = scalar_lea.vmem %s468, %s532 [#allocation3]
                $region67: #{st_llm_forward.20} parent=54 // loop_footer
                  %s474 = sadd.s32 %s472, 1
                $region68: #{st_llm_forward.20} parent=54 // loop_footer_branch
                  %471 = sbr.rel target = $region64
                $region69: #{st_llm_forward.20} parent=54 // loop_exit
                  _
              $region55: #{st_llm_forward.20} parent=39 // pred_fallthru
                _
              %p535 = pneg %p291
              // Predicated region
              $region70: #{st_llm_forward.20} parent=39 // pred_check
                _
              $region71: #{st_llm_forward.20} parent=39 // pred_check_branch
                %537 = sbr.rel (%p291) target = $region73
              $region72: #{st_llm_forward.20} parent=39 // pred_region
                %s538 = sand.u32 %s221, 7
                %s539 = ssub.s32 %s221, %s538
                %s540 = scalar_lea.vmem %s220, %s539
                %s541 = ssub.s32 %s221, %s538
                %s542 = scalar_lea.vmem %s212, %s541 [#allocation3]
                %s543 = sshrl.u32 %s221, 3
                %s544 = sdiv.u32.pop %s543, 3
                %s545 = srem.u32.pop %s543, 3
                // While loop
                $region74: #{st_llm_forward.20} parent=72 // loop_pre_header
                  _
                $region75: #{st_llm_forward.20} parent=72 // loop_header
                  %s549 = sphi 0, %s551
                  %p550 = scmp.ge.s32.totalorder %s549, %s544
                  %s554 = sphi 0, %s703
                  %s555 = sphi %s220, %s706
                  %s556 = sphi %s212, %s707
                $region76: #{st_llm_forward.20} parent=72 // loop_header_branch
                  %553 = sbr.rel (%p550) target = $region80
                $region77: #{st_llm_forward.20} parent=72 // loop_body
                  %v557 = vld [vmem:[%s555] sm:$0xff]
                  %558 = vst [vmem:[%s556] sm:$0xff] %v557
                  %v559 = vld [vmem:[%s555 + $0x8] sm:$0xff]
                  %560 = vst [vmem:[%s556 + $0x8] sm:$0xff] %v559
                  %v561 = vld [vmem:[%s555 + $0x10] sm:$0xff]
                  %562 = vst [vmem:[%s556 + $0x10] sm:$0xff] %v561
                  %v563 = vld [vmem:[%s555 + $0x18] sm:$0xff]
                  %564 = vst [vmem:[%s556 + $0x10] sm:$0xff] %v563
                  %v565 = vld [vmem:[%s555 + $0x20] sm:$0xff]
                  %566 = vst [vmem:[%s556 + $0x18] sm:$0xff] %v565
                  %v567 = vld [vmem:[%s555 + $0x28] sm:$0xff]
                  %568 = vst [vmem:[%s556 + $0x20] sm:$0xff] %v567
                  %v569 = vld [vmem:[%s555 + $0x30] sm:$0xff]
                  %570 = vst [vmem:[%s556 + $0x20] sm:$0xff] %v569
                  %v571 = vld [vmem:[%s555 + $0x38] sm:$0xff]
                  %572 = vst [vmem:[%s556 + $0x28] sm:$0xff] %v571
                  %v573 = vld [vmem:[%s555 + $0x40] sm:$0xff]
                  %574 = vst [vmem:[%s556 + $0x30] sm:$0xff] %v573
                  %v575 = vld [vmem:[%s555 + $0x48] sm:$0xff]
                  %576 = vst [vmem:[%s556 + $0x30] sm:$0xff] %v575
                  %v577 = vld [vmem:[%s555 + $0x50] sm:$0xff]
                  %578 = vst [vmem:[%s556 + $0x38] sm:$0xff] %v577
                  %v579 = vld [vmem:[%s555 + $0x58] sm:$0xff]
                  %580 = vst [vmem:[%s556 + $0x40] sm:$0xff] %v579
                  %v581 = vld [vmem:[%s555 + $0x60] sm:$0xff]
                  %582 = vst [vmem:[%s556 + $0x40] sm:$0xff] %v581
                  %v583 = vld [vmem:[%s555 + $0x68] sm:$0xff]
                  %584 = vst [vmem:[%s556 + $0x48] sm:$0xff] %v583
                  %v585 = vld [vmem:[%s555 + $0x70] sm:$0xff]
                  %586 = vst [vmem:[%s556 + $0x50] sm:$0xff] %v585
                  %v587 = vld [vmem:[%s555 + $0x78] sm:$0xff]
                  %588 = vst [vmem:[%s556 + $0x50] sm:$0xff] %v587
                  %v589 = vld [vmem:[%s555 + $0x80] sm:$0xff]
                  %590 = vst [vmem:[%s556 + $0x58] sm:$0xff] %v589
                  %v591 = vld [vmem:[%s555 + $0x88] sm:$0xff]
                  %592 = vst [vmem:[%s556 + $0x60] sm:$0xff] %v591
                  %v593 = vld [vmem:[%s555 + $0x90] sm:$0xff]
                  %594 = vst [vmem:[%s556 + $0x60] sm:$0xff] %v593
                  %v595 = vld [vmem:[%s555 + $0x98] sm:$0xff]
                  %596 = vst [vmem:[%s556 + $0x68] sm:$0xff] %v595
                  %v597 = vld [vmem:[%s555 + $0xa0] sm:$0xff]
                  %598 = vst [vmem:[%s556 + $0x70] sm:$0xff] %v597
                  %v599 = vld [vmem:[%s555 + $0xa8] sm:$0xff]
                  %600 = vst [vmem:[%s556 + $0x70] sm:$0xff] %v599
                  %v601 = vld [vmem:[%s555 + $0xb0] sm:$0xff]
                  %602 = vst [vmem:[%s556 + $0x78] sm:$0xff] %v601
                  %v603 = vld [vmem:[%s555 + $0xb8] sm:$0xff]
                  %604 = vst [vmem:[%s556 + $0x80] sm:$0xff] %v603
                  %v605 = vld [vmem:[%s555 + $0xc0] sm:$0xff]
                  %606 = vst [vmem:[%s556 + $0x80] sm:$0xff] %v605
                  %v607 = vld [vmem:[%s555 + $0xc8] sm:$0xff]
                  %608 = vst [vmem:[%s556 + $0x88] sm:$0xff] %v607
                  %v609 = vld [vmem:[%s555 + $0xd0] sm:$0xff]
                  %610 = vst [vmem:[%s556 + $0x90] sm:$0xff] %v609
                  %v611 = vld [vmem:[%s555 + $0xd8] sm:$0xff]
                  %612 = vst [vmem:[%s556 + $0x90] sm:$0xff] %v611
                  %v613 = vld [vmem:[%s555 + $0xe0] sm:$0xff]
                  %614 = vst [vmem:[%s556 + $0x98] sm:$0xff] %v613
                  %v615 = vld [vmem:[%s555 + $0xe8] sm:$0xff]
                  %616 = vst [vmem:[%s556 + $0xa0] sm:$0xff] %v615
                  %v617 = vld [vmem:[%s555 + $0xf0] sm:$0xff]
                  %618 = vst [vmem:[%s556 + $0xa0] sm:$0xff] %v617
                  %v619 = vld [vmem:[%s555 + $0xf8] sm:$0xff]
                  %620 = vst [vmem:[%s556 + $0xa8] sm:$0xff] %v619
                  %v621 = vld [vmem:[%s555 + $0x100] sm:$0xff]
                  %622 = vst [vmem:[%s556 + $0xb0] sm:$0xff] %v621
                  %v623 = vld [vmem:[%s555 + $0x108] sm:$0xff]
                  %624 = vst [vmem:[%s556 + $0xb0] sm:$0xff] %v623
                  %v625 = vld [vmem:[%s555 + $0x110] sm:$0xff]
                  %626 = vst [vmem:[%s556 + $0xb8] sm:$0xff] %v625
                  %v627 = vld [vmem:[%s555 + $0x118] sm:$0xff]
                  %628 = vst [vmem:[%s556 + $0xc0] sm:$0xff] %v627
                  %v629 = vld [vmem:[%s555 + $0x120] sm:$0xff]
                  %630 = vst [vmem:[%s556 + $0xc0] sm:$0xff] %v629
                  %v631 = vld [vmem:[%s555 + $0x128] sm:$0xff]
                  %632 = vst [vmem:[%s556 + $0xc8] sm:$0xff] %v631
                  %v633 = vld [vmem:[%s555 + $0x130] sm:$0xff]
                  %634 = vst [vmem:[%s556 + $0xd0] sm:$0xff] %v633
                  %v635 = vld [vmem:[%s555 + $0x138] sm:$0xff]
                  %636 = vst [vmem:[%s556 + $0xd0] sm:$0xff] %v635
                  %v637 = vld [vmem:[%s555 + $0x140] sm:$0xff]
                  %638 = vst [vmem:[%s556 + $0xd8] sm:$0xff] %v637
                  %v639 = vld [vmem:[%s555 + $0x148] sm:$0xff]
                  %640 = vst [vmem:[%s556 + $0xe0] sm:$0xff] %v639
                  %v641 = vld [vmem:[%s555 + $0x150] sm:$0xff]
                  %642 = vst [vmem:[%s556 + $0xe0] sm:$0xff] %v641
                  %v643 = vld [vmem:[%s555 + $0x158] sm:$0xff]
                  %644 = vst [vmem:[%s556 + $0xe8] sm:$0xff] %v643
                  %v645 = vld [vmem:[%s555 + $0x160] sm:$0xff]
                  %646 = vst [vmem:[%s556 + $0xf0] sm:$0xff] %v645
                  %v647 = vld [vmem:[%s555 + $0x168] sm:$0xff]
                  %648 = vst [vmem:[%s556 + $0xf0] sm:$0xff] %v647
                  %v649 = vld [vmem:[%s555 + $0x170] sm:$0xff]
                  %650 = vst [vmem:[%s556 + $0xf8] sm:$0xff] %v649
                  %v651 = vld [vmem:[%s555 + $0x178] sm:$0xff]
                  %652 = vst [vmem:[%s556 + $0x100] sm:$0xff] %v651
                  %v653 = vld [vmem:[%s555 + $0x180] sm:$0xff]
                  %654 = vst [vmem:[%s556 + $0x100] sm:$0xff] %v653
                  %v655 = vld [vmem:[%s555 + $0x188] sm:$0xff]
                  %656 = vst [vmem:[%s556 + $0x108] sm:$0xff] %v655
                  %v657 = vld [vmem:[%s555 + $0x190] sm:$0xff]
                  %658 = vst [vmem:[%s556 + $0x110] sm:$0xff] %v657
                  %v659 = vld [vmem:[%s555 + $0x198] sm:$0xff]
                  %660 = vst [vmem:[%s556 + $0x110] sm:$0xff] %v659
                  %v661 = vld [vmem:[%s555 + $0x1a0] sm:$0xff]
                  %662 = vst [vmem:[%s556 + $0x118] sm:$0xff] %v661
                  %v663 = vld [vmem:[%s555 + $0x1a8] sm:$0xff]
                  %664 = vst [vmem:[%s556 + $0x120] sm:$0xff] %v663
                  %v665 = vld [vmem:[%s555 + $0x1b0] sm:$0xff]
                  %666 = vst [vmem:[%s556 + $0x120] sm:$0xff] %v665
                  %v667 = vld [vmem:[%s555 + $0x1b8] sm:$0xff]
                  %668 = vst [vmem:[%s556 + $0x128] sm:$0xff] %v667
                  %v669 = vld [vmem:[%s555 + $0x1c0] sm:$0xff]
                  %670 = vst [vmem:[%s556 + $0x130] sm:$0xff] %v669
                  %v671 = vld [vmem:[%s555 + $0x1c8] sm:$0xff]
                  %672 = vst [vmem:[%s556 + $0x130] sm:$0xff] %v671
                  %v673 = vld [vmem:[%s555 + $0x1d0] sm:$0xff]
                  %674 = vst [vmem:[%s556 + $0x138] sm:$0xff] %v673
                  %v675 = vld [vmem:[%s555 + $0x1d8] sm:$0xff]
                  %676 = vst [vmem:[%s556 + $0x140] sm:$0xff] %v675
                  %v677 = vld [vmem:[%s555 + $0x1e0] sm:$0xff]
                  %678 = vst [vmem:[%s556 + $0x140] sm:$0xff] %v677
                  %v679 = vld [vmem:[%s555 + $0x1e8] sm:$0xff]
                  %680 = vst [vmem:[%s556 + $0x148] sm:$0xff] %v679
                  %v681 = vld [vmem:[%s555 + $0x1f0] sm:$0xff]
                  %682 = vst [vmem:[%s556 + $0x150] sm:$0xff] %v681
                  %v683 = vld [vmem:[%s555 + $0x1f8] sm:$0xff]
                  %684 = vst [vmem:[%s556 + $0x150] sm:$0xff] %v683
                  %v685 = vld [vmem:[%s555 + $0x200] sm:$0xff]
                  %686 = vst [vmem:[%s556 + $0x158] sm:$0xff] %v685
                  %v687 = vld [vmem:[%s555 + $0x208] sm:$0xff]
                  %688 = vst [vmem:[%s556 + $0x160] sm:$0xff] %v687
                  %v689 = vld [vmem:[%s555 + $0x210] sm:$0xff]
                  %690 = vst [vmem:[%s556 + $0x160] sm:$0xff] %v689
                  %v691 = vld [vmem:[%s555 + $0x218] sm:$0xff]
                  %692 = vst [vmem:[%s556 + $0x168] sm:$0xff] %v691
                  %v693 = vld [vmem:[%s555 + $0x220] sm:$0xff]
                  %694 = vst [vmem:[%s556 + $0x170] sm:$0xff] %v693
                  %v695 = vld [vmem:[%s555 + $0x228] sm:$0xff]
                  %696 = vst [vmem:[%s556 + $0x170] sm:$0xff] %v695
                  %v697 = vld [vmem:[%s555 + $0x230] sm:$0xff]
                  %698 = vst [vmem:[%s556 + $0x178] sm:$0xff] %v697
                  %v699 = vld [vmem:[%s555 + $0x238] sm:$0xff]
                  %700 = vst [vmem:[%s556 + $0x180] sm:$0xff] %v699
                  %s701 = sadd.s32 1, %s554
                  %p702 = scmp.ge.s32.totalorder %s701, %s544
                  %s703 = scalar_select %p702, 0, %s701
                  %s704 = smul.u32 %s703, 24
                  %s705 = smul.u32 %s703, 24
                  %s706 = scalar_lea.vmem %s220, %s704
                  %s707 = scalar_lea.vmem %s212, %s705 [#allocation3]
                $region78: #{st_llm_forward.20} parent=72 // loop_footer
                  %s551 = sadd.s32 %s549, 1
                $region79: #{st_llm_forward.20} parent=72 // loop_footer_branch
                  %548 = sbr.rel target = $region75
                $region80: #{st_llm_forward.20} parent=72 // loop_exit
                  _
                %s708 = sdiv.u32.pop %s543, 3
                %s709 = srem.u32.pop %s543, 3
                %s710 = smul.u32 %s708, 3
                %s711 = smul.u32 128, %s710
                %s712 = sshra.s32 %s711, 4
                %s713 = scalar_lea.vmem %s220, %s712
                %s714 = smul.u32 128, %s710
                %s715 = sshra.s32 %s714, 4
                %s716 = scalar_lea.vmem %s212, %s715 [#allocation3]
                // While loop
                $region81: #{st_llm_forward.20} parent=72 // loop_pre_header
                  _
                $region82: #{st_llm_forward.20} parent=72 // loop_header
                  %s720 = sphi 0, %s722
                  %p721 = scmp.ge.s32.totalorder %s720, %s709
                  %s725 = sphi 0, %s778
                  %s726 = sphi %s713, %s781
                  %s727 = sphi %s716, %s782
                $region83: #{st_llm_forward.20} parent=72 // loop_header_branch
                  %724 = sbr.rel (%p721) target = $region87
                $region84: #{st_llm_forward.20} parent=72 // loop_body
                  %v728 = vld [vmem:[%s726] sm:$0xff]
                  %729 = vst [vmem:[%s727] sm:$0xff] %v728
                  %v730 = vld [vmem:[%s726 + $0x18] sm:$0xff]
                  %731 = vst [vmem:[%s727 + $0x10] sm:$0xff] %v730
                  %v732 = vld [vmem:[%s726 + $0x30] sm:$0xff]
                  %733 = vst [vmem:[%s727 + $0x20] sm:$0xff] %v732
                  %v734 = vld [vmem:[%s726 + $0x48] sm:$0xff]
                  %735 = vst [vmem:[%s727 + $0x30] sm:$0xff] %v734
                  %v736 = vld [vmem:[%s726 + $0x60] sm:$0xff]
                  %737 = vst [vmem:[%s727 + $0x40] sm:$0xff] %v736
                  %v738 = vld [vmem:[%s726 + $0x78] sm:$0xff]
                  %739 = vst [vmem:[%s727 + $0x50] sm:$0xff] %v738
                  %v740 = vld [vmem:[%s726 + $0x90] sm:$0xff]
                  %741 = vst [vmem:[%s727 + $0x60] sm:$0xff] %v740
                  %v742 = vld [vmem:[%s726 + $0xa8] sm:$0xff]
                  %743 = vst [vmem:[%s727 + $0x70] sm:$0xff] %v742
                  %v744 = vld [vmem:[%s726 + $0xc0] sm:$0xff]
                  %745 = vst [vmem:[%s727 + $0x80] sm:$0xff] %v744
                  %v746 = vld [vmem:[%s726 + $0xd8] sm:$0xff]
                  %747 = vst [vmem:[%s727 + $0x90] sm:$0xff] %v746
                  %v748 = vld [vmem:[%s726 + $0xf0] sm:$0xff]
                  %749 = vst [vmem:[%s727 + $0xa0] sm:$0xff] %v748
                  %v750 = vld [vmem:[%s726 + $0x108] sm:$0xff]
                  %751 = vst [vmem:[%s727 + $0xb0] sm:$0xff] %v750
                  %v752 = vld [vmem:[%s726 + $0x120] sm:$0xff]
                  %753 = vst [vmem:[%s727 + $0xc0] sm:$0xff] %v752
                  %v754 = vld [vmem:[%s726 + $0x138] sm:$0xff]
                  %755 = vst [vmem:[%s727 + $0xd0] sm:$0xff] %v754
                  %v756 = vld [vmem:[%s726 + $0x150] sm:$0xff]
                  %757 = vst [vmem:[%s727 + $0xe0] sm:$0xff] %v756
                  %v758 = vld [vmem:[%s726 + $0x168] sm:$0xff]
                  %759 = vst [vmem:[%s727 + $0xf0] sm:$0xff] %v758
                  %v760 = vld [vmem:[%s726 + $0x180] sm:$0xff]
                  %761 = vst [vmem:[%s727 + $0x100] sm:$0xff] %v760
                  %v762 = vld [vmem:[%s726 + $0x198] sm:$0xff]
                  %763 = vst [vmem:[%s727 + $0x110] sm:$0xff] %v762
                  %v764 = vld [vmem:[%s726 + $0x1b0] sm:$0xff]
                  %765 = vst [vmem:[%s727 + $0x120] sm:$0xff] %v764
                  %v766 = vld [vmem:[%s726 + $0x1c8] sm:$0xff]
                  %767 = vst [vmem:[%s727 + $0x130] sm:$0xff] %v766
                  %v768 = vld [vmem:[%s726 + $0x1e0] sm:$0xff]
                  %769 = vst [vmem:[%s727 + $0x140] sm:$0xff] %v768
                  %v770 = vld [vmem:[%s726 + $0x1f8] sm:$0xff]
                  %771 = vst [vmem:[%s727 + $0x150] sm:$0xff] %v770
                  %v772 = vld [vmem:[%s726 + $0x210] sm:$0xff]
                  %773 = vst [vmem:[%s727 + $0x160] sm:$0xff] %v772
                  %v774 = vld [vmem:[%s726 + $0x228] sm:$0xff]
                  %775 = vst [vmem:[%s727 + $0x170] sm:$0xff] %v774
                  %s776 = sadd.s32 1, %s725
                  %p777 = scmp.ge.s32.totalorder %s776, %s709
                  %s778 = scalar_select %p777, 0, %s776
                  %s779 = smul.u32 %s778, 8
                  %s780 = smul.u32 %s778, 8
                  %s781 = scalar_lea.vmem %s713, %s779
                  %s782 = scalar_lea.vmem %s716, %s780 [#allocation3]
                $region85: #{st_llm_forward.20} parent=72 // loop_footer
                  %s722 = sadd.s32 %s720, 1
                $region86: #{st_llm_forward.20} parent=72 // loop_footer_branch
                  %719 = sbr.rel target = $region82
                $region87: #{st_llm_forward.20} parent=72 // loop_exit
                  _
                %s783 = sshll.u32 1, %s538
                %s784 = ssub.s32 %s783, 1
                loop: start=0, step=1, limit=1
                $region88: #{st_llm_forward.20} parent=72 // loop_pre_header
                  _
                $region89: #{st_llm_forward.20} parent=72 // loop_header
                  %s786 = sphi 0, %s790
                  %p787 = scmp.ge.s32.totalorder %s786, 1
                  %s791 = sphi %s540, %s540
                  %s792 = sphi %s542, %s542
                $region90: #{st_llm_forward.20} parent=72 // loop_header_branch
                  %789 = sbr.rel (%p787) target = $region94
                $region91: #{st_llm_forward.20} parent=72 // loop_body
                  %v793 = vld [vmem:[%s791] sm:%s784]
                  %794 = vst [vmem:[%s792] sm:%s784] %v793
                  %v795 = vld [vmem:[%s791 + $0x18] sm:%s784]
                  %796 = vst [vmem:[%s792 + $0x10] sm:%s784] %v795
                  %v797 = vld [vmem:[%s791 + $0x30] sm:%s784]
                  %798 = vst [vmem:[%s792 + $0x20] sm:%s784] %v797
                  %v799 = vld [vmem:[%s791 + $0x48] sm:%s784]
                  %800 = vst [vmem:[%s792 + $0x30] sm:%s784] %v799
                  %v801 = vld [vmem:[%s791 + $0x60] sm:%s784]
                  %802 = vst [vmem:[%s792 + $0x40] sm:%s784] %v801
                  %v803 = vld [vmem:[%s791 + $0x78] sm:%s784]
                  %804 = vst [vmem:[%s792 + $0x50] sm:%s784] %v803
                  %v805 = vld [vmem:[%s791 + $0x90] sm:%s784]
                  %806 = vst [vmem:[%s792 + $0x60] sm:%s784] %v805
                  %v807 = vld [vmem:[%s791 + $0xa8] sm:%s784]
                  %808 = vst [vmem:[%s792 + $0x70] sm:%s784] %v807
                  %v809 = vld [vmem:[%s791 + $0xc0] sm:%s784]
                  %810 = vst [vmem:[%s792 + $0x80] sm:%s784] %v809
                  %v811 = vld [vmem:[%s791 + $0xd8] sm:%s784]
                  %812 = vst [vmem:[%s792 + $0x90] sm:%s784] %v811
                  %v813 = vld [vmem:[%s791 + $0xf0] sm:%s784]
                  %814 = vst [vmem:[%s792 + $0xa0] sm:%s784] %v813
                  %v815 = vld [vmem:[%s791 + $0x108] sm:%s784]
                  %816 = vst [vmem:[%s792 + $0xb0] sm:%s784] %v815
                  %v817 = vld [vmem:[%s791 + $0x120] sm:%s784]
                  %818 = vst [vmem:[%s792 + $0xc0] sm:%s784] %v817
                  %v819 = vld [vmem:[%s791 + $0x138] sm:%s784]
                  %820 = vst [vmem:[%s792 + $0xd0] sm:%s784] %v819
                  %v821 = vld [vmem:[%s791 + $0x150] sm:%s784]
                  %822 = vst [vmem:[%s792 + $0xe0] sm:%s784] %v821
                  %v823 = vld [vmem:[%s791 + $0x168] sm:%s784]
                  %824 = vst [vmem:[%s792 + $0xf0] sm:%s784] %v823
                  %v825 = vld [vmem:[%s791 + $0x180] sm:%s784]
                  %826 = vst [vmem:[%s792 + $0x100] sm:%s784] %v825
                  %v827 = vld [vmem:[%s791 + $0x198] sm:%s784]
                  %828 = vst [vmem:[%s792 + $0x110] sm:%s784] %v827
                  %v829 = vld [vmem:[%s791 + $0x1b0] sm:%s784]
                  %830 = vst [vmem:[%s792 + $0x120] sm:%s784] %v829
                  %v831 = vld [vmem:[%s791 + $0x1c8] sm:%s784]
                  %832 = vst [vmem:[%s792 + $0x130] sm:%s784] %v831
                  %v833 = vld [vmem:[%s791 + $0x1e0] sm:%s784]
                  %834 = vst [vmem:[%s792 + $0x140] sm:%s784] %v833
                  %v835 = vld [vmem:[%s791 + $0x1f8] sm:%s784]
                  %836 = vst [vmem:[%s792 + $0x150] sm:%s784] %v835
                  %v837 = vld [vmem:[%s791 + $0x210] sm:%s784]
                  %838 = vst [vmem:[%s792 + $0x160] sm:%s784] %v837
                  %v839 = vld [vmem:[%s791 + $0x228] sm:%s784]
                  %840 = vst [vmem:[%s792 + $0x170] sm:%s784] %v839
                $region92: #{st_llm_forward.20} parent=72 // loop_footer
                  %s790 = sadd.s32 1, %s786
                $region93: #{st_llm_forward.20} parent=72 // loop_footer_branch
                  %785 = sbr.rel target = $region89
                $region94: #{st_llm_forward.20} parent=72 // loop_exit
                  _
              $region73: #{st_llm_forward.20} parent=39 // pred_fallthru
                _
            $region40: #{st_llm_forward.20} parent=35 // pred_fallthru
              _
            // Predicated region
            $region41: #{st_llm_forward.20} parent=35 // pred_check
              %p229 = pneg %p225
            $region42: #{st_llm_forward.20} parent=35 // pred_check_branch
              %231 = sbr.rel (%p229) target = $region44
            $region43: #{st_llm_forward.20} parent=35 // pred_region
              %s232 = sshll.u32 1, %s221
              %s233 = ssub.s32 %s232, 1
              loop: start=0, step=1, limit=1
              $region45: #{st_llm_forward.20} parent=43 // loop_pre_header
                _
              $region46: #{st_llm_forward.20} parent=43 // loop_header
                %s235 = sphi 0, %s239
                %p236 = scmp.ge.s32.totalorder %s235, 1
                %s240 = sphi %s220, %s220
                %s241 = sphi %s212, %s212
              $region47: #{st_llm_forward.20} parent=43 // loop_header_branch
                %238 = sbr.rel (%p236) target = $region51
              $region48: #{st_llm_forward.20} parent=43 // loop_body
                %v242 = vld [vmem:[%s240] sm:%s233]
                %243 = vst [vmem:[%s241] sm:%s233] %v242
                %v244 = vld [vmem:[%s240 + $0x18] sm:%s233]
                %245 = vst [vmem:[%s241 + $0x10] sm:%s233] %v244
                %v246 = vld [vmem:[%s240 + $0x30] sm:%s233]
                %247 = vst [vmem:[%s241 + $0x20] sm:%s233] %v246
                %v248 = vld [vmem:[%s240 + $0x48] sm:%s233]
                %249 = vst [vmem:[%s241 + $0x30] sm:%s233] %v248
                %v250 = vld [vmem:[%s240 + $0x60] sm:%s233]
                %251 = vst [vmem:[%s241 + $0x40] sm:%s233] %v250
                %v252 = vld [vmem:[%s240 + $0x78] sm:%s233]
                %253 = vst [vmem:[%s241 + $0x50] sm:%s233] %v252
                %v254 = vld [vmem:[%s240 + $0x90] sm:%s233]
                %255 = vst [vmem:[%s241 + $0x60] sm:%s233] %v254
                %v256 = vld [vmem:[%s240 + $0xa8] sm:%s233]
                %257 = vst [vmem:[%s241 + $0x70] sm:%s233] %v256
                %v258 = vld [vmem:[%s240 + $0xc0] sm:%s233]
                %259 = vst [vmem:[%s241 + $0x80] sm:%s233] %v258
                %v260 = vld [vmem:[%s240 + $0xd8] sm:%s233]
                %261 = vst [vmem:[%s241 + $0x90] sm:%s233] %v260
                %v262 = vld [vmem:[%s240 + $0xf0] sm:%s233]
                %263 = vst [vmem:[%s241 + $0xa0] sm:%s233] %v262
                %v264 = vld [vmem:[%s240 + $0x108] sm:%s233]
                %265 = vst [vmem:[%s241 + $0xb0] sm:%s233] %v264
                %v266 = vld [vmem:[%s240 + $0x120] sm:%s233]
                %267 = vst [vmem:[%s241 + $0xc0] sm:%s233] %v266
                %v268 = vld [vmem:[%s240 + $0x138] sm:%s233]
                %269 = vst [vmem:[%s241 + $0xd0] sm:%s233] %v268
                %v270 = vld [vmem:[%s240 + $0x150] sm:%s233]
                %271 = vst [vmem:[%s241 + $0xe0] sm:%s233] %v270
                %v272 = vld [vmem:[%s240 + $0x168] sm:%s233]
                %273 = vst [vmem:[%s241 + $0xf0] sm:%s233] %v272
                %v274 = vld [vmem:[%s240 + $0x180] sm:%s233]
                %275 = vst [vmem:[%s241 + $0x100] sm:%s233] %v274
                %v276 = vld [vmem:[%s240 + $0x198] sm:%s233]
                %277 = vst [vmem:[%s241 + $0x110] sm:%s233] %v276
                %v278 = vld [vmem:[%s240 + $0x1b0] sm:%s233]
                %279 = vst [vmem:[%s241 + $0x120] sm:%s233] %v278
                %v280 = vld [vmem:[%s240 + $0x1c8] sm:%s233]
                %281 = vst [vmem:[%s241 + $0x130] sm:%s233] %v280
                %v282 = vld [vmem:[%s240 + $0x1e0] sm:%s233]
                %283 = vst [vmem:[%s241 + $0x140] sm:%s233] %v282
                %v284 = vld [vmem:[%s240 + $0x1f8] sm:%s233]
                %285 = vst [vmem:[%s241 + $0x150] sm:%s233] %v284
                %v286 = vld [vmem:[%s240 + $0x210] sm:%s233]
                %287 = vst [vmem:[%s241 + $0x160] sm:%s233] %v286
                %v288 = vld [vmem:[%s240 + $0x228] sm:%s233]
                %289 = vst [vmem:[%s241 + $0x170] sm:%s233] %v288
              $region49: #{st_llm_forward.20} parent=43 // loop_footer
                %s239 = sadd.s32 1, %s235
              $region50: #{st_llm_forward.20} parent=43 // loop_footer_branch
                %234 = sbr.rel target = $region46
              $region51: #{st_llm_forward.20} parent=43 // loop_exit
                _
            $region44: #{st_llm_forward.20} parent=35 // pred_fallthru
              _
          $region36: #{st_llm_forward.20} parent=31 // pred_fallthru
            _
          %841 = vnop
        $region32: #{st_llm_forward.20} parent=27 // pred_fallthru
          _
        // Predicated region
        $region95: #{st_llm_forward.20} parent=27 // pred_check
          %p842 = pneg %p95
        $region96: #{st_llm_forward.20} parent=27 // pred_check_branch
          %844 = sbr.rel (%p842) target = $region98
        $region97: #{st_llm_forward.20} parent=27 // pred_region
          %s845 = smul.u32 4, %s19
          %s846 = ssub.s32 6, %s845
          %p847 = scmp.lt.s32.totalorder %s846, 4
          %s848 = scalar_select %p847, %s846, 4
          %s849 = smul.u32 16, %s848
          %p850 = scmp.lt.s32.totalorder %s845, 5
          %s851 = scalar_select %p850, %s845, 5
          %s852 = scalar_lea.vmem %s2, %s851
          %s853 = smul.u32 4, %s19
          %s854 = ssub.s32 6, %s853
          %p855 = scmp.lt.s32.totalorder %s854, 4
          %s856 = scalar_select %p855, %s854, 4
          %s857 = smul.u32 16, %s856
        $region98: #{st_llm_forward.20} parent=27 // pred_fallthru
          _
      $region28: #{st_llm_forward.20} parent=5 // pred_fallthru
        _
      %p858 = scmp.le.s32.totalorder 1, %s11
      %p859 = scmp.lt.s32.totalorder %s11, 3
      %p860 = pnand %p858, %p859
      %p861 = pneg %p860
      // Predicated region
      $region99: #{st_llm_forward.20} parent=5 // pred_check
        _
      $region100: #{st_llm_forward.20} parent=5 // pred_check_branch
        %863 = sbr.rel (%p860) target = $region102
      $region101: #{st_llm_forward.20} parent=5 // pred_region
        %s864 = ssub.s32 %s11, 1
        %s865 = sand.u32 %s62, 1
        %s866 = sand.u32 %s62, 1
        %s867 = smul.addr %s866, 384
        %s868 = scalar_lea.vmem [#allocation3], %s867
        // Predicated region
        $region103: #{st_llm_forward.20} parent=101 // pred_check
          %p869 = pneg %p75
        $region104: #{st_llm_forward.20} parent=101 // pred_check_branch
          %871 = sbr.rel (%p869) target = $region106
        $region105: #{st_llm_forward.20} parent=101 // pred_region
          _
        $region106: #{st_llm_forward.20} parent=101 // pred_fallthru
          _
        %s872 = smul.u32 4, %s20
        %p873 = scmp.lt.s32.totalorder %s872, 3
        %s874 = scalar_select %p873, %s872, 3
        %s875 = smul.addr %s874, 2
        %s876 = smul.addr %s875, 4
        %s877 = scalar_lea.vmem %s0, %s876
        %p878 = pneg %p49
        %p879 = pneg %p46
        %s880 = sand.u32 %s62, 1
        %s881 = sand.u32 %s62, 1
        %s882 = smul.addr %s881, 384
        %s883 = scalar_lea.vmem [#allocation3], %s882
        %p884 = pneg %p75
        %p885 = pneg %p72
        %s886 = smul.u32 4, %s21
        %s887 = ssub.s32 6, %s886
        %p888 = scmp.lt.s32.totalorder %s887, 4
        %s889 = scalar_select %p888, %s887, 4
        %s890 = smul.u32 16, %s889
        %p891 = scmp.lt.s32.totalorder %s886, 5
        %s892 = scalar_select %p891, %s886, 5
        %s893 = scalar_lea.vmem %s2, %s892
        %p894 = pneg %p101
        %p895 = pneg %p98
        %p896 = pneg %p122
        %p897 = pneg %p119
        %p898 = pneg %p143
        %p899 = pneg %p140
        %p900 = pneg %p171
        %p901 = pneg %p168
        %s902 = sand.u32 %s158, 1
        %s903 = sand.u32 %s158, 1
        %s904 = smul.addr %s903, 64
        %s905 = scalar_lea.vmem [#allocation4], %s904
        %s906 = smul.u32 4, %s20
        %p907 = scmp.lt.s32.totalorder %s906, 3
        %s908 = scalar_select %p907, %s906, 3
        %s909 = smul.addr %s908, 2
        %s910 = smul.addr %s909, 4
        %s911 = scalar_lea.vmem %s0, %s910
        %s912 = smul.u32 4, %s20
        %s913 = smul.u32 4, %s21
        %s914 = ssub.s32 6, %s913
        %p915 = scmp.lt.s32.totalorder %s914, 4
        %s916 = scalar_select %p915, %s914, 4
        %s917 = smul.u32 1536, %s916
        %s918 = smul.u32 4, %s21
        %s919 = ssub.s32 6, %s918
        %p920 = scmp.lt.s32.totalorder %s919, 4
        %s921 = scalar_select %p920, %s919, 4
        %s922 = smul.u32 16, %s921
        %p923 = scmp.lt.s32.totalorder %s918, 5
        %s924 = scalar_select %p923, %s918, 5
        %s925 = scalar_lea.vmem %s2, %s924
        %s926 = smul.u32 4, %s21
        %s927 = ssub.s32 6, %s926
        %p928 = scmp.lt.s32.totalorder %s927, 4
        %s929 = scalar_select %p928, %s927, 4
        %s930 = smul.u32 16, %s929
        %s931 = smul.u32 4, %s20
        %s932 = smul.u32 4, %s21
        %s933 = ssub.s32 6, %s932
        %p934 = scmp.lt.s32.totalorder %s933, 4
        %s935 = scalar_select %p934, %s933, 4
        %s936 = smul.u32 256, %s935
        %p938 = scmp.eq.s32.totalorder %s21, 0
        // Predicated region
        $region107: #{st_llm_forward.20} parent=101 // pred_check
          %p939 = pneg %p938
        $region108: #{st_llm_forward.20} parent=101 // pred_check_branch
          %941 = sbr.rel (%p939) target = $region110
        $region109: #{st_llm_forward.20} parent=101 // pred_region
          %v942 = vld [vmem:[%s911] sm:$0xff]
          %v943 = vld [vmem:[%s911 + $0x8] sm:$0xff]
          %v944 = vld [vmem:[%s911 + $0x10] sm:$0xff]
          %v945 = vld [vmem:[%s911 + $0x18] sm:$0xff]
          %v946 = vunpack.c.l.bf16 %v942
          %v947 = vunpack.c.h.bf16 %v942
          %v948 = vunpack.c.l.bf16 %v943
          %v949 = vunpack.c.h.bf16 %v943
          %v950 = vunpack.c.l.bf16 %v944
          %v951 = vunpack.c.h.bf16 %v944
          %v952 = vunpack.c.l.bf16 %v945
          %v953 = vunpack.c.h.bf16 %v945
          %vm954 = vcmask 523264
          %v955 = vsel %vm954, %v947, 0.0
          %v956 = vadd.f32 %v946, %v955
          %957 = vadd.xlane.f32.xlu0 %v956
          %v958 = vpop.xlane.xlu0 %957
          %v959 = vsel %vm954, %v949, 0.0
          %v960 = vadd.f32 %v948, %v959
          %961 = vadd.xlane.f32.xlu0 %v960
          %v962 = vpop.xlane.xlu0 %961
          %v963 = vsel %vm954, %v951, 0.0
          %v964 = vadd.f32 %v950, %v963
          %965 = vadd.xlane.f32.xlu0 %v964
          %v966 = vpop.xlane.xlu0 %965
          %v967 = vsel %vm954, %v953, 0.0
          %v968 = vadd.f32 %v952, %v967
          %969 = vadd.xlane.f32.xlu0 %v968
          %v970 = vpop.xlane.xlu0 %969
          %v971 = vrcp.pop 192.0
          %v972 = vmul.f32 %v958, %v971
          %v973 = vmul.f32 %v962, %v971
          %v974 = vmul.f32 %v966, %v971
          %v975 = vmul.f32 %v970, %v971
          %v976 = vsub.f32 %v946, %v972
          %v977 = vsub.f32 %v947, %v972
          %v978 = vsub.f32 %v948, %v973
          %v979 = vsub.f32 %v949, %v973
          %v980 = vsub.f32 %v950, %v974
          %v981 = vsub.f32 %v951, %v974
          %v982 = vsub.f32 %v952, %v975
          %v983 = vsub.f32 %v953, %v975
          %v984 = vmul.f32 %v976, %v976
          %v985 = vmul.f32 %v977, %v977
          %v986 = vmul.f32 %v978, %v978
          %v987 = vmul.f32 %v979, %v979
          %v988 = vmul.f32 %v980, %v980
          %v989 = vmul.f32 %v981, %v981
          %v990 = vmul.f32 %v982, %v982
          %v991 = vmul.f32 %v983, %v983
          %v992 = vsel %vm954, %v985, 0.0
          %v993 = vadd.f32 %v984, %v992
          %994 = vadd.xlane.f32.xlu0 %v993
          %v995 = vpop.xlane.xlu0 %994
          %v996 = vsel %vm954, %v987, 0.0
          %v997 = vadd.f32 %v986, %v996
          %998 = vadd.xlane.f32.xlu0 %v997
          %v999 = vpop.xlane.xlu0 %998
          %v1000 = vsel %vm954, %v989, 0.0
          %v1001 = vadd.f32 %v988, %v1000
          %1002 = vadd.xlane.f32.xlu0 %v1001
          %v1003 = vpop.xlane.xlu0 %1002
          %v1004 = vsel %vm954, %v991, 0.0
          %v1005 = vadd.f32 %v990, %v1004
          %1006 = vadd.xlane.f32.xlu0 %v1005
          %v1007 = vpop.xlane.xlu0 %1006
          %v1008 = vmul.f32 %v995, %v971
          %v1009 = vmul.f32 %v999, %v971
          %v1010 = vmul.f32 %v1003, %v971
          %v1011 = vmul.f32 %v1007, %v971
          %v1012 = vadd.f32 %v1008, 1e-05
          %v1013 = vadd.f32 %v1009, 1e-05
          %v1014 = vadd.f32 %v1010, 1e-05
          %v1015 = vadd.f32 %v1011, 1e-05
          %v1016 = vrsqrt.pop %v1012
          %v1017 = vrsqrt.pop %v1013
          %v1018 = vrsqrt.pop %v1014
          %v1019 = vrsqrt.pop %v1015
          %v1020 = vmul.f32 %v976, %v1016
          %v1021 = vmul.f32 %v977, %v1016
          %v1022 = vmul.f32 %v978, %v1017
          %v1023 = vmul.f32 %v979, %v1017
          %v1024 = vmul.f32 %v980, %v1018
          %v1025 = vmul.f32 %v981, %v1018
          %v1026 = vmul.f32 %v982, %v1019
          %v1027 = vmul.f32 %v983, %v1019
          %v1028 = vld [vmem:[%s3] sm:$0x3]
          %v1030 = vlaneseq
          %v1031 = vshrl.u32 %v1030, 7
          %v1032 = vsub.s32 0, %v1031
          %v1033 = vrot.slane %v1028, %v1032
          %v1034 = vlaneseq
          %v1035 = vshrl.u32 %v1034, 7
          %v1036 = vsub.s32 1, %v1035
          %v1037 = vrot.slane %v1028, %v1036
          %v1040 = vmul.f32 %v1020, %v1033
          %v1041 = vmul.f32 %v1021, %v1037
          %v1042 = vmul.f32 %v1022, %v1033
          %v1043 = vmul.f32 %v1023, %v1037
          %v1044 = vmul.f32 %v1024, %v1033
          %v1045 = vmul.f32 %v1025, %v1037
          %v1046 = vmul.f32 %v1026, %v1033
          %v1047 = vmul.f32 %v1027, %v1037
          %v1048 = vld [vmem:[%s4] sm:$0x3]
          %v1050 = vlaneseq
          %v1051 = vshrl.u32 %v1050, 7
          %v1052 = vsub.s32 0, %v1051
          %v1053 = vrot.slane %v1048, %v1052
          %v1054 = vlaneseq
          %v1055 = vshrl.u32 %v1054, 7
          %v1056 = vsub.s32 1, %v1055
          %v1057 = vrot.slane %v1048, %v1056
          %v1060 = vadd.f32 %v1040, %v1053
          %v1061 = vadd.f32 %v1041, %v1057
          %v1062 = vadd.f32 %v1042, %v1053
          %v1063 = vadd.f32 %v1043, %v1057
          %v1064 = vadd.f32 %v1044, %v1053
          %v1065 = vadd.f32 %v1045, %v1057
          %v1066 = vadd.f32 %v1046, %v1053
          %v1067 = vadd.f32 %v1047, %v1057
          %v1068 = vpack.c.bf16 %v1062, %v1060
          %v1069 = vpack.c.bf16 %v1063, %v1061
          %v1070 = vpack.c.bf16 %v1066, %v1064
          %v1071 = vpack.c.bf16 %v1067, %v1065
          %v1076 = vunpack.c.l.b16 %v1068
          %v1077 = vunpack.c.l.b16 %v1069
          %v1078 = vunpack.c.h.b16 %v1068
          %v1079 = vunpack.c.h.b16 %v1069
          %v1080 = vunpack.c.l.b16 %v1070
          %v1081 = vunpack.c.l.b16 %v1071
          %v1082 = vunpack.c.h.b16 %v1070
          %v1083 = vunpack.c.h.b16 %v1071
          %v1084 = vpack.c.b16 %v1077, %v1076
          %v1085 = vpack.c.b16 %v1079, %v1078
          %v1086 = vpack.c.b16 %v1081, %v1080
          %v1087 = vpack.c.b16 %v1083, %v1082
          %vm1092 = vcmask 1043456
          %vm1093 = vcmask 523268
          %vm1094 = vmor %vm1093, %vm1092
          %1095 = vst.msk [vmem:[#allocation2] sm:$0xff] %vm1094, %v1084
          %1096 = vst.msk [vmem:[#allocation2 + $0x8] sm:$0xff] %vm1094, %v1085
          %1097 = vst.msk [vmem:[#allocation2 + $0x10] sm:$0xff] %vm1094, %v1086
          %1098 = vst.msk [vmem:[#allocation2 + $0x18] sm:$0xff] %vm1094, %v1087
        $region110: #{st_llm_forward.20} parent=101 // pred_fallthru
          _
        %v1099 = vld [vmem:[#allocation2] sm:$0xff]
        %v1100 = vld [vmem:[#allocation2 + $0x8] sm:$0xff]
        %v1101 = vld [vmem:[#allocation2 + $0x10] sm:$0xff]
        %v1102 = vld [vmem:[#allocation2 + $0x18] sm:$0xff]
        %v1103 = vld [vmem:[%s868] sm:$0xff]
        %v1104 = vld [vmem:[%s868 + $0x8] sm:$0xff]
        %v1105 = vld [vmem:[%s868 + $0x10] sm:$0xff]
        %v1106 = vld [vmem:[%s868 + $0x18] sm:$0xff]
        %v1107 = vld [vmem:[%s868 + $0x20] sm:$0xff]
        %v1108 = vld [vmem:[%s868 + $0x28] sm:$0xff]
        %v1109 = vld [vmem:[%s868 + $0x30] sm:$0xff]
        %v1110 = vld [vmem:[%s868 + $0x38] sm:$0xff]
        %v1111 = vld [vmem:[%s868 + $0x40] sm:$0xff]
        %v1112 = vld [vmem:[%s868 + $0x48] sm:$0xff]
        %v1113 = vld [vmem:[%s868 + $0x50] sm:$0xff]
        %v1114 = vld [vmem:[%s868 + $0x58] sm:$0xff]
        %v1115 = vld [vmem:[%s868 + $0x60] sm:$0xff]
        %v1116 = vld [vmem:[%s868 + $0x68] sm:$0xff]
        %v1117 = vld [vmem:[%s868 + $0x70] sm:$0xff]
        %v1118 = vld [vmem:[%s868 + $0x78] sm:$0xff]
        %v1119 = vld [vmem:[%s868 + $0x80] sm:$0xff]
        %v1120 = vld [vmem:[%s868 + $0x88] sm:$0xff]
        %v1121 = vld [vmem:[%s868 + $0x90] sm:$0xff]
        %v1122 = vld [vmem:[%s868 + $0x98] sm:$0xff]
        %v1123 = vld [vmem:[%s868 + $0xa0] sm:$0xff]
        %v1124 = vld [vmem:[%s868 + $0xa8] sm:$0xff]
        %v1125 = vld [vmem:[%s868 + $0xb0] sm:$0xff]
        %v1126 = vld [vmem:[%s868 + $0xb8] sm:$0xff]
        %v1127 = vld [vmem:[%s868 + $0xc0] sm:$0xff]
        %v1128 = vld [vmem:[%s868 + $0xc8] sm:$0xff]
        %v1129 = vld [vmem:[%s868 + $0xd0] sm:$0xff]
        %v1130 = vld [vmem:[%s868 + $0xd8] sm:$0xff]
        %v1131 = vld [vmem:[%s868 + $0xe0] sm:$0xff]
        %v1132 = vld [vmem:[%s868 + $0xe8] sm:$0xff]
        %v1133 = vld [vmem:[%s868 + $0xf0] sm:$0xff]
        %v1134 = vld [vmem:[%s868 + $0xf8] sm:$0xff]
        %v1135 = vld [vmem:[%s868 + $0x100] sm:$0xff]
        %v1136 = vld [vmem:[%s868 + $0x108] sm:$0xff]
        %v1137 = vld [vmem:[%s868 + $0x110] sm:$0xff]
        %v1138 = vld [vmem:[%s868 + $0x118] sm:$0xff]
        %v1139 = vld [vmem:[%s868 + $0x120] sm:$0xff]
        %v1140 = vld [vmem:[%s868 + $0x128] sm:$0xff]
        %v1141 = vld [vmem:[%s868 + $0x130] sm:$0xff]
        %v1142 = vld [vmem:[%s868 + $0x138] sm:$0xff]
        %v1143 = vld [vmem:[%s868 + $0x140] sm:$0xff]
        %v1144 = vld [vmem:[%s868 + $0x148] sm:$0xff]
        %v1145 = vld [vmem:[%s868 + $0x150] sm:$0xff]
        %v1146 = vld [vmem:[%s868 + $0x158] sm:$0xff]
        %v1147 = vld [vmem:[%s868 + $0x160] sm:$0xff]
        %v1148 = vld [vmem:[%s868 + $0x168] sm:$0xff]
        %v1149 = vld [vmem:[%s868 + $0x170] sm:$0xff]
        %v1150 = vld [vmem:[%s868 + $0x178] sm:$0xff]
        %v1151 = vld [vmem:[%s925] sm:$0xf]
        %v1153 = vlaneseq
        %v1154 = vshrl.u32 %v1153, 7
        %v1155 = vsub.s32 0, %v1154
        %v1156 = vrot.slane %v1151, %v1155
        %v1157 = vlaneseq
        %v1158 = vshrl.u32 %v1157, 7
        %v1159 = vsub.s32 1, %v1158
        %v1160 = vrot.slane %v1151, %v1159
        %v1161 = vlaneseq
        %v1162 = vshrl.u32 %v1161, 7
        %v1163 = vsub.s32 2, %v1162
        %v1164 = vrot.slane %v1151, %v1163
        %v1165 = vlaneseq
        %v1166 = vshrl.u32 %v1165, 7
        %v1167 = vsub.s32 3, %v1166
        %v1168 = vrot.slane %v1151, %v1167
        %v1177 = vunpack.c.l.b16 %v1099
        %v1178 = vunpack.c.h.b16 %v1099
        %v1179 = vunpack.c.l.b16 %v1100
        %v1180 = vunpack.c.h.b16 %v1100
        %v1181 = vunpack.c.l.b16 %v1101
        %v1182 = vunpack.c.h.b16 %v1101
        %v1183 = vunpack.c.l.b16 %v1102
        %v1184 = vunpack.c.h.b16 %v1102
        %v1185 = vpack.c.b16 %v1179, %v1177
        %v1186 = vpack.c.b16 %v1180, %v1178
        %v1187 = vpack.c.b16 %v1183, %v1181
        %v1188 = vpack.c.b16 %v1184, %v1182
        %v1239 = vunpack.c.l.b16 %v1103
        %v1240 = vunpack.c.h.b16 %v1103
        %v1241 = vunpack.c.l.b16 %v1104
        %v1242 = vunpack.c.h.b16 %v1104
        %v1243 = vunpack.c.l.b16 %v1105
        %v1244 = vunpack.c.h.b16 %v1105
        %v1245 = vunpack.c.l.b16 %v1106
        %v1246 = vunpack.c.h.b16 %v1106
        %v1247 = vunpack.c.l.b16 %v1107
        %v1248 = vunpack.c.h.b16 %v1107
        %v1249 = vunpack.c.l.b16 %v1108
        %v1250 = vunpack.c.h.b16 %v1108
        %v1251 = vunpack.c.l.b16 %v1109
        %v1252 = vunpack.c.h.b16 %v1109
        %v1253 = vunpack.c.l.b16 %v1110
        %v1254 = vunpack.c.h.b16 %v1110
        %v1255 = vunpack.c.l.b16 %v1111
        %v1256 = vunpack.c.h.b16 %v1111
        %v1257 = vunpack.c.l.b16 %v1112
        %v1258 = vunpack.c.h.b16 %v1112
        %v1259 = vunpack.c.l.b16 %v1113
        %v1260 = vunpack.c.h.b16 %v1113
        %v1261 = vunpack.c.l.b16 %v1114
        %v1262 = vunpack.c.h.b16 %v1114
        %v1263 = vunpack.c.l.b16 %v1115
        %v1264 = vunpack.c.h.b16 %v1115
        %v1265 = vunpack.c.l.b16 %v1116
        %v1266 = vunpack.c.h.b16 %v1116
        %v1267 = vunpack.c.l.b16 %v1117
        %v1268 = vunpack.c.h.b16 %v1117
        %v1269 = vunpack.c.l.b16 %v1118
        %v1270 = vunpack.c.h.b16 %v1118
        %v1271 = vunpack.c.l.b16 %v1119
        %v1272 = vunpack.c.h.b16 %v1119
        %v1273 = vunpack.c.l.b16 %v1120
        %v1274 = vunpack.c.h.b16 %v1120
        %v1275 = vunpack.c.l.b16 %v1121
        %v1276 = vunpack.c.h.b16 %v1121
        %v1277 = vunpack.c.l.b16 %v1122
        %v1278 = vunpack.c.h.b16 %v1122
        %v1279 = vunpack.c.l.b16 %v1123
        %v1280 = vunpack.c.h.b16 %v1123
        %v1281 = vunpack.c.l.b16 %v1124
        %v1282 = vunpack.c.h.b16 %v1124
        %v1283 = vunpack.c.l.b16 %v1125
        %v1284 = vunpack.c.h.b16 %v1125
        %v1285 = vunpack.c.l.b16 %v1126
        %v1286 = vunpack.c.h.b16 %v1126
        %v1287 = vunpack.c.l.b16 %v1127
        %v1288 = vunpack.c.h.b16 %v1127
        %v1289 = vunpack.c.l.b16 %v1128
        %v1290 = vunpack.c.h.b16 %v1128
        %v1291 = vunpack.c.l.b16 %v1129
        %v1292 = vunpack.c.h.b16 %v1129
        %v1293 = vunpack.c.l.b16 %v1130
        %v1294 = vunpack.c.h.b16 %v1130
        %v1295 = vunpack.c.l.b16 %v1131
        %v1296 = vunpack.c.h.b16 %v1131
        %v1297 = vunpack.c.l.b16 %v1132
        %v1298 = vunpack.c.h.b16 %v1132
        %v1299 = vunpack.c.l.b16 %v1133
        %v1300 = vunpack.c.h.b16 %v1133
        %v1301 = vunpack.c.l.b16 %v1134
        %v1302 = vunpack.c.h.b16 %v1134
        %v1303 = vunpack.c.l.b16 %v1135
        %v1304 = vunpack.c.h.b16 %v1135
        %v1305 = vunpack.c.l.b16 %v1136
        %v1306 = vunpack.c.h.b16 %v1136
        %v1307 = vunpack.c.l.b16 %v1137
        %v1308 = vunpack.c.h.b16 %v1137
        %v1309 = vunpack.c.l.b16 %v1138
        %v1310 = vunpack.c.h.b16 %v1138
        %v1311 = vunpack.c.l.b16 %v1139
        %v1312 = vunpack.c.h.b16 %v1139
        %v1313 = vunpack.c.l.b16 %v1140
        %v1314 = vunpack.c.h.b16 %v1140
        %v1315 = vunpack.c.l.b16 %v1141
        %v1316 = vunpack.c.h.b16 %v1141
        %v1317 = vunpack.c.l.b16 %v1142
        %v1318 = vunpack.c.h.b16 %v1142
        %v1319 = vunpack.c.l.b16 %v1143
        %v1320 = vunpack.c.h.b16 %v1143
        %v1321 = vunpack.c.l.b16 %v1144
        %v1322 = vunpack.c.h.b16 %v1144
        %v1323 = vunpack.c.l.b16 %v1145
        %v1324 = vunpack.c.h.b16 %v1145
        %v1325 = vunpack.c.l.b16 %v1146
        %v1326 = vunpack.c.h.b16 %v1146
        %v1327 = vunpack.c.l.b16 %v1147
        %v1328 = vunpack.c.h.b16 %v1147
        %v1329 = vunpack.c.l.b16 %v1148
        %v1330 = vunpack.c.h.b16 %v1148
        %v1331 = vunpack.c.l.b16 %v1149
        %v1332 = vunpack.c.h.b16 %v1149
        %v1333 = vunpack.c.l.b16 %v1150
        %v1334 = vunpack.c.h.b16 %v1150
        %v1335 = vpack.c.b16 %v1243, %v1239
        %v1336 = vpack.c.b16 %v1244, %v1240
        %v1337 = vpack.c.b16 %v1245, %v1241
        %v1338 = vpack.c.b16 %v1246, %v1242
        %v1339 = vpack.c.b16 %v1251, %v1247
        %v1340 = vpack.c.b16 %v1252, %v1248
        %v1341 = vpack.c.b16 %v1253, %v1249
        %v1342 = vpack.c.b16 %v1254, %v1250
        %v1343 = vpack.c.b16 %v1259, %v1255
        %v1344 = vpack.c.b16 %v1260, %v1256
        %v1345 = vpack.c.b16 %v1261, %v1257
        %v1346 = vpack.c.b16 %v1262, %v1258
        %v1347 = vpack.c.b16 %v1267, %v1263
        %v1348 = vpack.c.b16 %v1268, %v1264
        %v1349 = vpack.c.b16 %v1269, %v1265
        %v1350 = vpack.c.b16 %v1270, %v1266
        %v1351 = vpack.c.b16 %v1275, %v1271
        %v1352 = vpack.c.b16 %v1276, %v1272
        %v1353 = vpack.c.b16 %v1277, %v1273
        %v1354 = vpack.c.b16 %v1278, %v1274
        %v1355 = vpack.c.b16 %v1283, %v1279
        %v1356 = vpack.c.b16 %v1284, %v1280
        %v1357 = vpack.c.b16 %v1285, %v1281
        %v1358 = vpack.c.b16 %v1286, %v1282
        %v1359 = vpack.c.b16 %v1291, %v1287
        %v1360 = vpack.c.b16 %v1292, %v1288
        %v1361 = vpack.c.b16 %v1293, %v1289
        %v1362 = vpack.c.b16 %v1294, %v1290
        %v1363 = vpack.c.b16 %v1299, %v1295
        %v1364 = vpack.c.b16 %v1300, %v1296
        %v1365 = vpack.c.b16 %v1301, %v1297
        %v1366 = vpack.c.b16 %v1302, %v1298
        %v1367 = vpack.c.b16 %v1307, %v1303
        %v1368 = vpack.c.b16 %v1308, %v1304
        %v1369 = vpack.c.b16 %v1309, %v1305
        %v1370 = vpack.c.b16 %v1310, %v1306
        %v1371 = vpack.c.b16 %v1315, %v1311
        %v1372 = vpack.c.b16 %v1316, %v1312
        %v1373 = vpack.c.b16 %v1317, %v1313
        %v1374 = vpack.c.b16 %v1318, %v1314
        %v1375 = vpack.c.b16 %v1323, %v1319
        %v1376 = vpack.c.b16 %v1324, %v1320
        %v1377 = vpack.c.b16 %v1325, %v1321
        %v1378 = vpack.c.b16 %v1326, %v1322
        %v1379 = vpack.c.b16 %v1331, %v1327
        %v1380 = vpack.c.b16 %v1332, %v1328
        %v1381 = vpack.c.b16 %v1333, %v1329
        %v1382 = vpack.c.b16 %v1334, %v1330
        %vm1431 = vcmask 523264
        %v1433 = vsel %vm1431, %v1186, 0
        %v1436 = vsel %vm1431, %v1188, 0
        %1438 = vmatprep.subr.bf16.mxu0 %v1364
        %1439 = vmatpush1.bf16.msra.mxu0 %v1363
        %1440 = vmatprep.subr.bf16.mxu0 %v1360
        %1441 = vmatpush1.bf16.msra.mxu0 %v1359
        %1442 = vmatprep.subr.bf16.mxu0 %v1356
        %1443 = vmatpush1.bf16.msra.mxu0 %v1355
        %1444 = vmatprep.subr.bf16.mxu0 %v1352
        %1445 = vmatpush1.bf16.msra.mxu0 %v1351
        %1446 = vmatprep.subr.bf16.mxu0 %v1348
        %1447 = vmatpush1.bf16.msra.mxu0 %v1347
        %1448 = vmatprep.subr.bf16.mxu0 %v1344
        %1449 = vmatpush1.bf16.msra.mxu0 %v1343
        %1450 = vmatprep.subr.bf16.mxu0 %v1340
        %1451 = vmatpush1.bf16.msra.mxu0 %v1339
        %1452 = vmatprep.subr.bf16.mxu0 %v1336
        %1453 = vmatpush1.bf16.msra.mxu0 %v1335
        %1454 = vmatprep.subr.bf16.mxu0 0
        %1455 = vmatpush2.bf16.msra.mxu0 0
        %1456 = vmatprep.subr.bf16.mxu0 0
        %1457 = vmatpush2.bf16.msra.mxu0 0
        %1458 = vmatprep.subr.bf16.mxu0 0
        %1459 = vmatpush2.bf16.msra.mxu0 0
        %1460 = vmatprep.subr.bf16.mxu0 0
        %1461 = vmatpush2.bf16.msra.mxu0 0
        %1462 = vmatprep.subr.bf16.mxu0 %v1380
        %1463 = vmatpush2.bf16.msra.mxu0 %v1379
        %1464 = vmatprep.subr.bf16.mxu0 %v1376
        %1465 = vmatpush2.bf16.msra.mxu0 %v1375
        %1466 = vmatprep.subr.bf16.mxu0 %v1372
        %1467 = vmatpush2.bf16.msra.mxu0 %v1371
        %1468 = vmatprep.subr.bf16.mxu0 %v1368
        %1469 = vmatpush2.bf16.msra.mxu0 %v1367
        %1470 = vmatprep.mubr.bf16.mxu0 %v1433
        %1471 = vmatmul.mubr.bf16.gmra.mxu0 %v1185
        %v1472 = vpop.f32.mrf.mxu0
        %v1473 = vadd.f32 %v1156, %v1472
        %v1474 = vpop.f32.mrf.mxu0
        %v1475 = vadd.f32 %v1160, %v1474
        %v1476 = vpop.f32.mrf.mxu0
        %v1477 = vadd.f32 %v1156, %v1476
        %v1478 = vpop.f32.mrf.mxu0
        %v1479 = vadd.f32 %v1160, %v1478
        %1480 = vmatprep.mubr.bf16.mxu0 %v1436
        %1481 = vmatmul.mubr.bf16.gmra.mxu0 %v1187
        %v1482 = vpop.f32.mrf.mxu0
        %v1483 = vadd.f32 %v1156, %v1482
        %v1484 = vpop.f32.mrf.mxu0
        %v1485 = vadd.f32 %v1160, %v1484
        %v1486 = vpop.f32.mrf.mxu0
        %v1487 = vadd.f32 %v1156, %v1486
        %v1488 = vpop.f32.mrf.mxu0
        %v1489 = vadd.f32 %v1160, %v1488
        %1490 = vdwg.mxu0
        %1491 = vmatprep.subr.bf16.mxu0 %v1366
        %1492 = vmatpush1.bf16.msra.mxu0 %v1365
        %1493 = vmatprep.subr.bf16.mxu0 %v1362
        %1494 = vmatpush1.bf16.msra.mxu0 %v1361
        %1495 = vmatprep.subr.bf16.mxu0 %v1358
        %1496 = vmatpush1.bf16.msra.mxu0 %v1357
        %1497 = vmatprep.subr.bf16.mxu0 %v1354
        %1498 = vmatpush1.bf16.msra.mxu0 %v1353
        %1499 = vmatprep.subr.bf16.mxu0 %v1350
        %1500 = vmatpush1.bf16.msra.mxu0 %v1349
        %1501 = vmatprep.subr.bf16.mxu0 %v1346
        %1502 = vmatpush1.bf16.msra.mxu0 %v1345
        %1503 = vmatprep.subr.bf16.mxu0 %v1342
        %1504 = vmatpush1.bf16.msra.mxu0 %v1341
        %1505 = vmatprep.subr.bf16.mxu0 %v1338
        %1506 = vmatpush1.bf16.msra.mxu0 %v1337
        %1507 = vmatprep.subr.bf16.mxu0 0
        %1508 = vmatpush2.bf16.msra.mxu0 0
        %1509 = vmatprep.subr.bf16.mxu0 0
        %1510 = vmatpush2.bf16.msra.mxu0 0
        %1511 = vmatprep.subr.bf16.mxu0 0
        %1512 = vmatpush2.bf16.msra.mxu0 0
        %1513 = vmatprep.subr.bf16.mxu0 0
        %1514 = vmatpush2.bf16.msra.mxu0 0
        %1515 = vmatprep.subr.bf16.mxu0 %v1382
        %1516 = vmatpush2.bf16.msra.mxu0 %v1381
        %1517 = vmatprep.subr.bf16.mxu0 %v1378
        %1518 = vmatpush2.bf16.msra.mxu0 %v1377
        %1519 = vmatprep.subr.bf16.mxu0 %v1374
        %1520 = vmatpush2.bf16.msra.mxu0 %v1373
        %1521 = vmatprep.subr.bf16.mxu0 %v1370
        %1522 = vmatpush2.bf16.msra.mxu0 %v1369
        %1523 = vmatprep.mubr.bf16.mxu0 %v1433
        %1524 = vmatmul.mubr.bf16.gmra.mxu0 %v1185
        %v1525 = vpop.f32.mrf.mxu0
        %v1526 = vadd.f32 %v1164, %v1525
        %v1527 = vpop.f32.mrf.mxu0
        %v1528 = vadd.f32 %v1168, %v1527
        %v1529 = vpop.f32.mrf.mxu0
        %v1530 = vadd.f32 %v1164, %v1529
        %v1531 = vpop.f32.mrf.mxu0
        %v1532 = vadd.f32 %v1168, %v1531
        %1533 = vmatprep.mubr.bf16.mxu0 %v1436
        %1534 = vmatmul.mubr.bf16.gmra.mxu0 %v1187
        %v1535 = vpop.f32.mrf.mxu0
        %v1536 = vadd.f32 %v1164, %v1535
        %v1537 = vpop.f32.mrf.mxu0
        %v1538 = vadd.f32 %v1168, %v1537
        %v1539 = vpop.f32.mrf.mxu0
        %v1540 = vadd.f32 %v1164, %v1539
        %v1541 = vpop.f32.mrf.mxu0
        %v1542 = vadd.f32 %v1168, %v1541
        %1543 = vdwg.mxu0
        %v1544 = vmul.f32 %v1473, %v1473
        %v1545 = vmul.f32 %v1475, %v1475
        %v1546 = vmul.f32 %v1526, %v1526
        %v1547 = vmul.f32 %v1528, %v1528
        %v1548 = vmul.f32 %v1477, %v1477
        %v1549 = vmul.f32 %v1479, %v1479
        %v1550 = vmul.f32 %v1530, %v1530
        %v1551 = vmul.f32 %v1532, %v1532
        %v1552 = vmul.f32 %v1483, %v1483
        %v1553 = vmul.f32 %v1485, %v1485
        %v1554 = vmul.f32 %v1536, %v1536
        %v1555 = vmul.f32 %v1538, %v1538
        %v1556 = vmul.f32 %v1487, %v1487
        %v1557 = vmul.f32 %v1489, %v1489
        %v1558 = vmul.f32 %v1540, %v1540
        %v1559 = vmul.f32 %v1542, %v1542
        %v1560 = vmul.f32 %v1473, %v1544
        %v1561 = vmul.f32 %v1475, %v1545
        %v1562 = vmul.f32 %v1526, %v1546
        %v1563 = vmul.f32 %v1528, %v1547
        %v1564 = vmul.f32 %v1477, %v1548
        %v1565 = vmul.f32 %v1479, %v1549
        %v1566 = vmul.f32 %v1530, %v1550
        %v1567 = vmul.f32 %v1532, %v1551
        %v1568 = vmul.f32 %v1483, %v1552
        %v1569 = vmul.f32 %v1485, %v1553
        %v1570 = vmul.f32 %v1536, %v1554
        %v1571 = vmul.f32 %v1538, %v1555
        %v1572 = vmul.f32 %v1487, %v1556
        %v1573 = vmul.f32 %v1489, %v1557
        %v1574 = vmul.f32 %v1540, %v1558
        %v1575 = vmul.f32 %v1542, %v1559
        %v1576 = vmul.f32 %v1560, 0.044715
        %v1577 = vmul.f32 %v1561, 0.044715
        %v1578 = vmul.f32 %v1562, 0.044715
        %v1579 = vmul.f32 %v1563, 0.044715
        %v1580 = vmul.f32 %v1564, 0.044715
        %v1581 = vmul.f32 %v1565, 0.044715
        %v1582 = vmul.f32 %v1566, 0.044715
        %v1583 = vmul.f32 %v1567, 0.044715
        %v1584 = vmul.f32 %v1568, 0.044715
        %v1585 = vmul.f32 %v1569, 0.044715
        %v1586 = vmul.f32 %v1570, 0.044715
        %v1587 = vmul.f32 %v1571, 0.044715
        %v1588 = vmul.f32 %v1572, 0.044715
        %v1589 = vmul.f32 %v1573, 0.044715
        %v1590 = vmul.f32 %v1574, 0.044715
        %v1591 = vmul.f32 %v1575, 0.044715
        %v1592 = vadd.f32 %v1473, %v1576
        %v1593 = vadd.f32 %v1475, %v1577
        %v1594 = vadd.f32 %v1526, %v1578
        %v1595 = vadd.f32 %v1528, %v1579
        %v1596 = vadd.f32 %v1477, %v1580
        %v1597 = vadd.f32 %v1479, %v1581
        %v1598 = vadd.f32 %v1530, %v1582
        %v1599 = vadd.f32 %v1532, %v1583
        %v1600 = vadd.f32 %v1483, %v1584
        %v1601 = vadd.f32 %v1485, %v1585
        %v1602 = vadd.f32 %v1536, %v1586
        %v1603 = vadd.f32 %v1538, %v1587
        %v1604 = vadd.f32 %v1487, %v1588
        %v1605 = vadd.f32 %v1489, %v1589
        %v1606 = vadd.f32 %v1540, %v1590
        %v1607 = vadd.f32 %v1542, %v1591
        %v1608 = vmul.f32 %v1592, 0.7978846
        %v1609 = vmul.f32 %v1593, 0.7978846
        %v1610 = vmul.f32 %v1594, 0.7978846
        %v1611 = vmul.f32 %v1595, 0.7978846
        %v1612 = vmul.f32 %v1596, 0.7978846
        %v1613 = vmul.f32 %v1597, 0.7978846
        %v1614 = vmul.f32 %v1598, 0.7978846
        %v1615 = vmul.f32 %v1599, 0.7978846
        %v1616 = vmul.f32 %v1600, 0.7978846
        %v1617 = vmul.f32 %v1601, 0.7978846
        %v1618 = vmul.f32 %v1602, 0.7978846
        %v1619 = vmul.f32 %v1603, 0.7978846
        %v1620 = vmul.f32 %v1604, 0.7978846
        %v1621 = vmul.f32 %v1605, 0.7978846
        %v1622 = vmul.f32 %v1606, 0.7978846
        %v1623 = vmul.f32 %v1607, 0.7978846
        %v1624 = vtanh.pop %v1608
        %v1625 = vtanh.pop %v1609
        %v1626 = vtanh.pop %v1610
        %v1627 = vtanh.pop %v1611
        %v1628 = vtanh.pop %v1612
        %v1629 = vtanh.pop %v1613
        %v1630 = vtanh.pop %v1614
        %v1631 = vtanh.pop %v1615
        %v1632 = vtanh.pop %v1616
        %v1633 = vtanh.pop %v1617
        %v1634 = vtanh.pop %v1618
        %v1635 = vtanh.pop %v1619
        %v1636 = vtanh.pop %v1620
        %v1637 = vtanh.pop %v1621
        %v1638 = vtanh.pop %v1622
        %v1639 = vtanh.pop %v1623
        %v1640 = vadd.f32 %v1624, 1.0
        %v1641 = vadd.f32 %v1625, 1.0
        %v1642 = vadd.f32 %v1626, 1.0
        %v1643 = vadd.f32 %v1627, 1.0
        %v1644 = vadd.f32 %v1628, 1.0
        %v1645 = vadd.f32 %v1629, 1.0
        %v1646 = vadd.f32 %v1630, 1.0
        %v1647 = vadd.f32 %v1631, 1.0
        %v1648 = vadd.f32 %v1632, 1.0
        %v1649 = vadd.f32 %v1633, 1.0
        %v1650 = vadd.f32 %v1634, 1.0
        %v1651 = vadd.f32 %v1635, 1.0
        %v1652 = vadd.f32 %v1636, 1.0
        %v1653 = vadd.f32 %v1637, 1.0
        %v1654 = vadd.f32 %v1638, 1.0
        %v1655 = vadd.f32 %v1639, 1.0
        %v1656 = vmul.f32 %v1640, 0.5
        %v1657 = vmul.f32 %v1641, 0.5
        %v1658 = vmul.f32 %v1642, 0.5
        %v1659 = vmul.f32 %v1643, 0.5
        %v1660 = vmul.f32 %v1644, 0.5
        %v1661 = vmul.f32 %v1645, 0.5
        %v1662 = vmul.f32 %v1646, 0.5
        %v1663 = vmul.f32 %v1647, 0.5
        %v1664 = vmul.f32 %v1648, 0.5
        %v1665 = vmul.f32 %v1649, 0.5
        %v1666 = vmul.f32 %v1650, 0.5
        %v1667 = vmul.f32 %v1651, 0.5
        %v1668 = vmul.f32 %v1652, 0.5
        %v1669 = vmul.f32 %v1653, 0.5
        %v1670 = vmul.f32 %v1654, 0.5
        %v1671 = vmul.f32 %v1655, 0.5
        %v1672 = vmul.f32 %v1473, %v1656
        %v1673 = vmul.f32 %v1475, %v1657
        %v1674 = vmul.f32 %v1526, %v1658
        %v1675 = vmul.f32 %v1528, %v1659
        %v1676 = vmul.f32 %v1477, %v1660
        %v1677 = vmul.f32 %v1479, %v1661
        %v1678 = vmul.f32 %v1530, %v1662
        %v1679 = vmul.f32 %v1532, %v1663
        %v1680 = vmul.f32 %v1483, %v1664
        %v1681 = vmul.f32 %v1485, %v1665
        %v1682 = vmul.f32 %v1536, %v1666
        %v1683 = vmul.f32 %v1538, %v1667
        %v1684 = vmul.f32 %v1487, %v1668
        %v1685 = vmul.f32 %v1489, %v1669
        %v1686 = vmul.f32 %v1540, %v1670
        %v1687 = vmul.f32 %v1542, %v1671
        %v1688 = vpack.c.bf16 %v1676, %v1672
        %v1689 = vpack.c.bf16 %v1677, %v1673
        %v1690 = vpack.c.bf16 %v1678, %v1674
        %v1691 = vpack.c.bf16 %v1679, %v1675
        %v1692 = vpack.c.bf16 %v1684, %v1680
        %v1693 = vpack.c.bf16 %v1685, %v1681
        %v1694 = vpack.c.bf16 %v1686, %v1682
        %v1695 = vpack.c.bf16 %v1687, %v1683
        %v1704 = vunpack.c.l.b16 %v1688
        %v1705 = vunpack.c.l.b16 %v1689
        %v1706 = vunpack.c.l.b16 %v1690
        %v1707 = vunpack.c.l.b16 %v1691
        %v1708 = vunpack.c.h.b16 %v1688
        %v1709 = vunpack.c.h.b16 %v1689
        %v1710 = vunpack.c.h.b16 %v1690
        %v1711 = vunpack.c.h.b16 %v1691
        %v1712 = vunpack.c.l.b16 %v1692
        %v1713 = vunpack.c.l.b16 %v1693
        %v1714 = vunpack.c.l.b16 %v1694
        %v1715 = vunpack.c.l.b16 %v1695
        %v1716 = vunpack.c.h.b16 %v1692
        %v1717 = vunpack.c.h.b16 %v1693
        %v1718 = vunpack.c.h.b16 %v1694
        %v1719 = vunpack.c.h.b16 %v1695
        %v1720 = vpack.c.b16 %v1705, %v1704
        %v1721 = vpack.c.b16 %v1707, %v1706
        %v1722 = vpack.c.b16 %v1709, %v1708
        %v1723 = vpack.c.b16 %v1711, %v1710
        %v1724 = vpack.c.b16 %v1713, %v1712
        %v1725 = vpack.c.b16 %v1715, %v1714
        %v1726 = vpack.c.b16 %v1717, %v1716
        %v1727 = vpack.c.b16 %v1719, %v1718
        %1736 = vst [vmem:[%s905] sm:$0xff] %v1720
        %1737 = vst [vmem:[%s905 + $0x8] sm:$0xff] %v1721
        %1738 = vst [vmem:[%s905 + $0x10] sm:$0xff] %v1722
        %1739 = vst [vmem:[%s905 + $0x18] sm:$0xff] %v1723
        %1740 = vst [vmem:[%s905 + $0x20] sm:$0xff] %v1724
        %1741 = vst [vmem:[%s905 + $0x28] sm:$0xff] %v1725
        %1742 = vst [vmem:[%s905 + $0x30] sm:$0xff] %v1726
        %1743 = vst [vmem:[%s905 + $0x38] sm:$0xff] %v1727
        %s1744 = sand.u32 %s158, 1
        %s1745 = sand.u32 %s158, 1
        %s1746 = smul.addr %s1745, 64
        %s1747 = scalar_lea.vmem [#allocation4], %s1746
        // Predicated region
        $region111: #{st_llm_forward.20} parent=101 // pred_check
          %p1748 = pneg %p168
        $region112: #{st_llm_forward.20} parent=101 // pred_check_branch
          %1750 = sbr.rel (%p1748) target = $region114
        $region113: #{st_llm_forward.20} parent=101 // pred_region
          %s1751 = smul.u32 4, %s20
          %s1752 = smul.u32 4, %s21
          %s1753 = ssub.s32 6, %s1752
          %p1754 = scmp.lt.s32.totalorder %s1753, 4
          %s1755 = scalar_select %p1754, %s1753, 4
          %s1756 = smul.u32 256, %s1755
          %p1757 = scmp.ne.s32.totalorder 0, %s1756
          %s1758 = smul.addr %s1751, 6
          %s1759 = sadd.s32 %s1752, %s1758
          %s1760 = smul.addr %s1759, 4
          %s1761 = scalar_lea.vmem %s5, %s1760
          %s1762 = smul.u32 %s1755, 4
          // Predicated region
          $region115: #{st_llm_forward.20} parent=113 // pred_check
            %p1763 = pneg %p1757
          $region116: #{st_llm_forward.20} parent=113 // pred_check_branch
            %1765 = sbr.rel (%p1763) target = $region118
          $region117: #{st_llm_forward.20} parent=113 // pred_region
            %p1766 = scmp.lt.u32.totalorder %s1762, 8
            %p1767 = pneg %p1766
            // Predicated region
            $region119: #{st_llm_forward.20} parent=117 // pred_check
              _
            $region120: #{st_llm_forward.20} parent=117 // pred_check_branch
              %1769 = sbr.rel (%p1766) target = $region122
            $region121: #{st_llm_forward.20} parent=117 // pred_region
              %s1791 = sand.u32 %s1762, 7
              %p1792 = scmp.eq.s32.totalorder %s1791, 0
              // Predicated region
              $region134: #{st_llm_forward.20} parent=121 // pred_check
                %p1793 = pneg %p1792
              $region135: #{st_llm_forward.20} parent=121 // pred_check_branch
                %1795 = sbr.rel (%p1793) target = $region137
              $region136: #{st_llm_forward.20} parent=121 // pred_region
                %s1796 = sshrl.u32 %s1762, 3
                %s1797 = sshrl.u32 %s1796, 4
                // While loop
                $region138: #{st_llm_forward.20} parent=136 // loop_pre_header
                  _
                $region139: #{st_llm_forward.20} parent=136 // loop_header
                  %s1801 = sphi 0, %s1803
                  %p1802 = scmp.ge.s32.totalorder %s1801, %s1797
                  %s1806 = sphi 0, %s1939
                  %s1807 = sphi %s1747, %s1942
                  %s1808 = sphi %s1761, %s1943
                $region140: #{st_llm_forward.20} parent=136 // loop_header_branch
                  %1805 = sbr.rel (%p1802) target = $region144
                $region141: #{st_llm_forward.20} parent=136 // loop_body
                  %v1809 = vld [vmem:[%s1807] sm:$0xff]
                  %1810 = vst [vmem:[%s1808] sm:$0xff] %v1809
                  %v1811 = vld [vmem:[%s1807 + $0x8] sm:$0xff]
                  %1812 = vst [vmem:[%s1808 + $0x8] sm:$0xff] %v1811
                  %v1813 = vld [vmem:[%s1807 + $0x10] sm:$0xff]
                  %1814 = vst [vmem:[%s1808 + $0x10] sm:$0xff] %v1813
                  %v1815 = vld [vmem:[%s1807 + $0x18] sm:$0xff]
                  %1816 = vst [vmem:[%s1808 + $0x18] sm:$0xff] %v1815
                  %v1817 = vld [vmem:[%s1807 + $0x20] sm:$0xff]
                  %1818 = vst [vmem:[%s1808 + $0x20] sm:$0xff] %v1817
                  %v1819 = vld [vmem:[%s1807 + $0x28] sm:$0xff]
                  %1820 = vst [vmem:[%s1808 + $0x28] sm:$0xff] %v1819
                  %v1821 = vld [vmem:[%s1807 + $0x30] sm:$0xff]
                  %1822 = vst [vmem:[%s1808 + $0x30] sm:$0xff] %v1821
                  %v1823 = vld [vmem:[%s1807 + $0x38] sm:$0xff]
                  %1824 = vst [vmem:[%s1808 + $0x38] sm:$0xff] %v1823
                  %v1825 = vld [vmem:[%s1807 + $0x40] sm:$0xff]
                  %1826 = vst [vmem:[%s1808 + $0x40] sm:$0xff] %v1825
                  %v1827 = vld [vmem:[%s1807 + $0x48] sm:$0xff]
                  %1828 = vst [vmem:[%s1808 + $0x48] sm:$0xff] %v1827
                  %v1829 = vld [vmem:[%s1807 + $0x50] sm:$0xff]
                  %1830 = vst [vmem:[%s1808 + $0x50] sm:$0xff] %v1829
                  %v1831 = vld [vmem:[%s1807 + $0x58] sm:$0xff]
                  %1832 = vst [vmem:[%s1808 + $0x58] sm:$0xff] %v1831
                  %v1833 = vld [vmem:[%s1807 + $0x60] sm:$0xff]
                  %1834 = vst [vmem:[%s1808 + $0x60] sm:$0xff] %v1833
                  %v1835 = vld [vmem:[%s1807 + $0x68] sm:$0xff]
                  %1836 = vst [vmem:[%s1808 + $0x68] sm:$0xff] %v1835
                  %v1837 = vld [vmem:[%s1807 + $0x70] sm:$0xff]
                  %1838 = vst [vmem:[%s1808 + $0x70] sm:$0xff] %v1837
                  %v1839 = vld [vmem:[%s1807 + $0x78] sm:$0xff]
                  %1840 = vst [vmem:[%s1808 + $0x78] sm:$0xff] %v1839
                  %v1841 = vld [vmem:[%s1807 + $0x10] sm:$0xff]
                  %1842 = vst [vmem:[%s1808 + $0x18] sm:$0xff] %v1841
                  %v1843 = vld [vmem:[%s1807 + $0x18] sm:$0xff]
                  %1844 = vst [vmem:[%s1808 + $0x20] sm:$0xff] %v1843
                  %v1845 = vld [vmem:[%s1807 + $0x20] sm:$0xff]
                  %1846 = vst [vmem:[%s1808 + $0x28] sm:$0xff] %v1845
                  %v1847 = vld [vmem:[%s1807 + $0x28] sm:$0xff]
                  %1848 = vst [vmem:[%s1808 + $0x30] sm:$0xff] %v1847
                  %v1849 = vld [vmem:[%s1807 + $0x30] sm:$0xff]
                  %1850 = vst [vmem:[%s1808 + $0x38] sm:$0xff] %v1849
                  %v1851 = vld [vmem:[%s1807 + $0x38] sm:$0xff]
                  %1852 = vst [vmem:[%s1808 + $0x40] sm:$0xff] %v1851
                  %v1853 = vld [vmem:[%s1807 + $0x40] sm:$0xff]
                  %1854 = vst [vmem:[%s1808 + $0x48] sm:$0xff] %v1853
                  %v1855 = vld [vmem:[%s1807 + $0x48] sm:$0xff]
                  %1856 = vst [vmem:[%s1808 + $0x50] sm:$0xff] %v1855
                  %v1857 = vld [vmem:[%s1807 + $0x50] sm:$0xff]
                  %1858 = vst [vmem:[%s1808 + $0x58] sm:$0xff] %v1857
                  %v1859 = vld [vmem:[%s1807 + $0x58] sm:$0xff]
                  %1860 = vst [vmem:[%s1808 + $0x60] sm:$0xff] %v1859
                  %v1861 = vld [vmem:[%s1807 + $0x60] sm:$0xff]
                  %1862 = vst [vmem:[%s1808 + $0x68] sm:$0xff] %v1861
                  %v1863 = vld [vmem:[%s1807 + $0x68] sm:$0xff]
                  %1864 = vst [vmem:[%s1808 + $0x70] sm:$0xff] %v1863
                  %v1865 = vld [vmem:[%s1807 + $0x70] sm:$0xff]
                  %1866 = vst [vmem:[%s1808 + $0x78] sm:$0xff] %v1865
                  %v1867 = vld [vmem:[%s1807 + $0x78] sm:$0xff]
                  %1868 = vst [vmem:[%s1808 + $0x80] sm:$0xff] %v1867
                  %v1869 = vld [vmem:[%s1807 + $0x80] sm:$0xff]
                  %1870 = vst [vmem:[%s1808 + $0x88] sm:$0xff] %v1869
                  %v1871 = vld [vmem:[%s1807 + $0x88] sm:$0xff]
                  %1872 = vst [vmem:[%s1808 + $0x90] sm:$0xff] %v1871
                  %v1873 = vld [vmem:[%s1807 + $0x20] sm:$0xff]
                  %1874 = vst [vmem:[%s1808 + $0x30] sm:$0xff] %v1873
                  %v1875 = vld [vmem:[%s1807 + $0x28] sm:$0xff]
                  %1876 = vst [vmem:[%s1808 + $0x38] sm:$0xff] %v1875
                  %v1877 = vld [vmem:[%s1807 + $0x30] sm:$0xff]
                  %1878 = vst [vmem:[%s1808 + $0x40] sm:$0xff] %v1877
                  %v1879 = vld [vmem:[%s1807 + $0x38] sm:$0xff]
                  %1880 = vst [vmem:[%s1808 + $0x48] sm:$0xff] %v1879
                  %v1881 = vld [vmem:[%s1807 + $0x40] sm:$0xff]
                  %1882 = vst [vmem:[%s1808 + $0x50] sm:$0xff] %v1881
                  %v1883 = vld [vmem:[%s1807 + $0x48] sm:$0xff]
                  %1884 = vst [vmem:[%s1808 + $0x58] sm:$0xff] %v1883
                  %v1885 = vld [vmem:[%s1807 + $0x50] sm:$0xff]
                  %1886 = vst [vmem:[%s1808 + $0x60] sm:$0xff] %v1885
                  %v1887 = vld [vmem:[%s1807 + $0x58] sm:$0xff]
                  %1888 = vst [vmem:[%s1808 + $0x68] sm:$0xff] %v1887
                  %v1889 = vld [vmem:[%s1807 + $0x60] sm:$0xff]
                  %1890 = vst [vmem:[%s1808 + $0x70] sm:$0xff] %v1889
                  %v1891 = vld [vmem:[%s1807 + $0x68] sm:$0xff]
                  %1892 = vst [vmem:[%s1808 + $0x78] sm:$0xff] %v1891
                  %v1893 = vld [vmem:[%s1807 + $0x70] sm:$0xff]
                  %1894 = vst [vmem:[%s1808 + $0x80] sm:$0xff] %v1893
                  %v1895 = vld [vmem:[%s1807 + $0x78] sm:$0xff]
                  %1896 = vst [vmem:[%s1808 + $0x88] sm:$0xff] %v1895
                  %v1897 = vld [vmem:[%s1807 + $0x80] sm:$0xff]
                  %1898 = vst [vmem:[%s1808 + $0x90] sm:$0xff] %v1897
                  %v1899 = vld [vmem:[%s1807 + $0x88] sm:$0xff]
                  %1900 = vst [vmem:[%s1808 + $0x98] sm:$0xff] %v1899
                  %v1901 = vld [vmem:[%s1807 + $0x90] sm:$0xff]
                  %1902 = vst [vmem:[%s1808 + $0xa0] sm:$0xff] %v1901
                  %v1903 = vld [vmem:[%s1807 + $0x98] sm:$0xff]
                  %1904 = vst [vmem:[%s1808 + $0xa8] sm:$0xff] %v1903
                  %v1905 = vld [vmem:[%s1807 + $0x30] sm:$0xff]
                  %1906 = vst [vmem:[%s1808 + $0x48] sm:$0xff] %v1905
                  %v1907 = vld [vmem:[%s1807 + $0x38] sm:$0xff]
                  %1908 = vst [vmem:[%s1808 + $0x50] sm:$0xff] %v1907
                  %v1909 = vld [vmem:[%s1807 + $0x40] sm:$0xff]
                  %1910 = vst [vmem:[%s1808 + $0x58] sm:$0xff] %v1909
                  %v1911 = vld [vmem:[%s1807 + $0x48] sm:$0xff]
                  %1912 = vst [vmem:[%s1808 + $0x60] sm:$0xff] %v1911
                  %v1913 = vld [vmem:[%s1807 + $0x50] sm:$0xff]
                  %1914 = vst [vmem:[%s1808 + $0x68] sm:$0xff] %v1913
                  %v1915 = vld [vmem:[%s1807 + $0x58] sm:$0xff]
                  %1916 = vst [vmem:[%s1808 + $0x70] sm:$0xff] %v1915
                  %v1917 = vld [vmem:[%s1807 + $0x60] sm:$0xff]
                  %1918 = vst [vmem:[%s1808 + $0x78] sm:$0xff] %v1917
                  %v1919 = vld [vmem:[%s1807 + $0x68] sm:$0xff]
                  %1920 = vst [vmem:[%s1808 + $0x80] sm:$0xff] %v1919
                  %v1921 = vld [vmem:[%s1807 + $0x70] sm:$0xff]
                  %1922 = vst [vmem:[%s1808 + $0x88] sm:$0xff] %v1921
                  %v1923 = vld [vmem:[%s1807 + $0x78] sm:$0xff]
                  %1924 = vst [vmem:[%s1808 + $0x90] sm:$0xff] %v1923
                  %v1925 = vld [vmem:[%s1807 + $0x80] sm:$0xff]
                  %1926 = vst [vmem:[%s1808 + $0x98] sm:$0xff] %v1925
                  %v1927 = vld [vmem:[%s1807 + $0x88] sm:$0xff]
                  %1928 = vst [vmem:[%s1808 + $0xa0] sm:$0xff] %v1927
                  %v1929 = vld [vmem:[%s1807 + $0x90] sm:$0xff]
                  %1930 = vst [vmem:[%s1808 + $0xa8] sm:$0xff] %v1929
                  %v1931 = vld [vmem:[%s1807 + $0x98] sm:$0xff]
                  %1932 = vst [vmem:[%s1808 + $0xb0] sm:$0xff] %v1931
                  %v1933 = vld [vmem:[%s1807 + $0xa0] sm:$0xff]
                  %1934 = vst [vmem:[%s1808 + $0xb8] sm:$0xff] %v1933
                  %v1935 = vld [vmem:[%s1807 + $0xa8] sm:$0xff]
                  %1936 = vst [vmem:[%s1808 + $0xc0] sm:$0xff] %v1935
                  %s1937 = sadd.s32 1, %s1806
                  %p1938 = scmp.ge.s32.totalorder %s1937, %s1797
                  %s1939 = scalar_select %p1938, 0, %s1937
                  %s1940 = smul.u32 %s1939, 128
                  %s1941 = smul.u32 %s1939, 128
                  %s1942 = scalar_lea.vmem %s1747, %s1940 [#allocation4]
                  %s1943 = scalar_lea.vmem %s1761, %s1941
                $region142: #{st_llm_forward.20} parent=136 // loop_footer
                  %s1803 = sadd.s32 %s1801, 1
                $region143: #{st_llm_forward.20} parent=136 // loop_footer_branch
                  %1800 = sbr.rel target = $region139
                $region144: #{st_llm_forward.20} parent=136 // loop_exit
                  _
                %s1944 = sshrl.u32 %s1796, 4
                %s1945 = sand.u32 %s1796, 15
                %s1946 = smul.u32 %s1944, 16
                %s1947 = smul.u32 128, %s1946
                %s1948 = sshra.s32 %s1947, 4
                %s1949 = scalar_lea.vmem %s1747, %s1948 [#allocation4]
                %s1950 = smul.u32 128, %s1946
                %s1951 = sshra.s32 %s1950, 4
                %s1952 = scalar_lea.vmem %s1761, %s1951
                // While loop
                $region145: #{st_llm_forward.20} parent=136 // loop_pre_header
                  _
                $region146: #{st_llm_forward.20} parent=136 // loop_header
                  %s1956 = sphi 0, %s1958
                  %p1957 = scmp.ge.s32.totalorder %s1956, %s1945
                  %s1961 = sphi 0, %s1974
                  %s1962 = sphi %s1949, %s1977
                  %s1963 = sphi %s1952, %s1978
                $region147: #{st_llm_forward.20} parent=136 // loop_header_branch
                  %1960 = sbr.rel (%p1957) target = $region151
                $region148: #{st_llm_forward.20} parent=136 // loop_body
                  %v1964 = vld [vmem:[%s1962] sm:$0xff]
                  %1965 = vst [vmem:[%s1963] sm:$0xff] %v1964
                  %v1966 = vld [vmem:[%s1962 + $0x10] sm:$0xff]
                  %1967 = vst [vmem:[%s1963 + $0x18] sm:$0xff] %v1966
                  %v1968 = vld [vmem:[%s1962 + $0x20] sm:$0xff]
                  %1969 = vst [vmem:[%s1963 + $0x30] sm:$0xff] %v1968
                  %v1970 = vld [vmem:[%s1962 + $0x30] sm:$0xff]
                  %1971 = vst [vmem:[%s1963 + $0x48] sm:$0xff] %v1970
                  %s1972 = sadd.s32 1, %s1961
                  %p1973 = scmp.ge.s32.totalorder %s1972, %s1945
                  %s1974 = scalar_select %p1973, 0, %s1972
                  %s1975 = smul.u32 %s1974, 8
                  %s1976 = smul.u32 %s1974, 8
                  %s1977 = scalar_lea.vmem %s1949, %s1975 [#allocation4]
                  %s1978 = scalar_lea.vmem %s1952, %s1976
                $region149: #{st_llm_forward.20} parent=136 // loop_footer
                  %s1958 = sadd.s32 %s1956, 1
                $region150: #{st_llm_forward.20} parent=136 // loop_footer_branch
                  %1955 = sbr.rel target = $region146
                $region151: #{st_llm_forward.20} parent=136 // loop_exit
                  _
              $region137: #{st_llm_forward.20} parent=121 // pred_fallthru
                _
              %p1979 = pneg %p1792
              // Predicated region
              $region152: #{st_llm_forward.20} parent=121 // pred_check
                _
              $region153: #{st_llm_forward.20} parent=121 // pred_check_branch
                %1981 = sbr.rel (%p1792) target = $region155
              $region154: #{st_llm_forward.20} parent=121 // pred_region
                %s1982 = sand.u32 %s1762, 7
                %s1983 = ssub.s32 %s1762, %s1982
                %s1984 = scalar_lea.vmem %s1747, %s1983 [#allocation4]
                %s1985 = ssub.s32 %s1762, %s1982
                %s1986 = scalar_lea.vmem %s1761, %s1985
                %s1987 = sshrl.u32 %s1762, 3
                %s1988 = sshrl.u32 %s1987, 4
                // While loop
                $region156: #{st_llm_forward.20} parent=154 // loop_pre_header
                  _
                $region157: #{st_llm_forward.20} parent=154 // loop_header
                  %s1992 = sphi 0, %s1994
                  %p1993 = scmp.ge.s32.totalorder %s1992, %s1988
                  %s1997 = sphi 0, %s2130
                  %s1998 = sphi %s1747, %s2133
                  %s1999 = sphi %s1761, %s2134
                $region158: #{st_llm_forward.20} parent=154 // loop_header_branch
                  %1996 = sbr.rel (%p1993) target = $region162
                $region159: #{st_llm_forward.20} parent=154 // loop_body
                  %v2000 = vld [vmem:[%s1998] sm:$0xff]
                  %2001 = vst [vmem:[%s1999] sm:$0xff] %v2000
                  %v2002 = vld [vmem:[%s1998 + $0x8] sm:$0xff]
                  %2003 = vst [vmem:[%s1999 + $0x8] sm:$0xff] %v2002
                  %v2004 = vld [vmem:[%s1998 + $0x10] sm:$0xff]
                  %2005 = vst [vmem:[%s1999 + $0x10] sm:$0xff] %v2004
                  %v2006 = vld [vmem:[%s1998 + $0x18] sm:$0xff]
                  %2007 = vst [vmem:[%s1999 + $0x18] sm:$0xff] %v2006
                  %v2008 = vld [vmem:[%s1998 + $0x20] sm:$0xff]
                  %2009 = vst [vmem:[%s1999 + $0x20] sm:$0xff] %v2008
                  %v2010 = vld [vmem:[%s1998 + $0x28] sm:$0xff]
                  %2011 = vst [vmem:[%s1999 + $0x28] sm:$0xff] %v2010
                  %v2012 = vld [vmem:[%s1998 + $0x30] sm:$0xff]
                  %2013 = vst [vmem:[%s1999 + $0x30] sm:$0xff] %v2012
                  %v2014 = vld [vmem:[%s1998 + $0x38] sm:$0xff]
                  %2015 = vst [vmem:[%s1999 + $0x38] sm:$0xff] %v2014
                  %v2016 = vld [vmem:[%s1998 + $0x40] sm:$0xff]
                  %2017 = vst [vmem:[%s1999 + $0x40] sm:$0xff] %v2016
                  %v2018 = vld [vmem:[%s1998 + $0x48] sm:$0xff]
                  %2019 = vst [vmem:[%s1999 + $0x48] sm:$0xff] %v2018
                  %v2020 = vld [vmem:[%s1998 + $0x50] sm:$0xff]
                  %2021 = vst [vmem:[%s1999 + $0x50] sm:$0xff] %v2020
                  %v2022 = vld [vmem:[%s1998 + $0x58] sm:$0xff]
                  %2023 = vst [vmem:[%s1999 + $0x58] sm:$0xff] %v2022
                  %v2024 = vld [vmem:[%s1998 + $0x60] sm:$0xff]
                  %2025 = vst [vmem:[%s1999 + $0x60] sm:$0xff] %v2024
                  %v2026 = vld [vmem:[%s1998 + $0x68] sm:$0xff]
                  %2027 = vst [vmem:[%s1999 + $0x68] sm:$0xff] %v2026
                  %v2028 = vld [vmem:[%s1998 + $0x70] sm:$0xff]
                  %2029 = vst [vmem:[%s1999 + $0x70] sm:$0xff] %v2028
                  %v2030 = vld [vmem:[%s1998 + $0x78] sm:$0xff]
                  %2031 = vst [vmem:[%s1999 + $0x78] sm:$0xff] %v2030
                  %v2032 = vld [vmem:[%s1998 + $0x10] sm:$0xff]
                  %2033 = vst [vmem:[%s1999 + $0x18] sm:$0xff] %v2032
                  %v2034 = vld [vmem:[%s1998 + $0x18] sm:$0xff]
                  %2035 = vst [vmem:[%s1999 + $0x20] sm:$0xff] %v2034
                  %v2036 = vld [vmem:[%s1998 + $0x20] sm:$0xff]
                  %2037 = vst [vmem:[%s1999 + $0x28] sm:$0xff] %v2036
                  %v2038 = vld [vmem:[%s1998 + $0x28] sm:$0xff]
                  %2039 = vst [vmem:[%s1999 + $0x30] sm:$0xff] %v2038
                  %v2040 = vld [vmem:[%s1998 + $0x30] sm:$0xff]
                  %2041 = vst [vmem:[%s1999 + $0x38] sm:$0xff] %v2040
                  %v2042 = vld [vmem:[%s1998 + $0x38] sm:$0xff]
                  %2043 = vst [vmem:[%s1999 + $0x40] sm:$0xff] %v2042
                  %v2044 = vld [vmem:[%s1998 + $0x40] sm:$0xff]
                  %2045 = vst [vmem:[%s1999 + $0x48] sm:$0xff] %v2044
                  %v2046 = vld [vmem:[%s1998 + $0x48] sm:$0xff]
                  %2047 = vst [vmem:[%s1999 + $0x50] sm:$0xff] %v2046
                  %v2048 = vld [vmem:[%s1998 + $0x50] sm:$0xff]
                  %2049 = vst [vmem:[%s1999 + $0x58] sm:$0xff] %v2048
                  %v2050 = vld [vmem:[%s1998 + $0x58] sm:$0xff]
                  %2051 = vst [vmem:[%s1999 + $0x60] sm:$0xff] %v2050
                  %v2052 = vld [vmem:[%s1998 + $0x60] sm:$0xff]
                  %2053 = vst [vmem:[%s1999 + $0x68] sm:$0xff] %v2052
                  %v2054 = vld [vmem:[%s1998 + $0x68] sm:$0xff]
                  %2055 = vst [vmem:[%s1999 + $0x70] sm:$0xff] %v2054
                  %v2056 = vld [vmem:[%s1998 + $0x70] sm:$0xff]
                  %2057 = vst [vmem:[%s1999 + $0x78] sm:$0xff] %v2056
                  %v2058 = vld [vmem:[%s1998 + $0x78] sm:$0xff]
                  %2059 = vst [vmem:[%s1999 + $0x80] sm:$0xff] %v2058
                  %v2060 = vld [vmem:[%s1998 + $0x80] sm:$0xff]
                  %2061 = vst [vmem:[%s1999 + $0x88] sm:$0xff] %v2060
                  %v2062 = vld [vmem:[%s1998 + $0x88] sm:$0xff]
                  %2063 = vst [vmem:[%s1999 + $0x90] sm:$0xff] %v2062
                  %v2064 = vld [vmem:[%s1998 + $0x20] sm:$0xff]
                  %2065 = vst [vmem:[%s1999 + $0x30] sm:$0xff] %v2064
                  %v2066 = vld [vmem:[%s1998 + $0x28] sm:$0xff]
                  %2067 = vst [vmem:[%s1999 + $0x38] sm:$0xff] %v2066
                  %v2068 = vld [vmem:[%s1998 + $0x30] sm:$0xff]
                  %2069 = vst [vmem:[%s1999 + $0x40] sm:$0xff] %v2068
                  %v2070 = vld [vmem:[%s1998 + $0x38] sm:$0xff]
                  %2071 = vst [vmem:[%s1999 + $0x48] sm:$0xff] %v2070
                  %v2072 = vld [vmem:[%s1998 + $0x40] sm:$0xff]
                  %2073 = vst [vmem:[%s1999 + $0x50] sm:$0xff] %v2072
                  %v2074 = vld [vmem:[%s1998 + $0x48] sm:$0xff]
                  %2075 = vst [vmem:[%s1999 + $0x58] sm:$0xff] %v2074
                  %v2076 = vld [vmem:[%s1998 + $0x50] sm:$0xff]
                  %2077 = vst [vmem:[%s1999 + $0x60] sm:$0xff] %v2076
                  %v2078 = vld [vmem:[%s1998 + $0x58] sm:$0xff]
                  %2079 = vst [vmem:[%s1999 + $0x68] sm:$0xff] %v2078
                  %v2080 = vld [vmem:[%s1998 + $0x60] sm:$0xff]
                  %2081 = vst [vmem:[%s1999 + $0x70] sm:$0xff] %v2080
                  %v2082 = vld [vmem:[%s1998 + $0x68] sm:$0xff]
                  %2083 = vst [vmem:[%s1999 + $0x78] sm:$0xff] %v2082
                  %v2084 = vld [vmem:[%s1998 + $0x70] sm:$0xff]
                  %2085 = vst [vmem:[%s1999 + $0x80] sm:$0xff] %v2084
                  %v2086 = vld [vmem:[%s1998 + $0x78] sm:$0xff]
                  %2087 = vst [vmem:[%s1999 + $0x88] sm:$0xff] %v2086
                  %v2088 = vld [vmem:[%s1998 + $0x80] sm:$0xff]
                  %2089 = vst [vmem:[%s1999 + $0x90] sm:$0xff] %v2088
                  %v2090 = vld [vmem:[%s1998 + $0x88] sm:$0xff]
                  %2091 = vst [vmem:[%s1999 + $0x98] sm:$0xff] %v2090
                  %v2092 = vld [vmem:[%s1998 + $0x90] sm:$0xff]
                  %2093 = vst [vmem:[%s1999 + $0xa0] sm:$0xff] %v2092
                  %v2094 = vld [vmem:[%s1998 + $0x98] sm:$0xff]
                  %2095 = vst [vmem:[%s1999 + $0xa8] sm:$0xff] %v2094
                  %v2096 = vld [vmem:[%s1998 + $0x30] sm:$0xff]
                  %2097 = vst [vmem:[%s1999 + $0x48] sm:$0xff] %v2096
                  %v2098 = vld [vmem:[%s1998 + $0x38] sm:$0xff]
                  %2099 = vst [vmem:[%s1999 + $0x50] sm:$0xff] %v2098
                  %v2100 = vld [vmem:[%s1998 + $0x40] sm:$0xff]
                  %2101 = vst [vmem:[%s1999 + $0x58] sm:$0xff] %v2100
                  %v2102 = vld [vmem:[%s1998 + $0x48] sm:$0xff]
                  %2103 = vst [vmem:[%s1999 + $0x60] sm:$0xff] %v2102
                  %v2104 = vld [vmem:[%s1998 + $0x50] sm:$0xff]
                  %2105 = vst [vmem:[%s1999 + $0x68] sm:$0xff] %v2104
                  %v2106 = vld [vmem:[%s1998 + $0x58] sm:$0xff]
                  %2107 = vst [vmem:[%s1999 + $0x70] sm:$0xff] %v2106
                  %v2108 = vld [vmem:[%s1998 + $0x60] sm:$0xff]
                  %2109 = vst [vmem:[%s1999 + $0x78] sm:$0xff] %v2108
                  %v2110 = vld [vmem:[%s1998 + $0x68] sm:$0xff]
                  %2111 = vst [vmem:[%s1999 + $0x80] sm:$0xff] %v2110
                  %v2112 = vld [vmem:[%s1998 + $0x70] sm:$0xff]
                  %2113 = vst [vmem:[%s1999 + $0x88] sm:$0xff] %v2112
                  %v2114 = vld [vmem:[%s1998 + $0x78] sm:$0xff]
                  %2115 = vst [vmem:[%s1999 + $0x90] sm:$0xff] %v2114
                  %v2116 = vld [vmem:[%s1998 + $0x80] sm:$0xff]
                  %2117 = vst [vmem:[%s1999 + $0x98] sm:$0xff] %v2116
                  %v2118 = vld [vmem:[%s1998 + $0x88] sm:$0xff]
                  %2119 = vst [vmem:[%s1999 + $0xa0] sm:$0xff] %v2118
                  %v2120 = vld [vmem:[%s1998 + $0x90] sm:$0xff]
                  %2121 = vst [vmem:[%s1999 + $0xa8] sm:$0xff] %v2120
                  %v2122 = vld [vmem:[%s1998 + $0x98] sm:$0xff]
                  %2123 = vst [vmem:[%s1999 + $0xb0] sm:$0xff] %v2122
                  %v2124 = vld [vmem:[%s1998 + $0xa0] sm:$0xff]
                  %2125 = vst [vmem:[%s1999 + $0xb8] sm:$0xff] %v2124
                  %v2126 = vld [vmem:[%s1998 + $0xa8] sm:$0xff]
                  %2127 = vst [vmem:[%s1999 + $0xc0] sm:$0xff] %v2126
                  %s2128 = sadd.s32 1, %s1997
                  %p2129 = scmp.ge.s32.totalorder %s2128, %s1988
                  %s2130 = scalar_select %p2129, 0, %s2128
                  %s2131 = smul.u32 %s2130, 128
                  %s2132 = smul.u32 %s2130, 128
                  %s2133 = scalar_lea.vmem %s1747, %s2131 [#allocation4]
                  %s2134 = scalar_lea.vmem %s1761, %s2132
                $region160: #{st_llm_forward.20} parent=154 // loop_footer
                  %s1994 = sadd.s32 %s1992, 1
                $region161: #{st_llm_forward.20} parent=154 // loop_footer_branch
                  %1991 = sbr.rel target = $region157
                $region162: #{st_llm_forward.20} parent=154 // loop_exit
                  _
                %s2135 = sshrl.u32 %s1987, 4
                %s2136 = sand.u32 %s1987, 15
                %s2137 = smul.u32 %s2135, 16
                %s2138 = smul.u32 128, %s2137
                %s2139 = sshra.s32 %s2138, 4
                %s2140 = scalar_lea.vmem %s1747, %s2139 [#allocation4]
                %s2141 = smul.u32 128, %s2137
                %s2142 = sshra.s32 %s2141, 4
                %s2143 = scalar_lea.vmem %s1761, %s2142
                // While loop
                $region163: #{st_llm_forward.20} parent=154 // loop_pre_header
                  _
                $region164: #{st_llm_forward.20} parent=154 // loop_header
                  %s2147 = sphi 0, %s2149
                  %p2148 = scmp.ge.s32.totalorder %s2147, %s2136
                  %s2152 = sphi 0, %s2165
                  %s2153 = sphi %s2140, %s2168
                  %s2154 = sphi %s2143, %s2169
                $region165: #{st_llm_forward.20} parent=154 // loop_header_branch
                  %2151 = sbr.rel (%p2148) target = $region169
                $region166: #{st_llm_forward.20} parent=154 // loop_body
                  %v2155 = vld [vmem:[%s2153] sm:$0xff]
                  %2156 = vst [vmem:[%s2154] sm:$0xff] %v2155
                  %v2157 = vld [vmem:[%s2153 + $0x10] sm:$0xff]
                  %2158 = vst [vmem:[%s2154 + $0x18] sm:$0xff] %v2157
                  %v2159 = vld [vmem:[%s2153 + $0x20] sm:$0xff]
                  %2160 = vst [vmem:[%s2154 + $0x30] sm:$0xff] %v2159
                  %v2161 = vld [vmem:[%s2153 + $0x30] sm:$0xff]
                  %2162 = vst [vmem:[%s2154 + $0x48] sm:$0xff] %v2161
                  %s2163 = sadd.s32 1, %s2152
                  %p2164 = scmp.ge.s32.totalorder %s2163, %s2136
                  %s2165 = scalar_select %p2164, 0, %s2163
                  %s2166 = smul.u32 %s2165, 8
                  %s2167 = smul.u32 %s2165, 8
                  %s2168 = scalar_lea.vmem %s2140, %s2166 [#allocation4]
                  %s2169 = scalar_lea.vmem %s2143, %s2167
                $region167: #{st_llm_forward.20} parent=154 // loop_footer
                  %s2149 = sadd.s32 %s2147, 1
                $region168: #{st_llm_forward.20} parent=154 // loop_footer_branch
                  %2146 = sbr.rel target = $region164
                $region169: #{st_llm_forward.20} parent=154 // loop_exit
                  _
                %s2170 = sshll.u32 1, %s1982
                %s2171 = ssub.s32 %s2170, 1
                loop: start=0, step=1, limit=1
                $region170: #{st_llm_forward.20} parent=154 // loop_pre_header
                  _
                $region171: #{st_llm_forward.20} parent=154 // loop_header
                  %s2173 = sphi 0, %s2177
                  %p2174 = scmp.ge.s32.totalorder %s2173, 1
                  %s2178 = sphi %s1984, %s1984
                  %s2179 = sphi %s1986, %s1986
                $region172: #{st_llm_forward.20} parent=154 // loop_header_branch
                  %2176 = sbr.rel (%p2174) target = $region176
                $region173: #{st_llm_forward.20} parent=154 // loop_body
                  %v2180 = vld [vmem:[%s2178] sm:%s2171]
                  %2181 = vst [vmem:[%s2179] sm:%s2171] %v2180
                  %v2182 = vld [vmem:[%s2178 + $0x10] sm:%s2171]
                  %2183 = vst [vmem:[%s2179 + $0x18] sm:%s2171] %v2182
                  %v2184 = vld [vmem:[%s2178 + $0x20] sm:%s2171]
                  %2185 = vst [vmem:[%s2179 + $0x30] sm:%s2171] %v2184
                  %v2186 = vld [vmem:[%s2178 + $0x30] sm:%s2171]
                  %2187 = vst [vmem:[%s2179 + $0x48] sm:%s2171] %v2186
                $region174: #{st_llm_forward.20} parent=154 // loop_footer
                  %s2177 = sadd.s32 1, %s2173
                $region175: #{st_llm_forward.20} parent=154 // loop_footer_branch
                  %2172 = sbr.rel target = $region171
                $region176: #{st_llm_forward.20} parent=154 // loop_exit
                  _
              $region155: #{st_llm_forward.20} parent=121 // pred_fallthru
                _
            $region122: #{st_llm_forward.20} parent=117 // pred_fallthru
              _
            // Predicated region
            $region123: #{st_llm_forward.20} parent=117 // pred_check
              %p1770 = pneg %p1766
            $region124: #{st_llm_forward.20} parent=117 // pred_check_branch
              %1772 = sbr.rel (%p1770) target = $region126
            $region125: #{st_llm_forward.20} parent=117 // pred_region
              %s1773 = sshll.u32 1, %s1762
              %s1774 = ssub.s32 %s1773, 1
              loop: start=0, step=1, limit=1
              $region127: #{st_llm_forward.20} parent=125 // loop_pre_header
                _
              $region128: #{st_llm_forward.20} parent=125 // loop_header
                %s1776 = sphi 0, %s1780
                %p1777 = scmp.ge.s32.totalorder %s1776, 1
                %s1781 = sphi %s1747, %s1747
                %s1782 = sphi %s1761, %s1761
              $region129: #{st_llm_forward.20} parent=125 // loop_header_branch
                %1779 = sbr.rel (%p1777) target = $region133
              $region130: #{st_llm_forward.20} parent=125 // loop_body
                %v1783 = vld [vmem:[%s1781] sm:%s1774]
                %1784 = vst [vmem:[%s1782] sm:%s1774] %v1783
                %v1785 = vld [vmem:[%s1781 + $0x10] sm:%s1774]
                %1786 = vst [vmem:[%s1782 + $0x18] sm:%s1774] %v1785
                %v1787 = vld [vmem:[%s1781 + $0x20] sm:%s1774]
                %1788 = vst [vmem:[%s1782 + $0x30] sm:%s1774] %v1787
                %v1789 = vld [vmem:[%s1781 + $0x30] sm:%s1774]
                %1790 = vst [vmem:[%s1782 + $0x48] sm:%s1774] %v1789
              $region131: #{st_llm_forward.20} parent=125 // loop_footer
                %s1780 = sadd.s32 1, %s1776
              $region132: #{st_llm_forward.20} parent=125 // loop_footer_branch
                %1775 = sbr.rel target = $region128
              $region133: #{st_llm_forward.20} parent=125 // loop_exit
                _
            $region126: #{st_llm_forward.20} parent=117 // pred_fallthru
              _
          $region118: #{st_llm_forward.20} parent=113 // pred_fallthru
            _
          %2188 = vnop
        $region114: #{st_llm_forward.20} parent=101 // pred_fallthru
          _
      $region102: #{st_llm_forward.20} parent=5 // pred_fallthru
        _
      %p2189 = scmp.le.s32.totalorder 2, %s11
      // Predicated region
      $region177: #{st_llm_forward.20} parent=5 // pred_check
        %p2190 = pneg %p2189
      $region178: #{st_llm_forward.20} parent=5 // pred_check_branch
        %2192 = sbr.rel (%p2190) target = $region180
      $region179: #{st_llm_forward.20} parent=5 // pred_region
        %s2193 = ssub.s32 %s11, 2
        // Predicated region
        $region181: #{st_llm_forward.20} parent=179 // pred_check
          %p2194 = pneg %p174
        $region182: #{st_llm_forward.20} parent=179 // pred_check_branch
          %2196 = sbr.rel (%p2194) target = $region184
        $region183: #{st_llm_forward.20} parent=179 // pred_region
          %s2197 = sand.u32 %s159, 1
          %s2198 = sand.u32 %s159, 1
          %s2199 = smul.addr %s2198, 64
          %s2200 = scalar_lea.vmem [#allocation4], %s2199
        $region184: #{st_llm_forward.20} parent=179 // pred_fallthru
          _
      $region180: #{st_llm_forward.20} parent=5 // pred_fallthru
        _
    $region6: #{st_llm_forward.20} parent=1 // loop_footer
      %s15 = sadd.s32 1, %s11
    $region7: #{st_llm_forward.20} parent=1 // loop_footer_branch
      %10 = sbr.rel target = $region3
    $region8: #{st_llm_forward.20} parent=1 // loop_exit
      _

// kernel: st_llm_forward.27
$region0: #{st_llm_forward.27}
  #allocation0 [shape = 'u32[]', space=smem, size = 0x4, offset = 0x4, fixed_abs, tag = 'smem constant byte address 0x4 - core index']
  #allocation1 [shape = 'u32[144,128]{1,0:T(1,128)}', space=vmem, size = 0x12000, scoped, tag = 'internal scratch']
  %s0 = inlined_call_operand.vmem [shape: bf16[32,192], index: 0, kind: input, shape index: {}]
  %s1 = inlined_call_operand.vmem [shape: bf16[192,128], index: 1, kind: input, shape index: {}]
  %s2 = inlined_call_operand.vmem [shape: f32[1,128], index: 2, kind: input, shape index: {}]
  %s3 = inlined_call_operand.vmem [shape: f32[1,192], index: 3, kind: input, shape index: {}]
  %s4 = inlined_call_operand.vmem [shape: f32[1,192], index: 4, kind: input, shape index: {}]
  %s5 = inlined_call_operand.vmem [shape: f32[32,128], index: 5, kind: output, shape index: {}]
  %s6 = sld [smem:[#allocation0]]
  $region30: #{st_llm_forward.27} parent=0
    _
  %s8 = ssub.s32 1, %s6
  %s9 = scalar_select 0, %s8, %s6
  // Predicated region
  $region2: #{st_llm_forward.27} parent=0 // pred_check
    _
  $region3: #{st_llm_forward.27} parent=0 // pred_check_branch
    %11 = sbr.rel (0) target = $region5
  $region4: #{st_llm_forward.27} parent=0 // pred_region
    _
  $region5: #{st_llm_forward.27} parent=0 // pred_fallthru
    _
  // Predicated region
  $region6: #{st_llm_forward.27} parent=0 // pred_check
    _
  $region7: #{st_llm_forward.27} parent=0 // pred_check_branch
    %13 = sbr.rel (0) target = $region9
  $region8: #{st_llm_forward.27} parent=0 // pred_region
    _
  $region9: #{st_llm_forward.27} parent=0 // pred_fallthru
    _
  // Predicated region
  $region10: #{st_llm_forward.27} parent=0 // pred_check
    _
  $region11: #{st_llm_forward.27} parent=0 // pred_check_branch
    %15 = sbr.rel (0) target = $region13
  $region12: #{st_llm_forward.27} parent=0 // pred_region
    _
  $region13: #{st_llm_forward.27} parent=0 // pred_fallthru
    _
  // Predicated region
  $region14: #{st_llm_forward.27} parent=0 // pred_check
    _
  $region15: #{st_llm_forward.27} parent=0 // pred_check_branch
    %17 = sbr.rel (0) target = $region17
  $region16: #{st_llm_forward.27} parent=0 // pred_region
    _
  $region17: #{st_llm_forward.27} parent=0 // pred_fallthru
    _
  // Predicated region
  $region18: #{st_llm_forward.27} parent=0 // pred_check
    _
  $region19: #{st_llm_forward.27} parent=0 // pred_check_branch
    %19 = sbr.rel (0) target = $region21
  $region20: #{st_llm_forward.27} parent=0 // pred_region
    _
  $region21: #{st_llm_forward.27} parent=0 // pred_fallthru
    _
  %v21 = vld [vmem:[%s0] sm:$0xff]
  %v22 = vld [vmem:[%s0 + $0x8] sm:$0xff]
  %v23 = vld [vmem:[%s0 + $0x10] sm:$0xff]
  %v24 = vld [vmem:[%s0 + $0x18] sm:$0xff]
  %v25 = vunpack.c.l.bf16 %v21
  %v26 = vunpack.c.h.bf16 %v21
  %v27 = vunpack.c.l.bf16 %v22
  %v28 = vunpack.c.h.bf16 %v22
  %v29 = vunpack.c.l.bf16 %v23
  %v30 = vunpack.c.h.bf16 %v23
  %v31 = vunpack.c.l.bf16 %v24
  %v32 = vunpack.c.h.bf16 %v24
  %vm33 = vcmask 523264
  %v34 = vsel %vm33, %v26, 0.0
  %v35 = vadd.f32 %v25, %v34
  %36 = vadd.xlane.f32.xlu0 %v35
  %v37 = vpop.xlane.xlu0 %36
  %v38 = vsel %vm33, %v28, 0.0
  %v39 = vadd.f32 %v27, %v38
  %40 = vadd.xlane.f32.xlu0 %v39
  %v41 = vpop.xlane.xlu0 %40
  %v42 = vsel %vm33, %v30, 0.0
  %v43 = vadd.f32 %v29, %v42
  %44 = vadd.xlane.f32.xlu0 %v43
  %v45 = vpop.xlane.xlu0 %44
  %v46 = vsel %vm33, %v32, 0.0
  %v47 = vadd.f32 %v31, %v46
  %48 = vadd.xlane.f32.xlu0 %v47
  %v49 = vpop.xlane.xlu0 %48
  %v50 = vrcp.pop 192.0
  %v51 = vmul.f32 %v37, %v50
  %v52 = vmul.f32 %v41, %v50
  %v53 = vmul.f32 %v45, %v50
  %v54 = vmul.f32 %v49, %v50
  %v55 = vsub.f32 %v25, %v51
  %v56 = vsub.f32 %v26, %v51
  %v57 = vsub.f32 %v27, %v52
  %v58 = vsub.f32 %v28, %v52
  %v59 = vsub.f32 %v29, %v53
  %v60 = vsub.f32 %v30, %v53
  %v61 = vsub.f32 %v31, %v54
  %v62 = vsub.f32 %v32, %v54
  %v63 = vmul.f32 %v55, %v55
  %v64 = vmul.f32 %v56, %v56
  %v65 = vmul.f32 %v57, %v57
  %v66 = vmul.f32 %v58, %v58
  %v67 = vmul.f32 %v59, %v59
  %v68 = vmul.f32 %v60, %v60
  %v69 = vmul.f32 %v61, %v61
  %v70 = vmul.f32 %v62, %v62
  %v71 = vsel %vm33, %v64, 0.0
  %v72 = vadd.f32 %v63, %v71
  %73 = vadd.xlane.f32.xlu0 %v72
  %v74 = vpop.xlane.xlu0 %73
  %v75 = vsel %vm33, %v66, 0.0
  %v76 = vadd.f32 %v65, %v75
  %77 = vadd.xlane.f32.xlu0 %v76
  %v78 = vpop.xlane.xlu0 %77
  %v79 = vsel %vm33, %v68, 0.0
  %v80 = vadd.f32 %v67, %v79
  %81 = vadd.xlane.f32.xlu0 %v80
  %v82 = vpop.xlane.xlu0 %81
  %v83 = vsel %vm33, %v70, 0.0
  %v84 = vadd.f32 %v69, %v83
  %85 = vadd.xlane.f32.xlu0 %v84
  %v86 = vpop.xlane.xlu0 %85
  %v87 = vmul.f32 %v74, %v50
  %v88 = vmul.f32 %v78, %v50
  %v89 = vmul.f32 %v82, %v50
  %v90 = vmul.f32 %v86, %v50
  %v91 = vadd.f32 %v87, 1e-05
  %v92 = vadd.f32 %v88, 1e-05
  %v93 = vadd.f32 %v89, 1e-05
  %v94 = vadd.f32 %v90, 1e-05
  %v95 = vrsqrt.pop %v91
  %v96 = vrsqrt.pop %v92
  %v97 = vrsqrt.pop %v93
  %v98 = vrsqrt.pop %v94
  %v99 = vmul.f32 %v55, %v95
  %v100 = vmul.f32 %v56, %v95
  %v101 = vmul.f32 %v57, %v96
  %v102 = vmul.f32 %v58, %v96
  %v103 = vmul.f32 %v59, %v97
  %v104 = vmul.f32 %v60, %v97
  %v105 = vmul.f32 %v61, %v98
  %v106 = vmul.f32 %v62, %v98
  %v107 = vld [vmem:[%s3] sm:$0x3]
  %v109 = vlaneseq
  %v110 = vshrl.u32 %v109, 7
  %v111 = vsub.s32 0, %v110
  %v112 = vrot.slane %v107, %v111
  %v113 = vlaneseq
  %v114 = vshrl.u32 %v113, 7
  %v115 = vsub.s32 1, %v114
  %v116 = vrot.slane %v107, %v115
  %v119 = vmul.f32 %v99, %v112
  %v120 = vmul.f32 %v100, %v116
  %v121 = vmul.f32 %v101, %v112
  %v122 = vmul.f32 %v102, %v116
  %v123 = vmul.f32 %v103, %v112
  %v124 = vmul.f32 %v104, %v116
  %v125 = vmul.f32 %v105, %v112
  %v126 = vmul.f32 %v106, %v116
  %v127 = vld [vmem:[%s4] sm:$0x3]
  %v129 = vlaneseq
  %v130 = vshrl.u32 %v129, 7
  %v131 = vsub.s32 0, %v130
  %v132 = vrot.slane %v127, %v131
  %v133 = vlaneseq
  %v134 = vshrl.u32 %v133, 7
  %v135 = vsub.s32 1, %v134
  %v136 = vrot.slane %v127, %v135
  %v139 = vadd.f32 %v119, %v132
  %v140 = vadd.f32 %v120, %v136
  %v141 = vadd.f32 %v121, %v132
  %v142 = vadd.f32 %v122, %v136
  %v143 = vadd.f32 %v123, %v132
  %v144 = vadd.f32 %v124, %v136
  %v145 = vadd.f32 %v125, %v132
  %v146 = vadd.f32 %v126, %v136
  %v147 = vpack.c.bf16 %v141, %v139
  %v148 = vpack.c.bf16 %v142, %v140
  %v149 = vpack.c.bf16 %v145, %v143
  %v150 = vpack.c.bf16 %v146, %v144
  %v151 = vld [vmem:[%s1] sm:$0xf]
  %v152 = vld [vmem:[%s1 + $0x4] sm:$0xf]
  %v153 = vld [vmem:[%s1 + $0x8] sm:$0xf]
  %v154 = vld [vmem:[%s1 + $0xc] sm:$0xf]
  %v155 = vld [vmem:[%s1 + $0x10] sm:$0xf]
  %v156 = vld [vmem:[%s1 + $0x14] sm:$0xf]
  %v157 = vld [vmem:[%s1 + $0x18] sm:$0xf]
  %v158 = vld [vmem:[%s1 + $0x1c] sm:$0xf]
  %v159 = vld [vmem:[%s1 + $0x20] sm:$0xf]
  %v160 = vld [vmem:[%s1 + $0x24] sm:$0xf]
  %v161 = vld [vmem:[%s1 + $0x28] sm:$0xf]
  %v162 = vld [vmem:[%s1 + $0x2c] sm:$0xf]
  %v163 = vld [vmem:[%s1 + $0x30] sm:$0xf]
  %v164 = vld [vmem:[%s1 + $0x34] sm:$0xf]
  %v165 = vld [vmem:[%s1 + $0x38] sm:$0xf]
  %v166 = vld [vmem:[%s1 + $0x3c] sm:$0xf]
  %v167 = vld [vmem:[%s1 + $0x40] sm:$0xf]
  %v168 = vld [vmem:[%s1 + $0x44] sm:$0xf]
  %v169 = vld [vmem:[%s1 + $0x48] sm:$0xf]
  %v170 = vld [vmem:[%s1 + $0x4c] sm:$0xf]
  %v171 = vld [vmem:[%s1 + $0x50] sm:$0xf]
  %v172 = vld [vmem:[%s1 + $0x54] sm:$0xf]
  %v173 = vld [vmem:[%s1 + $0x58] sm:$0xf]
  %v174 = vld [vmem:[%s1 + $0x5c] sm:$0xf]
  %v175 = vld [vmem:[%s2] sm:$0x1]
  %v177 = vlaneseq
  %v178 = vshrl.u32 %v177, 7
  %v179 = vsub.s32 0, %v178
  %v180 = vrot.slane %v175, %v179
  %v206 = vunpack.c.l.b16 %v151
  %v207 = vunpack.c.l.b16 %v152
  %v208 = vunpack.c.l.b16 %v153
  %v209 = vunpack.c.l.b16 %v154
  %v210 = vunpack.c.l.b16 %v155
  %v211 = vunpack.c.l.b16 %v156
  %v212 = vunpack.c.l.b16 %v157
  %v213 = vunpack.c.l.b16 %v158
  %v214 = vunpack.c.l.b16 %v159
  %v215 = vunpack.c.l.b16 %v160
  %v216 = vunpack.c.l.b16 %v161
  %v217 = vunpack.c.l.b16 %v162
  %v218 = vunpack.c.l.b16 %v163
  %v219 = vunpack.c.l.b16 %v164
  %v220 = vunpack.c.l.b16 %v165
  %v221 = vunpack.c.l.b16 %v166
  %v222 = vunpack.c.l.b16 %v167
  %v223 = vunpack.c.l.b16 %v168
  %v224 = vunpack.c.l.b16 %v169
  %v225 = vunpack.c.l.b16 %v170
  %v226 = vunpack.c.l.b16 %v171
  %v227 = vunpack.c.l.b16 %v172
  %v228 = vunpack.c.l.b16 %v173
  %v229 = vunpack.c.l.b16 %v174
  %v230 = vpack.c.b16 %v207, %v206
  %v231 = vpack.c.b16 %v209, %v208
  %v232 = vpack.c.b16 %v211, %v210
  %v233 = vpack.c.b16 %v213, %v212
  %v234 = vpack.c.b16 %v215, %v214
  %v235 = vpack.c.b16 %v217, %v216
  %v236 = vpack.c.b16 %v219, %v218
  %v237 = vpack.c.b16 %v221, %v220
  %v238 = vpack.c.b16 %v223, %v222
  %v239 = vpack.c.b16 %v225, %v224
  %v240 = vpack.c.b16 %v227, %v226
  %v241 = vpack.c.b16 %v229, %v228
  %v255 = vsel %vm33, %v148, 0
  %v258 = vsel %vm33, %v150, 0
  %260 = vmatprep.subr.bf16.mxu0 0
  %261 = vmatpush1.bf16.msra.mxu0 %v237
  %262 = vmatprep.subr.bf16.mxu0 0
  %263 = vmatpush1.bf16.msra.mxu0 %v236
  %264 = vmatprep.subr.bf16.mxu0 0
  %265 = vmatpush1.bf16.msra.mxu0 %v235
  %266 = vmatprep.subr.bf16.mxu0 0
  %267 = vmatpush1.bf16.msra.mxu0 %v234
  %268 = vmatprep.subr.bf16.mxu0 0
  %269 = vmatpush1.bf16.msra.mxu0 %v233
  %270 = vmatprep.subr.bf16.mxu0 0
  %271 = vmatpush1.bf16.msra.mxu0 %v232
  %272 = vmatprep.subr.bf16.mxu0 0
  %273 = vmatpush1.bf16.msra.mxu0 %v231
  %274 = vmatprep.subr.bf16.mxu0 0
  %275 = vmatpush1.bf16.msra.mxu0 %v230
  %276 = vmatprep.subr.bf16.mxu0 0
  %277 = vmatpush2.bf16.msra.mxu0 0
  %278 = vmatprep.subr.bf16.mxu0 0
  %279 = vmatpush2.bf16.msra.mxu0 0
  %280 = vmatprep.subr.bf16.mxu0 0
  %281 = vmatpush2.bf16.msra.mxu0 0
  %282 = vmatprep.subr.bf16.mxu0 0
  %283 = vmatpush2.bf16.msra.mxu0 0
  %284 = vmatprep.subr.bf16.mxu0 0
  %285 = vmatpush2.bf16.msra.mxu0 %v241
  %286 = vmatprep.subr.bf16.mxu0 0
  %287 = vmatpush2.bf16.msra.mxu0 %v240
  %288 = vmatprep.subr.bf16.mxu0 0
  %289 = vmatpush2.bf16.msra.mxu0 %v239
  %290 = vmatprep.subr.bf16.mxu0 0
  %291 = vmatpush2.bf16.msra.mxu0 %v238
  %292 = vmatprep.mubr.bf16.mxu0 %v255
  %293 = vmatmul.mubr.bf16.gmra.mxu0 %v147
  %v294 = vpop.f32.mrf.mxu0
  %v295 = vadd.f32 %v180, %v294
  %v296 = vpop.f32.mrf.mxu0
  %v297 = vpop.f32.mrf.mxu0
  %v298 = vadd.f32 %v180, %v297
  %v299 = vpop.f32.mrf.mxu0
  %300 = vmatprep.mubr.bf16.mxu0 %v258
  %301 = vmatmul.mubr.bf16.gmra.mxu0 %v149
  %v302 = vpop.f32.mrf.mxu0
  %v303 = vadd.f32 %v180, %v302
  %v304 = vpop.f32.mrf.mxu0
  %v305 = vpop.f32.mrf.mxu0
  %v306 = vadd.f32 %v180, %v305
  %v307 = vpop.f32.mrf.mxu0
  %308 = vdwg.mxu0
  %309 = vst [vmem:[%s5] sm:$0xff] %v295
  %310 = vst [vmem:[%s5 + $0x8] sm:$0xff] %v298
  %311 = vst [vmem:[%s5 + $0x10] sm:$0xff] %v303
  %312 = vst [vmem:[%s5 + $0x18] sm:$0xff] %v306
  // Predicated region
  $region22: #{st_llm_forward.27} parent=0 // pred_check
    _
  $region23: #{st_llm_forward.27} parent=0 // pred_check_branch
    %314 = sbr.rel (0) target = $region25
  $region24: #{st_llm_forward.27} parent=0 // pred_region
    _
  $region25: #{st_llm_forward.27} parent=0 // pred_fallthru
    _
  // Predicated region
  $region26: #{st_llm_forward.27} parent=0 // pred_check
    _
  $region27: #{st_llm_forward.27} parent=0 // pred_check_branch
    %316 = sbr.rel (0) target = $region29
  $region28: #{st_llm_forward.27} parent=0 // pred_region
    _
  $region29: #{st_llm_forward.27} parent=0 // pred_fallthru
    _

// kernel: st_llm_forward.21
$region0: #{st_llm_forward.21}
  #allocation0 [shape = 'u32[]', space=smem, size = 0x4, offset = 0x4, fixed_abs, tag = 'smem constant byte address 0x4 - core index']
  #allocation1 [shape = 'u32[144,128]{1,0:T(1,128)}', space=vmem, size = 0x12000, scoped, tag = 'internal scratch']
  %s0 = inlined_call_operand.vmem [shape: bf16[32,768], index: 0, kind: input, shape index: {}]
  %s1 = inlined_call_operand.vmem [shape: bf16[768,192], index: 1, kind: input, shape index: {}]
  %s2 = inlined_call_operand.vmem [shape: f32[1,192], index: 2, kind: input, shape index: {}]
  %s3 = inlined_call_operand.vmem [shape: bf16[32,192], index: 3, kind: input, shape index: {}]
  %s4 = inlined_call_operand.vmem [shape: bf16[32,192], index: 4, kind: output, shape index: {}]
  %s5 = sld [smem:[#allocation0]]
  $region26: #{st_llm_forward.21} parent=0
    _
  %s7 = ssub.s32 1, %s5
  %s8 = scalar_select 0, %s7, %s5
  // Predicated region
  $region2: #{st_llm_forward.21} parent=0 // pred_check
    _
  $region3: #{st_llm_forward.21} parent=0 // pred_check_branch
    %10 = sbr.rel (0) target = $region5
  $region4: #{st_llm_forward.21} parent=0 // pred_region
    _
  $region5: #{st_llm_forward.21} parent=0 // pred_fallthru
    _
  // Predicated region
  $region6: #{st_llm_forward.21} parent=0 // pred_check
    _
  $region7: #{st_llm_forward.21} parent=0 // pred_check_branch
    %12 = sbr.rel (0) target = $region9
  $region8: #{st_llm_forward.21} parent=0 // pred_region
    _
  $region9: #{st_llm_forward.21} parent=0 // pred_fallthru
    _
  // Predicated region
  $region10: #{st_llm_forward.21} parent=0 // pred_check
    _
  $region11: #{st_llm_forward.21} parent=0 // pred_check_branch
    %14 = sbr.rel (0) target = $region13
  $region12: #{st_llm_forward.21} parent=0 // pred_region
    _
  $region13: #{st_llm_forward.21} parent=0 // pred_fallthru
    _
  // Predicated region
  $region14: #{st_llm_forward.21} parent=0 // pred_check
    _
  $region15: #{st_llm_forward.21} parent=0 // pred_check_branch
    %16 = sbr.rel (0) target = $region17
  $region16: #{st_llm_forward.21} parent=0 // pred_region
    _
  $region17: #{st_llm_forward.21} parent=0 // pred_fallthru
    _
  %v17 = vld [vmem:[%s0] sm:$0xff]
  %v18 = vld [vmem:[%s0 + $0x8] sm:$0xff]
  %v19 = vld [vmem:[%s0 + $0x10] sm:$0xff]
  %v20 = vld [vmem:[%s0 + $0x18] sm:$0xff]
  %v21 = vld [vmem:[%s0 + $0x20] sm:$0xff]
  %v22 = vld [vmem:[%s0 + $0x28] sm:$0xff]
  %v23 = vld [vmem:[%s0 + $0x30] sm:$0xff]
  %v24 = vld [vmem:[%s0 + $0x38] sm:$0xff]
  %v25 = vld [vmem:[%s0 + $0x40] sm:$0xff]
  %v26 = vld [vmem:[%s0 + $0x48] sm:$0xff]
  %v27 = vld [vmem:[%s0 + $0x50] sm:$0xff]
  %v28 = vld [vmem:[%s0 + $0x58] sm:$0xff]
  %v29 = vld [vmem:[%s1] sm:$0xff]
  %v30 = vld [vmem:[%s1 + $0x8] sm:$0xff]
  %v31 = vld [vmem:[%s1 + $0x10] sm:$0xff]
  %v32 = vld [vmem:[%s1 + $0x18] sm:$0xff]
  %v33 = vld [vmem:[%s1 + $0x20] sm:$0xff]
  %v34 = vld [vmem:[%s1 + $0x28] sm:$0xff]
  %v35 = vld [vmem:[%s1 + $0x30] sm:$0xff]
  %v36 = vld [vmem:[%s1 + $0x38] sm:$0xff]
  %v37 = vld [vmem:[%s1 + $0x40] sm:$0xff]
  %v38 = vld [vmem:[%s1 + $0x48] sm:$0xff]
  %v39 = vld [vmem:[%s1 + $0x50] sm:$0xff]
  %v40 = vld [vmem:[%s1 + $0x58] sm:$0xff]
  %v41 = vld [vmem:[%s1 + $0x60] sm:$0xff]
  %v42 = vld [vmem:[%s1 + $0x68] sm:$0xff]
  %v43 = vld [vmem:[%s1 + $0x70] sm:$0xff]
  %v44 = vld [vmem:[%s1 + $0x78] sm:$0xff]
  %v45 = vld [vmem:[%s1 + $0x80] sm:$0xff]
  %v46 = vld [vmem:[%s1 + $0x88] sm:$0xff]
  %v47 = vld [vmem:[%s1 + $0x90] sm:$0xff]
  %v48 = vld [vmem:[%s1 + $0x98] sm:$0xff]
  %v49 = vld [vmem:[%s1 + $0xa0] sm:$0xff]
  %v50 = vld [vmem:[%s1 + $0xa8] sm:$0xff]
  %v51 = vld [vmem:[%s1 + $0xb0] sm:$0xff]
  %v52 = vld [vmem:[%s1 + $0xb8] sm:$0xff]
  %v53 = vld [vmem:[%s1 + $0xc0] sm:$0xff]
  %v54 = vld [vmem:[%s1 + $0xc8] sm:$0xff]
  %v55 = vld [vmem:[%s1 + $0xd0] sm:$0xff]
  %v56 = vld [vmem:[%s1 + $0xd8] sm:$0xff]
  %v57 = vld [vmem:[%s1 + $0xe0] sm:$0xff]
  %v58 = vld [vmem:[%s1 + $0xe8] sm:$0xff]
  %v59 = vld [vmem:[%s1 + $0xf0] sm:$0xff]
  %v60 = vld [vmem:[%s1 + $0xf8] sm:$0xff]
  %v61 = vld [vmem:[%s1 + $0x100] sm:$0xff]
  %v62 = vld [vmem:[%s1 + $0x108] sm:$0xff]
  %v63 = vld [vmem:[%s1 + $0x110] sm:$0xff]
  %v64 = vld [vmem:[%s1 + $0x118] sm:$0xff]
  %v65 = vld [vmem:[%s1 + $0x120] sm:$0xff]
  %v66 = vld [vmem:[%s1 + $0x128] sm:$0xff]
  %v67 = vld [vmem:[%s1 + $0x130] sm:$0xff]
  %v68 = vld [vmem:[%s1 + $0x138] sm:$0xff]
  %v69 = vld [vmem:[%s1 + $0x140] sm:$0xff]
  %v70 = vld [vmem:[%s1 + $0x148] sm:$0xff]
  %v71 = vld [vmem:[%s1 + $0x150] sm:$0xff]
  %v72 = vld [vmem:[%s1 + $0x158] sm:$0xff]
  %v73 = vld [vmem:[%s1 + $0x160] sm:$0xff]
  %v74 = vld [vmem:[%s1 + $0x168] sm:$0xff]
  %v75 = vld [vmem:[%s1 + $0x170] sm:$0xff]
  %v76 = vld [vmem:[%s1 + $0x178] sm:$0xff]
  %v77 = vld [vmem:[%s1 + $0x180] sm:$0xff]
  %v78 = vld [vmem:[%s1 + $0x188] sm:$0xff]
  %v79 = vld [vmem:[%s1 + $0x190] sm:$0xff]
  %v80 = vld [vmem:[%s1 + $0x198] sm:$0xff]
  %v81 = vld [vmem:[%s1 + $0x1a0] sm:$0xff]
  %v82 = vld [vmem:[%s1 + $0x1a8] sm:$0xff]
  %v83 = vld [vmem:[%s1 + $0x1b0] sm:$0xff]
  %v84 = vld [vmem:[%s1 + $0x1b8] sm:$0xff]
  %v85 = vld [vmem:[%s1 + $0x1c0] sm:$0xff]
  %v86 = vld [vmem:[%s1 + $0x1c8] sm:$0xff]
  %v87 = vld [vmem:[%s1 + $0x1d0] sm:$0xff]
  %v88 = vld [vmem:[%s1 + $0x1d8] sm:$0xff]
  %v89 = vld [vmem:[%s1 + $0x1e0] sm:$0xff]
  %v90 = vld [vmem:[%s1 + $0x1e8] sm:$0xff]
  %v91 = vld [vmem:[%s1 + $0x1f0] sm:$0xff]
  %v92 = vld [vmem:[%s1 + $0x1f8] sm:$0xff]
  %v93 = vld [vmem:[%s1 + $0x200] sm:$0xff]
  %v94 = vld [vmem:[%s1 + $0x208] sm:$0xff]
  %v95 = vld [vmem:[%s1 + $0x210] sm:$0xff]
  %v96 = vld [vmem:[%s1 + $0x218] sm:$0xff]
  %v97 = vld [vmem:[%s1 + $0x220] sm:$0xff]
  %v98 = vld [vmem:[%s1 + $0x228] sm:$0xff]
  %v99 = vld [vmem:[%s1 + $0x230] sm:$0xff]
  %v100 = vld [vmem:[%s1 + $0x238] sm:$0xff]
  %v101 = vld [vmem:[%s1 + $0x240] sm:$0xff]
  %v102 = vld [vmem:[%s1 + $0x248] sm:$0xff]
  %v103 = vld [vmem:[%s1 + $0x250] sm:$0xff]
  %v104 = vld [vmem:[%s1 + $0x258] sm:$0xff]
  %v105 = vld [vmem:[%s1 + $0x260] sm:$0xff]
  %v106 = vld [vmem:[%s1 + $0x268] sm:$0xff]
  %v107 = vld [vmem:[%s1 + $0x270] sm:$0xff]
  %v108 = vld [vmem:[%s1 + $0x278] sm:$0xff]
  %v109 = vld [vmem:[%s1 + $0x280] sm:$0xff]
  %v110 = vld [vmem:[%s1 + $0x288] sm:$0xff]
  %v111 = vld [vmem:[%s1 + $0x290] sm:$0xff]
  %v112 = vld [vmem:[%s1 + $0x298] sm:$0xff]
  %v113 = vld [vmem:[%s1 + $0x2a0] sm:$0xff]
  %v114 = vld [vmem:[%s1 + $0x2a8] sm:$0xff]
  %v115 = vld [vmem:[%s1 + $0x2b0] sm:$0xff]
  %v116 = vld [vmem:[%s1 + $0x2b8] sm:$0xff]
  %v117 = vld [vmem:[%s1 + $0x2c0] sm:$0xff]
  %v118 = vld [vmem:[%s1 + $0x2c8] sm:$0xff]
  %v119 = vld [vmem:[%s1 + $0x2d0] sm:$0xff]
  %v120 = vld [vmem:[%s1 + $0x2d8] sm:$0xff]
  %v121 = vld [vmem:[%s1 + $0x2e0] sm:$0xff]
  %v122 = vld [vmem:[%s1 + $0x2e8] sm:$0xff]
  %v123 = vld [vmem:[%s1 + $0x2f0] sm:$0xff]
  %v124 = vld [vmem:[%s1 + $0x2f8] sm:$0xff]
  %v125 = vld [vmem:[%s2] sm:$0x3]
  %v127 = vlaneseq
  %v128 = vshrl.u32 %v127, 7
  %v129 = vsub.s32 0, %v128
  %v130 = vrot.slane %v125, %v129
  %v131 = vlaneseq
  %v132 = vshrl.u32 %v131, 7
  %v133 = vsub.s32 1, %v132
  %v134 = vrot.slane %v125, %v133
  %v149 = vunpack.c.l.b16 %v17
  %v150 = vunpack.c.h.b16 %v17
  %v151 = vunpack.c.l.b16 %v18
  %v152 = vunpack.c.h.b16 %v18
  %v153 = vunpack.c.l.b16 %v19
  %v154 = vunpack.c.h.b16 %v19
  %v155 = vunpack.c.l.b16 %v20
  %v156 = vunpack.c.h.b16 %v20
  %v157 = vunpack.c.l.b16 %v21
  %v158 = vunpack.c.h.b16 %v21
  %v159 = vunpack.c.l.b16 %v22
  %v160 = vunpack.c.h.b16 %v22
  %v161 = vunpack.c.l.b16 %v23
  %v162 = vunpack.c.h.b16 %v23
  %v163 = vunpack.c.l.b16 %v24
  %v164 = vunpack.c.h.b16 %v24
  %v165 = vunpack.c.l.b16 %v25
  %v166 = vunpack.c.h.b16 %v25
  %v167 = vunpack.c.l.b16 %v26
  %v168 = vunpack.c.h.b16 %v26
  %v169 = vunpack.c.l.b16 %v27
  %v170 = vunpack.c.h.b16 %v27
  %v171 = vunpack.c.l.b16 %v28
  %v172 = vunpack.c.h.b16 %v28
  %v173 = vpack.c.b16 %v155, %v149
  %v174 = vpack.c.b16 %v156, %v150
  %v175 = vpack.c.b16 %v157, %v151
  %v176 = vpack.c.b16 %v158, %v152
  %v177 = vpack.c.b16 %v159, %v153
  %v178 = vpack.c.b16 %v160, %v154
  %v179 = vpack.c.b16 %v167, %v161
  %v180 = vpack.c.b16 %v168, %v162
  %v181 = vpack.c.b16 %v169, %v163
  %v182 = vpack.c.b16 %v170, %v164
  %v183 = vpack.c.b16 %v171, %v165
  %v184 = vpack.c.b16 %v172, %v166
  %v293 = vunpack.c.l.b16 %v29
  %v294 = vunpack.c.h.b16 %v29
  %v295 = vunpack.c.l.b16 %v30
  %v296 = vunpack.c.h.b16 %v30
  %v297 = vunpack.c.l.b16 %v31
  %v298 = vunpack.c.h.b16 %v31
  %v299 = vunpack.c.l.b16 %v32
  %v300 = vunpack.c.h.b16 %v32
  %v301 = vunpack.c.l.b16 %v33
  %v302 = vunpack.c.h.b16 %v33
  %v303 = vunpack.c.l.b16 %v34
  %v304 = vunpack.c.h.b16 %v34
  %v305 = vunpack.c.l.b16 %v35
  %v306 = vunpack.c.h.b16 %v35
  %v307 = vunpack.c.l.b16 %v36
  %v308 = vunpack.c.h.b16 %v36
  %v309 = vunpack.c.l.b16 %v37
  %v310 = vunpack.c.h.b16 %v37
  %v311 = vunpack.c.l.b16 %v38
  %v312 = vunpack.c.h.b16 %v38
  %v313 = vunpack.c.l.b16 %v39
  %v314 = vunpack.c.h.b16 %v39
  %v315 = vunpack.c.l.b16 %v40
  %v316 = vunpack.c.h.b16 %v40
  %v317 = vunpack.c.l.b16 %v41
  %v318 = vunpack.c.h.b16 %v41
  %v319 = vunpack.c.l.b16 %v42
  %v320 = vunpack.c.h.b16 %v42
  %v321 = vunpack.c.l.b16 %v43
  %v322 = vunpack.c.h.b16 %v43
  %v323 = vunpack.c.l.b16 %v44
  %v324 = vunpack.c.h.b16 %v44
  %v325 = vunpack.c.l.b16 %v45
  %v326 = vunpack.c.h.b16 %v45
  %v327 = vunpack.c.l.b16 %v46
  %v328 = vunpack.c.h.b16 %v46
  %v329 = vunpack.c.l.b16 %v47
  %v330 = vunpack.c.h.b16 %v47
  %v331 = vunpack.c.l.b16 %v48
  %v332 = vunpack.c.h.b16 %v48
  %v333 = vunpack.c.l.b16 %v49
  %v334 = vunpack.c.h.b16 %v49
  %v335 = vunpack.c.l.b16 %v50
  %v336 = vunpack.c.h.b16 %v50
  %v337 = vunpack.c.l.b16 %v51
  %v338 = vunpack.c.h.b16 %v51
  %v339 = vunpack.c.l.b16 %v52
  %v340 = vunpack.c.h.b16 %v52
  %v341 = vunpack.c.l.b16 %v53
  %v342 = vunpack.c.h.b16 %v53
  %v343 = vunpack.c.l.b16 %v54
  %v344 = vunpack.c.h.b16 %v54
  %v345 = vunpack.c.l.b16 %v55
  %v346 = vunpack.c.h.b16 %v55
  %v347 = vunpack.c.l.b16 %v56
  %v348 = vunpack.c.h.b16 %v56
  %v349 = vunpack.c.l.b16 %v57
  %v350 = vunpack.c.h.b16 %v57
  %v351 = vunpack.c.l.b16 %v58
  %v352 = vunpack.c.h.b16 %v58
  %v353 = vunpack.c.l.b16 %v59
  %v354 = vunpack.c.h.b16 %v59
  %v355 = vunpack.c.l.b16 %v60
  %v356 = vunpack.c.h.b16 %v60
  %v357 = vunpack.c.l.b16 %v61
  %v358 = vunpack.c.h.b16 %v61
  %v359 = vunpack.c.l.b16 %v62
  %v360 = vunpack.c.h.b16 %v62
  %v361 = vunpack.c.l.b16 %v63
  %v362 = vunpack.c.h.b16 %v63
  %v363 = vunpack.c.l.b16 %v64
  %v364 = vunpack.c.h.b16 %v64
  %v365 = vunpack.c.l.b16 %v65
  %v366 = vunpack.c.h.b16 %v65
  %v367 = vunpack.c.l.b16 %v66
  %v368 = vunpack.c.h.b16 %v66
  %v369 = vunpack.c.l.b16 %v67
  %v370 = vunpack.c.h.b16 %v67
  %v371 = vunpack.c.l.b16 %v68
  %v372 = vunpack.c.h.b16 %v68
  %v373 = vunpack.c.l.b16 %v69
  %v374 = vunpack.c.h.b16 %v69
  %v375 = vunpack.c.l.b16 %v70
  %v376 = vunpack.c.h.b16 %v70
  %v377 = vunpack.c.l.b16 %v71
  %v378 = vunpack.c.h.b16 %v71
  %v379 = vunpack.c.l.b16 %v72
  %v380 = vunpack.c.h.b16 %v72
  %v381 = vunpack.c.l.b16 %v73
  %v382 = vunpack.c.h.b16 %v73
  %v383 = vunpack.c.l.b16 %v74
  %v384 = vunpack.c.h.b16 %v74
  %v385 = vunpack.c.l.b16 %v75
  %v386 = vunpack.c.h.b16 %v75
  %v387 = vunpack.c.l.b16 %v76
  %v388 = vunpack.c.h.b16 %v76
  %v389 = vunpack.c.l.b16 %v77
  %v390 = vunpack.c.h.b16 %v77
  %v391 = vunpack.c.l.b16 %v78
  %v392 = vunpack.c.h.b16 %v78
  %v393 = vunpack.c.l.b16 %v79
  %v394 = vunpack.c.h.b16 %v79
  %v395 = vunpack.c.l.b16 %v80
  %v396 = vunpack.c.h.b16 %v80
  %v397 = vunpack.c.l.b16 %v81
  %v398 = vunpack.c.h.b16 %v81
  %v399 = vunpack.c.l.b16 %v82
  %v400 = vunpack.c.h.b16 %v82
  %v401 = vunpack.c.l.b16 %v83
  %v402 = vunpack.c.h.b16 %v83
  %v403 = vunpack.c.l.b16 %v84
  %v404 = vunpack.c.h.b16 %v84
  %v405 = vunpack.c.l.b16 %v85
  %v406 = vunpack.c.h.b16 %v85
  %v407 = vunpack.c.l.b16 %v86
  %v408 = vunpack.c.h.b16 %v86
  %v409 = vunpack.c.l.b16 %v87
  %v410 = vunpack.c.h.b16 %v87
  %v411 = vunpack.c.l.b16 %v88
  %v412 = vunpack.c.h.b16 %v88
  %v413 = vunpack.c.l.b16 %v89
  %v414 = vunpack.c.h.b16 %v89
  %v415 = vunpack.c.l.b16 %v90
  %v416 = vunpack.c.h.b16 %v90
  %v417 = vunpack.c.l.b16 %v91
  %v418 = vunpack.c.h.b16 %v91
  %v419 = vunpack.c.l.b16 %v92
  %v420 = vunpack.c.h.b16 %v92
  %v421 = vunpack.c.l.b16 %v93
  %v422 = vunpack.c.h.b16 %v93
  %v423 = vunpack.c.l.b16 %v94
  %v424 = vunpack.c.h.b16 %v94
  %v425 = vunpack.c.l.b16 %v95
  %v426 = vunpack.c.h.b16 %v95
  %v427 = vunpack.c.l.b16 %v96
  %v428 = vunpack.c.h.b16 %v96
  %v429 = vunpack.c.l.b16 %v97
  %v430 = vunpack.c.h.b16 %v97
  %v431 = vunpack.c.l.b16 %v98
  %v432 = vunpack.c.h.b16 %v98
  %v433 = vunpack.c.l.b16 %v99
  %v434 = vunpack.c.h.b16 %v99
  %v435 = vunpack.c.l.b16 %v100
  %v436 = vunpack.c.h.b16 %v100
  %v437 = vunpack.c.l.b16 %v101
  %v438 = vunpack.c.h.b16 %v101
  %v439 = vunpack.c.l.b16 %v102
  %v440 = vunpack.c.h.b16 %v102
  %v441 = vunpack.c.l.b16 %v103
  %v442 = vunpack.c.h.b16 %v103
  %v443 = vunpack.c.l.b16 %v104
  %v444 = vunpack.c.h.b16 %v104
  %v445 = vunpack.c.l.b16 %v105
  %v446 = vunpack.c.h.b16 %v105
  %v447 = vunpack.c.l.b16 %v106
  %v448 = vunpack.c.h.b16 %v106
  %v449 = vunpack.c.l.b16 %v107
  %v450 = vunpack.c.h.b16 %v107
  %v451 = vunpack.c.l.b16 %v108
  %v452 = vunpack.c.h.b16 %v108
  %v453 = vunpack.c.l.b16 %v109
  %v454 = vunpack.c.h.b16 %v109
  %v455 = vunpack.c.l.b16 %v110
  %v456 = vunpack.c.h.b16 %v110
  %v457 = vunpack.c.l.b16 %v111
  %v458 = vunpack.c.h.b16 %v111
  %v459 = vunpack.c.l.b16 %v112
  %v460 = vunpack.c.h.b16 %v112
  %v461 = vunpack.c.l.b16 %v113
  %v462 = vunpack.c.h.b16 %v113
  %v463 = vunpack.c.l.b16 %v114
  %v464 = vunpack.c.h.b16 %v114
  %v465 = vunpack.c.l.b16 %v115
  %v466 = vunpack.c.h.b16 %v115
  %v467 = vunpack.c.l.b16 %v116
  %v468 = vunpack.c.h.b16 %v116
  %v469 = vunpack.c.l.b16 %v117
  %v470 = vunpack.c.h.b16 %v117
  %v471 = vunpack.c.l.b16 %v118
  %v472 = vunpack.c.h.b16 %v118
  %v473 = vunpack.c.l.b16 %v119
  %v474 = vunpack.c.h.b16 %v119
  %v475 = vunpack.c.l.b16 %v120
  %v476 = vunpack.c.h.b16 %v120
  %v477 = vunpack.c.l.b16 %v121
  %v478 = vunpack.c.h.b16 %v121
  %v479 = vunpack.c.l.b16 %v122
  %v480 = vunpack.c.h.b16 %v122
  %v481 = vunpack.c.l.b16 %v123
  %v482 = vunpack.c.h.b16 %v123
  %v483 = vunpack.c.l.b16 %v124
  %v484 = vunpack.c.h.b16 %v124
  %v485 = vpack.c.b16 %v295, %v293
  %v486 = vpack.c.b16 %v296, %v294
  %v487 = vpack.c.b16 %v299, %v297
  %v488 = vpack.c.b16 %v300, %v298
  %v489 = vpack.c.b16 %v303, %v301
  %v490 = vpack.c.b16 %v304, %v302
  %v491 = vpack.c.b16 %v307, %v305
  %v492 = vpack.c.b16 %v308, %v306
  %v493 = vpack.c.b16 %v311, %v309
  %v494 = vpack.c.b16 %v312, %v310
  %v495 = vpack.c.b16 %v315, %v313
  %v496 = vpack.c.b16 %v316, %v314
  %v497 = vpack.c.b16 %v319, %v317
  %v498 = vpack.c.b16 %v320, %v318
  %v499 = vpack.c.b16 %v323, %v321
  %v500 = vpack.c.b16 %v324, %v322
  %v501 = vpack.c.b16 %v327, %v325
  %v502 = vpack.c.b16 %v328, %v326
  %v503 = vpack.c.b16 %v331, %v329
  %v504 = vpack.c.b16 %v332, %v330
  %v505 = vpack.c.b16 %v335, %v333
  %v506 = vpack.c.b16 %v336, %v334
  %v507 = vpack.c.b16 %v339, %v337
  %v508 = vpack.c.b16 %v340, %v338
  %v509 = vpack.c.b16 %v343, %v341
  %v510 = vpack.c.b16 %v344, %v342
  %v511 = vpack.c.b16 %v347, %v345
  %v512 = vpack.c.b16 %v348, %v346
  %v513 = vpack.c.b16 %v351, %v349
  %v514 = vpack.c.b16 %v352, %v350
  %v515 = vpack.c.b16 %v355, %v353
  %v516 = vpack.c.b16 %v356, %v354
  %v517 = vpack.c.b16 %v359, %v357
  %v518 = vpack.c.b16 %v360, %v358
  %v519 = vpack.c.b16 %v363, %v361
  %v520 = vpack.c.b16 %v364, %v362
  %v521 = vpack.c.b16 %v367, %v365
  %v522 = vpack.c.b16 %v368, %v366
  %v523 = vpack.c.b16 %v371, %v369
  %v524 = vpack.c.b16 %v372, %v370
  %v525 = vpack.c.b16 %v375, %v373
  %v526 = vpack.c.b16 %v376, %v374
  %v527 = vpack.c.b16 %v379, %v377
  %v528 = vpack.c.b16 %v380, %v378
  %v529 = vpack.c.b16 %v383, %v381
  %v530 = vpack.c.b16 %v384, %v382
  %v531 = vpack.c.b16 %v387, %v385
  %v532 = vpack.c.b16 %v388, %v386
  %v533 = vpack.c.b16 %v391, %v389
  %v534 = vpack.c.b16 %v392, %v390
  %v535 = vpack.c.b16 %v395, %v393
  %v536 = vpack.c.b16 %v396, %v394
  %v537 = vpack.c.b16 %v399, %v397
  %v538 = vpack.c.b16 %v400, %v398
  %v539 = vpack.c.b16 %v403, %v401
  %v540 = vpack.c.b16 %v404, %v402
  %v541 = vpack.c.b16 %v407, %v405
  %v542 = vpack.c.b16 %v408, %v406
  %v543 = vpack.c.b16 %v411, %v409
  %v544 = vpack.c.b16 %v412, %v410
  %v545 = vpack.c.b16 %v415, %v413
  %v546 = vpack.c.b16 %v416, %v414
  %v547 = vpack.c.b16 %v419, %v417
  %v548 = vpack.c.b16 %v420, %v418
  %v549 = vpack.c.b16 %v423, %v421
  %v550 = vpack.c.b16 %v424, %v422
  %v551 = vpack.c.b16 %v427, %v425
  %v552 = vpack.c.b16 %v428, %v426
  %v553 = vpack.c.b16 %v431, %v429
  %v554 = vpack.c.b16 %v432, %v430
  %v555 = vpack.c.b16 %v435, %v433
  %v556 = vpack.c.b16 %v436, %v434
  %v557 = vpack.c.b16 %v439, %v437
  %v558 = vpack.c.b16 %v440, %v438
  %v559 = vpack.c.b16 %v443, %v441
  %v560 = vpack.c.b16 %v444, %v442
  %v561 = vpack.c.b16 %v447, %v445
  %v562 = vpack.c.b16 %v448, %v446
  %v563 = vpack.c.b16 %v451, %v449
  %v564 = vpack.c.b16 %v452, %v450
  %v565 = vpack.c.b16 %v455, %v453
  %v566 = vpack.c.b16 %v456, %v454
  %v567 = vpack.c.b16 %v459, %v457
  %v568 = vpack.c.b16 %v460, %v458
  %v569 = vpack.c.b16 %v463, %v461
  %v570 = vpack.c.b16 %v464, %v462
  %v571 = vpack.c.b16 %v467, %v465
  %v572 = vpack.c.b16 %v468, %v466
  %v573 = vpack.c.b16 %v471, %v469
  %v574 = vpack.c.b16 %v472, %v470
  %v575 = vpack.c.b16 %v475, %v473
  %v576 = vpack.c.b16 %v476, %v474
  %v577 = vpack.c.b16 %v479, %v477
  %v578 = vpack.c.b16 %v480, %v478
  %v579 = vpack.c.b16 %v483, %v481
  %v580 = vpack.c.b16 %v484, %v482
  %677 = vmatprep.subr.bf16.mxu0 %v500
  %678 = vmatpush1.bf16.msra.mxu0 %v499
  %679 = vmatprep.subr.bf16.mxu0 %v498
  %680 = vmatpush1.bf16.msra.mxu0 %v497
  %681 = vmatprep.subr.bf16.mxu0 %v496
  %682 = vmatpush1.bf16.msra.mxu0 %v495
  %683 = vmatprep.subr.bf16.mxu0 %v494
  %684 = vmatpush1.bf16.msra.mxu0 %v493
  %685 = vmatprep.subr.bf16.mxu0 %v492
  %686 = vmatpush1.bf16.msra.mxu0 %v491
  %687 = vmatprep.subr.bf16.mxu0 %v490
  %688 = vmatpush1.bf16.msra.mxu0 %v489
  %689 = vmatprep.subr.bf16.mxu0 %v488
  %690 = vmatpush1.bf16.msra.mxu0 %v487
  %691 = vmatprep.subr.bf16.mxu0 %v486
  %692 = vmatpush1.bf16.msra.mxu0 %v485
  %693 = vmatprep.subr.bf16.mxu0 %v516
  %694 = vmatpush2.bf16.msra.mxu0 %v515
  %695 = vmatprep.subr.bf16.mxu0 %v514
  %696 = vmatpush2.bf16.msra.mxu0 %v513
  %697 = vmatprep.subr.bf16.mxu0 %v512
  %698 = vmatpush2.bf16.msra.mxu0 %v511
  %699 = vmatprep.subr.bf16.mxu0 %v510
  %700 = vmatpush2.bf16.msra.mxu0 %v509
  %701 = vmatprep.subr.bf16.mxu0 %v508
  %702 = vmatpush2.bf16.msra.mxu0 %v507
  %703 = vmatprep.subr.bf16.mxu0 %v506
  %704 = vmatpush2.bf16.msra.mxu0 %v505
  %705 = vmatprep.subr.bf16.mxu0 %v504
  %706 = vmatpush2.bf16.msra.mxu0 %v503
  %707 = vmatprep.subr.bf16.mxu0 %v502
  %708 = vmatpush2.bf16.msra.mxu0 %v501
  %709 = vmatprep.mubr.bf16.mxu0 %v174
  %710 = vmatmul.mubr.bf16.gmra.mxu0 %v173
  %v711 = vpop.f32.mrf.mxu0
  %v712 = vadd.f32 %v130, %v711
  %v713 = vpop.f32.mrf.mxu0
  %v714 = vadd.f32 %v134, %v713
  %v715 = vpop.f32.mrf.mxu0
  %v716 = vadd.f32 %v130, %v715
  %v717 = vpop.f32.mrf.mxu0
  %v718 = vadd.f32 %v134, %v717
  %719 = vmatprep.mubr.bf16.mxu0 %v180
  %720 = vmatmul.mubr.bf16.gmra.mxu0 %v179
  %v721 = vpop.f32.mrf.mxu0
  %v722 = vadd.f32 %v130, %v721
  %v723 = vpop.f32.mrf.mxu0
  %v724 = vadd.f32 %v134, %v723
  %v725 = vpop.f32.mrf.mxu0
  %v726 = vadd.f32 %v130, %v725
  %v727 = vpop.f32.mrf.mxu0
  %v728 = vadd.f32 %v134, %v727
  %729 = vdwg.mxu0
  %730 = vmatprep.subr.bf16.mxu0 %v532
  %731 = vmatpush1.bf16.msra.mxu0 %v531
  %732 = vmatprep.subr.bf16.mxu0 %v530
  %733 = vmatpush1.bf16.msra.mxu0 %v529
  %734 = vmatprep.subr.bf16.mxu0 %v528
  %735 = vmatpush1.bf16.msra.mxu0 %v527
  %736 = vmatprep.subr.bf16.mxu0 %v526
  %737 = vmatpush1.bf16.msra.mxu0 %v525
  %738 = vmatprep.subr.bf16.mxu0 %v524
  %739 = vmatpush1.bf16.msra.mxu0 %v523
  %740 = vmatprep.subr.bf16.mxu0 %v522
  %741 = vmatpush1.bf16.msra.mxu0 %v521
  %742 = vmatprep.subr.bf16.mxu0 %v520
  %743 = vmatpush1.bf16.msra.mxu0 %v519
  %744 = vmatprep.subr.bf16.mxu0 %v518
  %745 = vmatpush1.bf16.msra.mxu0 %v517
  %746 = vmatprep.subr.bf16.mxu0 %v548
  %747 = vmatpush2.bf16.msra.mxu0 %v547
  %748 = vmatprep.subr.bf16.mxu0 %v546
  %749 = vmatpush2.bf16.msra.mxu0 %v545
  %750 = vmatprep.subr.bf16.mxu0 %v544
  %751 = vmatpush2.bf16.msra.mxu0 %v543
  %752 = vmatprep.subr.bf16.mxu0 %v542
  %753 = vmatpush2.bf16.msra.mxu0 %v541
  %754 = vmatprep.subr.bf16.mxu0 %v540
  %755 = vmatpush2.bf16.msra.mxu0 %v539
  %756 = vmatprep.subr.bf16.mxu0 %v538
  %757 = vmatpush2.bf16.msra.mxu0 %v537
  %758 = vmatprep.subr.bf16.mxu0 %v536
  %759 = vmatpush2.bf16.msra.mxu0 %v535
  %760 = vmatprep.subr.bf16.mxu0 %v534
  %761 = vmatpush2.bf16.msra.mxu0 %v533
  %762 = vmatprep.mubr.bf16.mxu0 %v176
  %763 = vmatmul.mubr.bf16.gmra.mxu0 %v175
  %v764 = vpop.f32.mrf.mxu0
  %v765 = vadd.f32 %v712, %v764
  %v766 = vpop.f32.mrf.mxu0
  %v767 = vadd.f32 %v714, %v766
  %v768 = vpop.f32.mrf.mxu0
  %v769 = vadd.f32 %v716, %v768
  %v770 = vpop.f32.mrf.mxu0
  %v771 = vadd.f32 %v718, %v770
  %772 = vmatprep.mubr.bf16.mxu0 %v182
  %773 = vmatmul.mubr.bf16.gmra.mxu0 %v181
  %v774 = vpop.f32.mrf.mxu0
  %v775 = vadd.f32 %v722, %v774
  %v776 = vpop.f32.mrf.mxu0
  %v777 = vadd.f32 %v724, %v776
  %v778 = vpop.f32.mrf.mxu0
  %v779 = vadd.f32 %v726, %v778
  %v780 = vpop.f32.mrf.mxu0
  %v781 = vadd.f32 %v728, %v780
  %782 = vdwg.mxu0
  %783 = vmatprep.subr.bf16.mxu0 %v564
  %784 = vmatpush1.bf16.msra.mxu0 %v563
  %785 = vmatprep.subr.bf16.mxu0 %v562
  %786 = vmatpush1.bf16.msra.mxu0 %v561
  %787 = vmatprep.subr.bf16.mxu0 %v560
  %788 = vmatpush1.bf16.msra.mxu0 %v559
  %789 = vmatprep.subr.bf16.mxu0 %v558
  %790 = vmatpush1.bf16.msra.mxu0 %v557
  %791 = vmatprep.subr.bf16.mxu0 %v556
  %792 = vmatpush1.bf16.msra.mxu0 %v555
  %793 = vmatprep.subr.bf16.mxu0 %v554
  %794 = vmatpush1.bf16.msra.mxu0 %v553
  %795 = vmatprep.subr.bf16.mxu0 %v552
  %796 = vmatpush1.bf16.msra.mxu0 %v551
  %797 = vmatprep.subr.bf16.mxu0 %v550
  %798 = vmatpush1.bf16.msra.mxu0 %v549
  %799 = vmatprep.subr.bf16.mxu0 %v580
  %800 = vmatpush2.bf16.msra.mxu0 %v579
  %801 = vmatprep.subr.bf16.mxu0 %v578
  %802 = vmatpush2.bf16.msra.mxu0 %v577
  %803 = vmatprep.subr.bf16.mxu0 %v576
  %804 = vmatpush2.bf16.msra.mxu0 %v575
  %805 = vmatprep.subr.bf16.mxu0 %v574
  %806 = vmatpush2.bf16.msra.mxu0 %v573
  %807 = vmatprep.subr.bf16.mxu0 %v572
  %808 = vmatpush2.bf16.msra.mxu0 %v571
  %809 = vmatprep.subr.bf16.mxu0 %v570
  %810 = vmatpush2.bf16.msra.mxu0 %v569
  %811 = vmatprep.subr.bf16.mxu0 %v568
  %812 = vmatpush2.bf16.msra.mxu0 %v567
  %813 = vmatprep.subr.bf16.mxu0 %v566
  %814 = vmatpush2.bf16.msra.mxu0 %v565
  %815 = vmatprep.mubr.bf16.mxu0 %v178
  %816 = vmatmul.mubr.bf16.gmra.mxu0 %v177
  %v817 = vpop.f32.mrf.mxu0
  %v818 = vadd.f32 %v765, %v817
  %v819 = vpop.f32.mrf.mxu0
  %v820 = vadd.f32 %v767, %v819
  %v821 = vpop.f32.mrf.mxu0
  %v822 = vadd.f32 %v769, %v821
  %v823 = vpop.f32.mrf.mxu0
  %v824 = vadd.f32 %v771, %v823
  %825 = vmatprep.mubr.bf16.mxu0 %v184
  %826 = vmatmul.mubr.bf16.gmra.mxu0 %v183
  %v827 = vpop.f32.mrf.mxu0
  %v828 = vadd.f32 %v775, %v827
  %v829 = vpop.f32.mrf.mxu0
  %v830 = vadd.f32 %v777, %v829
  %v831 = vpop.f32.mrf.mxu0
  %v832 = vadd.f32 %v779, %v831
  %v833 = vpop.f32.mrf.mxu0
  %v834 = vadd.f32 %v781, %v833
  %835 = vdwg.mxu0
  %v836 = vld [vmem:[%s3] sm:$0xff]
  %v837 = vld [vmem:[%s3 + $0x8] sm:$0xff]
  %v838 = vld [vmem:[%s3 + $0x10] sm:$0xff]
  %v839 = vld [vmem:[%s3 + $0x18] sm:$0xff]
  %v840 = vunpack.c.l.bf16 %v836
  %v841 = vunpack.c.h.bf16 %v836
  %v842 = vunpack.c.l.bf16 %v837
  %v843 = vunpack.c.h.bf16 %v837
  %v844 = vunpack.c.l.bf16 %v838
  %v845 = vunpack.c.h.bf16 %v838
  %v846 = vunpack.c.l.bf16 %v839
  %v847 = vunpack.c.h.bf16 %v839
  %v848 = vadd.f32 %v818, %v840
  %v849 = vadd.f32 %v820, %v841
  %v850 = vadd.f32 %v822, %v842
  %v851 = vadd.f32 %v824, %v843
  %v852 = vadd.f32 %v828, %v844
  %v853 = vadd.f32 %v830, %v845
  %v854 = vadd.f32 %v832, %v846
  %v855 = vadd.f32 %v834, %v847
  %v856 = vpack.c.bf16 %v850, %v848
  %v857 = vpack.c.bf16 %v851, %v849
  %v858 = vpack.c.bf16 %v854, %v852
  %v859 = vpack.c.bf16 %v855, %v853
  %v864 = vunpack.c.l.b16 %v856
  %v865 = vunpack.c.l.b16 %v857
  %v866 = vunpack.c.h.b16 %v856
  %v867 = vunpack.c.h.b16 %v857
  %v868 = vunpack.c.l.b16 %v858
  %v869 = vunpack.c.l.b16 %v859
  %v870 = vunpack.c.h.b16 %v858
  %v871 = vunpack.c.h.b16 %v859
  %v872 = vpack.c.b16 %v865, %v864
  %v873 = vpack.c.b16 %v867, %v866
  %v874 = vpack.c.b16 %v869, %v868
  %v875 = vpack.c.b16 %v871, %v870
  %vm880 = vcmask 1043456
  %vm881 = vcmask 523268
  %vm882 = vmor %vm881, %vm880
  %883 = vst.msk [vmem:[%s4] sm:$0xff] %vm882, %v872
  %884 = vst.msk [vmem:[%s4 + $0x8] sm:$0xff] %vm882, %v873
  %885 = vst.msk [vmem:[%s4 + $0x10] sm:$0xff] %vm882, %v874
  %886 = vst.msk [vmem:[%s4 + $0x18] sm:$0xff] %vm882, %v875
  // Predicated region
  $region18: #{st_llm_forward.21} parent=0 // pred_check
    _
  $region19: #{st_llm_forward.21} parent=0 // pred_check_branch
    %888 = sbr.rel (0) target = $region21
  $region20: #{st_llm_forward.21} parent=0 // pred_region
    _
  $region21: #{st_llm_forward.21} parent=0 // pred_fallthru
    _
  // Predicated region
  $region22: #{st_llm_forward.21} parent=0 // pred_check
    _
  $region23: #{st_llm_forward.21} parent=0 // pred_check_branch
    %890 = sbr.rel (0) target = $region25
  $region24: #{st_llm_forward.21} parent=0 // pred_region
    _
  $region25: #{st_llm_forward.21} parent=0 // pred_fallthru
    _

</llo_original>
